<compile_context>
chip_gen: v7x
topology: tpu7x:2x2x1
jax: 0.10.0
libtpu: 0.0.40
codegen_flags: <defaults>
</compile_context>

<pallas_src>
import functools

import jax
import jax.numpy as jnp
import numpy as np
from jax.experimental import pallas as pl
from jax.experimental.pallas import tpu as pltpu


# --------------------------------------------------------------------------
# Kernel: full window-attention forward for WB windows (one grid step).
# --------------------------------------------------------------------------
def _window_attn_kernel(x_ref, wqkv_ref, bqkv_ref, bias_ref, wp_ref, bp_ref,
                        o_ref, *, num_heads, compute_dtype):
    # x_ref    : (WB, N, C)
    # wqkv_ref : (C, 3C)       = [scale*Wq^T | Wkv^T]
    # bqkv_ref : (1, 3C)       = [scale*bq | bkv]
    # bias_ref : (nH, N, N)    relative position bias (already gathered)
    # wp_ref   : (C, C)        proj.weight^T
    # bp_ref   : (1, C)
    # o_ref    : (WB, N, C)
    WB, N, C = x_ref.shape
    d = C // num_heads

    # Flatten windows into the matmul M dim (leading-dim merge, layout-free).
    x = x_ref[...].reshape(WB * N, C)

    # Fused QKV projection: one MXU matmul, f32 accumulation.
    qkv = jnp.dot(x, wqkv_ref[...], preferred_element_type=jnp.float32)
    qkv = qkv + bqkv_ref[...]
    qkv = qkv.reshape(WB, N, 3 * C)          # leading-dim split, layout-free

    acc = jnp.zeros((WB * N, C), jnp.float32)

    # Static head loop (nH is small); every matmul is batched over WB windows.
    for h in range(num_heads):
        qh = qkv[:, :, h * d:(h + 1) * d].astype(compute_dtype)          # (WB,N,d)
        kh = qkv[:, :, C + h * d:C + (h + 1) * d].astype(compute_dtype)  # (WB,N,d)
        vh = qkv[:, :, 2 * C + h * d:2 * C + (h + 1) * d]                # (WB,N,d)

        # scores: window-batched q @ k^T (contract head dim), f32 accumulation.
        s = jnp.einsum('wqd,wkd->wqk', qh, kh,
                       preferred_element_type=jnp.float32)               # (WB,N,N)
        s = s + bias_ref[h]                  # broadcast bias over WB windows

        # Numerically stable softmax along the lane axis (stats in f32).
        m = jnp.max(s, axis=-1, keepdims=True)
        e = jnp.exp(s - m)
        # approx=False keeps full precision (approx=True is available when the
        # tolerance budget allows; it moves the divide fully to the EUP slot).
        r = pl.reciprocal(jnp.sum(e, axis=-1, keepdims=True), approx=False)
        p = (e * r).astype(compute_dtype)

        pv = jnp.einsum('wqk,wkd->wqd', p, vh.astype(compute_dtype),
                        preferred_element_type=jnp.float32)              # (WB,N,d)

        # Fold the head concatenation into the output projection:
        #   concat_h(pv_h) @ Wp == sum_h pv_h @ Wp[h*d:(h+1)*d, :]
        wp_h = wp_ref[h * d:(h + 1) * d, :]                              # (d, C)
        acc = acc + jnp.dot(pv.reshape(WB * N, d).astype(compute_dtype), wp_h,
                            preferred_element_type=jnp.float32)

    y = acc + bp_ref[...]
    # Single store of the whole (WB, N, C) block.
    o_ref[...] = y.reshape(WB, N, C).astype(o_ref.dtype)


# --------------------------------------------------------------------------
# One-time parameter transforms (hoisted out of the per-call forward).
# --------------------------------------------------------------------------
def relative_position_index(win_size):
    """Mirrors the PyTorch buffer computation (int index into the bias table)."""
    Wh, Ww = win_size
    coords = jnp.stack(jnp.meshgrid(jnp.arange(Wh), jnp.arange(Ww),
                                    indexing="ij"))           # (2, Wh, Ww)
    coords_flat = coords.reshape(2, -1)                       # (2, N)
    rel = coords_flat[:, :, None] - coords_flat[:, None, :]   # (2, N, N)
    rel = rel.transpose(1, 2, 0)                              # (N, N, 2)
    rel = rel.at[:, :, 0].add(Wh - 1)
    rel = rel.at[:, :, 1].add(Ww - 1)
    rel = rel.at[:, :, 0].multiply(2 * Ww - 1)
    return rel.sum(-1)                                        # (N, N) int32


def gather_relative_position_bias(table, index, num_heads):
    """(table: ((2Wh-1)(2Ww-1), nH), index: (N, N)) -> (nH, N, N)."""
    N = index.shape[0]
    bias = table[index.reshape(-1)]                            # (N*N, nH)
    return bias.reshape(N, N, num_heads).transpose(2, 0, 1)    # (nH, N, N)


def prepare_window_attention_params(wq, bq, wkv, bkv, rel_bias_table, wp, bp,
                                    win_size, num_heads, qk_scale=None,
                                    compute_dtype=jnp.float32):
    """Shape-static parameter prep: call ONCE, reuse across forward calls.

    PyTorch Linear weights are (out_features, in_features)."""
    C = wq.shape[1]
    assert C % num_heads == 0, "dim must be divisible by num_heads"
    head_dim = C // num_heads
    scale = qk_scale if qk_scale is not None else head_dim ** (-0.5)

    # Fold q-scale into Wq/bq and fuse to_q + to_kv into one (C, 3C) operand.
    wqkv = jnp.concatenate([(wq * scale).T, wkv.T], axis=1)    # (C, 3C)
    bqkv = jnp.concatenate([bq * scale, bkv]).reshape(1, 3 * C)
    wp_t = wp.T                                                # (C, C)
    bp2 = bp.reshape(1, C)

    idx = relative_position_index(win_size)
    rel_bias = gather_relative_position_bias(rel_bias_table, idx, num_heads)
    rel_bias = rel_bias.astype(jnp.float32)

    if compute_dtype != jnp.float32:
        wqkv = wqkv.astype(compute_dtype)
        wp_t = wp_t.astype(compute_dtype)
    return wqkv, bqkv, rel_bias, wp_t, bp2


# --------------------------------------------------------------------------
# Forward wrapper: window-batched pallas_call.
# --------------------------------------------------------------------------
def window_attention_forward(x, params, num_heads, *, wb=64,
                             compute_dtype=jnp.float32):
    """Pallas forward. `params` comes from prepare_window_attention_params."""
    wqkv, bqkv, rel_bias, wp_t, bp2 = params
    B_, N, C = x.shape
    assert C % num_heads == 0

    # Batch WB windows per grid step; pad B_ up to a multiple of WB.
    wb = max(1, min(wb, B_))
    num_blocks = pl.cdiv(B_, wb)
    B_pad = num_blocks * wb
    x_in = x if B_pad == B_ else jnp.pad(x, ((0, B_pad - B_), (0, 0), (0, 0)))
    if compute_dtype != jnp.float32:
        x_in = x_in.astype(compute_dtype)

    kernel = functools.partial(_window_attn_kernel, num_heads=num_heads,
                               compute_dtype=compute_dtype)
    out = pl.pallas_call(
        kernel,
        out_shape=jax.ShapeDtypeStruct((B_pad, N, C), x.dtype),
        grid_spec=pltpu.PrefetchScalarGridSpec(
            num_scalar_prefetch=0,
            grid=(num_blocks,),
            in_specs=[
                pl.BlockSpec((wb, N, C), lambda b: (b, 0, 0)),           # x
                pl.BlockSpec((C, 3 * C), lambda b: (0, 0)),              # wqkv
                pl.BlockSpec((1, 3 * C), lambda b: (0, 0)),              # bqkv
                pl.BlockSpec((num_heads, N, N), lambda b: (0, 0, 0)),    # bias
                pl.BlockSpec((C, C), lambda b: (0, 0)),                  # wp^T
                pl.BlockSpec((1, C), lambda b: (0, 0)),                  # bp
            ],
            out_specs=pl.BlockSpec((wb, N, C), lambda b: (b, 0, 0)),
        ),
        compiler_params=pltpu.CompilerParams(
            dimension_semantics=("parallel",),
            # Capped at 48 MiB so the same WB fits v7x's 64 MiB physical VMEM
            # while raising the 16/32 MiB scoped defaults on v5e/v6e.
            vmem_limit_bytes=48 * 1024 * 1024),
    )(x_in, wqkv, bqkv, rel_bias, wp_t, bp2)

    return out if B_pad == B_ else out[:B_]


# --------------------------------------------------------------------------
# Pure-JAX reference mirroring PyTorch semantics.
# --------------------------------------------------------------------------
def window_attention_reference(x, wq, bq, wkv, bkv, rel_bias_table, wp, bp,
                               win_size, num_heads, qk_scale=None):
    B_, N, C = x.shape
    d = C // num_heads
    scale = qk_scale if qk_scale is not None else d ** (-0.5)

    q = x @ wq.T + bq
    kv = x @ wkv.T + bkv
    k, v = kv[..., :C], kv[..., C:]

    def to_heads(t):
        return t.reshape(B_, N, num_heads, d).transpose(0, 2, 1, 3)

    qh, kh, vh = to_heads(q) * scale, to_heads(k), to_heads(v)
    attn = jnp.einsum("bhqd,bhkd->bhqk", qh, kh)
    idx = relative_position_index(win_size)
    rel_bias = gather_relative_position_bias(rel_bias_table, idx, num_heads)
    attn = attn + rel_bias[None]
    attn = jax.nn.softmax(attn, axis=-1)
    out = jnp.einsum("bhqk,bhkd->bhqd", attn, vh)
    out = out.transpose(0, 2, 1, 3).reshape(B_, N, C)
    return out @ wp.T + bp


if __name__ == "__main__":
    dim = 32
    num_heads = 4
    win_size = (8, 8)
    N = win_size[0] * win_size[1]
    B_ = 6                      # number of windows*batch; NOT a multiple of WB
    WB = 4                      # windows per grid step (grid length 2)

    key = jax.random.PRNGKey(0)
    keys = jax.random.split(key, 8)
    x = jax.random.normal(keys[0], (B_, N, dim), dtype=jnp.float32)
    # PyTorch-layout weights: Linear.weight is (out_features, in_features).
    wq = jax.random.normal(keys[1], (dim, dim), dtype=jnp.float32) * 0.1
    bq = jax.random.normal(keys[2], (dim,), dtype=jnp.float32) * 0.1
    wkv = jax.random.normal(keys[3], (2 * dim, dim), dtype=jnp.float32) * 0.1
    bkv = jax.random.normal(keys[4], (2 * dim,), dtype=jnp.float32) * 0.1
    table_len = (2 * win_size[0] - 1) * (2 * win_size[1] - 1)
    rel_bias_table = jax.random.normal(
        keys[5], (table_len, num_heads), dtype=jnp.float32) * 0.02
    wp = jax.random.normal(keys[6], (dim, dim), dtype=jnp.float32) * 0.1
    bp = jax.random.normal(keys[7], (dim,), dtype=jnp.float32) * 0.1

    # One-time parameter prep (hoisted out of the per-call path), jitted fwd.
    params = prepare_window_attention_params(
        wq, bq, wkv, bkv, rel_bias_table, wp, bp, win_size, num_heads)
    fwd = jax.jit(lambda xx: window_attention_forward(
        xx, params, num_heads, wb=WB))

    out = jax.block_until_ready(fwd(x))

    ref = jax.block_until_ready(
        window_attention_reference(x, wq, bq, wkv, bkv, rel_bias_table,
                                   wp, bp, win_size, num_heads))
    assert out.shape == (B_, N, dim), out.shape
    np.testing.assert_allclose(np.asarray(out), np.asarray(ref),
                               rtol=1e-4, atol=1e-4)
    print("KERNEL_OK")
</pallas_src>

<mosaic_0001>
module attributes {stable_mosaic.version = 11 : i64} {
  func.func @_window_attn_kernel(%arg0: i32, %arg1: memref<4x64x32xf32, #tpu.memory_space<vmem>>, %arg2: memref<32x96xf32, #tpu.memory_space<vmem>>, %arg3: memref<1x96xf32, #tpu.memory_space<vmem>>, %arg4: memref<4x64x64xf32, #tpu.memory_space<vmem>>, %arg5: memref<32x32xf32, #tpu.memory_space<vmem>>, %arg6: memref<1x32xf32, #tpu.memory_space<vmem>>, %arg7: memref<4x64x32xf32, #tpu.memory_space<vmem>>) attributes {dimension_semantics = [#tpu.dimension_semantics<parallel>], iteration_bounds = array<i64: 2>, scalar_prefetch = 0 : i64, scratch_operands = 0 : i64, tpu.core_type = #tpu.core_type<tc>, window_params = [{transform_indices = @transform_0, window_bounds = array<i64: 4, 64, 32>}, {pipeline_mode = #tpu.pipeline_mode<synchronous>, transform_indices = @transform_1, window_bounds = array<i64: 32, 96>}, {pipeline_mode = #tpu.pipeline_mode<synchronous>, transform_indices = @transform_2, window_bounds = array<i64: 1, 96>}, {pipeline_mode = #tpu.pipeline_mode<synchronous>, transform_indices = @transform_3, window_bounds = array<i64: 4, 64, 64>}, {pipeline_mode = #tpu.pipeline_mode<synchronous>, transform_indices = @transform_4, window_bounds = array<i64: 32, 32>}, {pipeline_mode = #tpu.pipeline_mode<synchronous>, transform_indices = @transform_5, window_bounds = array<i64: 1, 32>}, {transform_indices = @transform_6, window_bounds = array<i64: 4, 64, 32>}]} {
    %c0 = arith.constant 0 : index
    %c0_0 = arith.constant 0 : index
    %c0_1 = arith.constant 0 : index
    %0 = vector.load %arg1[%c0, %c0_0, %c0_1] : memref<4x64x32xf32, #tpu.memory_space<vmem>>, vector<4x64x32xf32>
    %1 = vector.shape_cast %0 : vector<4x64x32xf32> to vector<256x32xf32>
    %c0_2 = arith.constant 0 : index
    %c0_3 = arith.constant 0 : index
    %2 = vector.load %arg2[%c0_2, %c0_3] : memref<32x96xf32, #tpu.memory_space<vmem>>, vector<32x96xf32>
    %cst = arith.constant dense<0.000000e+00> : vector<256x96xf32>
    %3 = tpu.matmul %1, %2, %cst {dimension_numbers = #tpu.dot_dimension_numbers<[1], [0], [0], [1], [0, 0, 1, 1], [], []>} : vector<256x32xf32>, vector<32x96xf32>, vector<256x96xf32> -> vector<256x96xf32>
    %c0_4 = arith.constant 0 : index
    %c0_5 = arith.constant 0 : index
    %4 = vector.load %arg3[%c0_4, %c0_5] : memref<1x96xf32, #tpu.memory_space<vmem>>, vector<1x96xf32>
    %5 = vector.broadcast %4 : vector<1x96xf32> to vector<256x96xf32>
    %6 = arith.addf %3, %5 : vector<256x96xf32>
    %7 = vector.shape_cast %6 : vector<256x96xf32> to vector<4x64x96xf32>
    %cst_6 = arith.constant 0.000000e+00 : f32
    %8 = vector.broadcast %cst_6 : f32 to vector<256x32xf32>
    %9 = vector.extract_strided_slice %7 {offsets = [0, 0, 0], sizes = [4, 64, 8], strides = [1, 1, 1]} : vector<4x64x96xf32> to vector<4x64x8xf32>
    %10 = vector.extract_strided_slice %7 {offsets = [0, 0, 32], sizes = [4, 64, 8], strides = [1, 1, 1]} : vector<4x64x96xf32> to vector<4x64x8xf32>
    %11 = vector.extract_strided_slice %7 {offsets = [0, 0, 64], sizes = [4, 64, 8], strides = [1, 1, 1]} : vector<4x64x96xf32> to vector<4x64x8xf32>
    "tpu.trace_start"() <{level = 10 : i32, message = "wqd,wkd->wqk"}> : () -> ()
    %cst_7 = arith.constant dense<0.000000e+00> : vector<4x64x64xf32>
    %12 = tpu.matmul %9, %10, %cst_7 {dimension_numbers = #tpu.dot_dimension_numbers<[2], [2], [1], [1], [0, 0, 0, 1, 1, 1], [0], [0]>} : vector<4x64x8xf32>, vector<4x64x8xf32>, vector<4x64x64xf32> -> vector<4x64x64xf32>
    "tpu.trace_stop"() : () -> ()
    %c0_8 = arith.constant 0 : index
    %c0_9 = arith.constant 0 : index
    %c0_10 = arith.constant 0 : index
    %13 = vector.load %arg4[%c0_8, %c0_9, %c0_10] : memref<4x64x64xf32, #tpu.memory_space<vmem>>, vector<1x64x64xf32>
    %14 = vector.shape_cast %13 : vector<1x64x64xf32> to vector<64x64xf32>
    %15 = vector.shape_cast %14 : vector<64x64xf32> to vector<1x64x64xf32>
    %16 = vector.broadcast %15 : vector<1x64x64xf32> to vector<4x64x64xf32>
    %17 = arith.addf %12, %16 : vector<4x64x64xf32>
    %cst_11 = arith.constant dense<0xFF800000> : vector<4x64xf32>
    %18 = vector.multi_reduction <maximumf>, %17, %cst_11 [2] : vector<4x64x64xf32> to vector<4x64xf32>
    %19 = vector.shape_cast %18 : vector<4x64xf32> to vector<4x64x1xf32>
    %20 = vector.broadcast %19 : vector<4x64x1xf32> to vector<4x64x64xf32>
    %21 = arith.subf %17, %20 : vector<4x64x64xf32>
    %22 = math.exp %21 : vector<4x64x64xf32>
    %cst_12 = arith.constant dense<0.000000e+00> : vector<4x64xf32>
    %23 = vector.multi_reduction <add>, %22, %cst_12 [2] : vector<4x64x64xf32> to vector<4x64xf32>
    %24 = vector.shape_cast %23 : vector<4x64xf32> to vector<4x64x1xf32>
    %25 = tpu.reciprocal %24 : vector<4x64x1xf32> -> vector<4x64x1xf32>
    %26 = vector.broadcast %25 : vector<4x64x1xf32> to vector<4x64x64xf32>
    %27 = arith.mulf %22, %26 : vector<4x64x64xf32>
    "tpu.trace_start"() <{level = 10 : i32, message = "wqk,wkd->wqd"}> : () -> ()
    %cst_13 = arith.constant dense<0.000000e+00> : vector<4x64x8xf32>
    %28 = tpu.matmul %27, %11, %cst_13 {dimension_numbers = #tpu.dot_dimension_numbers<[2], [1], [1], [2], [0, 0, 0, 1, 1, 2], [0], [0]>} : vector<4x64x64xf32>, vector<4x64x8xf32>, vector<4x64x8xf32> -> vector<4x64x8xf32>
    "tpu.trace_stop"() : () -> ()
    %c0_14 = arith.constant 0 : index
    %c0_15 = arith.constant 0 : index
    %29 = vector.load %arg5[%c0_14, %c0_15] : memref<32x32xf32, #tpu.memory_space<vmem>>, vector<8x32xf32>
    %30 = vector.shape_cast %28 : vector<4x64x8xf32> to vector<256x8xf32>
    %cst_16 = arith.constant dense<0.000000e+00> : vector<256x32xf32>
    %31 = tpu.matmul %30, %29, %cst_16 {dimension_numbers = #tpu.dot_dimension_numbers<[1], [0], [0], [1], [0, 0, 1, 1], [], []>} : vector<256x8xf32>, vector<8x32xf32>, vector<256x32xf32> -> vector<256x32xf32>
    %32 = arith.addf %8, %31 : vector<256x32xf32>
    %33 = vector.extract_strided_slice %7 {offsets = [0, 0, 8], sizes = [4, 64, 8], strides = [1, 1, 1]} : vector<4x64x96xf32> to vector<4x64x8xf32>
    %34 = vector.extract_strided_slice %7 {offsets = [0, 0, 40], sizes = [4, 64, 8], strides = [1, 1, 1]} : vector<4x64x96xf32> to vector<4x64x8xf32>
    %35 = vector.extract_strided_slice %7 {offsets = [0, 0, 72], sizes = [4, 64, 8], strides = [1, 1, 1]} : vector<4x64x96xf32> to vector<4x64x8xf32>
    "tpu.trace_start"() <{level = 10 : i32, message = "wqd,wkd->wqk"}> : () -> ()
    %cst_17 = arith.constant dense<0.000000e+00> : vector<4x64x64xf32>
    %36 = tpu.matmul %33, %34, %cst_17 {dimension_numbers = #tpu.dot_dimension_numbers<[2], [2], [1], [1], [0, 0, 0, 1, 1, 1], [0], [0]>} : vector<4x64x8xf32>, vector<4x64x8xf32>, vector<4x64x64xf32> -> vector<4x64x64xf32>
    "tpu.trace_stop"() : () -> ()
    %c1 = arith.constant 1 : index
    %c0_18 = arith.constant 0 : index
    %c0_19 = arith.constant 0 : index
    %37 = vector.load %arg4[%c1, %c0_18, %c0_19] : memref<4x64x64xf32, #tpu.memory_space<vmem>>, vector<1x64x64xf32>
    %38 = vector.shape_cast %37 : vector<1x64x64xf32> to vector<64x64xf32>
    %39 = vector.shape_cast %38 : vector<64x64xf32> to vector<1x64x64xf32>
    %40 = vector.broadcast %39 : vector<1x64x64xf32> to vector<4x64x64xf32>
    %41 = arith.addf %36, %40 : vector<4x64x64xf32>
    %cst_20 = arith.constant dense<0xFF800000> : vector<4x64xf32>
    %42 = vector.multi_reduction <maximumf>, %41, %cst_20 [2] : vector<4x64x64xf32> to vector<4x64xf32>
    %43 = vector.shape_cast %42 : vector<4x64xf32> to vector<4x64x1xf32>
    %44 = vector.broadcast %43 : vector<4x64x1xf32> to vector<4x64x64xf32>
    %45 = arith.subf %41, %44 : vector<4x64x64xf32>
    %46 = math.exp %45 : vector<4x64x64xf32>
    %cst_21 = arith.constant dense<0.000000e+00> : vector<4x64xf32>
    %47 = vector.multi_reduction <add>, %46, %cst_21 [2] : vector<4x64x64xf32> to vector<4x64xf32>
    %48 = vector.shape_cast %47 : vector<4x64xf32> to vector<4x64x1xf32>
    %49 = tpu.reciprocal %48 : vector<4x64x1xf32> -> vector<4x64x1xf32>
    %50 = vector.broadcast %49 : vector<4x64x1xf32> to vector<4x64x64xf32>
    %51 = arith.mulf %46, %50 : vector<4x64x64xf32>
    "tpu.trace_start"() <{level = 10 : i32, message = "wqk,wkd->wqd"}> : () -> ()
    %cst_22 = arith.constant dense<0.000000e+00> : vector<4x64x8xf32>
    %52 = tpu.matmul %51, %35, %cst_22 {dimension_numbers = #tpu.dot_dimension_numbers<[2], [1], [1], [2], [0, 0, 0, 1, 1, 2], [0], [0]>} : vector<4x64x64xf32>, vector<4x64x8xf32>, vector<4x64x8xf32> -> vector<4x64x8xf32>
    "tpu.trace_stop"() : () -> ()
    %c8 = arith.constant 8 : index
    %c0_23 = arith.constant 0 : index
    %53 = vector.load %arg5[%c8, %c0_23] : memref<32x32xf32, #tpu.memory_space<vmem>>, vector<8x32xf32>
    %54 = vector.shape_cast %52 : vector<4x64x8xf32> to vector<256x8xf32>
    %cst_24 = arith.constant dense<0.000000e+00> : vector<256x32xf32>
    %55 = tpu.matmul %54, %53, %cst_24 {dimension_numbers = #tpu.dot_dimension_numbers<[1], [0], [0], [1], [0, 0, 1, 1], [], []>} : vector<256x8xf32>, vector<8x32xf32>, vector<256x32xf32> -> vector<256x32xf32>
    %56 = arith.addf %32, %55 : vector<256x32xf32>
    %57 = vector.extract_strided_slice %7 {offsets = [0, 0, 16], sizes = [4, 64, 8], strides = [1, 1, 1]} : vector<4x64x96xf32> to vector<4x64x8xf32>
    %58 = vector.extract_strided_slice %7 {offsets = [0, 0, 48], sizes = [4, 64, 8], strides = [1, 1, 1]} : vector<4x64x96xf32> to vector<4x64x8xf32>
    %59 = vector.extract_strided_slice %7 {offsets = [0, 0, 80], sizes = [4, 64, 8], strides = [1, 1, 1]} : vector<4x64x96xf32> to vector<4x64x8xf32>
    "tpu.trace_start"() <{level = 10 : i32, message = "wqd,wkd->wqk"}> : () -> ()
    %cst_25 = arith.constant dense<0.000000e+00> : vector<4x64x64xf32>
    %60 = tpu.matmul %57, %58, %cst_25 {dimension_numbers = #tpu.dot_dimension_numbers<[2], [2], [1], [1], [0, 0, 0, 1, 1, 1], [0], [0]>} : vector<4x64x8xf32>, vector<4x64x8xf32>, vector<4x64x64xf32> -> vector<4x64x64xf32>
    "tpu.trace_stop"() : () -> ()
    %c2 = arith.constant 2 : index
    %c0_26 = arith.constant 0 : index
    %c0_27 = arith.constant 0 : index
    %61 = vector.load %arg4[%c2, %c0_26, %c0_27] : memref<4x64x64xf32, #tpu.memory_space<vmem>>, vector<1x64x64xf32>
    %62 = vector.shape_cast %61 : vector<1x64x64xf32> to vector<64x64xf32>
    %63 = vector.shape_cast %62 : vector<64x64xf32> to vector<1x64x64xf32>
    %64 = vector.broadcast %63 : vector<1x64x64xf32> to vector<4x64x64xf32>
    %65 = arith.addf %60, %64 : vector<4x64x64xf32>
    %cst_28 = arith.constant dense<0xFF800000> : vector<4x64xf32>
    %66 = vector.multi_reduction <maximumf>, %65, %cst_28 [2] : vector<4x64x64xf32> to vector<4x64xf32>
    %67 = vector.shape_cast %66 : vector<4x64xf32> to vector<4x64x1xf32>
    %68 = vector.broadcast %67 : vector<4x64x1xf32> to vector<4x64x64xf32>
    %69 = arith.subf %65, %68 : vector<4x64x64xf32>
    %70 = math.exp %69 : vector<4x64x64xf32>
    %cst_29 = arith.constant dense<0.000000e+00> : vector<4x64xf32>
    %71 = vector.multi_reduction <add>, %70, %cst_29 [2] : vector<4x64x64xf32> to vector<4x64xf32>
    %72 = vector.shape_cast %71 : vector<4x64xf32> to vector<4x64x1xf32>
    %73 = tpu.reciprocal %72 : vector<4x64x1xf32> -> vector<4x64x1xf32>
    %74 = vector.broadcast %73 : vector<4x64x1xf32> to vector<4x64x64xf32>
    %75 = arith.mulf %70, %74 : vector<4x64x64xf32>
    "tpu.trace_start"() <{level = 10 : i32, message = "wqk,wkd->wqd"}> : () -> ()
    %cst_30 = arith.constant dense<0.000000e+00> : vector<4x64x8xf32>
    %76 = tpu.matmul %75, %59, %cst_30 {dimension_numbers = #tpu.dot_dimension_numbers<[2], [1], [1], [2], [0, 0, 0, 1, 1, 2], [0], [0]>} : vector<4x64x64xf32>, vector<4x64x8xf32>, vector<4x64x8xf32> -> vector<4x64x8xf32>
    "tpu.trace_stop"() : () -> ()
    %c16 = arith.constant 16 : index
    %c0_31 = arith.constant 0 : index
    %77 = vector.load %arg5[%c16, %c0_31] : memref<32x32xf32, #tpu.memory_space<vmem>>, vector<8x32xf32>
    %78 = vector.shape_cast %76 : vector<4x64x8xf32> to vector<256x8xf32>
    %cst_32 = arith.constant dense<0.000000e+00> : vector<256x32xf32>
    %79 = tpu.matmul %78, %77, %cst_32 {dimension_numbers = #tpu.dot_dimension_numbers<[1], [0], [0], [1], [0, 0, 1, 1], [], []>} : vector<256x8xf32>, vector<8x32xf32>, vector<256x32xf32> -> vector<256x32xf32>
    %80 = arith.addf %56, %79 : vector<256x32xf32>
    %81 = vector.extract_strided_slice %7 {offsets = [0, 0, 24], sizes = [4, 64, 8], strides = [1, 1, 1]} : vector<4x64x96xf32> to vector<4x64x8xf32>
    %82 = vector.extract_strided_slice %7 {offsets = [0, 0, 56], sizes = [4, 64, 8], strides = [1, 1, 1]} : vector<4x64x96xf32> to vector<4x64x8xf32>
    %83 = vector.extract_strided_slice %7 {offsets = [0, 0, 88], sizes = [4, 64, 8], strides = [1, 1, 1]} : vector<4x64x96xf32> to vector<4x64x8xf32>
    "tpu.trace_start"() <{level = 10 : i32, message = "wqd,wkd->wqk"}> : () -> ()
    %cst_33 = arith.constant dense<0.000000e+00> : vector<4x64x64xf32>
    %84 = tpu.matmul %81, %82, %cst_33 {dimension_numbers = #tpu.dot_dimension_numbers<[2], [2], [1], [1], [0, 0, 0, 1, 1, 1], [0], [0]>} : vector<4x64x8xf32>, vector<4x64x8xf32>, vector<4x64x64xf32> -> vector<4x64x64xf32>
    "tpu.trace_stop"() : () -> ()
    %c3 = arith.constant 3 : index
    %c0_34 = arith.constant 0 : index
    %c0_35 = arith.constant 0 : index
    %85 = vector.load %arg4[%c3, %c0_34, %c0_35] : memref<4x64x64xf32, #tpu.memory_space<vmem>>, vector<1x64x64xf32>
    %86 = vector.shape_cast %85 : vector<1x64x64xf32> to vector<64x64xf32>
    %87 = vector.shape_cast %86 : vector<64x64xf32> to vector<1x64x64xf32>
    %88 = vector.broadcast %87 : vector<1x64x64xf32> to vector<4x64x64xf32>
    %89 = arith.addf %84, %88 : vector<4x64x64xf32>
    %cst_36 = arith.constant dense<0xFF800000> : vector<4x64xf32>
    %90 = vector.multi_reduction <maximumf>, %89, %cst_36 [2] : vector<4x64x64xf32> to vector<4x64xf32>
    %91 = vector.shape_cast %90 : vector<4x64xf32> to vector<4x64x1xf32>
    %92 = vector.broadcast %91 : vector<4x64x1xf32> to vector<4x64x64xf32>
    %93 = arith.subf %89, %92 : vector<4x64x64xf32>
    %94 = math.exp %93 : vector<4x64x64xf32>
    %cst_37 = arith.constant dense<0.000000e+00> : vector<4x64xf32>
    %95 = vector.multi_reduction <add>, %94, %cst_37 [2] : vector<4x64x64xf32> to vector<4x64xf32>
    %96 = vector.shape_cast %95 : vector<4x64xf32> to vector<4x64x1xf32>
    %97 = tpu.reciprocal %96 : vector<4x64x1xf32> -> vector<4x64x1xf32>
    %98 = vector.broadcast %97 : vector<4x64x1xf32> to vector<4x64x64xf32>
    %99 = arith.mulf %94, %98 : vector<4x64x64xf32>
    "tpu.trace_start"() <{level = 10 : i32, message = "wqk,wkd->wqd"}> : () -> ()
    %cst_38 = arith.constant dense<0.000000e+00> : vector<4x64x8xf32>
    %100 = tpu.matmul %99, %83, %cst_38 {dimension_numbers = #tpu.dot_dimension_numbers<[2], [1], [1], [2], [0, 0, 0, 1, 1, 2], [0], [0]>} : vector<4x64x64xf32>, vector<4x64x8xf32>, vector<4x64x8xf32> -> vector<4x64x8xf32>
    "tpu.trace_stop"() : () -> ()
    %c24 = arith.constant 24 : index
    %c0_39 = arith.constant 0 : index
    %101 = vector.load %arg5[%c24, %c0_39] : memref<32x32xf32, #tpu.memory_space<vmem>>, vector<8x32xf32>
    %102 = vector.shape_cast %100 : vector<4x64x8xf32> to vector<256x8xf32>
    %cst_40 = arith.constant dense<0.000000e+00> : vector<256x32xf32>
    %103 = tpu.matmul %102, %101, %cst_40 {dimension_numbers = #tpu.dot_dimension_numbers<[1], [0], [0], [1], [0, 0, 1, 1], [], []>} : vector<256x8xf32>, vector<8x32xf32>, vector<256x32xf32> -> vector<256x32xf32>
    %104 = arith.addf %80, %103 : vector<256x32xf32>
    %c0_41 = arith.constant 0 : index
    %c0_42 = arith.constant 0 : index
    %105 = vector.load %arg6[%c0_41, %c0_42] : memref<1x32xf32, #tpu.memory_space<vmem>>, vector<1x32xf32>
    %106 = vector.broadcast %105 : vector<1x32xf32> to vector<256x32xf32>
    %107 = arith.addf %104, %106 : vector<256x32xf32>
    %108 = vector.shape_cast %107 : vector<256x32xf32> to vector<4x64x32xf32>
    %c0_43 = arith.constant 0 : index
    %c0_44 = arith.constant 0 : index
    %c0_45 = arith.constant 0 : index
    %109 = vector.load %arg7[%c0_43, %c0_44, %c0_45] : memref<4x64x32xf32, #tpu.memory_space<vmem>>, vector<4x64x32xf32>
    tpu.vector_store %arg7[%c0_43, %c0_44, %c0_45], %108 {strides = array<i32>} : memref<4x64x32xf32, #tpu.memory_space<vmem>>, vector<4x64x32xf32>,
    return
  }
  func.func @transform_0(%arg0: i32) -> (i32, i32, i32) {
    %c0_i32 = arith.constant 0 : i32
    %c0_i32_0 = arith.constant 0 : i32
    %c0_i32_1 = arith.constant 0 : i32
    return %arg0, %c0_i32, %c0_i32_0 : i32, i32, i32
  }
  func.func @transform_1(%arg0: i32) -> (i32, i32) {
    %c0_i32 = arith.constant 0 : i32
    %c0_i32_0 = arith.constant 0 : i32
    %c0_i32_1 = arith.constant 0 : i32
    return %c0_i32, %c0_i32_0 : i32, i32
  }
  func.func @transform_2(%arg0: i32) -> (i32, i32) {
    %c0_i32 = arith.constant 0 : i32
    %c0_i32_0 = arith.constant 0 : i32
    %c0_i32_1 = arith.constant 0 : i32
    return %c0_i32, %c0_i32_0 : i32, i32
  }
  func.func @transform_3(%arg0: i32) -> (i32, i32, i32) {
    %c0_i32 = arith.constant 0 : i32
    %c0_i32_0 = arith.constant 0 : i32
    %c0_i32_1 = arith.constant 0 : i32
    %c0_i32_2 = arith.constant 0 : i32
    return %c0_i32, %c0_i32_0, %c0_i32_1 : i32, i32, i32
  }
  func.func @transform_4(%arg0: i32) -> (i32, i32) {
    %c0_i32 = arith.constant 0 : i32
    %c0_i32_0 = arith.constant 0 : i32
    %c0_i32_1 = arith.constant 0 : i32
    return %c0_i32, %c0_i32_0 : i32, i32
  }
  func.func @transform_5(%arg0: i32) -> (i32, i32) {
    %c0_i32 = arith.constant 0 : i32
    %c0_i32_0 = arith.constant 0 : i32
    %c0_i32_1 = arith.constant 0 : i32
    return %c0_i32, %c0_i32_0 : i32, i32
  }
  func.func @transform_6(%arg0: i32) -> (i32, i32, i32) {
    %c0_i32 = arith.constant 0 : i32
    %c0_i32_0 = arith.constant 0 : i32
    %c0_i32_1 = arith.constant 0 : i32
    return %arg0, %c0_i32, %c0_i32_0 : i32, i32, i32
  }
}

</mosaic_0001>

<llo_original>
// kernel: _lambda_.1
$region0: #{_lambda_.1}
  #allocation0 [shape = 'u32[]', space=smem, size = 0x4, offset = 0x4, fixed_abs, tag = 'smem constant byte address 0x4 - core index']
  #allocation1 [shape = 'u32[144,128]{1,0:T(1,128)}', space=vmem, size = 0x12000, scoped, tag = 'internal scratch']
  %s0 = inlined_call_operand.vmem [shape: f32[8,64,32], index: 0, kind: input, shape index: {}]
  %s1 = inlined_call_operand.vmem [shape: f32[32,96], index: 1, kind: input, shape index: {}]
  %s2 = inlined_call_operand.vmem [shape: f32[1,96], index: 2, kind: input, shape index: {}]
  %s3 = inlined_call_operand.vmem [shape: f32[4,64,64], index: 3, kind: input, shape index: {}]
  %s4 = inlined_call_operand.vmem [shape: f32[32,32], index: 4, kind: input, shape index: {}]
  %s5 = inlined_call_operand.vmem [shape: f32[1,32], index: 5, kind: input, shape index: {}]
  %s6 = inlined_call_operand.vmem [shape: f32[8,64,32], index: 6, kind: output, shape index: {}]
  %s7 = sld [smem:[#allocation0]]
  $region57: #{_lambda_.1} parent=0
    _
  %s9 = ssub.s32 1, %s7
  %s10 = scalar_select 0, %s9, %s7
  loop: start=0, step=1, limit=4
  $region2: #{_lambda_.1} parent=0 // loop_pre_header
    _
  $region3: #{_lambda_.1} parent=0 // loop_header
    %s12 = sphi 0, %s16
    %p13 = scmp.ge.s32.totalorder %s12, 4
    %s22 = sphi 0, %s24
    %s25 = sphi 0, %s22
    %s26 = sphi 0, %s25
    %s42 = sphi 0, %s26
    %s46 = sphi 0, %s46
    %s48 = sphi 0, %s46
    %s49 = sphi 0, %s48
    %s63 = sphi 0, %s49
    %s67 = sphi 0, %s67
    %s69 = sphi 0, %s67
    %s70 = sphi 0, %s69
    %s84 = sphi 0, %s70
    %s88 = sphi 0, %s88
    %s90 = sphi 0, %s88
    %s91 = sphi 0, %s90
    %s105 = sphi 0, %s91
    %s109 = sphi 0, %s109
    %s111 = sphi 0, %s109
    %s112 = sphi 0, %s111
    %s126 = sphi 0, %s112
    %s130 = sphi 0, %s130
    %s132 = sphi 0, %s130
    %s133 = sphi 0, %s132
    %s147 = sphi 0, %s133
    %s153 = sphi 0, %s155
    %s156 = sphi 0, %s153
    %s157 = sphi 0, %s156
    %s173 = sphi 0, %s157
  $region4: #{_lambda_.1} parent=0 // loop_header_branch
    %15 = sbr.rel (%p13) target = $region8
  $region5: #{_lambda_.1} parent=0 // loop_body
    %s17 = ssub.s32 %s12, 1
    %s18 = ssub.s32 %s12, 2
    %s19 = sadd.s32 %s12, 1
    %s20 = ssub.s32 %s12, %s19
    %p21 = scmp.eq.s32.totalorder %s20, 0
    %s23 = sadd.s32 %s22, 1
    %s24 = scalar_select %p21, %s22, %s23
    %p27 = pneg %p21
    %p28 = scmp.eq.s32.totalorder %s12, 1
    %p29 = por %p27, %p28
    %p30 = scmp.ne.s32.totalorder %s22, %s25
    %p31 = scmp.eq.s32.totalorder %s12, 0
    %p32 = por %p30, %p31
    %p33 = scmp.ne.s32.totalorder %s22, %s25
    %p34 = scmp.eq.s32.totalorder %s17, 1
    %p35 = por %p33, %p34
    %p36 = scmp.ne.s32.totalorder %s25, %s26
    %p37 = scmp.eq.s32.totalorder %s17, 0
    %p38 = por %p36, %p37
    %p39 = scmp.ne.s32.totalorder %s25, %s26
    %p40 = scmp.eq.s32.totalorder %s18, 1
    %p41 = por %p39, %p40
    %p43 = scmp.ne.s32.totalorder %s26, %s42
    %p44 = scmp.eq.s32.totalorder %s18, 0
    %p45 = por %p43, %p44
    %s47 = sadd.s32 %s46, 1
    %p50 = scmp.eq.s32.totalorder %s12, 1
    %p51 = scmp.ne.s32.totalorder %s46, %s48
    %p52 = scmp.eq.s32.totalorder %s12, 0
    %p53 = por %p51, %p52
    %p54 = scmp.ne.s32.totalorder %s46, %s48
    %p55 = scmp.eq.s32.totalorder %s17, 1
    %p56 = por %p54, %p55
    %p57 = scmp.ne.s32.totalorder %s48, %s49
    %p58 = scmp.eq.s32.totalorder %s17, 0
    %p59 = por %p57, %p58
    %p60 = scmp.ne.s32.totalorder %s48, %s49
    %p61 = scmp.eq.s32.totalorder %s18, 1
    %p62 = por %p60, %p61
    %p64 = scmp.ne.s32.totalorder %s49, %s63
    %p65 = scmp.eq.s32.totalorder %s18, 0
    %p66 = por %p64, %p65
    %s68 = sadd.s32 %s67, 1
    %p71 = scmp.eq.s32.totalorder %s12, 1
    %p72 = scmp.ne.s32.totalorder %s67, %s69
    %p73 = scmp.eq.s32.totalorder %s12, 0
    %p74 = por %p72, %p73
    %p75 = scmp.ne.s32.totalorder %s67, %s69
    %p76 = scmp.eq.s32.totalorder %s17, 1
    %p77 = por %p75, %p76
    %p78 = scmp.ne.s32.totalorder %s69, %s70
    %p79 = scmp.eq.s32.totalorder %s17, 0
    %p80 = por %p78, %p79
    %p81 = scmp.ne.s32.totalorder %s69, %s70
    %p82 = scmp.eq.s32.totalorder %s18, 1
    %p83 = por %p81, %p82
    %p85 = scmp.ne.s32.totalorder %s70, %s84
    %p86 = scmp.eq.s32.totalorder %s18, 0
    %p87 = por %p85, %p86
    %s89 = sadd.s32 %s88, 1
    %p92 = scmp.eq.s32.totalorder %s12, 1
    %p93 = scmp.ne.s32.totalorder %s88, %s90
    %p94 = scmp.eq.s32.totalorder %s12, 0
    %p95 = por %p93, %p94
    %p96 = scmp.ne.s32.totalorder %s88, %s90
    %p97 = scmp.eq.s32.totalorder %s17, 1
    %p98 = por %p96, %p97
    %p99 = scmp.ne.s32.totalorder %s90, %s91
    %p100 = scmp.eq.s32.totalorder %s17, 0
    %p101 = por %p99, %p100
    %p102 = scmp.ne.s32.totalorder %s90, %s91
    %p103 = scmp.eq.s32.totalorder %s18, 1
    %p104 = por %p102, %p103
    %p106 = scmp.ne.s32.totalorder %s91, %s105
    %p107 = scmp.eq.s32.totalorder %s18, 0
    %p108 = por %p106, %p107
    %s110 = sadd.s32 %s109, 1
    %p113 = scmp.eq.s32.totalorder %s12, 1
    %p114 = scmp.ne.s32.totalorder %s109, %s111
    %p115 = scmp.eq.s32.totalorder %s12, 0
    %p116 = por %p114, %p115
    %p117 = scmp.ne.s32.totalorder %s109, %s111
    %p118 = scmp.eq.s32.totalorder %s17, 1
    %p119 = por %p117, %p118
    %p120 = scmp.ne.s32.totalorder %s111, %s112
    %p121 = scmp.eq.s32.totalorder %s17, 0
    %p122 = por %p120, %p121
    %p123 = scmp.ne.s32.totalorder %s111, %s112
    %p124 = scmp.eq.s32.totalorder %s18, 1
    %p125 = por %p123, %p124
    %p127 = scmp.ne.s32.totalorder %s112, %s126
    %p128 = scmp.eq.s32.totalorder %s18, 0
    %p129 = por %p127, %p128
    %s131 = sadd.s32 %s130, 1
    %p134 = scmp.eq.s32.totalorder %s12, 1
    %p135 = scmp.ne.s32.totalorder %s130, %s132
    %p136 = scmp.eq.s32.totalorder %s12, 0
    %p137 = por %p135, %p136
    %p138 = scmp.ne.s32.totalorder %s130, %s132
    %p139 = scmp.eq.s32.totalorder %s17, 1
    %p140 = por %p138, %p139
    %p141 = scmp.ne.s32.totalorder %s132, %s133
    %p142 = scmp.eq.s32.totalorder %s17, 0
    %p143 = por %p141, %p142
    %p144 = scmp.ne.s32.totalorder %s132, %s133
    %p145 = scmp.eq.s32.totalorder %s18, 1
    %p146 = por %p144, %p145
    %p148 = scmp.ne.s32.totalorder %s133, %s147
    %p149 = scmp.eq.s32.totalorder %s18, 0
    %p150 = por %p148, %p149
    %s151 = ssub.s32 %s12, %s19
    %p152 = scmp.eq.s32.totalorder %s151, 0
    %s154 = sadd.s32 %s153, 1
    %s155 = scalar_select %p152, %s153, %s154
    %p158 = pneg %p152
    %p159 = scmp.eq.s32.totalorder %s12, 1
    %p160 = por %p158, %p159
    %p161 = scmp.ne.s32.totalorder %s153, %s156
    %p162 = scmp.eq.s32.totalorder %s12, 0
    %p163 = por %p161, %p162
    %p164 = scmp.ne.s32.totalorder %s153, %s156
    %p165 = scmp.eq.s32.totalorder %s17, 1
    %p166 = por %p164, %p165
    %p167 = scmp.ne.s32.totalorder %s156, %s157
    %p168 = scmp.eq.s32.totalorder %s17, 0
    %p169 = por %p167, %p168
    %p170 = scmp.ne.s32.totalorder %s156, %s157
    %p171 = scmp.eq.s32.totalorder %s18, 1
    %p172 = por %p170, %p171
    %p174 = scmp.ne.s32.totalorder %s157, %s173
    %p175 = scmp.eq.s32.totalorder %s18, 0
    %p176 = por %p174, %p175
    %p177 = scmp.le.s32.totalorder 1, %s12
    %p178 = scmp.lt.s32.totalorder %s12, 3
    %p179 = pnand %p177, %p178
    %p180 = pneg %p179
    // Predicated region
    $region9: #{_lambda_.1} parent=5 // pred_check
      _
    $region10: #{_lambda_.1} parent=5 // pred_check_branch
      %182 = sbr.rel (%p179) target = $region12
    $region11: #{_lambda_.1} parent=5 // pred_region
      %s183 = ssub.s32 %s12, 1
      // Predicated region
      $region13: #{_lambda_.1} parent=11 // pred_check
        %p184 = pneg %p59
      $region14: #{_lambda_.1} parent=11 // pred_check_branch
        %186 = sbr.rel (%p184) target = $region16
      $region15: #{_lambda_.1} parent=11 // pred_region
        _
      $region16: #{_lambda_.1} parent=11 // pred_fallthru
        _
      // Predicated region
      $region17: #{_lambda_.1} parent=11 // pred_check
        %p187 = pneg %p80
      $region18: #{_lambda_.1} parent=11 // pred_check_branch
        %189 = sbr.rel (%p187) target = $region20
      $region19: #{_lambda_.1} parent=11 // pred_region
        _
      $region20: #{_lambda_.1} parent=11 // pred_fallthru
        _
      // Predicated region
      $region21: #{_lambda_.1} parent=11 // pred_check
        %p190 = pneg %p101
      $region22: #{_lambda_.1} parent=11 // pred_check_branch
        %192 = sbr.rel (%p190) target = $region24
      $region23: #{_lambda_.1} parent=11 // pred_region
        _
      $region24: #{_lambda_.1} parent=11 // pred_fallthru
        _
      // Predicated region
      $region25: #{_lambda_.1} parent=11 // pred_check
        %p193 = pneg %p122
      $region26: #{_lambda_.1} parent=11 // pred_check_branch
        %195 = sbr.rel (%p193) target = $region28
      $region27: #{_lambda_.1} parent=11 // pred_region
        _
      $region28: #{_lambda_.1} parent=11 // pred_fallthru
        _
      // Predicated region
      $region29: #{_lambda_.1} parent=11 // pred_check
        %p196 = pneg %p143
      $region30: #{_lambda_.1} parent=11 // pred_check_branch
        %198 = sbr.rel (%p196) target = $region32
      $region31: #{_lambda_.1} parent=11 // pred_region
        _
      $region32: #{_lambda_.1} parent=11 // pred_fallthru
        _
    $region12: #{_lambda_.1} parent=5 // pred_fallthru
      _
    %p199 = scmp.lt.s32.totalorder %s12, 2
    // Predicated region
    $region33: #{_lambda_.1} parent=5 // pred_check
      %p200 = pneg %p199
    $region34: #{_lambda_.1} parent=5 // pred_check_branch
      %202 = sbr.rel (%p200) target = $region36
    $region35: #{_lambda_.1} parent=5 // pred_region
      // Predicated region
      $region37: #{_lambda_.1} parent=35 // pred_check
        %p203 = pneg %p32
      $region38: #{_lambda_.1} parent=35 // pred_check_branch
        %205 = sbr.rel (%p203) target = $region40
      $region39: #{_lambda_.1} parent=35 // pred_region
        %s206 = smul.u32 4, %s12
        %p207 = scmp.lt.s32.totalorder %s206, 7
        %s208 = scalar_select %p207, %s206, 7
        %s209 = smul.addr %s208, 8
        %s210 = smul.addr %s209, 8
        %s211 = scalar_lea.vmem %s0, %s210
        %s212 = smul.u32 4, %s12
      $region40: #{_lambda_.1} parent=35 // pred_fallthru
        _
    $region36: #{_lambda_.1} parent=5 // pred_fallthru
      _
    %p213 = scmp.le.s32.totalorder 1, %s12
    %p214 = scmp.lt.s32.totalorder %s12, 3
    %p215 = pnand %p213, %p214
    %p216 = pneg %p215
    // Predicated region
    $region41: #{_lambda_.1} parent=5 // pred_check
      _
    $region42: #{_lambda_.1} parent=5 // pred_check_branch
      %218 = sbr.rel (%p215) target = $region44
    $region43: #{_lambda_.1} parent=5 // pred_region
      %s219 = ssub.s32 %s12, 1
      %s220 = smul.u32 4, %s17
      %p221 = scmp.lt.s32.totalorder %s220, 7
      %s222 = scalar_select %p221, %s220, 7
      %s223 = smul.addr %s222, 8
      %s224 = smul.addr %s223, 8
      %s225 = scalar_lea.vmem %s0, %s224
      %p226 = pneg %p38
      %p227 = pneg %p35
      %p228 = pneg %p59
      %p229 = pneg %p56
      %p230 = pneg %p80
      %p231 = pneg %p77
      %p232 = pneg %p101
      %p233 = pneg %p98
      %p234 = pneg %p122
      %p235 = pneg %p119
      %p236 = pneg %p143
      %p237 = pneg %p140
      %p238 = pneg %p169
      %p239 = pneg %p166
      %s240 = smul.u32 4, %s17
      %p241 = scmp.lt.s32.totalorder %s240, 7
      %s242 = scalar_select %p241, %s240, 7
      %s243 = smul.addr %s242, 8
      %s244 = smul.addr %s243, 8
      %s245 = scalar_lea.vmem %s6, %s244
      %s246 = smul.u32 4, %s17
      %p247 = scmp.lt.s32.totalorder %s246, 7
      %s248 = scalar_select %p247, %s246, 7
      %s249 = smul.addr %s248, 8
      %s250 = smul.addr %s249, 8
      %s251 = scalar_lea.vmem %s0, %s250
      %s252 = smul.u32 4, %s17
      %s253 = smul.u32 4, %s17
      %p254 = scmp.lt.s32.totalorder %s253, 7
      %s255 = scalar_select %p254, %s253, 7
      %s256 = smul.addr %s255, 8
      %s257 = smul.addr %s256, 8
      %s258 = scalar_lea.vmem %s6, %s257
      %s259 = smul.u32 4, %s17
      %v260 = vld [vmem:[%s251] sm:$0xff]
      %v261 = vld [vmem:[%s251 + $0x8] sm:$0xff]
      %v262 = vld [vmem:[%s251 + $0x10] sm:$0xff]
      %v263 = vld [vmem:[%s251 + $0x18] sm:$0xff]
      %v264 = vld [vmem:[%s251 + $0x20] sm:$0xff]
      %v265 = vld [vmem:[%s251 + $0x28] sm:$0xff]
      %v266 = vld [vmem:[%s251 + $0x30] sm:$0xff]
      %v267 = vld [vmem:[%s251 + $0x38] sm:$0xff]
      %v268 = vld [vmem:[%s251 + $0x40] sm:$0xff]
      %v269 = vld [vmem:[%s251 + $0x48] sm:$0xff]
      %v270 = vld [vmem:[%s251 + $0x50] sm:$0xff]
      %v271 = vld [vmem:[%s251 + $0x58] sm:$0xff]
      %v272 = vld [vmem:[%s251 + $0x60] sm:$0xff]
      %v273 = vld [vmem:[%s251 + $0x68] sm:$0xff]
      %v274 = vld [vmem:[%s251 + $0x70] sm:$0xff]
      %v275 = vld [vmem:[%s251 + $0x78] sm:$0xff]
      %v276 = vld [vmem:[%s251 + $0x80] sm:$0xff]
      %v277 = vld [vmem:[%s251 + $0x88] sm:$0xff]
      %v278 = vld [vmem:[%s251 + $0x90] sm:$0xff]
      %v279 = vld [vmem:[%s251 + $0x98] sm:$0xff]
      %v280 = vld [vmem:[%s251 + $0xa0] sm:$0xff]
      %v281 = vld [vmem:[%s251 + $0xa8] sm:$0xff]
      %v282 = vld [vmem:[%s251 + $0xb0] sm:$0xff]
      %v283 = vld [vmem:[%s251 + $0xb8] sm:$0xff]
      %v284 = vld [vmem:[%s251 + $0xc0] sm:$0xff]
      %v285 = vld [vmem:[%s251 + $0xc8] sm:$0xff]
      %v286 = vld [vmem:[%s251 + $0xd0] sm:$0xff]
      %v287 = vld [vmem:[%s251 + $0xd8] sm:$0xff]
      %v288 = vld [vmem:[%s251 + $0xe0] sm:$0xff]
      %v289 = vld [vmem:[%s251 + $0xe8] sm:$0xff]
      %v290 = vld [vmem:[%s251 + $0xf0] sm:$0xff]
      %v291 = vld [vmem:[%s251 + $0xf8] sm:$0xff]
      %v292 = vld [vmem:[%s1] sm:$0xff]
      %v293 = vld [vmem:[%s1 + $0x8] sm:$0xff]
      %v294 = vld [vmem:[%s1 + $0x10] sm:$0xff]
      %v295 = vld [vmem:[%s1 + $0x18] sm:$0xff]
      %v296 = vld [vmem:[%s2] sm:$0x1]
      %v298 = vlaneseq
      %v299 = vshrl.u32 %v298, 7
      %v300 = vsub.s32 0, %v299
      %v301 = vrot.slane %v296, %v300
      %vm303 = vcmask 261120
      %v305 = vsel %vm303, %v260, 0
      %v308 = vsel %vm303, %v261, 0
      %v311 = vsel %vm303, %v262, 0
      %v314 = vsel %vm303, %v263, 0
      %v317 = vsel %vm303, %v264, 0
      %v320 = vsel %vm303, %v265, 0
      %v323 = vsel %vm303, %v266, 0
      %v326 = vsel %vm303, %v267, 0
      %v329 = vsel %vm303, %v268, 0
      %v332 = vsel %vm303, %v269, 0
      %v335 = vsel %vm303, %v270, 0
      %v338 = vsel %vm303, %v271, 0
      %v341 = vsel %vm303, %v272, 0
      %v344 = vsel %vm303, %v273, 0
      %v347 = vsel %vm303, %v274, 0
      %v350 = vsel %vm303, %v275, 0
      %v353 = vsel %vm303, %v276, 0
      %v356 = vsel %vm303, %v277, 0
      %v359 = vsel %vm303, %v278, 0
      %v362 = vsel %vm303, %v279, 0
      %v365 = vsel %vm303, %v280, 0
      %v368 = vsel %vm303, %v281, 0
      %v371 = vsel %vm303, %v282, 0
      %v374 = vsel %vm303, %v283, 0
      %v377 = vsel %vm303, %v284, 0
      %v380 = vsel %vm303, %v285, 0
      %v383 = vsel %vm303, %v286, 0
      %v386 = vsel %vm303, %v287, 0
      %v389 = vsel %vm303, %v288, 0
      %v392 = vsel %vm303, %v289, 0
      %v395 = vsel %vm303, %v290, 0
      %v398 = vsel %vm303, %v291, 0
      %400 = vmatprep.subr.mxu0 0.0
      %401 = vmatpush1.msra.mxu0 %v292
      %402 = vmatprep.subr.mxu0 0.0
      %403 = vmatpush1.msra.mxu0 %v293
      %404 = vmatprep.subr.mxu0 0.0
      %405 = vmatpush1.msra.mxu0 %v294
      %406 = vmatprep.subr.mxu0 0.0
      %407 = vmatpush1.msra.mxu0 %v295
      %408 = vmatprep.subr.mxu0 0.0
      %409 = vmatpush1.msra.mxu0 0.0
      %410 = vmatprep.subr.mxu0 0.0
      %411 = vmatpush1.msra.mxu0 0.0
      %412 = vmatprep.subr.mxu0 0.0
      %413 = vmatpush1.msra.mxu0 0.0
      %414 = vmatprep.subr.mxu0 0.0
      %415 = vmatpush1.msra.mxu0 0.0
      %416 = vmatprep.subr.mxu0 0.0
      %417 = vmatpush1.msra.mxu0 0.0
      %418 = vmatprep.subr.mxu0 0.0
      %419 = vmatpush1.msra.mxu0 0.0
      %420 = vmatprep.subr.mxu0 0.0
      %421 = vmatpush1.msra.mxu0 0.0
      %422 = vmatprep.subr.mxu0 0.0
      %423 = vmatpush1.msra.mxu0 0.0
      %424 = vmatprep.subr.mxu0 0.0
      %425 = vmatpush1.msra.mxu0 0.0
      %426 = vmatprep.subr.mxu0 0.0
      %427 = vmatpush1.msra.mxu0 0.0
      %428 = vmatprep.subr.mxu0 0.0
      %429 = vmatpush1.msra.mxu0 0.0
      %430 = vmatprep.subr.mxu0 0.0
      %431 = vmatpush1.msra.mxu0 0.0
      %432 = vmatprep.subr.mxu0 0.0
      %433 = vmatpush1.msra.mxu0 0.0
      %434 = vmatprep.subr.mxu0 0.0
      %435 = vmatpush1.msra.mxu0 0.0
      %436 = vmatprep.subr.mxu0 0.0
      %437 = vmatpush1.msra.mxu0 0.0
      %438 = vmatprep.subr.mxu0 0.0
      %439 = vmatpush1.msra.mxu0 0.0
      %440 = vmatprep.subr.mxu0 0.0
      %441 = vmatpush1.msra.mxu0 0.0
      %442 = vmatprep.subr.mxu0 0.0
      %443 = vmatpush1.msra.mxu0 0.0
      %444 = vmatprep.subr.mxu0 0.0
      %445 = vmatpush1.msra.mxu0 0.0
      %446 = vmatprep.subr.mxu0 0.0
      %447 = vmatpush1.msra.mxu0 0.0
      %448 = vmatprep.subr.mxu0 0.0
      %449 = vmatpush1.msra.mxu0 0.0
      %450 = vmatprep.subr.mxu0 0.0
      %451 = vmatpush1.msra.mxu0 0.0
      %452 = vmatprep.subr.mxu0 0.0
      %453 = vmatpush1.msra.mxu0 0.0
      %454 = vmatprep.subr.mxu0 0.0
      %455 = vmatpush1.msra.mxu0 0.0
      %456 = vmatprep.subr.mxu0 0.0
      %457 = vmatpush1.msra.mxu0 0.0
      %458 = vmatprep.subr.mxu0 0.0
      %459 = vmatpush1.msra.mxu0 0.0
      %460 = vmatprep.subr.mxu0 0.0
      %461 = vmatpush1.msra.mxu0 0.0
      %462 = vmatprep.subr.mxu0 0.0
      %463 = vmatpush1.msra.mxu0 0.0
      %464 = vmatprep.mubr.f32.mxu0 0.0
      %465 = vmatmul.mubr.f32.gmra.mrb[0].mxu0 %v305
      %v466 = vpop.f32.mrb[0].mxu0
      %v467 = vadd.f32 %v301, %v466
      %v468 = vpop.f32.mrb[0].mxu0
      %469 = vmatprep.mubr.f32.mxu0 0.0
      %470 = vmatmul.mubr.f32.gmra.mrb[0].mxu0 %v308
      %v471 = vpop.f32.mrb[0].mxu0
      %v472 = vadd.f32 %v301, %v471
      %v473 = vpop.f32.mrb[0].mxu0
      %474 = vmatprep.mubr.f32.mxu0 0.0
      %475 = vmatmul.mubr.f32.gmra.mrb[0].mxu0 %v311
      %v476 = vpop.f32.mrb[0].mxu0
      %v477 = vadd.f32 %v301, %v476
      %v478 = vpop.f32.mrb[0].mxu0
      %479 = vmatprep.mubr.f32.mxu0 0.0
      %480 = vmatmul.mubr.f32.gmra.mrb[0].mxu0 %v314
      %v481 = vpop.f32.mrb[0].mxu0
      %v482 = vadd.f32 %v301, %v481
      %v483 = vpop.f32.mrb[0].mxu0
      %484 = vmatprep.mubr.f32.mxu0 0.0
      %485 = vmatmul.mubr.f32.gmra.mrb[0].mxu0 %v317
      %v486 = vpop.f32.mrb[0].mxu0
      %v487 = vadd.f32 %v301, %v486
      %v488 = vpop.f32.mrb[0].mxu0
      %489 = vmatprep.mubr.f32.mxu0 0.0
      %490 = vmatmul.mubr.f32.gmra.mrb[0].mxu0 %v320
      %v491 = vpop.f32.mrb[0].mxu0
      %v492 = vadd.f32 %v301, %v491
      %v493 = vpop.f32.mrb[0].mxu0
      %494 = vmatprep.mubr.f32.mxu0 0.0
      %495 = vmatmul.mubr.f32.gmra.mrb[0].mxu0 %v323
      %v496 = vpop.f32.mrb[0].mxu0
      %v497 = vadd.f32 %v301, %v496
      %v498 = vpop.f32.mrb[0].mxu0
      %499 = vmatprep.mubr.f32.mxu0 0.0
      %500 = vmatmul.mubr.f32.gmra.mrb[0].mxu0 %v326
      %v501 = vpop.f32.mrb[0].mxu0
      %v502 = vadd.f32 %v301, %v501
      %v503 = vpop.f32.mrb[0].mxu0
      %504 = vmatprep.mubr.f32.mxu0 0.0
      %505 = vmatmul.mubr.f32.gmra.mrb[0].mxu0 %v329
      %v506 = vpop.f32.mrb[0].mxu0
      %v507 = vadd.f32 %v301, %v506
      %v508 = vpop.f32.mrb[0].mxu0
      %509 = vmatprep.mubr.f32.mxu0 0.0
      %510 = vmatmul.mubr.f32.gmra.mrb[0].mxu0 %v332
      %v511 = vpop.f32.mrb[0].mxu0
      %v512 = vadd.f32 %v301, %v511
      %v513 = vpop.f32.mrb[0].mxu0
      %514 = vmatprep.mubr.f32.mxu0 0.0
      %515 = vmatmul.mubr.f32.gmra.mrb[0].mxu0 %v335
      %v516 = vpop.f32.mrb[0].mxu0
      %v517 = vadd.f32 %v301, %v516
      %v518 = vpop.f32.mrb[0].mxu0
      %519 = vmatprep.mubr.f32.mxu0 0.0
      %520 = vmatmul.mubr.f32.gmra.mrb[0].mxu0 %v338
      %v521 = vpop.f32.mrb[0].mxu0
      %v522 = vadd.f32 %v301, %v521
      %v523 = vpop.f32.mrb[0].mxu0
      %524 = vmatprep.mubr.f32.mxu0 0.0
      %525 = vmatmul.mubr.f32.gmra.mrb[0].mxu0 %v341
      %v526 = vpop.f32.mrb[0].mxu0
      %v527 = vadd.f32 %v301, %v526
      %v528 = vpop.f32.mrb[0].mxu0
      %529 = vmatprep.mubr.f32.mxu0 0.0
      %530 = vmatmul.mubr.f32.gmra.mrb[0].mxu0 %v344
      %v531 = vpop.f32.mrb[0].mxu0
      %v532 = vadd.f32 %v301, %v531
      %v533 = vpop.f32.mrb[0].mxu0
      %534 = vmatprep.mubr.f32.mxu0 0.0
      %535 = vmatmul.mubr.f32.gmra.mrb[0].mxu0 %v347
      %v536 = vpop.f32.mrb[0].mxu0
      %v537 = vadd.f32 %v301, %v536
      %v538 = vpop.f32.mrb[0].mxu0
      %539 = vmatprep.mubr.f32.mxu0 0.0
      %540 = vmatmul.mubr.f32.gmra.mrb[0].mxu0 %v350
      %v541 = vpop.f32.mrb[0].mxu0
      %v542 = vadd.f32 %v301, %v541
      %v543 = vpop.f32.mrb[0].mxu0
      %544 = vmatprep.mubr.f32.mxu0 0.0
      %545 = vmatmul.mubr.f32.gmra.mrb[0].mxu0 %v353
      %v546 = vpop.f32.mrb[0].mxu0
      %v547 = vadd.f32 %v301, %v546
      %v548 = vpop.f32.mrb[0].mxu0
      %549 = vmatprep.mubr.f32.mxu0 0.0
      %550 = vmatmul.mubr.f32.gmra.mrb[0].mxu0 %v356
      %v551 = vpop.f32.mrb[0].mxu0
      %v552 = vadd.f32 %v301, %v551
      %v553 = vpop.f32.mrb[0].mxu0
      %554 = vmatprep.mubr.f32.mxu0 0.0
      %555 = vmatmul.mubr.f32.gmra.mrb[0].mxu0 %v359
      %v556 = vpop.f32.mrb[0].mxu0
      %v557 = vadd.f32 %v301, %v556
      %v558 = vpop.f32.mrb[0].mxu0
      %559 = vmatprep.mubr.f32.mxu0 0.0
      %560 = vmatmul.mubr.f32.gmra.mrb[0].mxu0 %v362
      %v561 = vpop.f32.mrb[0].mxu0
      %v562 = vadd.f32 %v301, %v561
      %v563 = vpop.f32.mrb[0].mxu0
      %564 = vmatprep.mubr.f32.mxu0 0.0
      %565 = vmatmul.mubr.f32.gmra.mrb[0].mxu0 %v365
      %v566 = vpop.f32.mrb[0].mxu0
      %v567 = vadd.f32 %v301, %v566
      %v568 = vpop.f32.mrb[0].mxu0
      %569 = vmatprep.mubr.f32.mxu0 0.0
      %570 = vmatmul.mubr.f32.gmra.mrb[0].mxu0 %v368
      %v571 = vpop.f32.mrb[0].mxu0
      %v572 = vadd.f32 %v301, %v571
      %v573 = vpop.f32.mrb[0].mxu0
      %574 = vmatprep.mubr.f32.mxu0 0.0
      %575 = vmatmul.mubr.f32.gmra.mrb[0].mxu0 %v371
      %v576 = vpop.f32.mrb[0].mxu0
      %v577 = vadd.f32 %v301, %v576
      %v578 = vpop.f32.mrb[0].mxu0
      %579 = vmatprep.mubr.f32.mxu0 0.0
      %580 = vmatmul.mubr.f32.gmra.mrb[0].mxu0 %v374
      %v581 = vpop.f32.mrb[0].mxu0
      %v582 = vadd.f32 %v301, %v581
      %v583 = vpop.f32.mrb[0].mxu0
      %584 = vmatprep.mubr.f32.mxu0 0.0
      %585 = vmatmul.mubr.f32.gmra.mrb[0].mxu0 %v377
      %v586 = vpop.f32.mrb[0].mxu0
      %v587 = vadd.f32 %v301, %v586
      %v588 = vpop.f32.mrb[0].mxu0
      %589 = vmatprep.mubr.f32.mxu0 0.0
      %590 = vmatmul.mubr.f32.gmra.mrb[0].mxu0 %v380
      %v591 = vpop.f32.mrb[0].mxu0
      %v592 = vadd.f32 %v301, %v591
      %v593 = vpop.f32.mrb[0].mxu0
      %594 = vmatprep.mubr.f32.mxu0 0.0
      %595 = vmatmul.mubr.f32.gmra.mrb[0].mxu0 %v383
      %v596 = vpop.f32.mrb[0].mxu0
      %v597 = vadd.f32 %v301, %v596
      %v598 = vpop.f32.mrb[0].mxu0
      %599 = vmatprep.mubr.f32.mxu0 0.0
      %600 = vmatmul.mubr.f32.gmra.mrb[0].mxu0 %v386
      %v601 = vpop.f32.mrb[0].mxu0
      %v602 = vadd.f32 %v301, %v601
      %v603 = vpop.f32.mrb[0].mxu0
      %604 = vmatprep.mubr.f32.mxu0 0.0
      %605 = vmatmul.mubr.f32.gmra.mrb[0].mxu0 %v389
      %v606 = vpop.f32.mrb[0].mxu0
      %v607 = vadd.f32 %v301, %v606
      %v608 = vpop.f32.mrb[0].mxu0
      %609 = vmatprep.mubr.f32.mxu0 0.0
      %610 = vmatmul.mubr.f32.gmra.mrb[0].mxu0 %v392
      %v611 = vpop.f32.mrb[0].mxu0
      %v612 = vadd.f32 %v301, %v611
      %v613 = vpop.f32.mrb[0].mxu0
      %614 = vmatprep.mubr.f32.mxu0 0.0
      %615 = vmatmul.mubr.f32.gmra.mrb[0].mxu0 %v395
      %v616 = vpop.f32.mrb[0].mxu0
      %v617 = vadd.f32 %v301, %v616
      %v618 = vpop.f32.mrb[0].mxu0
      %619 = vmatprep.mubr.f32.mxu0 0.0
      %620 = vmatmul.mubr.f32.gmra.mrb[0].mxu0 %v398
      %v621 = vpop.f32.mrb[0].mxu0
      %v622 = vadd.f32 %v301, %v621
      %v623 = vpop.f32.mrb[0].mxu0
      %624 = vdwg.mxu0
      %v625 = vld [vmem:[%s3] sm:$0xff]
      %v626 = vld [vmem:[%s3 + $0x8] sm:$0xff]
      %v627 = vld [vmem:[%s3 + $0x10] sm:$0xff]
      %v628 = vld [vmem:[%s3 + $0x18] sm:$0xff]
      %v629 = vld [vmem:[%s3 + $0x20] sm:$0xff]
      %v630 = vld [vmem:[%s3 + $0x28] sm:$0xff]
      %v631 = vld [vmem:[%s3 + $0x30] sm:$0xff]
      %v632 = vld [vmem:[%s3 + $0x38] sm:$0xff]
      %641 = vrot.lane.b32.xlu0 %v467, 96
      %v642 = vpop.permute.xlu0 %641
      %643 = vrot.lane.b32.xlu0 %v472, 96
      %v644 = vpop.permute.xlu0 %643
      %645 = vrot.lane.b32.xlu0 %v477, 96
      %v646 = vpop.permute.xlu0 %645
      %647 = vrot.lane.b32.xlu0 %v482, 96
      %v648 = vpop.permute.xlu0 %647
      %649 = vrot.lane.b32.xlu0 %v487, 96
      %v650 = vpop.permute.xlu0 %649
      %651 = vrot.lane.b32.xlu0 %v492, 96
      %v652 = vpop.permute.xlu0 %651
      %653 = vrot.lane.b32.xlu0 %v497, 96
      %v654 = vpop.permute.xlu0 %653
      %655 = vrot.lane.b32.xlu0 %v502, 96
      %v656 = vpop.permute.xlu0 %655
      %vm657 = vcmask 64512
      %v658 = vsel %vm657, %v467, 0
      %v660 = vsel %vm657, %v472, 0
      %v662 = vsel %vm657, %v477, 0
      %v664 = vsel %vm657, %v482, 0
      %v666 = vsel %vm657, %v487, 0
      %v668 = vsel %vm657, %v492, 0
      %v670 = vsel %vm657, %v497, 0
      %v672 = vsel %vm657, %v502, 0
      %v674 = vsel %vm657, %v642, 0
      %v676 = vsel %vm657, %v644, 0
      %v678 = vsel %vm657, %v646, 0
      %v680 = vsel %vm657, %v648, 0
      %v682 = vsel %vm657, %v650, 0
      %v684 = vsel %vm657, %v652, 0
      %v686 = vsel %vm657, %v654, 0
      %v688 = vsel %vm657, %v656, 0
      %690 = vmatprep.subr.mxu0 0.0
      %691 = vmatpush1.xpose.msra.mxu0 %v674
      %692 = vmatprep.subr.mxu0 0.0
      %693 = vmatpush1.xpose.msra.mxu0 %v676
      %694 = vmatprep.subr.mxu0 0.0
      %695 = vmatpush1.xpose.msra.mxu0 %v678
      %696 = vmatprep.subr.mxu0 0.0
      %697 = vmatpush1.xpose.msra.mxu0 %v680
      %698 = vmatprep.subr.mxu0 0.0
      %699 = vmatpush1.xpose.msra.mxu0 %v682
      %700 = vmatprep.subr.mxu0 0.0
      %701 = vmatpush1.xpose.msra.mxu0 %v684
      %702 = vmatprep.subr.mxu0 0.0
      %703 = vmatpush1.xpose.msra.mxu0 %v686
      %704 = vmatprep.subr.mxu0 0.0
      %705 = vmatpush1.xpose.msra.mxu0 %v688
      %706 = vmatprep.subr.mxu0 0.0
      %707 = vmatpush1.xpose.msra.mxu0 0.0
      %708 = vmatprep.subr.mxu0 0.0
      %709 = vmatpush1.xpose.msra.mxu0 0.0
      %710 = vmatprep.subr.mxu0 0.0
      %711 = vmatpush1.xpose.msra.mxu0 0.0
      %712 = vmatprep.subr.mxu0 0.0
      %713 = vmatpush1.xpose.msra.mxu0 0.0
      %714 = vmatprep.subr.mxu0 0.0
      %715 = vmatpush1.xpose.msra.mxu0 0.0
      %716 = vmatprep.subr.mxu0 0.0
      %717 = vmatpush1.xpose.msra.mxu0 0.0
      %718 = vmatprep.subr.mxu0 0.0
      %719 = vmatpush1.xpose.msra.mxu0 0.0
      %720 = vmatprep.subr.mxu0 0.0
      %721 = vmatpush1.xpose.msra.mxu0 0.0
      %722 = vmatprep.subr.mxu0 0.0
      %723 = vmatpush1.xpose.msra.mxu0 0.0
      %724 = vmatprep.subr.mxu0 0.0
      %725 = vmatpush1.xpose.msra.mxu0 0.0
      %726 = vmatprep.subr.mxu0 0.0
      %727 = vmatpush1.xpose.msra.mxu0 0.0
      %728 = vmatprep.subr.mxu0 0.0
      %729 = vmatpush1.xpose.msra.mxu0 0.0
      %730 = vmatprep.subr.mxu0 0.0
      %731 = vmatpush1.xpose.msra.mxu0 0.0
      %732 = vmatprep.subr.mxu0 0.0
      %733 = vmatpush1.xpose.msra.mxu0 0.0
      %734 = vmatprep.subr.mxu0 0.0
      %735 = vmatpush1.xpose.msra.mxu0 0.0
      %736 = vmatprep.subr.mxu0 0.0
      %737 = vmatpush1.xpose.msra.mxu0 0.0
      %738 = vmatprep.subr.mxu0 0.0
      %739 = vmatpush1.xpose.msra.mxu0 0.0
      %740 = vmatprep.subr.mxu0 0.0
      %741 = vmatpush1.xpose.msra.mxu0 0.0
      %742 = vmatprep.subr.mxu0 0.0
      %743 = vmatpush1.xpose.msra.mxu0 0.0
      %744 = vmatprep.subr.mxu0 0.0
      %745 = vmatpush1.xpose.msra.mxu0 0.0
      %746 = vmatprep.subr.mxu0 0.0
      %747 = vmatpush1.xpose.msra.mxu0 0.0
      %748 = vmatprep.subr.mxu0 0.0
      %749 = vmatpush1.xpose.msra.mxu0 0.0
      %750 = vmatprep.subr.mxu0 0.0
      %751 = vmatpush1.xpose.msra.mxu0 0.0
      %752 = vmatprep.subr.mxu0 0.0
      %753 = vmatpush1.xpose.msra.mxu0 0.0
      %754 = vmatprep.mubr.f32.mxu0 0.0
      %755 = vmatmul.mubr.f32.gmra.mrb[0].mxu0 %v658
      %v756 = vpop.f32.mrb[0].mxu0
      %v757 = vadd.f32 %v625, %v756
      %v758 = vpop.f32.mrb[0].mxu0
      %759 = vmatprep.mubr.f32.mxu0 0.0
      %760 = vmatmul.mubr.f32.gmra.mrb[0].mxu0 %v660
      %v761 = vpop.f32.mrb[0].mxu0
      %v762 = vadd.f32 %v626, %v761
      %v763 = vpop.f32.mrb[0].mxu0
      %764 = vmatprep.mubr.f32.mxu0 0.0
      %765 = vmatmul.mubr.f32.gmra.mrb[0].mxu0 %v662
      %v766 = vpop.f32.mrb[0].mxu0
      %v767 = vadd.f32 %v627, %v766
      %v768 = vpop.f32.mrb[0].mxu0
      %769 = vmatprep.mubr.f32.mxu0 0.0
      %770 = vmatmul.mubr.f32.gmra.mrb[0].mxu0 %v664
      %v771 = vpop.f32.mrb[0].mxu0
      %v772 = vadd.f32 %v628, %v771
      %v773 = vpop.f32.mrb[0].mxu0
      %774 = vmatprep.mubr.f32.mxu0 0.0
      %775 = vmatmul.mubr.f32.gmra.mrb[0].mxu0 %v666
      %v776 = vpop.f32.mrb[0].mxu0
      %v777 = vadd.f32 %v629, %v776
      %v778 = vpop.f32.mrb[0].mxu0
      %779 = vmatprep.mubr.f32.mxu0 0.0
      %780 = vmatmul.mubr.f32.gmra.mrb[0].mxu0 %v668
      %v781 = vpop.f32.mrb[0].mxu0
      %v782 = vadd.f32 %v630, %v781
      %v783 = vpop.f32.mrb[0].mxu0
      %784 = vmatprep.mubr.f32.mxu0 0.0
      %785 = vmatmul.mubr.f32.gmra.mrb[0].mxu0 %v670
      %v786 = vpop.f32.mrb[0].mxu0
      %v787 = vadd.f32 %v631, %v786
      %v788 = vpop.f32.mrb[0].mxu0
      %789 = vmatprep.mubr.f32.mxu0 0.0
      %790 = vmatmul.mubr.f32.gmra.mrb[0].mxu0 %v672
      %v791 = vpop.f32.mrb[0].mxu0
      %v792 = vadd.f32 %v632, %v791
      %v793 = vpop.f32.mrb[0].mxu0
      %794 = vdwg.mxu0
      %803 = vrot.lane.b32.xlu0 %v507, 96
      %v804 = vpop.permute.xlu0 %803
      %805 = vrot.lane.b32.xlu0 %v512, 96
      %v806 = vpop.permute.xlu0 %805
      %807 = vrot.lane.b32.xlu0 %v517, 96
      %v808 = vpop.permute.xlu0 %807
      %809 = vrot.lane.b32.xlu0 %v522, 96
      %v810 = vpop.permute.xlu0 %809
      %811 = vrot.lane.b32.xlu0 %v527, 96
      %v812 = vpop.permute.xlu0 %811
      %813 = vrot.lane.b32.xlu0 %v532, 96
      %v814 = vpop.permute.xlu0 %813
      %815 = vrot.lane.b32.xlu0 %v537, 96
      %v816 = vpop.permute.xlu0 %815
      %817 = vrot.lane.b32.xlu0 %v542, 96
      %v818 = vpop.permute.xlu0 %817
      %v819 = vsel %vm657, %v507, 0
      %v821 = vsel %vm657, %v512, 0
      %v823 = vsel %vm657, %v517, 0
      %v825 = vsel %vm657, %v522, 0
      %v827 = vsel %vm657, %v527, 0
      %v829 = vsel %vm657, %v532, 0
      %v831 = vsel %vm657, %v537, 0
      %v833 = vsel %vm657, %v542, 0
      %v835 = vsel %vm657, %v804, 0
      %v837 = vsel %vm657, %v806, 0
      %v839 = vsel %vm657, %v808, 0
      %v841 = vsel %vm657, %v810, 0
      %v843 = vsel %vm657, %v812, 0
      %v845 = vsel %vm657, %v814, 0
      %v847 = vsel %vm657, %v816, 0
      %v849 = vsel %vm657, %v818, 0
      %851 = vmatprep.subr.mxu0 0.0
      %852 = vmatpush1.xpose.msra.mxu0 %v835
      %853 = vmatprep.subr.mxu0 0.0
      %854 = vmatpush1.xpose.msra.mxu0 %v837
      %855 = vmatprep.subr.mxu0 0.0
      %856 = vmatpush1.xpose.msra.mxu0 %v839
      %857 = vmatprep.subr.mxu0 0.0
      %858 = vmatpush1.xpose.msra.mxu0 %v841
      %859 = vmatprep.subr.mxu0 0.0
      %860 = vmatpush1.xpose.msra.mxu0 %v843
      %861 = vmatprep.subr.mxu0 0.0
      %862 = vmatpush1.xpose.msra.mxu0 %v845
      %863 = vmatprep.subr.mxu0 0.0
      %864 = vmatpush1.xpose.msra.mxu0 %v847
      %865 = vmatprep.subr.mxu0 0.0
      %866 = vmatpush1.xpose.msra.mxu0 %v849
      %867 = vmatprep.subr.mxu0 0.0
      %868 = vmatpush1.xpose.msra.mxu0 0.0
      %869 = vmatprep.subr.mxu0 0.0
      %870 = vmatpush1.xpose.msra.mxu0 0.0
      %871 = vmatprep.subr.mxu0 0.0
      %872 = vmatpush1.xpose.msra.mxu0 0.0
      %873 = vmatprep.subr.mxu0 0.0
      %874 = vmatpush1.xpose.msra.mxu0 0.0
      %875 = vmatprep.subr.mxu0 0.0
      %876 = vmatpush1.xpose.msra.mxu0 0.0
      %877 = vmatprep.subr.mxu0 0.0
      %878 = vmatpush1.xpose.msra.mxu0 0.0
      %879 = vmatprep.subr.mxu0 0.0
      %880 = vmatpush1.xpose.msra.mxu0 0.0
      %881 = vmatprep.subr.mxu0 0.0
      %882 = vmatpush1.xpose.msra.mxu0 0.0
      %883 = vmatprep.subr.mxu0 0.0
      %884 = vmatpush1.xpose.msra.mxu0 0.0
      %885 = vmatprep.subr.mxu0 0.0
      %886 = vmatpush1.xpose.msra.mxu0 0.0
      %887 = vmatprep.subr.mxu0 0.0
      %888 = vmatpush1.xpose.msra.mxu0 0.0
      %889 = vmatprep.subr.mxu0 0.0
      %890 = vmatpush1.xpose.msra.mxu0 0.0
      %891 = vmatprep.subr.mxu0 0.0
      %892 = vmatpush1.xpose.msra.mxu0 0.0
      %893 = vmatprep.subr.mxu0 0.0
      %894 = vmatpush1.xpose.msra.mxu0 0.0
      %895 = vmatprep.subr.mxu0 0.0
      %896 = vmatpush1.xpose.msra.mxu0 0.0
      %897 = vmatprep.subr.mxu0 0.0
      %898 = vmatpush1.xpose.msra.mxu0 0.0
      %899 = vmatprep.subr.mxu0 0.0
      %900 = vmatpush1.xpose.msra.mxu0 0.0
      %901 = vmatprep.subr.mxu0 0.0
      %902 = vmatpush1.xpose.msra.mxu0 0.0
      %903 = vmatprep.subr.mxu0 0.0
      %904 = vmatpush1.xpose.msra.mxu0 0.0
      %905 = vmatprep.subr.mxu0 0.0
      %906 = vmatpush1.xpose.msra.mxu0 0.0
      %907 = vmatprep.subr.mxu0 0.0
      %908 = vmatpush1.xpose.msra.mxu0 0.0
      %909 = vmatprep.subr.mxu0 0.0
      %910 = vmatpush1.xpose.msra.mxu0 0.0
      %911 = vmatprep.subr.mxu0 0.0
      %912 = vmatpush1.xpose.msra.mxu0 0.0
      %913 = vmatprep.subr.mxu0 0.0
      %914 = vmatpush1.xpose.msra.mxu0 0.0
      %915 = vmatprep.mubr.f32.mxu0 0.0
      %916 = vmatmul.mubr.f32.gmra.mrb[0].mxu0 %v819
      %v917 = vpop.f32.mrb[0].mxu0
      %v918 = vadd.f32 %v625, %v917
      %v919 = vpop.f32.mrb[0].mxu0
      %920 = vmatprep.mubr.f32.mxu0 0.0
      %921 = vmatmul.mubr.f32.gmra.mrb[0].mxu0 %v821
      %v922 = vpop.f32.mrb[0].mxu0
      %v923 = vadd.f32 %v626, %v922
      %v924 = vpop.f32.mrb[0].mxu0
      %925 = vmatprep.mubr.f32.mxu0 0.0
      %926 = vmatmul.mubr.f32.gmra.mrb[0].mxu0 %v823
      %v927 = vpop.f32.mrb[0].mxu0
      %v928 = vadd.f32 %v627, %v927
      %v929 = vpop.f32.mrb[0].mxu0
      %930 = vmatprep.mubr.f32.mxu0 0.0
      %931 = vmatmul.mubr.f32.gmra.mrb[0].mxu0 %v825
      %v932 = vpop.f32.mrb[0].mxu0
      %v933 = vadd.f32 %v628, %v932
      %v934 = vpop.f32.mrb[0].mxu0
      %935 = vmatprep.mubr.f32.mxu0 0.0
      %936 = vmatmul.mubr.f32.gmra.mrb[0].mxu0 %v827
      %v937 = vpop.f32.mrb[0].mxu0
      %v938 = vadd.f32 %v629, %v937
      %v939 = vpop.f32.mrb[0].mxu0
      %940 = vmatprep.mubr.f32.mxu0 0.0
      %941 = vmatmul.mubr.f32.gmra.mrb[0].mxu0 %v829
      %v942 = vpop.f32.mrb[0].mxu0
      %v943 = vadd.f32 %v630, %v942
      %v944 = vpop.f32.mrb[0].mxu0
      %945 = vmatprep.mubr.f32.mxu0 0.0
      %946 = vmatmul.mubr.f32.gmra.mrb[0].mxu0 %v831
      %v947 = vpop.f32.mrb[0].mxu0
      %v948 = vadd.f32 %v631, %v947
      %v949 = vpop.f32.mrb[0].mxu0
      %950 = vmatprep.mubr.f32.mxu0 0.0
      %951 = vmatmul.mubr.f32.gmra.mrb[0].mxu0 %v833
      %v952 = vpop.f32.mrb[0].mxu0
      %v953 = vadd.f32 %v632, %v952
      %v954 = vpop.f32.mrb[0].mxu0
      %955 = vdwg.mxu0
      %964 = vrot.lane.b32.xlu0 %v547, 96
      %v965 = vpop.permute.xlu0 %964
      %966 = vrot.lane.b32.xlu0 %v552, 96
      %v967 = vpop.permute.xlu0 %966
      %968 = vrot.lane.b32.xlu0 %v557, 96
      %v969 = vpop.permute.xlu0 %968
      %970 = vrot.lane.b32.xlu0 %v562, 96
      %v971 = vpop.permute.xlu0 %970
      %972 = vrot.lane.b32.xlu0 %v567, 96
      %v973 = vpop.permute.xlu0 %972
      %974 = vrot.lane.b32.xlu0 %v572, 96
      %v975 = vpop.permute.xlu0 %974
      %976 = vrot.lane.b32.xlu0 %v577, 96
      %v977 = vpop.permute.xlu0 %976
      %978 = vrot.lane.b32.xlu0 %v582, 96
      %v979 = vpop.permute.xlu0 %978
      %v980 = vsel %vm657, %v547, 0
      %v982 = vsel %vm657, %v552, 0
      %v984 = vsel %vm657, %v557, 0
      %v986 = vsel %vm657, %v562, 0
      %v988 = vsel %vm657, %v567, 0
      %v990 = vsel %vm657, %v572, 0
      %v992 = vsel %vm657, %v577, 0
      %v994 = vsel %vm657, %v582, 0
      %v996 = vsel %vm657, %v965, 0
      %v998 = vsel %vm657, %v967, 0
      %v1000 = vsel %vm657, %v969, 0
      %v1002 = vsel %vm657, %v971, 0
      %v1004 = vsel %vm657, %v973, 0
      %v1006 = vsel %vm657, %v975, 0
      %v1008 = vsel %vm657, %v977, 0
      %v1010 = vsel %vm657, %v979, 0
      %1012 = vmatprep.subr.mxu0 0.0
      %1013 = vmatpush1.xpose.msra.mxu0 %v996
      %1014 = vmatprep.subr.mxu0 0.0
      %1015 = vmatpush1.xpose.msra.mxu0 %v998
      %1016 = vmatprep.subr.mxu0 0.0
      %1017 = vmatpush1.xpose.msra.mxu0 %v1000
      %1018 = vmatprep.subr.mxu0 0.0
      %1019 = vmatpush1.xpose.msra.mxu0 %v1002
      %1020 = vmatprep.subr.mxu0 0.0
      %1021 = vmatpush1.xpose.msra.mxu0 %v1004
      %1022 = vmatprep.subr.mxu0 0.0
      %1023 = vmatpush1.xpose.msra.mxu0 %v1006
      %1024 = vmatprep.subr.mxu0 0.0
      %1025 = vmatpush1.xpose.msra.mxu0 %v1008
      %1026 = vmatprep.subr.mxu0 0.0
      %1027 = vmatpush1.xpose.msra.mxu0 %v1010
      %1028 = vmatprep.subr.mxu0 0.0
      %1029 = vmatpush1.xpose.msra.mxu0 0.0
      %1030 = vmatprep.subr.mxu0 0.0
      %1031 = vmatpush1.xpose.msra.mxu0 0.0
      %1032 = vmatprep.subr.mxu0 0.0
      %1033 = vmatpush1.xpose.msra.mxu0 0.0
      %1034 = vmatprep.subr.mxu0 0.0
      %1035 = vmatpush1.xpose.msra.mxu0 0.0
      %1036 = vmatprep.subr.mxu0 0.0
      %1037 = vmatpush1.xpose.msra.mxu0 0.0
      %1038 = vmatprep.subr.mxu0 0.0
      %1039 = vmatpush1.xpose.msra.mxu0 0.0
      %1040 = vmatprep.subr.mxu0 0.0
      %1041 = vmatpush1.xpose.msra.mxu0 0.0
      %1042 = vmatprep.subr.mxu0 0.0
      %1043 = vmatpush1.xpose.msra.mxu0 0.0
      %1044 = vmatprep.subr.mxu0 0.0
      %1045 = vmatpush1.xpose.msra.mxu0 0.0
      %1046 = vmatprep.subr.mxu0 0.0
      %1047 = vmatpush1.xpose.msra.mxu0 0.0
      %1048 = vmatprep.subr.mxu0 0.0
      %1049 = vmatpush1.xpose.msra.mxu0 0.0
      %1050 = vmatprep.subr.mxu0 0.0
      %1051 = vmatpush1.xpose.msra.mxu0 0.0
      %1052 = vmatprep.subr.mxu0 0.0
      %1053 = vmatpush1.xpose.msra.mxu0 0.0
      %1054 = vmatprep.subr.mxu0 0.0
      %1055 = vmatpush1.xpose.msra.mxu0 0.0
      %1056 = vmatprep.subr.mxu0 0.0
      %1057 = vmatpush1.xpose.msra.mxu0 0.0
      %1058 = vmatprep.subr.mxu0 0.0
      %1059 = vmatpush1.xpose.msra.mxu0 0.0
      %1060 = vmatprep.subr.mxu0 0.0
      %1061 = vmatpush1.xpose.msra.mxu0 0.0
      %1062 = vmatprep.subr.mxu0 0.0
      %1063 = vmatpush1.xpose.msra.mxu0 0.0
      %1064 = vmatprep.subr.mxu0 0.0
      %1065 = vmatpush1.xpose.msra.mxu0 0.0
      %1066 = vmatprep.subr.mxu0 0.0
      %1067 = vmatpush1.xpose.msra.mxu0 0.0
      %1068 = vmatprep.subr.mxu0 0.0
      %1069 = vmatpush1.xpose.msra.mxu0 0.0
      %1070 = vmatprep.subr.mxu0 0.0
      %1071 = vmatpush1.xpose.msra.mxu0 0.0
      %1072 = vmatprep.subr.mxu0 0.0
      %1073 = vmatpush1.xpose.msra.mxu0 0.0
      %1074 = vmatprep.subr.mxu0 0.0
      %1075 = vmatpush1.xpose.msra.mxu0 0.0
      %1076 = vmatprep.mubr.f32.mxu0 0.0
      %1077 = vmatmul.mubr.f32.gmra.mrb[0].mxu0 %v980
      %v1078 = vpop.f32.mrb[0].mxu0
      %v1079 = vadd.f32 %v625, %v1078
      %v1080 = vpop.f32.mrb[0].mxu0
      %1081 = vmatprep.mubr.f32.mxu0 0.0
      %1082 = vmatmul.mubr.f32.gmra.mrb[0].mxu0 %v982
      %v1083 = vpop.f32.mrb[0].mxu0
      %v1084 = vadd.f32 %v626, %v1083
      %v1085 = vpop.f32.mrb[0].mxu0
      %1086 = vmatprep.mubr.f32.mxu0 0.0
      %1087 = vmatmul.mubr.f32.gmra.mrb[0].mxu0 %v984
      %v1088 = vpop.f32.mrb[0].mxu0
      %v1089 = vadd.f32 %v627, %v1088
      %v1090 = vpop.f32.mrb[0].mxu0
      %1091 = vmatprep.mubr.f32.mxu0 0.0
      %1092 = vmatmul.mubr.f32.gmra.mrb[0].mxu0 %v986
      %v1093 = vpop.f32.mrb[0].mxu0
      %v1094 = vadd.f32 %v628, %v1093
      %v1095 = vpop.f32.mrb[0].mxu0
      %1096 = vmatprep.mubr.f32.mxu0 0.0
      %1097 = vmatmul.mubr.f32.gmra.mrb[0].mxu0 %v988
      %v1098 = vpop.f32.mrb[0].mxu0
      %v1099 = vadd.f32 %v629, %v1098
      %v1100 = vpop.f32.mrb[0].mxu0
      %1101 = vmatprep.mubr.f32.mxu0 0.0
      %1102 = vmatmul.mubr.f32.gmra.mrb[0].mxu0 %v990
      %v1103 = vpop.f32.mrb[0].mxu0
      %v1104 = vadd.f32 %v630, %v1103
      %v1105 = vpop.f32.mrb[0].mxu0
      %1106 = vmatprep.mubr.f32.mxu0 0.0
      %1107 = vmatmul.mubr.f32.gmra.mrb[0].mxu0 %v992
      %v1108 = vpop.f32.mrb[0].mxu0
      %v1109 = vadd.f32 %v631, %v1108
      %v1110 = vpop.f32.mrb[0].mxu0
      %1111 = vmatprep.mubr.f32.mxu0 0.0
      %1112 = vmatmul.mubr.f32.gmra.mrb[0].mxu0 %v994
      %v1113 = vpop.f32.mrb[0].mxu0
      %v1114 = vadd.f32 %v632, %v1113
      %v1115 = vpop.f32.mrb[0].mxu0
      %1116 = vdwg.mxu0
      %1125 = vrot.lane.b32.xlu0 %v587, 96
      %v1126 = vpop.permute.xlu0 %1125
      %1127 = vrot.lane.b32.xlu0 %v592, 96
      %v1128 = vpop.permute.xlu0 %1127
      %1129 = vrot.lane.b32.xlu0 %v597, 96
      %v1130 = vpop.permute.xlu0 %1129
      %1131 = vrot.lane.b32.xlu0 %v602, 96
      %v1132 = vpop.permute.xlu0 %1131
      %1133 = vrot.lane.b32.xlu0 %v607, 96
      %v1134 = vpop.permute.xlu0 %1133
      %1135 = vrot.lane.b32.xlu0 %v612, 96
      %v1136 = vpop.permute.xlu0 %1135
      %1137 = vrot.lane.b32.xlu0 %v617, 96
      %v1138 = vpop.permute.xlu0 %1137
      %1139 = vrot.lane.b32.xlu0 %v622, 96
      %v1140 = vpop.permute.xlu0 %1139
      %v1141 = vsel %vm657, %v587, 0
      %v1143 = vsel %vm657, %v592, 0
      %v1145 = vsel %vm657, %v597, 0
      %v1147 = vsel %vm657, %v602, 0
      %v1149 = vsel %vm657, %v607, 0
      %v1151 = vsel %vm657, %v612, 0
      %v1153 = vsel %vm657, %v617, 0
      %v1155 = vsel %vm657, %v622, 0
      %v1157 = vsel %vm657, %v1126, 0
      %v1159 = vsel %vm657, %v1128, 0
      %v1161 = vsel %vm657, %v1130, 0
      %v1163 = vsel %vm657, %v1132, 0
      %v1165 = vsel %vm657, %v1134, 0
      %v1167 = vsel %vm657, %v1136, 0
      %v1169 = vsel %vm657, %v1138, 0
      %v1171 = vsel %vm657, %v1140, 0
      %1173 = vmatprep.subr.mxu0 0.0
      %1174 = vmatpush1.xpose.msra.mxu0 %v1157
      %1175 = vmatprep.subr.mxu0 0.0
      %1176 = vmatpush1.xpose.msra.mxu0 %v1159
      %1177 = vmatprep.subr.mxu0 0.0
      %1178 = vmatpush1.xpose.msra.mxu0 %v1161
      %1179 = vmatprep.subr.mxu0 0.0
      %1180 = vmatpush1.xpose.msra.mxu0 %v1163
      %1181 = vmatprep.subr.mxu0 0.0
      %1182 = vmatpush1.xpose.msra.mxu0 %v1165
      %1183 = vmatprep.subr.mxu0 0.0
      %1184 = vmatpush1.xpose.msra.mxu0 %v1167
      %1185 = vmatprep.subr.mxu0 0.0
      %1186 = vmatpush1.xpose.msra.mxu0 %v1169
      %1187 = vmatprep.subr.mxu0 0.0
      %1188 = vmatpush1.xpose.msra.mxu0 %v1171
      %1189 = vmatprep.subr.mxu0 0.0
      %1190 = vmatpush1.xpose.msra.mxu0 0.0
      %1191 = vmatprep.subr.mxu0 0.0
      %1192 = vmatpush1.xpose.msra.mxu0 0.0
      %1193 = vmatprep.subr.mxu0 0.0
      %1194 = vmatpush1.xpose.msra.mxu0 0.0
      %1195 = vmatprep.subr.mxu0 0.0
      %1196 = vmatpush1.xpose.msra.mxu0 0.0
      %1197 = vmatprep.subr.mxu0 0.0
      %1198 = vmatpush1.xpose.msra.mxu0 0.0
      %1199 = vmatprep.subr.mxu0 0.0
      %1200 = vmatpush1.xpose.msra.mxu0 0.0
      %1201 = vmatprep.subr.mxu0 0.0
      %1202 = vmatpush1.xpose.msra.mxu0 0.0
      %1203 = vmatprep.subr.mxu0 0.0
      %1204 = vmatpush1.xpose.msra.mxu0 0.0
      %1205 = vmatprep.subr.mxu0 0.0
      %1206 = vmatpush1.xpose.msra.mxu0 0.0
      %1207 = vmatprep.subr.mxu0 0.0
      %1208 = vmatpush1.xpose.msra.mxu0 0.0
      %1209 = vmatprep.subr.mxu0 0.0
      %1210 = vmatpush1.xpose.msra.mxu0 0.0
      %1211 = vmatprep.subr.mxu0 0.0
      %1212 = vmatpush1.xpose.msra.mxu0 0.0
      %1213 = vmatprep.subr.mxu0 0.0
      %1214 = vmatpush1.xpose.msra.mxu0 0.0
      %1215 = vmatprep.subr.mxu0 0.0
      %1216 = vmatpush1.xpose.msra.mxu0 0.0
      %1217 = vmatprep.subr.mxu0 0.0
      %1218 = vmatpush1.xpose.msra.mxu0 0.0
      %1219 = vmatprep.subr.mxu0 0.0
      %1220 = vmatpush1.xpose.msra.mxu0 0.0
      %1221 = vmatprep.subr.mxu0 0.0
      %1222 = vmatpush1.xpose.msra.mxu0 0.0
      %1223 = vmatprep.subr.mxu0 0.0
      %1224 = vmatpush1.xpose.msra.mxu0 0.0
      %1225 = vmatprep.subr.mxu0 0.0
      %1226 = vmatpush1.xpose.msra.mxu0 0.0
      %1227 = vmatprep.subr.mxu0 0.0
      %1228 = vmatpush1.xpose.msra.mxu0 0.0
      %1229 = vmatprep.subr.mxu0 0.0
      %1230 = vmatpush1.xpose.msra.mxu0 0.0
      %1231 = vmatprep.subr.mxu0 0.0
      %1232 = vmatpush1.xpose.msra.mxu0 0.0
      %1233 = vmatprep.subr.mxu0 0.0
      %1234 = vmatpush1.xpose.msra.mxu0 0.0
      %1235 = vmatprep.subr.mxu0 0.0
      %1236 = vmatpush1.xpose.msra.mxu0 0.0
      %1237 = vmatprep.mubr.f32.mxu0 0.0
      %1238 = vmatmul.mubr.f32.gmra.mrb[0].mxu0 %v1141
      %v1239 = vpop.f32.mrb[0].mxu0
      %v1240 = vadd.f32 %v625, %v1239
      %v1241 = vpop.f32.mrb[0].mxu0
      %1242 = vmatprep.mubr.f32.mxu0 0.0
      %1243 = vmatmul.mubr.f32.gmra.mrb[0].mxu0 %v1143
      %v1244 = vpop.f32.mrb[0].mxu0
      %v1245 = vadd.f32 %v626, %v1244
      %v1246 = vpop.f32.mrb[0].mxu0
      %1247 = vmatprep.mubr.f32.mxu0 0.0
      %1248 = vmatmul.mubr.f32.gmra.mrb[0].mxu0 %v1145
      %v1249 = vpop.f32.mrb[0].mxu0
      %v1250 = vadd.f32 %v627, %v1249
      %v1251 = vpop.f32.mrb[0].mxu0
      %1252 = vmatprep.mubr.f32.mxu0 0.0
      %1253 = vmatmul.mubr.f32.gmra.mrb[0].mxu0 %v1147
      %v1254 = vpop.f32.mrb[0].mxu0
      %v1255 = vadd.f32 %v628, %v1254
      %v1256 = vpop.f32.mrb[0].mxu0
      %1257 = vmatprep.mubr.f32.mxu0 0.0
      %1258 = vmatmul.mubr.f32.gmra.mrb[0].mxu0 %v1149
      %v1259 = vpop.f32.mrb[0].mxu0
      %v1260 = vadd.f32 %v629, %v1259
      %v1261 = vpop.f32.mrb[0].mxu0
      %1262 = vmatprep.mubr.f32.mxu0 0.0
      %1263 = vmatmul.mubr.f32.gmra.mrb[0].mxu0 %v1151
      %v1264 = vpop.f32.mrb[0].mxu0
      %v1265 = vadd.f32 %v630, %v1264
      %v1266 = vpop.f32.mrb[0].mxu0
      %1267 = vmatprep.mubr.f32.mxu0 0.0
      %1268 = vmatmul.mubr.f32.gmra.mrb[0].mxu0 %v1153
      %v1269 = vpop.f32.mrb[0].mxu0
      %v1270 = vadd.f32 %v631, %v1269
      %v1271 = vpop.f32.mrb[0].mxu0
      %1272 = vmatprep.mubr.f32.mxu0 0.0
      %1273 = vmatmul.mubr.f32.gmra.mrb[0].mxu0 %v1155
      %v1274 = vpop.f32.mrb[0].mxu0
      %v1275 = vadd.f32 %v632, %v1274
      %v1276 = vpop.f32.mrb[0].mxu0
      %1277 = vdwg.mxu0
      %vm1278 = vcmask 523264
      %v1279 = vsel %vm1278, %v757, -inf
      %1280 = vmax.xlane.f32.xlu0 %v1279
      %v1281 = vpop.xlane.xlu0 %1280
      %v1282 = vsel %vm1278, %v762, -inf
      %1283 = vmax.xlane.f32.xlu0 %v1282
      %v1284 = vpop.xlane.xlu0 %1283
      %v1285 = vsel %vm1278, %v767, -inf
      %1286 = vmax.xlane.f32.xlu0 %v1285
      %v1287 = vpop.xlane.xlu0 %1286
      %v1288 = vsel %vm1278, %v772, -inf
      %1289 = vmax.xlane.f32.xlu0 %v1288
      %v1290 = vpop.xlane.xlu0 %1289
      %v1291 = vsel %vm1278, %v777, -inf
      %1292 = vmax.xlane.f32.xlu0 %v1291
      %v1293 = vpop.xlane.xlu0 %1292
      %v1294 = vsel %vm1278, %v782, -inf
      %1295 = vmax.xlane.f32.xlu0 %v1294
      %v1296 = vpop.xlane.xlu0 %1295
      %v1297 = vsel %vm1278, %v787, -inf
      %1298 = vmax.xlane.f32.xlu0 %v1297
      %v1299 = vpop.xlane.xlu0 %1298
      %v1300 = vsel %vm1278, %v792, -inf
      %1301 = vmax.xlane.f32.xlu0 %v1300
      %v1302 = vpop.xlane.xlu0 %1301
      %v1303 = vsel %vm1278, %v918, -inf
      %1304 = vmax.xlane.f32.xlu0 %v1303
      %v1305 = vpop.xlane.xlu0 %1304
      %v1306 = vsel %vm1278, %v923, -inf
      %1307 = vmax.xlane.f32.xlu0 %v1306
      %v1308 = vpop.xlane.xlu0 %1307
      %v1309 = vsel %vm1278, %v928, -inf
      %1310 = vmax.xlane.f32.xlu0 %v1309
      %v1311 = vpop.xlane.xlu0 %1310
      %v1312 = vsel %vm1278, %v933, -inf
      %1313 = vmax.xlane.f32.xlu0 %v1312
      %v1314 = vpop.xlane.xlu0 %1313
      %v1315 = vsel %vm1278, %v938, -inf
      %1316 = vmax.xlane.f32.xlu0 %v1315
      %v1317 = vpop.xlane.xlu0 %1316
      %v1318 = vsel %vm1278, %v943, -inf
      %1319 = vmax.xlane.f32.xlu0 %v1318
      %v1320 = vpop.xlane.xlu0 %1319
      %v1321 = vsel %vm1278, %v948, -inf
      %1322 = vmax.xlane.f32.xlu0 %v1321
      %v1323 = vpop.xlane.xlu0 %1322
      %v1324 = vsel %vm1278, %v953, -inf
      %1325 = vmax.xlane.f32.xlu0 %v1324
      %v1326 = vpop.xlane.xlu0 %1325
      %v1327 = vsel %vm1278, %v1079, -inf
      %1328 = vmax.xlane.f32.xlu0 %v1327
      %v1329 = vpop.xlane.xlu0 %1328
      %v1330 = vsel %vm1278, %v1084, -inf
      %1331 = vmax.xlane.f32.xlu0 %v1330
      %v1332 = vpop.xlane.xlu0 %1331
      %v1333 = vsel %vm1278, %v1089, -inf
      %1334 = vmax.xlane.f32.xlu0 %v1333
      %v1335 = vpop.xlane.xlu0 %1334
      %v1336 = vsel %vm1278, %v1094, -inf
      %1337 = vmax.xlane.f32.xlu0 %v1336
      %v1338 = vpop.xlane.xlu0 %1337
      %v1339 = vsel %vm1278, %v1099, -inf
      %1340 = vmax.xlane.f32.xlu0 %v1339
      %v1341 = vpop.xlane.xlu0 %1340
      %v1342 = vsel %vm1278, %v1104, -inf
      %1343 = vmax.xlane.f32.xlu0 %v1342
      %v1344 = vpop.xlane.xlu0 %1343
      %v1345 = vsel %vm1278, %v1109, -inf
      %1346 = vmax.xlane.f32.xlu0 %v1345
      %v1347 = vpop.xlane.xlu0 %1346
      %v1348 = vsel %vm1278, %v1114, -inf
      %1349 = vmax.xlane.f32.xlu0 %v1348
      %v1350 = vpop.xlane.xlu0 %1349
      %v1351 = vsel %vm1278, %v1240, -inf
      %1352 = vmax.xlane.f32.xlu0 %v1351
      %v1353 = vpop.xlane.xlu0 %1352
      %v1354 = vsel %vm1278, %v1245, -inf
      %1355 = vmax.xlane.f32.xlu0 %v1354
      %v1356 = vpop.xlane.xlu0 %1355
      %v1357 = vsel %vm1278, %v1250, -inf
      %1358 = vmax.xlane.f32.xlu0 %v1357
      %v1359 = vpop.xlane.xlu0 %1358
      %v1360 = vsel %vm1278, %v1255, -inf
      %1361 = vmax.xlane.f32.xlu0 %v1360
      %v1362 = vpop.xlane.xlu0 %1361
      %v1363 = vsel %vm1278, %v1260, -inf
      %1364 = vmax.xlane.f32.xlu0 %v1363
      %v1365 = vpop.xlane.xlu0 %1364
      %v1366 = vsel %vm1278, %v1265, -inf
      %1367 = vmax.xlane.f32.xlu0 %v1366
      %v1368 = vpop.xlane.xlu0 %1367
      %v1369 = vsel %vm1278, %v1270, -inf
      %1370 = vmax.xlane.f32.xlu0 %v1369
      %v1371 = vpop.xlane.xlu0 %1370
      %v1372 = vsel %vm1278, %v1275, -inf
      %1373 = vmax.xlane.f32.xlu0 %v1372
      %v1374 = vpop.xlane.xlu0 %1373
      %v1375 = vsub.f32 %v757, %v1281
      %v1376 = vsub.f32 %v762, %v1284
      %v1377 = vsub.f32 %v767, %v1287
      %v1378 = vsub.f32 %v772, %v1290
      %v1379 = vsub.f32 %v777, %v1293
      %v1380 = vsub.f32 %v782, %v1296
      %v1381 = vsub.f32 %v787, %v1299
      %v1382 = vsub.f32 %v792, %v1302
      %v1383 = vsub.f32 %v918, %v1305
      %v1384 = vsub.f32 %v923, %v1308
      %v1385 = vsub.f32 %v928, %v1311
      %v1386 = vsub.f32 %v933, %v1314
      %v1387 = vsub.f32 %v938, %v1317
      %v1388 = vsub.f32 %v943, %v1320
      %v1389 = vsub.f32 %v948, %v1323
      %v1390 = vsub.f32 %v953, %v1326
      %v1391 = vsub.f32 %v1079, %v1329
      %v1392 = vsub.f32 %v1084, %v1332
      %v1393 = vsub.f32 %v1089, %v1335
      %v1394 = vsub.f32 %v1094, %v1338
      %v1395 = vsub.f32 %v1099, %v1341
      %v1396 = vsub.f32 %v1104, %v1344
      %v1397 = vsub.f32 %v1109, %v1347
      %v1398 = vsub.f32 %v1114, %v1350
      %v1399 = vsub.f32 %v1240, %v1353
      %v1400 = vsub.f32 %v1245, %v1356
      %v1401 = vsub.f32 %v1250, %v1359
      %v1402 = vsub.f32 %v1255, %v1362
      %v1403 = vsub.f32 %v1260, %v1365
      %v1404 = vsub.f32 %v1265, %v1368
      %v1405 = vsub.f32 %v1270, %v1371
      %v1406 = vsub.f32 %v1275, %v1374
      %v1407 = vmul.f32 %v1375, 1.442695
      %v1408 = vpow.pop %v1407
      %v1409 = vmul.f32 %v1376, 1.442695
      %v1410 = vpow.pop %v1409
      %v1411 = vmul.f32 %v1377, 1.442695
      %v1412 = vpow.pop %v1411
      %v1413 = vmul.f32 %v1378, 1.442695
      %v1414 = vpow.pop %v1413
      %v1415 = vmul.f32 %v1379, 1.442695
      %v1416 = vpow.pop %v1415
      %v1417 = vmul.f32 %v1380, 1.442695
      %v1418 = vpow.pop %v1417
      %v1419 = vmul.f32 %v1381, 1.442695
      %v1420 = vpow.pop %v1419
      %v1421 = vmul.f32 %v1382, 1.442695
      %v1422 = vpow.pop %v1421
      %v1423 = vmul.f32 %v1383, 1.442695
      %v1424 = vpow.pop %v1423
      %v1425 = vmul.f32 %v1384, 1.442695
      %v1426 = vpow.pop %v1425
      %v1427 = vmul.f32 %v1385, 1.442695
      %v1428 = vpow.pop %v1427
      %v1429 = vmul.f32 %v1386, 1.442695
      %v1430 = vpow.pop %v1429
      %v1431 = vmul.f32 %v1387, 1.442695
      %v1432 = vpow.pop %v1431
      %v1433 = vmul.f32 %v1388, 1.442695
      %v1434 = vpow.pop %v1433
      %v1435 = vmul.f32 %v1389, 1.442695
      %v1436 = vpow.pop %v1435
      %v1437 = vmul.f32 %v1390, 1.442695
      %v1438 = vpow.pop %v1437
      %v1439 = vmul.f32 %v1391, 1.442695
      %v1440 = vpow.pop %v1439
      %v1441 = vmul.f32 %v1392, 1.442695
      %v1442 = vpow.pop %v1441
      %v1443 = vmul.f32 %v1393, 1.442695
      %v1444 = vpow.pop %v1443
      %v1445 = vmul.f32 %v1394, 1.442695
      %v1446 = vpow.pop %v1445
      %v1447 = vmul.f32 %v1395, 1.442695
      %v1448 = vpow.pop %v1447
      %v1449 = vmul.f32 %v1396, 1.442695
      %v1450 = vpow.pop %v1449
      %v1451 = vmul.f32 %v1397, 1.442695
      %v1452 = vpow.pop %v1451
      %v1453 = vmul.f32 %v1398, 1.442695
      %v1454 = vpow.pop %v1453
      %v1455 = vmul.f32 %v1399, 1.442695
      %v1456 = vpow.pop %v1455
      %v1457 = vmul.f32 %v1400, 1.442695
      %v1458 = vpow.pop %v1457
      %v1459 = vmul.f32 %v1401, 1.442695
      %v1460 = vpow.pop %v1459
      %v1461 = vmul.f32 %v1402, 1.442695
      %v1462 = vpow.pop %v1461
      %v1463 = vmul.f32 %v1403, 1.442695
      %v1464 = vpow.pop %v1463
      %v1465 = vmul.f32 %v1404, 1.442695
      %v1466 = vpow.pop %v1465
      %v1467 = vmul.f32 %v1405, 1.442695
      %v1468 = vpow.pop %v1467
      %v1469 = vmul.f32 %v1406, 1.442695
      %v1470 = vpow.pop %v1469
      %v1471 = vsel %vm1278, %v1408, 0.0
      %1472 = vadd.xlane.f32.xlu0 %v1471
      %v1473 = vpop.xlane.xlu0 %1472
      %v1474 = vsel %vm1278, %v1410, 0.0
      %1475 = vadd.xlane.f32.xlu0 %v1474
      %v1476 = vpop.xlane.xlu0 %1475
      %v1477 = vsel %vm1278, %v1412, 0.0
      %1478 = vadd.xlane.f32.xlu0 %v1477
      %v1479 = vpop.xlane.xlu0 %1478
      %v1480 = vsel %vm1278, %v1414, 0.0
      %1481 = vadd.xlane.f32.xlu0 %v1480
      %v1482 = vpop.xlane.xlu0 %1481
      %v1483 = vsel %vm1278, %v1416, 0.0
      %1484 = vadd.xlane.f32.xlu0 %v1483
      %v1485 = vpop.xlane.xlu0 %1484
      %v1486 = vsel %vm1278, %v1418, 0.0
      %1487 = vadd.xlane.f32.xlu0 %v1486
      %v1488 = vpop.xlane.xlu0 %1487
      %v1489 = vsel %vm1278, %v1420, 0.0
      %1490 = vadd.xlane.f32.xlu0 %v1489
      %v1491 = vpop.xlane.xlu0 %1490
      %v1492 = vsel %vm1278, %v1422, 0.0
      %1493 = vadd.xlane.f32.xlu0 %v1492
      %v1494 = vpop.xlane.xlu0 %1493
      %v1495 = vsel %vm1278, %v1424, 0.0
      %1496 = vadd.xlane.f32.xlu0 %v1495
      %v1497 = vpop.xlane.xlu0 %1496
      %v1498 = vsel %vm1278, %v1426, 0.0
      %1499 = vadd.xlane.f32.xlu0 %v1498
      %v1500 = vpop.xlane.xlu0 %1499
      %v1501 = vsel %vm1278, %v1428, 0.0
      %1502 = vadd.xlane.f32.xlu0 %v1501
      %v1503 = vpop.xlane.xlu0 %1502
      %v1504 = vsel %vm1278, %v1430, 0.0
      %1505 = vadd.xlane.f32.xlu0 %v1504
      %v1506 = vpop.xlane.xlu0 %1505
      %v1507 = vsel %vm1278, %v1432, 0.0
      %1508 = vadd.xlane.f32.xlu0 %v1507
      %v1509 = vpop.xlane.xlu0 %1508
      %v1510 = vsel %vm1278, %v1434, 0.0
      %1511 = vadd.xlane.f32.xlu0 %v1510
      %v1512 = vpop.xlane.xlu0 %1511
      %v1513 = vsel %vm1278, %v1436, 0.0
      %1514 = vadd.xlane.f32.xlu0 %v1513
      %v1515 = vpop.xlane.xlu0 %1514
      %v1516 = vsel %vm1278, %v1438, 0.0
      %1517 = vadd.xlane.f32.xlu0 %v1516
      %v1518 = vpop.xlane.xlu0 %1517
      %v1519 = vsel %vm1278, %v1440, 0.0
      %1520 = vadd.xlane.f32.xlu0 %v1519
      %v1521 = vpop.xlane.xlu0 %1520
      %v1522 = vsel %vm1278, %v1442, 0.0
      %1523 = vadd.xlane.f32.xlu0 %v1522
      %v1524 = vpop.xlane.xlu0 %1523
      %v1525 = vsel %vm1278, %v1444, 0.0
      %1526 = vadd.xlane.f32.xlu0 %v1525
      %v1527 = vpop.xlane.xlu0 %1526
      %v1528 = vsel %vm1278, %v1446, 0.0
      %1529 = vadd.xlane.f32.xlu0 %v1528
      %v1530 = vpop.xlane.xlu0 %1529
      %v1531 = vsel %vm1278, %v1448, 0.0
      %1532 = vadd.xlane.f32.xlu0 %v1531
      %v1533 = vpop.xlane.xlu0 %1532
      %v1534 = vsel %vm1278, %v1450, 0.0
      %1535 = vadd.xlane.f32.xlu0 %v1534
      %v1536 = vpop.xlane.xlu0 %1535
      %v1537 = vsel %vm1278, %v1452, 0.0
      %1538 = vadd.xlane.f32.xlu0 %v1537
      %v1539 = vpop.xlane.xlu0 %1538
      %v1540 = vsel %vm1278, %v1454, 0.0
      %1541 = vadd.xlane.f32.xlu0 %v1540
      %v1542 = vpop.xlane.xlu0 %1541
      %v1543 = vsel %vm1278, %v1456, 0.0
      %1544 = vadd.xlane.f32.xlu0 %v1543
      %v1545 = vpop.xlane.xlu0 %1544
      %v1546 = vsel %vm1278, %v1458, 0.0
      %1547 = vadd.xlane.f32.xlu0 %v1546
      %v1548 = vpop.xlane.xlu0 %1547
      %v1549 = vsel %vm1278, %v1460, 0.0
      %1550 = vadd.xlane.f32.xlu0 %v1549
      %v1551 = vpop.xlane.xlu0 %1550
      %v1552 = vsel %vm1278, %v1462, 0.0
      %1553 = vadd.xlane.f32.xlu0 %v1552
      %v1554 = vpop.xlane.xlu0 %1553
      %v1555 = vsel %vm1278, %v1464, 0.0
      %1556 = vadd.xlane.f32.xlu0 %v1555
      %v1557 = vpop.xlane.xlu0 %1556
      %v1558 = vsel %vm1278, %v1466, 0.0
      %1559 = vadd.xlane.f32.xlu0 %v1558
      %v1560 = vpop.xlane.xlu0 %1559
      %v1561 = vsel %vm1278, %v1468, 0.0
      %1562 = vadd.xlane.f32.xlu0 %v1561
      %v1563 = vpop.xlane.xlu0 %1562
      %v1564 = vsel %vm1278, %v1470, 0.0
      %1565 = vadd.xlane.f32.xlu0 %v1564
      %v1566 = vpop.xlane.xlu0 %1565
      %v1567 = vrcp.pop %v1473
      %v1568 = vrcp.pop %v1476
      %v1569 = vrcp.pop %v1479
      %v1570 = vrcp.pop %v1482
      %v1571 = vrcp.pop %v1485
      %v1572 = vrcp.pop %v1488
      %v1573 = vrcp.pop %v1491
      %v1574 = vrcp.pop %v1494
      %v1575 = vrcp.pop %v1497
      %v1576 = vrcp.pop %v1500
      %v1577 = vrcp.pop %v1503
      %v1578 = vrcp.pop %v1506
      %v1579 = vrcp.pop %v1509
      %v1580 = vrcp.pop %v1512
      %v1581 = vrcp.pop %v1515
      %v1582 = vrcp.pop %v1518
      %v1583 = vrcp.pop %v1521
      %v1584 = vrcp.pop %v1524
      %v1585 = vrcp.pop %v1527
      %v1586 = vrcp.pop %v1530
      %v1587 = vrcp.pop %v1533
      %v1588 = vrcp.pop %v1536
      %v1589 = vrcp.pop %v1539
      %v1590 = vrcp.pop %v1542
      %v1591 = vrcp.pop %v1545
      %v1592 = vrcp.pop %v1548
      %v1593 = vrcp.pop %v1551
      %v1594 = vrcp.pop %v1554
      %v1595 = vrcp.pop %v1557
      %v1596 = vrcp.pop %v1560
      %v1597 = vrcp.pop %v1563
      %v1598 = vrcp.pop %v1566
      %v1599 = vmul.f32 %v1408, %v1567
      %v1600 = vmul.f32 %v1410, %v1568
      %v1601 = vmul.f32 %v1412, %v1569
      %v1602 = vmul.f32 %v1414, %v1570
      %v1603 = vmul.f32 %v1416, %v1571
      %v1604 = vmul.f32 %v1418, %v1572
      %v1605 = vmul.f32 %v1420, %v1573
      %v1606 = vmul.f32 %v1422, %v1574
      %v1607 = vmul.f32 %v1424, %v1575
      %v1608 = vmul.f32 %v1426, %v1576
      %v1609 = vmul.f32 %v1428, %v1577
      %v1610 = vmul.f32 %v1430, %v1578
      %v1611 = vmul.f32 %v1432, %v1579
      %v1612 = vmul.f32 %v1434, %v1580
      %v1613 = vmul.f32 %v1436, %v1581
      %v1614 = vmul.f32 %v1438, %v1582
      %v1615 = vmul.f32 %v1440, %v1583
      %v1616 = vmul.f32 %v1442, %v1584
      %v1617 = vmul.f32 %v1444, %v1585
      %v1618 = vmul.f32 %v1446, %v1586
      %v1619 = vmul.f32 %v1448, %v1587
      %v1620 = vmul.f32 %v1450, %v1588
      %v1621 = vmul.f32 %v1452, %v1589
      %v1622 = vmul.f32 %v1454, %v1590
      %v1623 = vmul.f32 %v1456, %v1591
      %v1624 = vmul.f32 %v1458, %v1592
      %v1625 = vmul.f32 %v1460, %v1593
      %v1626 = vmul.f32 %v1462, %v1594
      %v1627 = vmul.f32 %v1464, %v1595
      %v1628 = vmul.f32 %v1466, %v1596
      %v1629 = vmul.f32 %v1468, %v1597
      %v1630 = vmul.f32 %v1470, %v1598
      %1631 = vrot.lane.b32.xlu0 %v467, 64
      %v1632 = vpop.permute.xlu0 %1631
      %1633 = vrot.lane.b32.xlu0 %v472, 64
      %v1634 = vpop.permute.xlu0 %1633
      %1635 = vrot.lane.b32.xlu0 %v477, 64
      %v1636 = vpop.permute.xlu0 %1635
      %1637 = vrot.lane.b32.xlu0 %v482, 64
      %v1638 = vpop.permute.xlu0 %1637
      %1639 = vrot.lane.b32.xlu0 %v487, 64
      %v1640 = vpop.permute.xlu0 %1639
      %1641 = vrot.lane.b32.xlu0 %v492, 64
      %v1642 = vpop.permute.xlu0 %1641
      %1643 = vrot.lane.b32.xlu0 %v497, 64
      %v1644 = vpop.permute.xlu0 %1643
      %1645 = vrot.lane.b32.xlu0 %v502, 64
      %v1646 = vpop.permute.xlu0 %1645
      %v1656 = vsel %vm1278, %v1599, 0
      %v1659 = vsel %vm1278, %v1600, 0
      %v1662 = vsel %vm1278, %v1601, 0
      %v1665 = vsel %vm1278, %v1602, 0
      %v1668 = vsel %vm1278, %v1603, 0
      %v1671 = vsel %vm1278, %v1604, 0
      %v1674 = vsel %vm1278, %v1605, 0
      %v1677 = vsel %vm1278, %v1606, 0
      %1679 = vmatprep.subr.mxu0 0.0
      %1680 = vmatpush1.msra.mxu0 %v1632
      %1681 = vmatprep.subr.mxu0 0.0
      %1682 = vmatpush1.msra.mxu0 %v1634
      %1683 = vmatprep.subr.mxu0 0.0
      %1684 = vmatpush1.msra.mxu0 %v1636
      %1685 = vmatprep.subr.mxu0 0.0
      %1686 = vmatpush1.msra.mxu0 %v1638
      %1687 = vmatprep.subr.mxu0 0.0
      %1688 = vmatpush1.msra.mxu0 %v1640
      %1689 = vmatprep.subr.mxu0 0.0
      %1690 = vmatpush1.msra.mxu0 %v1642
      %1691 = vmatprep.subr.mxu0 0.0
      %1692 = vmatpush1.msra.mxu0 %v1644
      %1693 = vmatprep.subr.mxu0 0.0
      %1694 = vmatpush1.msra.mxu0 %v1646
      %1695 = vmatprep.subr.mxu0 0.0
      %1696 = vmatpush1.msra.mxu0 0.0
      %1697 = vmatprep.subr.mxu0 0.0
      %1698 = vmatpush1.msra.mxu0 0.0
      %1699 = vmatprep.subr.mxu0 0.0
      %1700 = vmatpush1.msra.mxu0 0.0
      %1701 = vmatprep.subr.mxu0 0.0
      %1702 = vmatpush1.msra.mxu0 0.0
      %1703 = vmatprep.subr.mxu0 0.0
      %1704 = vmatpush1.msra.mxu0 0.0
      %1705 = vmatprep.subr.mxu0 0.0
      %1706 = vmatpush1.msra.mxu0 0.0
      %1707 = vmatprep.subr.mxu0 0.0
      %1708 = vmatpush1.msra.mxu0 0.0
      %1709 = vmatprep.subr.mxu0 0.0
      %1710 = vmatpush1.msra.mxu0 0.0
      %1711 = vmatprep.subr.mxu0 0.0
      %1712 = vmatpush1.msra.mxu0 0.0
      %1713 = vmatprep.subr.mxu0 0.0
      %1714 = vmatpush1.msra.mxu0 0.0
      %1715 = vmatprep.subr.mxu0 0.0
      %1716 = vmatpush1.msra.mxu0 0.0
      %1717 = vmatprep.subr.mxu0 0.0
      %1718 = vmatpush1.msra.mxu0 0.0
      %1719 = vmatprep.subr.mxu0 0.0
      %1720 = vmatpush1.msra.mxu0 0.0
      %1721 = vmatprep.subr.mxu0 0.0
      %1722 = vmatpush1.msra.mxu0 0.0
      %1723 = vmatprep.subr.mxu0 0.0
      %1724 = vmatpush1.msra.mxu0 0.0
      %1725 = vmatprep.subr.mxu0 0.0
      %1726 = vmatpush1.msra.mxu0 0.0
      %1727 = vmatprep.subr.mxu0 0.0
      %1728 = vmatpush1.msra.mxu0 0.0
      %1729 = vmatprep.subr.mxu0 0.0
      %1730 = vmatpush1.msra.mxu0 0.0
      %1731 = vmatprep.subr.mxu0 0.0
      %1732 = vmatpush1.msra.mxu0 0.0
      %1733 = vmatprep.subr.mxu0 0.0
      %1734 = vmatpush1.msra.mxu0 0.0
      %1735 = vmatprep.subr.mxu0 0.0
      %1736 = vmatpush1.msra.mxu0 0.0
      %1737 = vmatprep.subr.mxu0 0.0
      %1738 = vmatpush1.msra.mxu0 0.0
      %1739 = vmatprep.subr.mxu0 0.0
      %1740 = vmatpush1.msra.mxu0 0.0
      %1741 = vmatprep.subr.mxu0 0.0
      %1742 = vmatpush1.msra.mxu0 0.0
      %1743 = vmatprep.mubr.f32.mxu0 0.0
      %1744 = vmatmul.mubr.f32.gmra.mrb[0].mxu0 %v1656
      %v1745 = vpop.f32.mrb[0].mxu0
      %v1746 = vadd.f32 0.0, %v1745
      %v1747 = vpop.f32.mrb[0].mxu0
      %1748 = vmatprep.mubr.f32.mxu0 0.0
      %1749 = vmatmul.mubr.f32.gmra.mrb[0].mxu0 %v1659
      %v1750 = vpop.f32.mrb[0].mxu0
      %v1751 = vadd.f32 0.0, %v1750
      %v1752 = vpop.f32.mrb[0].mxu0
      %1753 = vmatprep.mubr.f32.mxu0 0.0
      %1754 = vmatmul.mubr.f32.gmra.mrb[0].mxu0 %v1662
      %v1755 = vpop.f32.mrb[0].mxu0
      %v1756 = vadd.f32 0.0, %v1755
      %v1757 = vpop.f32.mrb[0].mxu0
      %1758 = vmatprep.mubr.f32.mxu0 0.0
      %1759 = vmatmul.mubr.f32.gmra.mrb[0].mxu0 %v1665
      %v1760 = vpop.f32.mrb[0].mxu0
      %v1761 = vadd.f32 0.0, %v1760
      %v1762 = vpop.f32.mrb[0].mxu0
      %1763 = vmatprep.mubr.f32.mxu0 0.0
      %1764 = vmatmul.mubr.f32.gmra.mrb[0].mxu0 %v1668
      %v1765 = vpop.f32.mrb[0].mxu0
      %v1766 = vadd.f32 0.0, %v1765
      %v1767 = vpop.f32.mrb[0].mxu0
      %1768 = vmatprep.mubr.f32.mxu0 0.0
      %1769 = vmatmul.mubr.f32.gmra.mrb[0].mxu0 %v1671
      %v1770 = vpop.f32.mrb[0].mxu0
      %v1771 = vadd.f32 0.0, %v1770
      %v1772 = vpop.f32.mrb[0].mxu0
      %1773 = vmatprep.mubr.f32.mxu0 0.0
      %1774 = vmatmul.mubr.f32.gmra.mrb[0].mxu0 %v1674
      %v1775 = vpop.f32.mrb[0].mxu0
      %v1776 = vadd.f32 0.0, %v1775
      %v1777 = vpop.f32.mrb[0].mxu0
      %1778 = vmatprep.mubr.f32.mxu0 0.0
      %1779 = vmatmul.mubr.f32.gmra.mrb[0].mxu0 %v1677
      %v1780 = vpop.f32.mrb[0].mxu0
      %v1781 = vadd.f32 0.0, %v1780
      %v1782 = vpop.f32.mrb[0].mxu0
      %1783 = vdwg.mxu0
      %1784 = vrot.lane.b32.xlu0 %v507, 64
      %v1785 = vpop.permute.xlu0 %1784
      %1786 = vrot.lane.b32.xlu0 %v512, 64
      %v1787 = vpop.permute.xlu0 %1786
      %1788 = vrot.lane.b32.xlu0 %v517, 64
      %v1789 = vpop.permute.xlu0 %1788
      %1790 = vrot.lane.b32.xlu0 %v522, 64
      %v1791 = vpop.permute.xlu0 %1790
      %1792 = vrot.lane.b32.xlu0 %v527, 64
      %v1793 = vpop.permute.xlu0 %1792
      %1794 = vrot.lane.b32.xlu0 %v532, 64
      %v1795 = vpop.permute.xlu0 %1794
      %1796 = vrot.lane.b32.xlu0 %v537, 64
      %v1797 = vpop.permute.xlu0 %1796
      %1798 = vrot.lane.b32.xlu0 %v542, 64
      %v1799 = vpop.permute.xlu0 %1798
      %v1809 = vsel %vm1278, %v1607, 0
      %v1812 = vsel %vm1278, %v1608, 0
      %v1815 = vsel %vm1278, %v1609, 0
      %v1818 = vsel %vm1278, %v1610, 0
      %v1821 = vsel %vm1278, %v1611, 0
      %v1824 = vsel %vm1278, %v1612, 0
      %v1827 = vsel %vm1278, %v1613, 0
      %v1830 = vsel %vm1278, %v1614, 0
      %1832 = vmatprep.subr.mxu0 0.0
      %1833 = vmatpush1.msra.mxu0 %v1785
      %1834 = vmatprep.subr.mxu0 0.0
      %1835 = vmatpush1.msra.mxu0 %v1787
      %1836 = vmatprep.subr.mxu0 0.0
      %1837 = vmatpush1.msra.mxu0 %v1789
      %1838 = vmatprep.subr.mxu0 0.0
      %1839 = vmatpush1.msra.mxu0 %v1791
      %1840 = vmatprep.subr.mxu0 0.0
      %1841 = vmatpush1.msra.mxu0 %v1793
      %1842 = vmatprep.subr.mxu0 0.0
      %1843 = vmatpush1.msra.mxu0 %v1795
      %1844 = vmatprep.subr.mxu0 0.0
      %1845 = vmatpush1.msra.mxu0 %v1797
      %1846 = vmatprep.subr.mxu0 0.0
      %1847 = vmatpush1.msra.mxu0 %v1799
      %1848 = vmatprep.subr.mxu0 0.0
      %1849 = vmatpush1.msra.mxu0 0.0
      %1850 = vmatprep.subr.mxu0 0.0
      %1851 = vmatpush1.msra.mxu0 0.0
      %1852 = vmatprep.subr.mxu0 0.0
      %1853 = vmatpush1.msra.mxu0 0.0
      %1854 = vmatprep.subr.mxu0 0.0
      %1855 = vmatpush1.msra.mxu0 0.0
      %1856 = vmatprep.subr.mxu0 0.0
      %1857 = vmatpush1.msra.mxu0 0.0
      %1858 = vmatprep.subr.mxu0 0.0
      %1859 = vmatpush1.msra.mxu0 0.0
      %1860 = vmatprep.subr.mxu0 0.0
      %1861 = vmatpush1.msra.mxu0 0.0
      %1862 = vmatprep.subr.mxu0 0.0
      %1863 = vmatpush1.msra.mxu0 0.0
      %1864 = vmatprep.subr.mxu0 0.0
      %1865 = vmatpush1.msra.mxu0 0.0
      %1866 = vmatprep.subr.mxu0 0.0
      %1867 = vmatpush1.msra.mxu0 0.0
      %1868 = vmatprep.subr.mxu0 0.0
      %1869 = vmatpush1.msra.mxu0 0.0
      %1870 = vmatprep.subr.mxu0 0.0
      %1871 = vmatpush1.msra.mxu0 0.0
      %1872 = vmatprep.subr.mxu0 0.0
      %1873 = vmatpush1.msra.mxu0 0.0
      %1874 = vmatprep.subr.mxu0 0.0
      %1875 = vmatpush1.msra.mxu0 0.0
      %1876 = vmatprep.subr.mxu0 0.0
      %1877 = vmatpush1.msra.mxu0 0.0
      %1878 = vmatprep.subr.mxu0 0.0
      %1879 = vmatpush1.msra.mxu0 0.0
      %1880 = vmatprep.subr.mxu0 0.0
      %1881 = vmatpush1.msra.mxu0 0.0
      %1882 = vmatprep.subr.mxu0 0.0
      %1883 = vmatpush1.msra.mxu0 0.0
      %1884 = vmatprep.subr.mxu0 0.0
      %1885 = vmatpush1.msra.mxu0 0.0
      %1886 = vmatprep.subr.mxu0 0.0
      %1887 = vmatpush1.msra.mxu0 0.0
      %1888 = vmatprep.subr.mxu0 0.0
      %1889 = vmatpush1.msra.mxu0 0.0
      %1890 = vmatprep.subr.mxu0 0.0
      %1891 = vmatpush1.msra.mxu0 0.0
      %1892 = vmatprep.subr.mxu0 0.0
      %1893 = vmatpush1.msra.mxu0 0.0
      %1894 = vmatprep.subr.mxu0 0.0
      %1895 = vmatpush1.msra.mxu0 0.0
      %1896 = vmatprep.mubr.f32.mxu0 0.0
      %1897 = vmatmul.mubr.f32.gmra.mrb[0].mxu0 %v1809
      %v1898 = vpop.f32.mrb[0].mxu0
      %v1899 = vadd.f32 0.0, %v1898
      %v1900 = vpop.f32.mrb[0].mxu0
      %1901 = vmatprep.mubr.f32.mxu0 0.0
      %1902 = vmatmul.mubr.f32.gmra.mrb[0].mxu0 %v1812
      %v1903 = vpop.f32.mrb[0].mxu0
      %v1904 = vadd.f32 0.0, %v1903
      %v1905 = vpop.f32.mrb[0].mxu0
      %1906 = vmatprep.mubr.f32.mxu0 0.0
      %1907 = vmatmul.mubr.f32.gmra.mrb[0].mxu0 %v1815
      %v1908 = vpop.f32.mrb[0].mxu0
      %v1909 = vadd.f32 0.0, %v1908
      %v1910 = vpop.f32.mrb[0].mxu0
      %1911 = vmatprep.mubr.f32.mxu0 0.0
      %1912 = vmatmul.mubr.f32.gmra.mrb[0].mxu0 %v1818
      %v1913 = vpop.f32.mrb[0].mxu0
      %v1914 = vadd.f32 0.0, %v1913
      %v1915 = vpop.f32.mrb[0].mxu0
      %1916 = vmatprep.mubr.f32.mxu0 0.0
      %1917 = vmatmul.mubr.f32.gmra.mrb[0].mxu0 %v1821
      %v1918 = vpop.f32.mrb[0].mxu0
      %v1919 = vadd.f32 0.0, %v1918
      %v1920 = vpop.f32.mrb[0].mxu0
      %1921 = vmatprep.mubr.f32.mxu0 0.0
      %1922 = vmatmul.mubr.f32.gmra.mrb[0].mxu0 %v1824
      %v1923 = vpop.f32.mrb[0].mxu0
      %v1924 = vadd.f32 0.0, %v1923
      %v1925 = vpop.f32.mrb[0].mxu0
      %1926 = vmatprep.mubr.f32.mxu0 0.0
      %1927 = vmatmul.mubr.f32.gmra.mrb[0].mxu0 %v1827
      %v1928 = vpop.f32.mrb[0].mxu0
      %v1929 = vadd.f32 0.0, %v1928
      %v1930 = vpop.f32.mrb[0].mxu0
      %1931 = vmatprep.mubr.f32.mxu0 0.0
      %1932 = vmatmul.mubr.f32.gmra.mrb[0].mxu0 %v1830
      %v1933 = vpop.f32.mrb[0].mxu0
      %v1934 = vadd.f32 0.0, %v1933
      %v1935 = vpop.f32.mrb[0].mxu0
      %1936 = vdwg.mxu0
      %1937 = vrot.lane.b32.xlu0 %v547, 64
      %v1938 = vpop.permute.xlu0 %1937
      %1939 = vrot.lane.b32.xlu0 %v552, 64
      %v1940 = vpop.permute.xlu0 %1939
      %1941 = vrot.lane.b32.xlu0 %v557, 64
      %v1942 = vpop.permute.xlu0 %1941
      %1943 = vrot.lane.b32.xlu0 %v562, 64
      %v1944 = vpop.permute.xlu0 %1943
      %1945 = vrot.lane.b32.xlu0 %v567, 64
      %v1946 = vpop.permute.xlu0 %1945
      %1947 = vrot.lane.b32.xlu0 %v572, 64
      %v1948 = vpop.permute.xlu0 %1947
      %1949 = vrot.lane.b32.xlu0 %v577, 64
      %v1950 = vpop.permute.xlu0 %1949
      %1951 = vrot.lane.b32.xlu0 %v582, 64
      %v1952 = vpop.permute.xlu0 %1951
      %v1962 = vsel %vm1278, %v1615, 0
      %v1965 = vsel %vm1278, %v1616, 0
      %v1968 = vsel %vm1278, %v1617, 0
      %v1971 = vsel %vm1278, %v1618, 0
      %v1974 = vsel %vm1278, %v1619, 0
      %v1977 = vsel %vm1278, %v1620, 0
      %v1980 = vsel %vm1278, %v1621, 0
      %v1983 = vsel %vm1278, %v1622, 0
      %1985 = vmatprep.subr.mxu0 0.0
      %1986 = vmatpush1.msra.mxu0 %v1938
      %1987 = vmatprep.subr.mxu0 0.0
      %1988 = vmatpush1.msra.mxu0 %v1940
      %1989 = vmatprep.subr.mxu0 0.0
      %1990 = vmatpush1.msra.mxu0 %v1942
      %1991 = vmatprep.subr.mxu0 0.0
      %1992 = vmatpush1.msra.mxu0 %v1944
      %1993 = vmatprep.subr.mxu0 0.0
      %1994 = vmatpush1.msra.mxu0 %v1946
      %1995 = vmatprep.subr.mxu0 0.0
      %1996 = vmatpush1.msra.mxu0 %v1948
      %1997 = vmatprep.subr.mxu0 0.0
      %1998 = vmatpush1.msra.mxu0 %v1950
      %1999 = vmatprep.subr.mxu0 0.0
      %2000 = vmatpush1.msra.mxu0 %v1952
      %2001 = vmatprep.subr.mxu0 0.0
      %2002 = vmatpush1.msra.mxu0 0.0
      %2003 = vmatprep.subr.mxu0 0.0
      %2004 = vmatpush1.msra.mxu0 0.0
      %2005 = vmatprep.subr.mxu0 0.0
      %2006 = vmatpush1.msra.mxu0 0.0
      %2007 = vmatprep.subr.mxu0 0.0
      %2008 = vmatpush1.msra.mxu0 0.0
      %2009 = vmatprep.subr.mxu0 0.0
      %2010 = vmatpush1.msra.mxu0 0.0
      %2011 = vmatprep.subr.mxu0 0.0
      %2012 = vmatpush1.msra.mxu0 0.0
      %2013 = vmatprep.subr.mxu0 0.0
      %2014 = vmatpush1.msra.mxu0 0.0
      %2015 = vmatprep.subr.mxu0 0.0
      %2016 = vmatpush1.msra.mxu0 0.0
      %2017 = vmatprep.subr.mxu0 0.0
      %2018 = vmatpush1.msra.mxu0 0.0
      %2019 = vmatprep.subr.mxu0 0.0
      %2020 = vmatpush1.msra.mxu0 0.0
      %2021 = vmatprep.subr.mxu0 0.0
      %2022 = vmatpush1.msra.mxu0 0.0
      %2023 = vmatprep.subr.mxu0 0.0
      %2024 = vmatpush1.msra.mxu0 0.0
      %2025 = vmatprep.subr.mxu0 0.0
      %2026 = vmatpush1.msra.mxu0 0.0
      %2027 = vmatprep.subr.mxu0 0.0
      %2028 = vmatpush1.msra.mxu0 0.0
      %2029 = vmatprep.subr.mxu0 0.0
      %2030 = vmatpush1.msra.mxu0 0.0
      %2031 = vmatprep.subr.mxu0 0.0
      %2032 = vmatpush1.msra.mxu0 0.0
      %2033 = vmatprep.subr.mxu0 0.0
      %2034 = vmatpush1.msra.mxu0 0.0
      %2035 = vmatprep.subr.mxu0 0.0
      %2036 = vmatpush1.msra.mxu0 0.0
      %2037 = vmatprep.subr.mxu0 0.0
      %2038 = vmatpush1.msra.mxu0 0.0
      %2039 = vmatprep.subr.mxu0 0.0
      %2040 = vmatpush1.msra.mxu0 0.0
      %2041 = vmatprep.subr.mxu0 0.0
      %2042 = vmatpush1.msra.mxu0 0.0
      %2043 = vmatprep.subr.mxu0 0.0
      %2044 = vmatpush1.msra.mxu0 0.0
      %2045 = vmatprep.subr.mxu0 0.0
      %2046 = vmatpush1.msra.mxu0 0.0
      %2047 = vmatprep.subr.mxu0 0.0
      %2048 = vmatpush1.msra.mxu0 0.0
      %2049 = vmatprep.mubr.f32.mxu0 0.0
      %2050 = vmatmul.mubr.f32.gmra.mrb[0].mxu0 %v1962
      %v2051 = vpop.f32.mrb[0].mxu0
      %v2052 = vadd.f32 0.0, %v2051
      %v2053 = vpop.f32.mrb[0].mxu0
      %2054 = vmatprep.mubr.f32.mxu0 0.0
      %2055 = vmatmul.mubr.f32.gmra.mrb[0].mxu0 %v1965
      %v2056 = vpop.f32.mrb[0].mxu0
      %v2057 = vadd.f32 0.0, %v2056
      %v2058 = vpop.f32.mrb[0].mxu0
      %2059 = vmatprep.mubr.f32.mxu0 0.0
      %2060 = vmatmul.mubr.f32.gmra.mrb[0].mxu0 %v1968
      %v2061 = vpop.f32.mrb[0].mxu0
      %v2062 = vadd.f32 0.0, %v2061
      %v2063 = vpop.f32.mrb[0].mxu0
      %2064 = vmatprep.mubr.f32.mxu0 0.0
      %2065 = vmatmul.mubr.f32.gmra.mrb[0].mxu0 %v1971
      %v2066 = vpop.f32.mrb[0].mxu0
      %v2067 = vadd.f32 0.0, %v2066
      %v2068 = vpop.f32.mrb[0].mxu0
      %2069 = vmatprep.mubr.f32.mxu0 0.0
      %2070 = vmatmul.mubr.f32.gmra.mrb[0].mxu0 %v1974
      %v2071 = vpop.f32.mrb[0].mxu0
      %v2072 = vadd.f32 0.0, %v2071
      %v2073 = vpop.f32.mrb[0].mxu0
      %2074 = vmatprep.mubr.f32.mxu0 0.0
      %2075 = vmatmul.mubr.f32.gmra.mrb[0].mxu0 %v1977
      %v2076 = vpop.f32.mrb[0].mxu0
      %v2077 = vadd.f32 0.0, %v2076
      %v2078 = vpop.f32.mrb[0].mxu0
      %2079 = vmatprep.mubr.f32.mxu0 0.0
      %2080 = vmatmul.mubr.f32.gmra.mrb[0].mxu0 %v1980
      %v2081 = vpop.f32.mrb[0].mxu0
      %v2082 = vadd.f32 0.0, %v2081
      %v2083 = vpop.f32.mrb[0].mxu0
      %2084 = vmatprep.mubr.f32.mxu0 0.0
      %2085 = vmatmul.mubr.f32.gmra.mrb[0].mxu0 %v1983
      %v2086 = vpop.f32.mrb[0].mxu0
      %v2087 = vadd.f32 0.0, %v2086
      %v2088 = vpop.f32.mrb[0].mxu0
      %2089 = vdwg.mxu0
      %2090 = vrot.lane.b32.xlu0 %v587, 64
      %v2091 = vpop.permute.xlu0 %2090
      %2092 = vrot.lane.b32.xlu0 %v592, 64
      %v2093 = vpop.permute.xlu0 %2092
      %2094 = vrot.lane.b32.xlu0 %v597, 64
      %v2095 = vpop.permute.xlu0 %2094
      %2096 = vrot.lane.b32.xlu0 %v602, 64
      %v2097 = vpop.permute.xlu0 %2096
      %2098 = vrot.lane.b32.xlu0 %v607, 64
      %v2099 = vpop.permute.xlu0 %2098
      %2100 = vrot.lane.b32.xlu0 %v612, 64
      %v2101 = vpop.permute.xlu0 %2100
      %2102 = vrot.lane.b32.xlu0 %v617, 64
      %v2103 = vpop.permute.xlu0 %2102
      %2104 = vrot.lane.b32.xlu0 %v622, 64
      %v2105 = vpop.permute.xlu0 %2104
      %v2115 = vsel %vm1278, %v1623, 0
      %v2118 = vsel %vm1278, %v1624, 0
      %v2121 = vsel %vm1278, %v1625, 0
      %v2124 = vsel %vm1278, %v1626, 0
      %v2127 = vsel %vm1278, %v1627, 0
      %v2130 = vsel %vm1278, %v1628, 0
      %v2133 = vsel %vm1278, %v1629, 0
      %v2136 = vsel %vm1278, %v1630, 0
      %2138 = vmatprep.subr.mxu0 0.0
      %2139 = vmatpush1.msra.mxu0 %v2091
      %2140 = vmatprep.subr.mxu0 0.0
      %2141 = vmatpush1.msra.mxu0 %v2093
      %2142 = vmatprep.subr.mxu0 0.0
      %2143 = vmatpush1.msra.mxu0 %v2095
      %2144 = vmatprep.subr.mxu0 0.0
      %2145 = vmatpush1.msra.mxu0 %v2097
      %2146 = vmatprep.subr.mxu0 0.0
      %2147 = vmatpush1.msra.mxu0 %v2099
      %2148 = vmatprep.subr.mxu0 0.0
      %2149 = vmatpush1.msra.mxu0 %v2101
      %2150 = vmatprep.subr.mxu0 0.0
      %2151 = vmatpush1.msra.mxu0 %v2103
      %2152 = vmatprep.subr.mxu0 0.0
      %2153 = vmatpush1.msra.mxu0 %v2105
      %2154 = vmatprep.subr.mxu0 0.0
      %2155 = vmatpush1.msra.mxu0 0.0
      %2156 = vmatprep.subr.mxu0 0.0
      %2157 = vmatpush1.msra.mxu0 0.0
      %2158 = vmatprep.subr.mxu0 0.0
      %2159 = vmatpush1.msra.mxu0 0.0
      %2160 = vmatprep.subr.mxu0 0.0
      %2161 = vmatpush1.msra.mxu0 0.0
      %2162 = vmatprep.subr.mxu0 0.0
      %2163 = vmatpush1.msra.mxu0 0.0
      %2164 = vmatprep.subr.mxu0 0.0
      %2165 = vmatpush1.msra.mxu0 0.0
      %2166 = vmatprep.subr.mxu0 0.0
      %2167 = vmatpush1.msra.mxu0 0.0
      %2168 = vmatprep.subr.mxu0 0.0
      %2169 = vmatpush1.msra.mxu0 0.0
      %2170 = vmatprep.subr.mxu0 0.0
      %2171 = vmatpush1.msra.mxu0 0.0
      %2172 = vmatprep.subr.mxu0 0.0
      %2173 = vmatpush1.msra.mxu0 0.0
      %2174 = vmatprep.subr.mxu0 0.0
      %2175 = vmatpush1.msra.mxu0 0.0
      %2176 = vmatprep.subr.mxu0 0.0
      %2177 = vmatpush1.msra.mxu0 0.0
      %2178 = vmatprep.subr.mxu0 0.0
      %2179 = vmatpush1.msra.mxu0 0.0
      %2180 = vmatprep.subr.mxu0 0.0
      %2181 = vmatpush1.msra.mxu0 0.0
      %2182 = vmatprep.subr.mxu0 0.0
      %2183 = vmatpush1.msra.mxu0 0.0
      %2184 = vmatprep.subr.mxu0 0.0
      %2185 = vmatpush1.msra.mxu0 0.0
      %2186 = vmatprep.subr.mxu0 0.0
      %2187 = vmatpush1.msra.mxu0 0.0
      %2188 = vmatprep.subr.mxu0 0.0
      %2189 = vmatpush1.msra.mxu0 0.0
      %2190 = vmatprep.subr.mxu0 0.0
      %2191 = vmatpush1.msra.mxu0 0.0
      %2192 = vmatprep.subr.mxu0 0.0
      %2193 = vmatpush1.msra.mxu0 0.0
      %2194 = vmatprep.subr.mxu0 0.0
      %2195 = vmatpush1.msra.mxu0 0.0
      %2196 = vmatprep.subr.mxu0 0.0
      %2197 = vmatpush1.msra.mxu0 0.0
      %2198 = vmatprep.subr.mxu0 0.0
      %2199 = vmatpush1.msra.mxu0 0.0
      %2200 = vmatprep.subr.mxu0 0.0
      %2201 = vmatpush1.msra.mxu0 0.0
      %2202 = vmatprep.mubr.f32.mxu0 0.0
      %2203 = vmatmul.mubr.f32.gmra.mrb[0].mxu0 %v2115
      %v2204 = vpop.f32.mrb[0].mxu0
      %v2205 = vadd.f32 0.0, %v2204
      %v2206 = vpop.f32.mrb[0].mxu0
      %2207 = vmatprep.mubr.f32.mxu0 0.0
      %2208 = vmatmul.mubr.f32.gmra.mrb[0].mxu0 %v2118
      %v2209 = vpop.f32.mrb[0].mxu0
      %v2210 = vadd.f32 0.0, %v2209
      %v2211 = vpop.f32.mrb[0].mxu0
      %2212 = vmatprep.mubr.f32.mxu0 0.0
      %2213 = vmatmul.mubr.f32.gmra.mrb[0].mxu0 %v2121
      %v2214 = vpop.f32.mrb[0].mxu0
      %v2215 = vadd.f32 0.0, %v2214
      %v2216 = vpop.f32.mrb[0].mxu0
      %2217 = vmatprep.mubr.f32.mxu0 0.0
      %2218 = vmatmul.mubr.f32.gmra.mrb[0].mxu0 %v2124
      %v2219 = vpop.f32.mrb[0].mxu0
      %v2220 = vadd.f32 0.0, %v2219
      %v2221 = vpop.f32.mrb[0].mxu0
      %2222 = vmatprep.mubr.f32.mxu0 0.0
      %2223 = vmatmul.mubr.f32.gmra.mrb[0].mxu0 %v2127
      %v2224 = vpop.f32.mrb[0].mxu0
      %v2225 = vadd.f32 0.0, %v2224
      %v2226 = vpop.f32.mrb[0].mxu0
      %2227 = vmatprep.mubr.f32.mxu0 0.0
      %2228 = vmatmul.mubr.f32.gmra.mrb[0].mxu0 %v2130
      %v2229 = vpop.f32.mrb[0].mxu0
      %v2230 = vadd.f32 0.0, %v2229
      %v2231 = vpop.f32.mrb[0].mxu0
      %2232 = vmatprep.mubr.f32.mxu0 0.0
      %2233 = vmatmul.mubr.f32.gmra.mrb[0].mxu0 %v2133
      %v2234 = vpop.f32.mrb[0].mxu0
      %v2235 = vadd.f32 0.0, %v2234
      %v2236 = vpop.f32.mrb[0].mxu0
      %2237 = vmatprep.mubr.f32.mxu0 0.0
      %2238 = vmatmul.mubr.f32.gmra.mrb[0].mxu0 %v2136
      %v2239 = vpop.f32.mrb[0].mxu0
      %v2240 = vadd.f32 0.0, %v2239
      %v2241 = vpop.f32.mrb[0].mxu0
      %2242 = vdwg.mxu0
      %v2243 = vld [vmem:[%s4] sm:$0xff]
      %s2244 = scalar_lea.vmem %s3, 64
      %v2245 = vld [vmem:[%s2244] sm:$0xff]
      %v2246 = vld [vmem:[%s2244 + $0x8] sm:$0xff]
      %v2247 = vld [vmem:[%s2244 + $0x10] sm:$0xff]
      %v2248 = vld [vmem:[%s2244 + $0x18] sm:$0xff]
      %v2249 = vld [vmem:[%s2244 + $0x20] sm:$0xff]
      %v2250 = vld [vmem:[%s2244 + $0x28] sm:$0xff]
      %v2251 = vld [vmem:[%s2244 + $0x30] sm:$0xff]
      %v2252 = vld [vmem:[%s2244 + $0x38] sm:$0xff]
      %2253 = vrot.lane.b32.xlu0 %v467, 120
      %v2254 = vpop.permute.xlu0 %2253
      %2255 = vrot.lane.b32.xlu0 %v472, 120
      %v2256 = vpop.permute.xlu0 %2255
      %2257 = vrot.lane.b32.xlu0 %v477, 120
      %v2258 = vpop.permute.xlu0 %2257
      %2259 = vrot.lane.b32.xlu0 %v482, 120
      %v2260 = vpop.permute.xlu0 %2259
      %2261 = vrot.lane.b32.xlu0 %v487, 120
      %v2262 = vpop.permute.xlu0 %2261
      %2263 = vrot.lane.b32.xlu0 %v492, 120
      %v2264 = vpop.permute.xlu0 %2263
      %2265 = vrot.lane.b32.xlu0 %v497, 120
      %v2266 = vpop.permute.xlu0 %2265
      %2267 = vrot.lane.b32.xlu0 %v502, 120
      %v2268 = vpop.permute.xlu0 %2267
      %2269 = vrot.lane.b32.xlu0 %v467, 88
      %v2270 = vpop.permute.xlu0 %2269
      %2271 = vrot.lane.b32.xlu0 %v472, 88
      %v2272 = vpop.permute.xlu0 %2271
      %2273 = vrot.lane.b32.xlu0 %v477, 88
      %v2274 = vpop.permute.xlu0 %2273
      %2275 = vrot.lane.b32.xlu0 %v482, 88
      %v2276 = vpop.permute.xlu0 %2275
      %2277 = vrot.lane.b32.xlu0 %v487, 88
      %v2278 = vpop.permute.xlu0 %2277
      %2279 = vrot.lane.b32.xlu0 %v492, 88
      %v2280 = vpop.permute.xlu0 %2279
      %2281 = vrot.lane.b32.xlu0 %v497, 88
      %v2282 = vpop.permute.xlu0 %2281
      %2283 = vrot.lane.b32.xlu0 %v502, 88
      %v2284 = vpop.permute.xlu0 %2283
      %v2285 = vsel %vm657, %v2254, 0
      %v2287 = vsel %vm657, %v2256, 0
      %v2289 = vsel %vm657, %v2258, 0
      %v2291 = vsel %vm657, %v2260, 0
      %v2293 = vsel %vm657, %v2262, 0
      %v2295 = vsel %vm657, %v2264, 0
      %v2297 = vsel %vm657, %v2266, 0
      %v2299 = vsel %vm657, %v2268, 0
      %v2301 = vsel %vm657, %v2270, 0
      %v2303 = vsel %vm657, %v2272, 0
      %v2305 = vsel %vm657, %v2274, 0
      %v2307 = vsel %vm657, %v2276, 0
      %v2309 = vsel %vm657, %v2278, 0
      %v2311 = vsel %vm657, %v2280, 0
      %v2313 = vsel %vm657, %v2282, 0
      %v2315 = vsel %vm657, %v2284, 0
      %2317 = vmatprep.subr.mxu0 0.0
      %2318 = vmatpush1.xpose.msra.mxu0 %v2301
      %2319 = vmatprep.subr.mxu0 0.0
      %2320 = vmatpush1.xpose.msra.mxu0 %v2303
      %2321 = vmatprep.subr.mxu0 0.0
      %2322 = vmatpush1.xpose.msra.mxu0 %v2305
      %2323 = vmatprep.subr.mxu0 0.0
      %2324 = vmatpush1.xpose.msra.mxu0 %v2307
      %2325 = vmatprep.subr.mxu0 0.0
      %2326 = vmatpush1.xpose.msra.mxu0 %v2309
      %2327 = vmatprep.subr.mxu0 0.0
      %2328 = vmatpush1.xpose.msra.mxu0 %v2311
      %2329 = vmatprep.subr.mxu0 0.0
      %2330 = vmatpush1.xpose.msra.mxu0 %v2313
      %2331 = vmatprep.subr.mxu0 0.0
      %2332 = vmatpush1.xpose.msra.mxu0 %v2315
      %2333 = vmatprep.subr.mxu0 0.0
      %2334 = vmatpush1.xpose.msra.mxu0 0.0
      %2335 = vmatprep.subr.mxu0 0.0
      %2336 = vmatpush1.xpose.msra.mxu0 0.0
      %2337 = vmatprep.subr.mxu0 0.0
      %2338 = vmatpush1.xpose.msra.mxu0 0.0
      %2339 = vmatprep.subr.mxu0 0.0
      %2340 = vmatpush1.xpose.msra.mxu0 0.0
      %2341 = vmatprep.subr.mxu0 0.0
      %2342 = vmatpush1.xpose.msra.mxu0 0.0
      %2343 = vmatprep.subr.mxu0 0.0
      %2344 = vmatpush1.xpose.msra.mxu0 0.0
      %2345 = vmatprep.subr.mxu0 0.0
      %2346 = vmatpush1.xpose.msra.mxu0 0.0
      %2347 = vmatprep.subr.mxu0 0.0
      %2348 = vmatpush1.xpose.msra.mxu0 0.0
      %2349 = vmatprep.subr.mxu0 0.0
      %2350 = vmatpush1.xpose.msra.mxu0 0.0
      %2351 = vmatprep.subr.mxu0 0.0
      %2352 = vmatpush1.xpose.msra.mxu0 0.0
      %2353 = vmatprep.subr.mxu0 0.0
      %2354 = vmatpush1.xpose.msra.mxu0 0.0
      %2355 = vmatprep.subr.mxu0 0.0
      %2356 = vmatpush1.xpose.msra.mxu0 0.0
      %2357 = vmatprep.subr.mxu0 0.0
      %2358 = vmatpush1.xpose.msra.mxu0 0.0
      %2359 = vmatprep.subr.mxu0 0.0
      %2360 = vmatpush1.xpose.msra.mxu0 0.0
      %2361 = vmatprep.subr.mxu0 0.0
      %2362 = vmatpush1.xpose.msra.mxu0 0.0
      %2363 = vmatprep.subr.mxu0 0.0
      %2364 = vmatpush1.xpose.msra.mxu0 0.0
      %2365 = vmatprep.subr.mxu0 0.0
      %2366 = vmatpush1.xpose.msra.mxu0 0.0
      %2367 = vmatprep.subr.mxu0 0.0
      %2368 = vmatpush1.xpose.msra.mxu0 0.0
      %2369 = vmatprep.subr.mxu0 0.0
      %2370 = vmatpush1.xpose.msra.mxu0 0.0
      %2371 = vmatprep.subr.mxu0 0.0
      %2372 = vmatpush1.xpose.msra.mxu0 0.0
      %2373 = vmatprep.subr.mxu0 0.0
      %2374 = vmatpush1.xpose.msra.mxu0 0.0
      %2375 = vmatprep.subr.mxu0 0.0
      %2376 = vmatpush1.xpose.msra.mxu0 0.0
      %2377 = vmatprep.subr.mxu0 0.0
      %2378 = vmatpush1.xpose.msra.mxu0 0.0
      %2379 = vmatprep.subr.mxu0 0.0
      %2380 = vmatpush1.xpose.msra.mxu0 0.0
      %2381 = vmatprep.mubr.f32.mxu0 0.0
      %2382 = vmatmul.mubr.f32.gmra.mrb[0].mxu0 %v2285
      %v2383 = vpop.f32.mrb[0].mxu0
      %v2384 = vadd.f32 %v2245, %v2383
      %v2385 = vpop.f32.mrb[0].mxu0
      %2386 = vmatprep.mubr.f32.mxu0 0.0
      %2387 = vmatmul.mubr.f32.gmra.mrb[0].mxu0 %v2287
      %v2388 = vpop.f32.mrb[0].mxu0
      %v2389 = vadd.f32 %v2246, %v2388
      %v2390 = vpop.f32.mrb[0].mxu0
      %2391 = vmatprep.mubr.f32.mxu0 0.0
      %2392 = vmatmul.mubr.f32.gmra.mrb[0].mxu0 %v2289
      %v2393 = vpop.f32.mrb[0].mxu0
      %v2394 = vadd.f32 %v2247, %v2393
      %v2395 = vpop.f32.mrb[0].mxu0
      %2396 = vmatprep.mubr.f32.mxu0 0.0
      %2397 = vmatmul.mubr.f32.gmra.mrb[0].mxu0 %v2291
      %v2398 = vpop.f32.mrb[0].mxu0
      %v2399 = vadd.f32 %v2248, %v2398
      %v2400 = vpop.f32.mrb[0].mxu0
      %2401 = vmatprep.mubr.f32.mxu0 0.0
      %2402 = vmatmul.mubr.f32.gmra.mrb[0].mxu0 %v2293
      %v2403 = vpop.f32.mrb[0].mxu0
      %v2404 = vadd.f32 %v2249, %v2403
      %v2405 = vpop.f32.mrb[0].mxu0
      %2406 = vmatprep.mubr.f32.mxu0 0.0
      %2407 = vmatmul.mubr.f32.gmra.mrb[0].mxu0 %v2295
      %v2408 = vpop.f32.mrb[0].mxu0
      %v2409 = vadd.f32 %v2250, %v2408
      %v2410 = vpop.f32.mrb[0].mxu0
      %2411 = vmatprep.mubr.f32.mxu0 0.0
      %2412 = vmatmul.mubr.f32.gmra.mrb[0].mxu0 %v2297
      %v2413 = vpop.f32.mrb[0].mxu0
      %v2414 = vadd.f32 %v2251, %v2413
      %v2415 = vpop.f32.mrb[0].mxu0
      %2416 = vmatprep.mubr.f32.mxu0 0.0
      %2417 = vmatmul.mubr.f32.gmra.mrb[0].mxu0 %v2299
      %v2418 = vpop.f32.mrb[0].mxu0
      %v2419 = vadd.f32 %v2252, %v2418
      %v2420 = vpop.f32.mrb[0].mxu0
      %2421 = vdwg.mxu0
      %2422 = vrot.lane.b32.xlu0 %v507, 120
      %v2423 = vpop.permute.xlu0 %2422
      %2424 = vrot.lane.b32.xlu0 %v512, 120
      %v2425 = vpop.permute.xlu0 %2424
      %2426 = vrot.lane.b32.xlu0 %v517, 120
      %v2427 = vpop.permute.xlu0 %2426
      %2428 = vrot.lane.b32.xlu0 %v522, 120
      %v2429 = vpop.permute.xlu0 %2428
      %2430 = vrot.lane.b32.xlu0 %v527, 120
      %v2431 = vpop.permute.xlu0 %2430
      %2432 = vrot.lane.b32.xlu0 %v532, 120
      %v2433 = vpop.permute.xlu0 %2432
      %2434 = vrot.lane.b32.xlu0 %v537, 120
      %v2435 = vpop.permute.xlu0 %2434
      %2436 = vrot.lane.b32.xlu0 %v542, 120
      %v2437 = vpop.permute.xlu0 %2436
      %2438 = vrot.lane.b32.xlu0 %v507, 88
      %v2439 = vpop.permute.xlu0 %2438
      %2440 = vrot.lane.b32.xlu0 %v512, 88
      %v2441 = vpop.permute.xlu0 %2440
      %2442 = vrot.lane.b32.xlu0 %v517, 88
      %v2443 = vpop.permute.xlu0 %2442
      %2444 = vrot.lane.b32.xlu0 %v522, 88
      %v2445 = vpop.permute.xlu0 %2444
      %2446 = vrot.lane.b32.xlu0 %v527, 88
      %v2447 = vpop.permute.xlu0 %2446
      %2448 = vrot.lane.b32.xlu0 %v532, 88
      %v2449 = vpop.permute.xlu0 %2448
      %2450 = vrot.lane.b32.xlu0 %v537, 88
      %v2451 = vpop.permute.xlu0 %2450
      %2452 = vrot.lane.b32.xlu0 %v542, 88
      %v2453 = vpop.permute.xlu0 %2452
      %v2454 = vsel %vm657, %v2423, 0
      %v2456 = vsel %vm657, %v2425, 0
      %v2458 = vsel %vm657, %v2427, 0
      %v2460 = vsel %vm657, %v2429, 0
      %v2462 = vsel %vm657, %v2431, 0
      %v2464 = vsel %vm657, %v2433, 0
      %v2466 = vsel %vm657, %v2435, 0
      %v2468 = vsel %vm657, %v2437, 0
      %v2470 = vsel %vm657, %v2439, 0
      %v2472 = vsel %vm657, %v2441, 0
      %v2474 = vsel %vm657, %v2443, 0
      %v2476 = vsel %vm657, %v2445, 0
      %v2478 = vsel %vm657, %v2447, 0
      %v2480 = vsel %vm657, %v2449, 0
      %v2482 = vsel %vm657, %v2451, 0
      %v2484 = vsel %vm657, %v2453, 0
      %2486 = vmatprep.subr.mxu0 0.0
      %2487 = vmatpush1.xpose.msra.mxu0 %v2470
      %2488 = vmatprep.subr.mxu0 0.0
      %2489 = vmatpush1.xpose.msra.mxu0 %v2472
      %2490 = vmatprep.subr.mxu0 0.0
      %2491 = vmatpush1.xpose.msra.mxu0 %v2474
      %2492 = vmatprep.subr.mxu0 0.0
      %2493 = vmatpush1.xpose.msra.mxu0 %v2476
      %2494 = vmatprep.subr.mxu0 0.0
      %2495 = vmatpush1.xpose.msra.mxu0 %v2478
      %2496 = vmatprep.subr.mxu0 0.0
      %2497 = vmatpush1.xpose.msra.mxu0 %v2480
      %2498 = vmatprep.subr.mxu0 0.0
      %2499 = vmatpush1.xpose.msra.mxu0 %v2482
      %2500 = vmatprep.subr.mxu0 0.0
      %2501 = vmatpush1.xpose.msra.mxu0 %v2484
      %2502 = vmatprep.subr.mxu0 0.0
      %2503 = vmatpush1.xpose.msra.mxu0 0.0
      %2504 = vmatprep.subr.mxu0 0.0
      %2505 = vmatpush1.xpose.msra.mxu0 0.0
      %2506 = vmatprep.subr.mxu0 0.0
      %2507 = vmatpush1.xpose.msra.mxu0 0.0
      %2508 = vmatprep.subr.mxu0 0.0
      %2509 = vmatpush1.xpose.msra.mxu0 0.0
      %2510 = vmatprep.subr.mxu0 0.0
      %2511 = vmatpush1.xpose.msra.mxu0 0.0
      %2512 = vmatprep.subr.mxu0 0.0
      %2513 = vmatpush1.xpose.msra.mxu0 0.0
      %2514 = vmatprep.subr.mxu0 0.0
      %2515 = vmatpush1.xpose.msra.mxu0 0.0
      %2516 = vmatprep.subr.mxu0 0.0
      %2517 = vmatpush1.xpose.msra.mxu0 0.0
      %2518 = vmatprep.subr.mxu0 0.0
      %2519 = vmatpush1.xpose.msra.mxu0 0.0
      %2520 = vmatprep.subr.mxu0 0.0
      %2521 = vmatpush1.xpose.msra.mxu0 0.0
      %2522 = vmatprep.subr.mxu0 0.0
      %2523 = vmatpush1.xpose.msra.mxu0 0.0
      %2524 = vmatprep.subr.mxu0 0.0
      %2525 = vmatpush1.xpose.msra.mxu0 0.0
      %2526 = vmatprep.subr.mxu0 0.0
      %2527 = vmatpush1.xpose.msra.mxu0 0.0
      %2528 = vmatprep.subr.mxu0 0.0
      %2529 = vmatpush1.xpose.msra.mxu0 0.0
      %2530 = vmatprep.subr.mxu0 0.0
      %2531 = vmatpush1.xpose.msra.mxu0 0.0
      %2532 = vmatprep.subr.mxu0 0.0
      %2533 = vmatpush1.xpose.msra.mxu0 0.0
      %2534 = vmatprep.subr.mxu0 0.0
      %2535 = vmatpush1.xpose.msra.mxu0 0.0
      %2536 = vmatprep.subr.mxu0 0.0
      %2537 = vmatpush1.xpose.msra.mxu0 0.0
      %2538 = vmatprep.subr.mxu0 0.0
      %2539 = vmatpush1.xpose.msra.mxu0 0.0
      %2540 = vmatprep.subr.mxu0 0.0
      %2541 = vmatpush1.xpose.msra.mxu0 0.0
      %2542 = vmatprep.subr.mxu0 0.0
      %2543 = vmatpush1.xpose.msra.mxu0 0.0
      %2544 = vmatprep.subr.mxu0 0.0
      %2545 = vmatpush1.xpose.msra.mxu0 0.0
      %2546 = vmatprep.subr.mxu0 0.0
      %2547 = vmatpush1.xpose.msra.mxu0 0.0
      %2548 = vmatprep.subr.mxu0 0.0
      %2549 = vmatpush1.xpose.msra.mxu0 0.0
      %2550 = vmatprep.mubr.f32.mxu0 0.0
      %2551 = vmatmul.mubr.f32.gmra.mrb[0].mxu0 %v2454
      %v2552 = vpop.f32.mrb[0].mxu0
      %v2553 = vadd.f32 %v2245, %v2552
      %v2554 = vpop.f32.mrb[0].mxu0
      %2555 = vmatprep.mubr.f32.mxu0 0.0
      %2556 = vmatmul.mubr.f32.gmra.mrb[0].mxu0 %v2456
      %v2557 = vpop.f32.mrb[0].mxu0
      %v2558 = vadd.f32 %v2246, %v2557
      %v2559 = vpop.f32.mrb[0].mxu0
      %2560 = vmatprep.mubr.f32.mxu0 0.0
      %2561 = vmatmul.mubr.f32.gmra.mrb[0].mxu0 %v2458
      %v2562 = vpop.f32.mrb[0].mxu0
      %v2563 = vadd.f32 %v2247, %v2562
      %v2564 = vpop.f32.mrb[0].mxu0
      %2565 = vmatprep.mubr.f32.mxu0 0.0
      %2566 = vmatmul.mubr.f32.gmra.mrb[0].mxu0 %v2460
      %v2567 = vpop.f32.mrb[0].mxu0
      %v2568 = vadd.f32 %v2248, %v2567
      %v2569 = vpop.f32.mrb[0].mxu0
      %2570 = vmatprep.mubr.f32.mxu0 0.0
      %2571 = vmatmul.mubr.f32.gmra.mrb[0].mxu0 %v2462
      %v2572 = vpop.f32.mrb[0].mxu0
      %v2573 = vadd.f32 %v2249, %v2572
      %v2574 = vpop.f32.mrb[0].mxu0
      %2575 = vmatprep.mubr.f32.mxu0 0.0
      %2576 = vmatmul.mubr.f32.gmra.mrb[0].mxu0 %v2464
      %v2577 = vpop.f32.mrb[0].mxu0
      %v2578 = vadd.f32 %v2250, %v2577
      %v2579 = vpop.f32.mrb[0].mxu0
      %2580 = vmatprep.mubr.f32.mxu0 0.0
      %2581 = vmatmul.mubr.f32.gmra.mrb[0].mxu0 %v2466
      %v2582 = vpop.f32.mrb[0].mxu0
      %v2583 = vadd.f32 %v2251, %v2582
      %v2584 = vpop.f32.mrb[0].mxu0
      %2585 = vmatprep.mubr.f32.mxu0 0.0
      %2586 = vmatmul.mubr.f32.gmra.mrb[0].mxu0 %v2468
      %v2587 = vpop.f32.mrb[0].mxu0
      %v2588 = vadd.f32 %v2252, %v2587
      %v2589 = vpop.f32.mrb[0].mxu0
      %2590 = vdwg.mxu0
      %2591 = vrot.lane.b32.xlu0 %v547, 120
      %v2592 = vpop.permute.xlu0 %2591
      %2593 = vrot.lane.b32.xlu0 %v552, 120
      %v2594 = vpop.permute.xlu0 %2593
      %2595 = vrot.lane.b32.xlu0 %v557, 120
      %v2596 = vpop.permute.xlu0 %2595
      %2597 = vrot.lane.b32.xlu0 %v562, 120
      %v2598 = vpop.permute.xlu0 %2597
      %2599 = vrot.lane.b32.xlu0 %v567, 120
      %v2600 = vpop.permute.xlu0 %2599
      %2601 = vrot.lane.b32.xlu0 %v572, 120
      %v2602 = vpop.permute.xlu0 %2601
      %2603 = vrot.lane.b32.xlu0 %v577, 120
      %v2604 = vpop.permute.xlu0 %2603
      %2605 = vrot.lane.b32.xlu0 %v582, 120
      %v2606 = vpop.permute.xlu0 %2605
      %2607 = vrot.lane.b32.xlu0 %v547, 88
      %v2608 = vpop.permute.xlu0 %2607
      %2609 = vrot.lane.b32.xlu0 %v552, 88
      %v2610 = vpop.permute.xlu0 %2609
      %2611 = vrot.lane.b32.xlu0 %v557, 88
      %v2612 = vpop.permute.xlu0 %2611
      %2613 = vrot.lane.b32.xlu0 %v562, 88
      %v2614 = vpop.permute.xlu0 %2613
      %2615 = vrot.lane.b32.xlu0 %v567, 88
      %v2616 = vpop.permute.xlu0 %2615
      %2617 = vrot.lane.b32.xlu0 %v572, 88
      %v2618 = vpop.permute.xlu0 %2617
      %2619 = vrot.lane.b32.xlu0 %v577, 88
      %v2620 = vpop.permute.xlu0 %2619
      %2621 = vrot.lane.b32.xlu0 %v582, 88
      %v2622 = vpop.permute.xlu0 %2621
      %v2623 = vsel %vm657, %v2592, 0
      %v2625 = vsel %vm657, %v2594, 0
      %v2627 = vsel %vm657, %v2596, 0
      %v2629 = vsel %vm657, %v2598, 0
      %v2631 = vsel %vm657, %v2600, 0
      %v2633 = vsel %vm657, %v2602, 0
      %v2635 = vsel %vm657, %v2604, 0
      %v2637 = vsel %vm657, %v2606, 0
      %v2639 = vsel %vm657, %v2608, 0
      %v2641 = vsel %vm657, %v2610, 0
      %v2643 = vsel %vm657, %v2612, 0
      %v2645 = vsel %vm657, %v2614, 0
      %v2647 = vsel %vm657, %v2616, 0
      %v2649 = vsel %vm657, %v2618, 0
      %v2651 = vsel %vm657, %v2620, 0
      %v2653 = vsel %vm657, %v2622, 0
      %2655 = vmatprep.subr.mxu0 0.0
      %2656 = vmatpush1.xpose.msra.mxu0 %v2639
      %2657 = vmatprep.subr.mxu0 0.0
      %2658 = vmatpush1.xpose.msra.mxu0 %v2641
      %2659 = vmatprep.subr.mxu0 0.0
      %2660 = vmatpush1.xpose.msra.mxu0 %v2643
      %2661 = vmatprep.subr.mxu0 0.0
      %2662 = vmatpush1.xpose.msra.mxu0 %v2645
      %2663 = vmatprep.subr.mxu0 0.0
      %2664 = vmatpush1.xpose.msra.mxu0 %v2647
      %2665 = vmatprep.subr.mxu0 0.0
      %2666 = vmatpush1.xpose.msra.mxu0 %v2649
      %2667 = vmatprep.subr.mxu0 0.0
      %2668 = vmatpush1.xpose.msra.mxu0 %v2651
      %2669 = vmatprep.subr.mxu0 0.0
      %2670 = vmatpush1.xpose.msra.mxu0 %v2653
      %2671 = vmatprep.subr.mxu0 0.0
      %2672 = vmatpush1.xpose.msra.mxu0 0.0
      %2673 = vmatprep.subr.mxu0 0.0
      %2674 = vmatpush1.xpose.msra.mxu0 0.0
      %2675 = vmatprep.subr.mxu0 0.0
      %2676 = vmatpush1.xpose.msra.mxu0 0.0
      %2677 = vmatprep.subr.mxu0 0.0
      %2678 = vmatpush1.xpose.msra.mxu0 0.0
      %2679 = vmatprep.subr.mxu0 0.0
      %2680 = vmatpush1.xpose.msra.mxu0 0.0
      %2681 = vmatprep.subr.mxu0 0.0
      %2682 = vmatpush1.xpose.msra.mxu0 0.0
      %2683 = vmatprep.subr.mxu0 0.0
      %2684 = vmatpush1.xpose.msra.mxu0 0.0
      %2685 = vmatprep.subr.mxu0 0.0
      %2686 = vmatpush1.xpose.msra.mxu0 0.0
      %2687 = vmatprep.subr.mxu0 0.0
      %2688 = vmatpush1.xpose.msra.mxu0 0.0
      %2689 = vmatprep.subr.mxu0 0.0
      %2690 = vmatpush1.xpose.msra.mxu0 0.0
      %2691 = vmatprep.subr.mxu0 0.0
      %2692 = vmatpush1.xpose.msra.mxu0 0.0
      %2693 = vmatprep.subr.mxu0 0.0
      %2694 = vmatpush1.xpose.msra.mxu0 0.0
      %2695 = vmatprep.subr.mxu0 0.0
      %2696 = vmatpush1.xpose.msra.mxu0 0.0
      %2697 = vmatprep.subr.mxu0 0.0
      %2698 = vmatpush1.xpose.msra.mxu0 0.0
      %2699 = vmatprep.subr.mxu0 0.0
      %2700 = vmatpush1.xpose.msra.mxu0 0.0
      %2701 = vmatprep.subr.mxu0 0.0
      %2702 = vmatpush1.xpose.msra.mxu0 0.0
      %2703 = vmatprep.subr.mxu0 0.0
      %2704 = vmatpush1.xpose.msra.mxu0 0.0
      %2705 = vmatprep.subr.mxu0 0.0
      %2706 = vmatpush1.xpose.msra.mxu0 0.0
      %2707 = vmatprep.subr.mxu0 0.0
      %2708 = vmatpush1.xpose.msra.mxu0 0.0
      %2709 = vmatprep.subr.mxu0 0.0
      %2710 = vmatpush1.xpose.msra.mxu0 0.0
      %2711 = vmatprep.subr.mxu0 0.0
      %2712 = vmatpush1.xpose.msra.mxu0 0.0
      %2713 = vmatprep.subr.mxu0 0.0
      %2714 = vmatpush1.xpose.msra.mxu0 0.0
      %2715 = vmatprep.subr.mxu0 0.0
      %2716 = vmatpush1.xpose.msra.mxu0 0.0
      %2717 = vmatprep.subr.mxu0 0.0
      %2718 = vmatpush1.xpose.msra.mxu0 0.0
      %2719 = vmatprep.mubr.f32.mxu0 0.0
      %2720 = vmatmul.mubr.f32.gmra.mrb[0].mxu0 %v2623
      %v2721 = vpop.f32.mrb[0].mxu0
      %v2722 = vadd.f32 %v2245, %v2721
      %v2723 = vpop.f32.mrb[0].mxu0
      %2724 = vmatprep.mubr.f32.mxu0 0.0
      %2725 = vmatmul.mubr.f32.gmra.mrb[0].mxu0 %v2625
      %v2726 = vpop.f32.mrb[0].mxu0
      %v2727 = vadd.f32 %v2246, %v2726
      %v2728 = vpop.f32.mrb[0].mxu0
      %2729 = vmatprep.mubr.f32.mxu0 0.0
      %2730 = vmatmul.mubr.f32.gmra.mrb[0].mxu0 %v2627
      %v2731 = vpop.f32.mrb[0].mxu0
      %v2732 = vadd.f32 %v2247, %v2731
      %v2733 = vpop.f32.mrb[0].mxu0
      %2734 = vmatprep.mubr.f32.mxu0 0.0
      %2735 = vmatmul.mubr.f32.gmra.mrb[0].mxu0 %v2629
      %v2736 = vpop.f32.mrb[0].mxu0
      %v2737 = vadd.f32 %v2248, %v2736
      %v2738 = vpop.f32.mrb[0].mxu0
      %2739 = vmatprep.mubr.f32.mxu0 0.0
      %2740 = vmatmul.mubr.f32.gmra.mrb[0].mxu0 %v2631
      %v2741 = vpop.f32.mrb[0].mxu0
      %v2742 = vadd.f32 %v2249, %v2741
      %v2743 = vpop.f32.mrb[0].mxu0
      %2744 = vmatprep.mubr.f32.mxu0 0.0
      %2745 = vmatmul.mubr.f32.gmra.mrb[0].mxu0 %v2633
      %v2746 = vpop.f32.mrb[0].mxu0
      %v2747 = vadd.f32 %v2250, %v2746
      %v2748 = vpop.f32.mrb[0].mxu0
      %2749 = vmatprep.mubr.f32.mxu0 0.0
      %2750 = vmatmul.mubr.f32.gmra.mrb[0].mxu0 %v2635
      %v2751 = vpop.f32.mrb[0].mxu0
      %v2752 = vadd.f32 %v2251, %v2751
      %v2753 = vpop.f32.mrb[0].mxu0
      %2754 = vmatprep.mubr.f32.mxu0 0.0
      %2755 = vmatmul.mubr.f32.gmra.mrb[0].mxu0 %v2637
      %v2756 = vpop.f32.mrb[0].mxu0
      %v2757 = vadd.f32 %v2252, %v2756
      %v2758 = vpop.f32.mrb[0].mxu0
      %2759 = vdwg.mxu0
      %2760 = vrot.lane.b32.xlu0 %v587, 120
      %v2761 = vpop.permute.xlu0 %2760
      %2762 = vrot.lane.b32.xlu0 %v592, 120
      %v2763 = vpop.permute.xlu0 %2762
      %2764 = vrot.lane.b32.xlu0 %v597, 120
      %v2765 = vpop.permute.xlu0 %2764
      %2766 = vrot.lane.b32.xlu0 %v602, 120
      %v2767 = vpop.permute.xlu0 %2766
      %2768 = vrot.lane.b32.xlu0 %v607, 120
      %v2769 = vpop.permute.xlu0 %2768
      %2770 = vrot.lane.b32.xlu0 %v612, 120
      %v2771 = vpop.permute.xlu0 %2770
      %2772 = vrot.lane.b32.xlu0 %v617, 120
      %v2773 = vpop.permute.xlu0 %2772
      %2774 = vrot.lane.b32.xlu0 %v622, 120
      %v2775 = vpop.permute.xlu0 %2774
      %2776 = vrot.lane.b32.xlu0 %v587, 88
      %v2777 = vpop.permute.xlu0 %2776
      %2778 = vrot.lane.b32.xlu0 %v592, 88
      %v2779 = vpop.permute.xlu0 %2778
      %2780 = vrot.lane.b32.xlu0 %v597, 88
      %v2781 = vpop.permute.xlu0 %2780
      %2782 = vrot.lane.b32.xlu0 %v602, 88
      %v2783 = vpop.permute.xlu0 %2782
      %2784 = vrot.lane.b32.xlu0 %v607, 88
      %v2785 = vpop.permute.xlu0 %2784
      %2786 = vrot.lane.b32.xlu0 %v612, 88
      %v2787 = vpop.permute.xlu0 %2786
      %2788 = vrot.lane.b32.xlu0 %v617, 88
      %v2789 = vpop.permute.xlu0 %2788
      %2790 = vrot.lane.b32.xlu0 %v622, 88
      %v2791 = vpop.permute.xlu0 %2790
      %v2792 = vsel %vm657, %v2761, 0
      %v2794 = vsel %vm657, %v2763, 0
      %v2796 = vsel %vm657, %v2765, 0
      %v2798 = vsel %vm657, %v2767, 0
      %v2800 = vsel %vm657, %v2769, 0
      %v2802 = vsel %vm657, %v2771, 0
      %v2804 = vsel %vm657, %v2773, 0
      %v2806 = vsel %vm657, %v2775, 0
      %v2808 = vsel %vm657, %v2777, 0
      %v2810 = vsel %vm657, %v2779, 0
      %v2812 = vsel %vm657, %v2781, 0
      %v2814 = vsel %vm657, %v2783, 0
      %v2816 = vsel %vm657, %v2785, 0
      %v2818 = vsel %vm657, %v2787, 0
      %v2820 = vsel %vm657, %v2789, 0
      %v2822 = vsel %vm657, %v2791, 0
      %2824 = vmatprep.subr.mxu0 0.0
      %2825 = vmatpush1.xpose.msra.mxu0 %v2808
      %2826 = vmatprep.subr.mxu0 0.0
      %2827 = vmatpush1.xpose.msra.mxu0 %v2810
      %2828 = vmatprep.subr.mxu0 0.0
      %2829 = vmatpush1.xpose.msra.mxu0 %v2812
      %2830 = vmatprep.subr.mxu0 0.0
      %2831 = vmatpush1.xpose.msra.mxu0 %v2814
      %2832 = vmatprep.subr.mxu0 0.0
      %2833 = vmatpush1.xpose.msra.mxu0 %v2816
      %2834 = vmatprep.subr.mxu0 0.0
      %2835 = vmatpush1.xpose.msra.mxu0 %v2818
      %2836 = vmatprep.subr.mxu0 0.0
      %2837 = vmatpush1.xpose.msra.mxu0 %v2820
      %2838 = vmatprep.subr.mxu0 0.0
      %2839 = vmatpush1.xpose.msra.mxu0 %v2822
      %2840 = vmatprep.subr.mxu0 0.0
      %2841 = vmatpush1.xpose.msra.mxu0 0.0
      %2842 = vmatprep.subr.mxu0 0.0
      %2843 = vmatpush1.xpose.msra.mxu0 0.0
      %2844 = vmatprep.subr.mxu0 0.0
      %2845 = vmatpush1.xpose.msra.mxu0 0.0
      %2846 = vmatprep.subr.mxu0 0.0
      %2847 = vmatpush1.xpose.msra.mxu0 0.0
      %2848 = vmatprep.subr.mxu0 0.0
      %2849 = vmatpush1.xpose.msra.mxu0 0.0
      %2850 = vmatprep.subr.mxu0 0.0
      %2851 = vmatpush1.xpose.msra.mxu0 0.0
      %2852 = vmatprep.subr.mxu0 0.0
      %2853 = vmatpush1.xpose.msra.mxu0 0.0
      %2854 = vmatprep.subr.mxu0 0.0
      %2855 = vmatpush1.xpose.msra.mxu0 0.0
      %2856 = vmatprep.subr.mxu0 0.0
      %2857 = vmatpush1.xpose.msra.mxu0 0.0
      %2858 = vmatprep.subr.mxu0 0.0
      %2859 = vmatpush1.xpose.msra.mxu0 0.0
      %2860 = vmatprep.subr.mxu0 0.0
      %2861 = vmatpush1.xpose.msra.mxu0 0.0
      %2862 = vmatprep.subr.mxu0 0.0
      %2863 = vmatpush1.xpose.msra.mxu0 0.0
      %2864 = vmatprep.subr.mxu0 0.0
      %2865 = vmatpush1.xpose.msra.mxu0 0.0
      %2866 = vmatprep.subr.mxu0 0.0
      %2867 = vmatpush1.xpose.msra.mxu0 0.0
      %2868 = vmatprep.subr.mxu0 0.0
      %2869 = vmatpush1.xpose.msra.mxu0 0.0
      %2870 = vmatprep.subr.mxu0 0.0
      %2871 = vmatpush1.xpose.msra.mxu0 0.0
      %2872 = vmatprep.subr.mxu0 0.0
      %2873 = vmatpush1.xpose.msra.mxu0 0.0
      %2874 = vmatprep.subr.mxu0 0.0
      %2875 = vmatpush1.xpose.msra.mxu0 0.0
      %2876 = vmatprep.subr.mxu0 0.0
      %2877 = vmatpush1.xpose.msra.mxu0 0.0
      %2878 = vmatprep.subr.mxu0 0.0
      %2879 = vmatpush1.xpose.msra.mxu0 0.0
      %2880 = vmatprep.subr.mxu0 0.0
      %2881 = vmatpush1.xpose.msra.mxu0 0.0
      %2882 = vmatprep.subr.mxu0 0.0
      %2883 = vmatpush1.xpose.msra.mxu0 0.0
      %2884 = vmatprep.subr.mxu0 0.0
      %2885 = vmatpush1.xpose.msra.mxu0 0.0
      %2886 = vmatprep.subr.mxu0 0.0
      %2887 = vmatpush1.xpose.msra.mxu0 0.0
      %2888 = vmatprep.mubr.f32.mxu0 0.0
      %2889 = vmatmul.mubr.f32.gmra.mrb[0].mxu0 %v2792
      %v2890 = vpop.f32.mrb[0].mxu0
      %v2891 = vadd.f32 %v2245, %v2890
      %v2892 = vpop.f32.mrb[0].mxu0
      %2893 = vmatprep.mubr.f32.mxu0 0.0
      %2894 = vmatmul.mubr.f32.gmra.mrb[0].mxu0 %v2794
      %v2895 = vpop.f32.mrb[0].mxu0
      %v2896 = vadd.f32 %v2246, %v2895
      %v2897 = vpop.f32.mrb[0].mxu0
      %2898 = vmatprep.mubr.f32.mxu0 0.0
      %2899 = vmatmul.mubr.f32.gmra.mrb[0].mxu0 %v2796
      %v2900 = vpop.f32.mrb[0].mxu0
      %v2901 = vadd.f32 %v2247, %v2900
      %v2902 = vpop.f32.mrb[0].mxu0
      %2903 = vmatprep.mubr.f32.mxu0 0.0
      %2904 = vmatmul.mubr.f32.gmra.mrb[0].mxu0 %v2798
      %v2905 = vpop.f32.mrb[0].mxu0
      %v2906 = vadd.f32 %v2248, %v2905
      %v2907 = vpop.f32.mrb[0].mxu0
      %2908 = vmatprep.mubr.f32.mxu0 0.0
      %2909 = vmatmul.mubr.f32.gmra.mrb[0].mxu0 %v2800
      %v2910 = vpop.f32.mrb[0].mxu0
      %v2911 = vadd.f32 %v2249, %v2910
      %v2912 = vpop.f32.mrb[0].mxu0
      %2913 = vmatprep.mubr.f32.mxu0 0.0
      %2914 = vmatmul.mubr.f32.gmra.mrb[0].mxu0 %v2802
      %v2915 = vpop.f32.mrb[0].mxu0
      %v2916 = vadd.f32 %v2250, %v2915
      %v2917 = vpop.f32.mrb[0].mxu0
      %2918 = vmatprep.mubr.f32.mxu0 0.0
      %2919 = vmatmul.mubr.f32.gmra.mrb[0].mxu0 %v2804
      %v2920 = vpop.f32.mrb[0].mxu0
      %v2921 = vadd.f32 %v2251, %v2920
      %v2922 = vpop.f32.mrb[0].mxu0
      %2923 = vmatprep.mubr.f32.mxu0 0.0
      %2924 = vmatmul.mubr.f32.gmra.mrb[0].mxu0 %v2806
      %v2925 = vpop.f32.mrb[0].mxu0
      %v2926 = vadd.f32 %v2252, %v2925
      %v2927 = vpop.f32.mrb[0].mxu0
      %2928 = vdwg.mxu0
      %v2929 = vsel %vm1278, %v2384, -inf
      %2930 = vmax.xlane.f32.xlu0 %v2929
      %v2931 = vpop.xlane.xlu0 %2930
      %v2932 = vsel %vm1278, %v2389, -inf
      %2933 = vmax.xlane.f32.xlu0 %v2932
      %v2934 = vpop.xlane.xlu0 %2933
      %v2935 = vsel %vm1278, %v2394, -inf
      %2936 = vmax.xlane.f32.xlu0 %v2935
      %v2937 = vpop.xlane.xlu0 %2936
      %v2938 = vsel %vm1278, %v2399, -inf
      %2939 = vmax.xlane.f32.xlu0 %v2938
      %v2940 = vpop.xlane.xlu0 %2939
      %v2941 = vsel %vm1278, %v2404, -inf
      %2942 = vmax.xlane.f32.xlu0 %v2941
      %v2943 = vpop.xlane.xlu0 %2942
      %v2944 = vsel %vm1278, %v2409, -inf
      %2945 = vmax.xlane.f32.xlu0 %v2944
      %v2946 = vpop.xlane.xlu0 %2945
      %v2947 = vsel %vm1278, %v2414, -inf
      %2948 = vmax.xlane.f32.xlu0 %v2947
      %v2949 = vpop.xlane.xlu0 %2948
      %v2950 = vsel %vm1278, %v2419, -inf
      %2951 = vmax.xlane.f32.xlu0 %v2950
      %v2952 = vpop.xlane.xlu0 %2951
      %v2953 = vsel %vm1278, %v2553, -inf
      %2954 = vmax.xlane.f32.xlu0 %v2953
      %v2955 = vpop.xlane.xlu0 %2954
      %v2956 = vsel %vm1278, %v2558, -inf
      %2957 = vmax.xlane.f32.xlu0 %v2956
      %v2958 = vpop.xlane.xlu0 %2957
      %v2959 = vsel %vm1278, %v2563, -inf
      %2960 = vmax.xlane.f32.xlu0 %v2959
      %v2961 = vpop.xlane.xlu0 %2960
      %v2962 = vsel %vm1278, %v2568, -inf
      %2963 = vmax.xlane.f32.xlu0 %v2962
      %v2964 = vpop.xlane.xlu0 %2963
      %v2965 = vsel %vm1278, %v2573, -inf
      %2966 = vmax.xlane.f32.xlu0 %v2965
      %v2967 = vpop.xlane.xlu0 %2966
      %v2968 = vsel %vm1278, %v2578, -inf
      %2969 = vmax.xlane.f32.xlu0 %v2968
      %v2970 = vpop.xlane.xlu0 %2969
      %v2971 = vsel %vm1278, %v2583, -inf
      %2972 = vmax.xlane.f32.xlu0 %v2971
      %v2973 = vpop.xlane.xlu0 %2972
      %v2974 = vsel %vm1278, %v2588, -inf
      %2975 = vmax.xlane.f32.xlu0 %v2974
      %v2976 = vpop.xlane.xlu0 %2975
      %v2977 = vsel %vm1278, %v2722, -inf
      %2978 = vmax.xlane.f32.xlu0 %v2977
      %v2979 = vpop.xlane.xlu0 %2978
      %v2980 = vsel %vm1278, %v2727, -inf
      %2981 = vmax.xlane.f32.xlu0 %v2980
      %v2982 = vpop.xlane.xlu0 %2981
      %v2983 = vsel %vm1278, %v2732, -inf
      %2984 = vmax.xlane.f32.xlu0 %v2983
      %v2985 = vpop.xlane.xlu0 %2984
      %v2986 = vsel %vm1278, %v2737, -inf
      %2987 = vmax.xlane.f32.xlu0 %v2986
      %v2988 = vpop.xlane.xlu0 %2987
      %v2989 = vsel %vm1278, %v2742, -inf
      %2990 = vmax.xlane.f32.xlu0 %v2989
      %v2991 = vpop.xlane.xlu0 %2990
      %v2992 = vsel %vm1278, %v2747, -inf
      %2993 = vmax.xlane.f32.xlu0 %v2992
      %v2994 = vpop.xlane.xlu0 %2993
      %v2995 = vsel %vm1278, %v2752, -inf
      %2996 = vmax.xlane.f32.xlu0 %v2995
      %v2997 = vpop.xlane.xlu0 %2996
      %v2998 = vsel %vm1278, %v2757, -inf
      %2999 = vmax.xlane.f32.xlu0 %v2998
      %v3000 = vpop.xlane.xlu0 %2999
      %v3001 = vsel %vm1278, %v2891, -inf
      %3002 = vmax.xlane.f32.xlu0 %v3001
      %v3003 = vpop.xlane.xlu0 %3002
      %v3004 = vsel %vm1278, %v2896, -inf
      %3005 = vmax.xlane.f32.xlu0 %v3004
      %v3006 = vpop.xlane.xlu0 %3005
      %v3007 = vsel %vm1278, %v2901, -inf
      %3008 = vmax.xlane.f32.xlu0 %v3007
      %v3009 = vpop.xlane.xlu0 %3008
      %v3010 = vsel %vm1278, %v2906, -inf
      %3011 = vmax.xlane.f32.xlu0 %v3010
      %v3012 = vpop.xlane.xlu0 %3011
      %v3013 = vsel %vm1278, %v2911, -inf
      %3014 = vmax.xlane.f32.xlu0 %v3013
      %v3015 = vpop.xlane.xlu0 %3014
      %v3016 = vsel %vm1278, %v2916, -inf
      %3017 = vmax.xlane.f32.xlu0 %v3016
      %v3018 = vpop.xlane.xlu0 %3017
      %v3019 = vsel %vm1278, %v2921, -inf
      %3020 = vmax.xlane.f32.xlu0 %v3019
      %v3021 = vpop.xlane.xlu0 %3020
      %v3022 = vsel %vm1278, %v2926, -inf
      %3023 = vmax.xlane.f32.xlu0 %v3022
      %v3024 = vpop.xlane.xlu0 %3023
      %v3025 = vsub.f32 %v2384, %v2931
      %v3026 = vsub.f32 %v2389, %v2934
      %v3027 = vsub.f32 %v2394, %v2937
      %v3028 = vsub.f32 %v2399, %v2940
      %v3029 = vsub.f32 %v2404, %v2943
      %v3030 = vsub.f32 %v2409, %v2946
      %v3031 = vsub.f32 %v2414, %v2949
      %v3032 = vsub.f32 %v2419, %v2952
      %v3033 = vsub.f32 %v2553, %v2955
      %v3034 = vsub.f32 %v2558, %v2958
      %v3035 = vsub.f32 %v2563, %v2961
      %v3036 = vsub.f32 %v2568, %v2964
      %v3037 = vsub.f32 %v2573, %v2967
      %v3038 = vsub.f32 %v2578, %v2970
      %v3039 = vsub.f32 %v2583, %v2973
      %v3040 = vsub.f32 %v2588, %v2976
      %v3041 = vsub.f32 %v2722, %v2979
      %v3042 = vsub.f32 %v2727, %v2982
      %v3043 = vsub.f32 %v2732, %v2985
      %v3044 = vsub.f32 %v2737, %v2988
      %v3045 = vsub.f32 %v2742, %v2991
      %v3046 = vsub.f32 %v2747, %v2994
      %v3047 = vsub.f32 %v2752, %v2997
      %v3048 = vsub.f32 %v2757, %v3000
      %v3049 = vsub.f32 %v2891, %v3003
      %v3050 = vsub.f32 %v2896, %v3006
      %v3051 = vsub.f32 %v2901, %v3009
      %v3052 = vsub.f32 %v2906, %v3012
      %v3053 = vsub.f32 %v2911, %v3015
      %v3054 = vsub.f32 %v2916, %v3018
      %v3055 = vsub.f32 %v2921, %v3021
      %v3056 = vsub.f32 %v2926, %v3024
      %v3057 = vmul.f32 %v3025, 1.442695
      %v3058 = vpow.pop %v3057
      %v3059 = vmul.f32 %v3026, 1.442695
      %v3060 = vpow.pop %v3059
      %v3061 = vmul.f32 %v3027, 1.442695
      %v3062 = vpow.pop %v3061
      %v3063 = vmul.f32 %v3028, 1.442695
      %v3064 = vpow.pop %v3063
      %v3065 = vmul.f32 %v3029, 1.442695
      %v3066 = vpow.pop %v3065
      %v3067 = vmul.f32 %v3030, 1.442695
      %v3068 = vpow.pop %v3067
      %v3069 = vmul.f32 %v3031, 1.442695
      %v3070 = vpow.pop %v3069
      %v3071 = vmul.f32 %v3032, 1.442695
      %v3072 = vpow.pop %v3071
      %v3073 = vmul.f32 %v3033, 1.442695
      %v3074 = vpow.pop %v3073
      %v3075 = vmul.f32 %v3034, 1.442695
      %v3076 = vpow.pop %v3075
      %v3077 = vmul.f32 %v3035, 1.442695
      %v3078 = vpow.pop %v3077
      %v3079 = vmul.f32 %v3036, 1.442695
      %v3080 = vpow.pop %v3079
      %v3081 = vmul.f32 %v3037, 1.442695
      %v3082 = vpow.pop %v3081
      %v3083 = vmul.f32 %v3038, 1.442695
      %v3084 = vpow.pop %v3083
      %v3085 = vmul.f32 %v3039, 1.442695
      %v3086 = vpow.pop %v3085
      %v3087 = vmul.f32 %v3040, 1.442695
      %v3088 = vpow.pop %v3087
      %v3089 = vmul.f32 %v3041, 1.442695
      %v3090 = vpow.pop %v3089
      %v3091 = vmul.f32 %v3042, 1.442695
      %v3092 = vpow.pop %v3091
      %v3093 = vmul.f32 %v3043, 1.442695
      %v3094 = vpow.pop %v3093
      %v3095 = vmul.f32 %v3044, 1.442695
      %v3096 = vpow.pop %v3095
      %v3097 = vmul.f32 %v3045, 1.442695
      %v3098 = vpow.pop %v3097
      %v3099 = vmul.f32 %v3046, 1.442695
      %v3100 = vpow.pop %v3099
      %v3101 = vmul.f32 %v3047, 1.442695
      %v3102 = vpow.pop %v3101
      %v3103 = vmul.f32 %v3048, 1.442695
      %v3104 = vpow.pop %v3103
      %v3105 = vmul.f32 %v3049, 1.442695
      %v3106 = vpow.pop %v3105
      %v3107 = vmul.f32 %v3050, 1.442695
      %v3108 = vpow.pop %v3107
      %v3109 = vmul.f32 %v3051, 1.442695
      %v3110 = vpow.pop %v3109
      %v3111 = vmul.f32 %v3052, 1.442695
      %v3112 = vpow.pop %v3111
      %v3113 = vmul.f32 %v3053, 1.442695
      %v3114 = vpow.pop %v3113
      %v3115 = vmul.f32 %v3054, 1.442695
      %v3116 = vpow.pop %v3115
      %v3117 = vmul.f32 %v3055, 1.442695
      %v3118 = vpow.pop %v3117
      %v3119 = vmul.f32 %v3056, 1.442695
      %v3120 = vpow.pop %v3119
      %v3121 = vsel %vm1278, %v3058, 0.0
      %3122 = vadd.xlane.f32.xlu0 %v3121
      %v3123 = vpop.xlane.xlu0 %3122
      %v3124 = vsel %vm1278, %v3060, 0.0
      %3125 = vadd.xlane.f32.xlu0 %v3124
      %v3126 = vpop.xlane.xlu0 %3125
      %v3127 = vsel %vm1278, %v3062, 0.0
      %3128 = vadd.xlane.f32.xlu0 %v3127
      %v3129 = vpop.xlane.xlu0 %3128
      %v3130 = vsel %vm1278, %v3064, 0.0
      %3131 = vadd.xlane.f32.xlu0 %v3130
      %v3132 = vpop.xlane.xlu0 %3131
      %v3133 = vsel %vm1278, %v3066, 0.0
      %3134 = vadd.xlane.f32.xlu0 %v3133
      %v3135 = vpop.xlane.xlu0 %3134
      %v3136 = vsel %vm1278, %v3068, 0.0
      %3137 = vadd.xlane.f32.xlu0 %v3136
      %v3138 = vpop.xlane.xlu0 %3137
      %v3139 = vsel %vm1278, %v3070, 0.0
      %3140 = vadd.xlane.f32.xlu0 %v3139
      %v3141 = vpop.xlane.xlu0 %3140
      %v3142 = vsel %vm1278, %v3072, 0.0
      %3143 = vadd.xlane.f32.xlu0 %v3142
      %v3144 = vpop.xlane.xlu0 %3143
      %v3145 = vsel %vm1278, %v3074, 0.0
      %3146 = vadd.xlane.f32.xlu0 %v3145
      %v3147 = vpop.xlane.xlu0 %3146
      %v3148 = vsel %vm1278, %v3076, 0.0
      %3149 = vadd.xlane.f32.xlu0 %v3148
      %v3150 = vpop.xlane.xlu0 %3149
      %v3151 = vsel %vm1278, %v3078, 0.0
      %3152 = vadd.xlane.f32.xlu0 %v3151
      %v3153 = vpop.xlane.xlu0 %3152
      %v3154 = vsel %vm1278, %v3080, 0.0
      %3155 = vadd.xlane.f32.xlu0 %v3154
      %v3156 = vpop.xlane.xlu0 %3155
      %v3157 = vsel %vm1278, %v3082, 0.0
      %3158 = vadd.xlane.f32.xlu0 %v3157
      %v3159 = vpop.xlane.xlu0 %3158
      %v3160 = vsel %vm1278, %v3084, 0.0
      %3161 = vadd.xlane.f32.xlu0 %v3160
      %v3162 = vpop.xlane.xlu0 %3161
      %v3163 = vsel %vm1278, %v3086, 0.0
      %3164 = vadd.xlane.f32.xlu0 %v3163
      %v3165 = vpop.xlane.xlu0 %3164
      %v3166 = vsel %vm1278, %v3088, 0.0
      %3167 = vadd.xlane.f32.xlu0 %v3166
      %v3168 = vpop.xlane.xlu0 %3167
      %v3169 = vsel %vm1278, %v3090, 0.0
      %3170 = vadd.xlane.f32.xlu0 %v3169
      %v3171 = vpop.xlane.xlu0 %3170
      %v3172 = vsel %vm1278, %v3092, 0.0
      %3173 = vadd.xlane.f32.xlu0 %v3172
      %v3174 = vpop.xlane.xlu0 %3173
      %v3175 = vsel %vm1278, %v3094, 0.0
      %3176 = vadd.xlane.f32.xlu0 %v3175
      %v3177 = vpop.xlane.xlu0 %3176
      %v3178 = vsel %vm1278, %v3096, 0.0
      %3179 = vadd.xlane.f32.xlu0 %v3178
      %v3180 = vpop.xlane.xlu0 %3179
      %v3181 = vsel %vm1278, %v3098, 0.0
      %3182 = vadd.xlane.f32.xlu0 %v3181
      %v3183 = vpop.xlane.xlu0 %3182
      %v3184 = vsel %vm1278, %v3100, 0.0
      %3185 = vadd.xlane.f32.xlu0 %v3184
      %v3186 = vpop.xlane.xlu0 %3185
      %v3187 = vsel %vm1278, %v3102, 0.0
      %3188 = vadd.xlane.f32.xlu0 %v3187
      %v3189 = vpop.xlane.xlu0 %3188
      %v3190 = vsel %vm1278, %v3104, 0.0
      %3191 = vadd.xlane.f32.xlu0 %v3190
      %v3192 = vpop.xlane.xlu0 %3191
      %v3193 = vsel %vm1278, %v3106, 0.0
      %3194 = vadd.xlane.f32.xlu0 %v3193
      %v3195 = vpop.xlane.xlu0 %3194
      %v3196 = vsel %vm1278, %v3108, 0.0
      %3197 = vadd.xlane.f32.xlu0 %v3196
      %v3198 = vpop.xlane.xlu0 %3197
      %v3199 = vsel %vm1278, %v3110, 0.0
      %3200 = vadd.xlane.f32.xlu0 %v3199
      %v3201 = vpop.xlane.xlu0 %3200
      %v3202 = vsel %vm1278, %v3112, 0.0
      %3203 = vadd.xlane.f32.xlu0 %v3202
      %v3204 = vpop.xlane.xlu0 %3203
      %v3205 = vsel %vm1278, %v3114, 0.0
      %3206 = vadd.xlane.f32.xlu0 %v3205
      %v3207 = vpop.xlane.xlu0 %3206
      %v3208 = vsel %vm1278, %v3116, 0.0
      %3209 = vadd.xlane.f32.xlu0 %v3208
      %v3210 = vpop.xlane.xlu0 %3209
      %v3211 = vsel %vm1278, %v3118, 0.0
      %3212 = vadd.xlane.f32.xlu0 %v3211
      %v3213 = vpop.xlane.xlu0 %3212
      %v3214 = vsel %vm1278, %v3120, 0.0
      %3215 = vadd.xlane.f32.xlu0 %v3214
      %v3216 = vpop.xlane.xlu0 %3215
      %v3217 = vrcp.pop %v3123
      %v3218 = vrcp.pop %v3126
      %v3219 = vrcp.pop %v3129
      %v3220 = vrcp.pop %v3132
      %v3221 = vrcp.pop %v3135
      %v3222 = vrcp.pop %v3138
      %v3223 = vrcp.pop %v3141
      %v3224 = vrcp.pop %v3144
      %v3225 = vrcp.pop %v3147
      %v3226 = vrcp.pop %v3150
      %v3227 = vrcp.pop %v3153
      %v3228 = vrcp.pop %v3156
      %v3229 = vrcp.pop %v3159
      %v3230 = vrcp.pop %v3162
      %v3231 = vrcp.pop %v3165
      %v3232 = vrcp.pop %v3168
      %v3233 = vrcp.pop %v3171
      %v3234 = vrcp.pop %v3174
      %v3235 = vrcp.pop %v3177
      %v3236 = vrcp.pop %v3180
      %v3237 = vrcp.pop %v3183
      %v3238 = vrcp.pop %v3186
      %v3239 = vrcp.pop %v3189
      %v3240 = vrcp.pop %v3192
      %v3241 = vrcp.pop %v3195
      %v3242 = vrcp.pop %v3198
      %v3243 = vrcp.pop %v3201
      %v3244 = vrcp.pop %v3204
      %v3245 = vrcp.pop %v3207
      %v3246 = vrcp.pop %v3210
      %v3247 = vrcp.pop %v3213
      %v3248 = vrcp.pop %v3216
      %v3249 = vmul.f32 %v3058, %v3217
      %v3250 = vmul.f32 %v3060, %v3218
      %v3251 = vmul.f32 %v3062, %v3219
      %v3252 = vmul.f32 %v3064, %v3220
      %v3253 = vmul.f32 %v3066, %v3221
      %v3254 = vmul.f32 %v3068, %v3222
      %v3255 = vmul.f32 %v3070, %v3223
      %v3256 = vmul.f32 %v3072, %v3224
      %v3257 = vmul.f32 %v3074, %v3225
      %v3258 = vmul.f32 %v3076, %v3226
      %v3259 = vmul.f32 %v3078, %v3227
      %v3260 = vmul.f32 %v3080, %v3228
      %v3261 = vmul.f32 %v3082, %v3229
      %v3262 = vmul.f32 %v3084, %v3230
      %v3263 = vmul.f32 %v3086, %v3231
      %v3264 = vmul.f32 %v3088, %v3232
      %v3265 = vmul.f32 %v3090, %v3233
      %v3266 = vmul.f32 %v3092, %v3234
      %v3267 = vmul.f32 %v3094, %v3235
      %v3268 = vmul.f32 %v3096, %v3236
      %v3269 = vmul.f32 %v3098, %v3237
      %v3270 = vmul.f32 %v3100, %v3238
      %v3271 = vmul.f32 %v3102, %v3239
      %v3272 = vmul.f32 %v3104, %v3240
      %v3273 = vmul.f32 %v3106, %v3241
      %v3274 = vmul.f32 %v3108, %v3242
      %v3275 = vmul.f32 %v3110, %v3243
      %v3276 = vmul.f32 %v3112, %v3244
      %v3277 = vmul.f32 %v3114, %v3245
      %v3278 = vmul.f32 %v3116, %v3246
      %v3279 = vmul.f32 %v3118, %v3247
      %v3280 = vmul.f32 %v3120, %v3248
      %3281 = vrot.lane.b32.xlu0 %v467, 56
      %v3282 = vpop.permute.xlu0 %3281
      %3283 = vrot.lane.b32.xlu0 %v472, 56
      %v3284 = vpop.permute.xlu0 %3283
      %3285 = vrot.lane.b32.xlu0 %v477, 56
      %v3286 = vpop.permute.xlu0 %3285
      %3287 = vrot.lane.b32.xlu0 %v482, 56
      %v3288 = vpop.permute.xlu0 %3287
      %3289 = vrot.lane.b32.xlu0 %v487, 56
      %v3290 = vpop.permute.xlu0 %3289
      %3291 = vrot.lane.b32.xlu0 %v492, 56
      %v3292 = vpop.permute.xlu0 %3291
      %3293 = vrot.lane.b32.xlu0 %v497, 56
      %v3294 = vpop.permute.xlu0 %3293
      %3295 = vrot.lane.b32.xlu0 %v502, 56
      %v3296 = vpop.permute.xlu0 %3295
      %v3306 = vsel %vm1278, %v3249, 0
      %v3309 = vsel %vm1278, %v3250, 0
      %v3312 = vsel %vm1278, %v3251, 0
      %v3315 = vsel %vm1278, %v3252, 0
      %v3318 = vsel %vm1278, %v3253, 0
      %v3321 = vsel %vm1278, %v3254, 0
      %v3324 = vsel %vm1278, %v3255, 0
      %v3327 = vsel %vm1278, %v3256, 0
      %3329 = vmatprep.subr.mxu0 0.0
      %3330 = vmatpush1.msra.mxu0 %v3282
      %3331 = vmatprep.subr.mxu0 0.0
      %3332 = vmatpush1.msra.mxu0 %v3284
      %3333 = vmatprep.subr.mxu0 0.0
      %3334 = vmatpush1.msra.mxu0 %v3286
      %3335 = vmatprep.subr.mxu0 0.0
      %3336 = vmatpush1.msra.mxu0 %v3288
      %3337 = vmatprep.subr.mxu0 0.0
      %3338 = vmatpush1.msra.mxu0 %v3290
      %3339 = vmatprep.subr.mxu0 0.0
      %3340 = vmatpush1.msra.mxu0 %v3292
      %3341 = vmatprep.subr.mxu0 0.0
      %3342 = vmatpush1.msra.mxu0 %v3294
      %3343 = vmatprep.subr.mxu0 0.0
      %3344 = vmatpush1.msra.mxu0 %v3296
      %3345 = vmatprep.subr.mxu0 0.0
      %3346 = vmatpush1.msra.mxu0 0.0
      %3347 = vmatprep.subr.mxu0 0.0
      %3348 = vmatpush1.msra.mxu0 0.0
      %3349 = vmatprep.subr.mxu0 0.0
      %3350 = vmatpush1.msra.mxu0 0.0
      %3351 = vmatprep.subr.mxu0 0.0
      %3352 = vmatpush1.msra.mxu0 0.0
      %3353 = vmatprep.subr.mxu0 0.0
      %3354 = vmatpush1.msra.mxu0 0.0
      %3355 = vmatprep.subr.mxu0 0.0
      %3356 = vmatpush1.msra.mxu0 0.0
      %3357 = vmatprep.subr.mxu0 0.0
      %3358 = vmatpush1.msra.mxu0 0.0
      %3359 = vmatprep.subr.mxu0 0.0
      %3360 = vmatpush1.msra.mxu0 0.0
      %3361 = vmatprep.subr.mxu0 0.0
      %3362 = vmatpush1.msra.mxu0 0.0
      %3363 = vmatprep.subr.mxu0 0.0
      %3364 = vmatpush1.msra.mxu0 0.0
      %3365 = vmatprep.subr.mxu0 0.0
      %3366 = vmatpush1.msra.mxu0 0.0
      %3367 = vmatprep.subr.mxu0 0.0
      %3368 = vmatpush1.msra.mxu0 0.0
      %3369 = vmatprep.subr.mxu0 0.0
      %3370 = vmatpush1.msra.mxu0 0.0
      %3371 = vmatprep.subr.mxu0 0.0
      %3372 = vmatpush1.msra.mxu0 0.0
      %3373 = vmatprep.subr.mxu0 0.0
      %3374 = vmatpush1.msra.mxu0 0.0
      %3375 = vmatprep.subr.mxu0 0.0
      %3376 = vmatpush1.msra.mxu0 0.0
      %3377 = vmatprep.subr.mxu0 0.0
      %3378 = vmatpush1.msra.mxu0 0.0
      %3379 = vmatprep.subr.mxu0 0.0
      %3380 = vmatpush1.msra.mxu0 0.0
      %3381 = vmatprep.subr.mxu0 0.0
      %3382 = vmatpush1.msra.mxu0 0.0
      %3383 = vmatprep.subr.mxu0 0.0
      %3384 = vmatpush1.msra.mxu0 0.0
      %3385 = vmatprep.subr.mxu0 0.0
      %3386 = vmatpush1.msra.mxu0 0.0
      %3387 = vmatprep.subr.mxu0 0.0
      %3388 = vmatpush1.msra.mxu0 0.0
      %3389 = vmatprep.subr.mxu0 0.0
      %3390 = vmatpush1.msra.mxu0 0.0
      %3391 = vmatprep.subr.mxu0 0.0
      %3392 = vmatpush1.msra.mxu0 0.0
      %3393 = vmatprep.mubr.f32.mxu0 0.0
      %3394 = vmatmul.mubr.f32.gmra.mrb[0].mxu0 %v3306
      %v3395 = vpop.f32.mrb[0].mxu0
      %v3396 = vadd.f32 0.0, %v3395
      %v3397 = vpop.f32.mrb[0].mxu0
      %3398 = vmatprep.mubr.f32.mxu0 0.0
      %3399 = vmatmul.mubr.f32.gmra.mrb[0].mxu0 %v3309
      %v3400 = vpop.f32.mrb[0].mxu0
      %v3401 = vadd.f32 0.0, %v3400
      %v3402 = vpop.f32.mrb[0].mxu0
      %3403 = vmatprep.mubr.f32.mxu0 0.0
      %3404 = vmatmul.mubr.f32.gmra.mrb[0].mxu0 %v3312
      %v3405 = vpop.f32.mrb[0].mxu0
      %v3406 = vadd.f32 0.0, %v3405
      %v3407 = vpop.f32.mrb[0].mxu0
      %3408 = vmatprep.mubr.f32.mxu0 0.0
      %3409 = vmatmul.mubr.f32.gmra.mrb[0].mxu0 %v3315
      %v3410 = vpop.f32.mrb[0].mxu0
      %v3411 = vadd.f32 0.0, %v3410
      %v3412 = vpop.f32.mrb[0].mxu0
      %3413 = vmatprep.mubr.f32.mxu0 0.0
      %3414 = vmatmul.mubr.f32.gmra.mrb[0].mxu0 %v3318
      %v3415 = vpop.f32.mrb[0].mxu0
      %v3416 = vadd.f32 0.0, %v3415
      %v3417 = vpop.f32.mrb[0].mxu0
      %3418 = vmatprep.mubr.f32.mxu0 0.0
      %3419 = vmatmul.mubr.f32.gmra.mrb[0].mxu0 %v3321
      %v3420 = vpop.f32.mrb[0].mxu0
      %v3421 = vadd.f32 0.0, %v3420
      %v3422 = vpop.f32.mrb[0].mxu0
      %3423 = vmatprep.mubr.f32.mxu0 0.0
      %3424 = vmatmul.mubr.f32.gmra.mrb[0].mxu0 %v3324
      %v3425 = vpop.f32.mrb[0].mxu0
      %v3426 = vadd.f32 0.0, %v3425
      %v3427 = vpop.f32.mrb[0].mxu0
      %3428 = vmatprep.mubr.f32.mxu0 0.0
      %3429 = vmatmul.mubr.f32.gmra.mrb[0].mxu0 %v3327
      %v3430 = vpop.f32.mrb[0].mxu0
      %v3431 = vadd.f32 0.0, %v3430
      %v3432 = vpop.f32.mrb[0].mxu0
      %3433 = vdwg.mxu0
      %3434 = vrot.lane.b32.xlu0 %v507, 56
      %v3435 = vpop.permute.xlu0 %3434
      %3436 = vrot.lane.b32.xlu0 %v512, 56
      %v3437 = vpop.permute.xlu0 %3436
      %3438 = vrot.lane.b32.xlu0 %v517, 56
      %v3439 = vpop.permute.xlu0 %3438
      %3440 = vrot.lane.b32.xlu0 %v522, 56
      %v3441 = vpop.permute.xlu0 %3440
      %3442 = vrot.lane.b32.xlu0 %v527, 56
      %v3443 = vpop.permute.xlu0 %3442
      %3444 = vrot.lane.b32.xlu0 %v532, 56
      %v3445 = vpop.permute.xlu0 %3444
      %3446 = vrot.lane.b32.xlu0 %v537, 56
      %v3447 = vpop.permute.xlu0 %3446
      %3448 = vrot.lane.b32.xlu0 %v542, 56
      %v3449 = vpop.permute.xlu0 %3448
      %v3459 = vsel %vm1278, %v3257, 0
      %v3462 = vsel %vm1278, %v3258, 0
      %v3465 = vsel %vm1278, %v3259, 0
      %v3468 = vsel %vm1278, %v3260, 0
      %v3471 = vsel %vm1278, %v3261, 0
      %v3474 = vsel %vm1278, %v3262, 0
      %v3477 = vsel %vm1278, %v3263, 0
      %v3480 = vsel %vm1278, %v3264, 0
      %3482 = vmatprep.subr.mxu0 0.0
      %3483 = vmatpush1.msra.mxu0 %v3435
      %3484 = vmatprep.subr.mxu0 0.0
      %3485 = vmatpush1.msra.mxu0 %v3437
      %3486 = vmatprep.subr.mxu0 0.0
      %3487 = vmatpush1.msra.mxu0 %v3439
      %3488 = vmatprep.subr.mxu0 0.0
      %3489 = vmatpush1.msra.mxu0 %v3441
      %3490 = vmatprep.subr.mxu0 0.0
      %3491 = vmatpush1.msra.mxu0 %v3443
      %3492 = vmatprep.subr.mxu0 0.0
      %3493 = vmatpush1.msra.mxu0 %v3445
      %3494 = vmatprep.subr.mxu0 0.0
      %3495 = vmatpush1.msra.mxu0 %v3447
      %3496 = vmatprep.subr.mxu0 0.0
      %3497 = vmatpush1.msra.mxu0 %v3449
      %3498 = vmatprep.subr.mxu0 0.0
      %3499 = vmatpush1.msra.mxu0 0.0
      %3500 = vmatprep.subr.mxu0 0.0
      %3501 = vmatpush1.msra.mxu0 0.0
      %3502 = vmatprep.subr.mxu0 0.0
      %3503 = vmatpush1.msra.mxu0 0.0
      %3504 = vmatprep.subr.mxu0 0.0
      %3505 = vmatpush1.msra.mxu0 0.0
      %3506 = vmatprep.subr.mxu0 0.0
      %3507 = vmatpush1.msra.mxu0 0.0
      %3508 = vmatprep.subr.mxu0 0.0
      %3509 = vmatpush1.msra.mxu0 0.0
      %3510 = vmatprep.subr.mxu0 0.0
      %3511 = vmatpush1.msra.mxu0 0.0
      %3512 = vmatprep.subr.mxu0 0.0
      %3513 = vmatpush1.msra.mxu0 0.0
      %3514 = vmatprep.subr.mxu0 0.0
      %3515 = vmatpush1.msra.mxu0 0.0
      %3516 = vmatprep.subr.mxu0 0.0
      %3517 = vmatpush1.msra.mxu0 0.0
      %3518 = vmatprep.subr.mxu0 0.0
      %3519 = vmatpush1.msra.mxu0 0.0
      %3520 = vmatprep.subr.mxu0 0.0
      %3521 = vmatpush1.msra.mxu0 0.0
      %3522 = vmatprep.subr.mxu0 0.0
      %3523 = vmatpush1.msra.mxu0 0.0
      %3524 = vmatprep.subr.mxu0 0.0
      %3525 = vmatpush1.msra.mxu0 0.0
      %3526 = vmatprep.subr.mxu0 0.0
      %3527 = vmatpush1.msra.mxu0 0.0
      %3528 = vmatprep.subr.mxu0 0.0
      %3529 = vmatpush1.msra.mxu0 0.0
      %3530 = vmatprep.subr.mxu0 0.0
      %3531 = vmatpush1.msra.mxu0 0.0
      %3532 = vmatprep.subr.mxu0 0.0
      %3533 = vmatpush1.msra.mxu0 0.0
      %3534 = vmatprep.subr.mxu0 0.0
      %3535 = vmatpush1.msra.mxu0 0.0
      %3536 = vmatprep.subr.mxu0 0.0
      %3537 = vmatpush1.msra.mxu0 0.0
      %3538 = vmatprep.subr.mxu0 0.0
      %3539 = vmatpush1.msra.mxu0 0.0
      %3540 = vmatprep.subr.mxu0 0.0
      %3541 = vmatpush1.msra.mxu0 0.0
      %3542 = vmatprep.subr.mxu0 0.0
      %3543 = vmatpush1.msra.mxu0 0.0
      %3544 = vmatprep.subr.mxu0 0.0
      %3545 = vmatpush1.msra.mxu0 0.0
      %3546 = vmatprep.mubr.f32.mxu0 0.0
      %3547 = vmatmul.mubr.f32.gmra.mrb[0].mxu0 %v3459
      %v3548 = vpop.f32.mrb[0].mxu0
      %v3549 = vadd.f32 0.0, %v3548
      %v3550 = vpop.f32.mrb[0].mxu0
      %3551 = vmatprep.mubr.f32.mxu0 0.0
      %3552 = vmatmul.mubr.f32.gmra.mrb[0].mxu0 %v3462
      %v3553 = vpop.f32.mrb[0].mxu0
      %v3554 = vadd.f32 0.0, %v3553
      %v3555 = vpop.f32.mrb[0].mxu0
      %3556 = vmatprep.mubr.f32.mxu0 0.0
      %3557 = vmatmul.mubr.f32.gmra.mrb[0].mxu0 %v3465
      %v3558 = vpop.f32.mrb[0].mxu0
      %v3559 = vadd.f32 0.0, %v3558
      %v3560 = vpop.f32.mrb[0].mxu0
      %3561 = vmatprep.mubr.f32.mxu0 0.0
      %3562 = vmatmul.mubr.f32.gmra.mrb[0].mxu0 %v3468
      %v3563 = vpop.f32.mrb[0].mxu0
      %v3564 = vadd.f32 0.0, %v3563
      %v3565 = vpop.f32.mrb[0].mxu0
      %3566 = vmatprep.mubr.f32.mxu0 0.0
      %3567 = vmatmul.mubr.f32.gmra.mrb[0].mxu0 %v3471
      %v3568 = vpop.f32.mrb[0].mxu0
      %v3569 = vadd.f32 0.0, %v3568
      %v3570 = vpop.f32.mrb[0].mxu0
      %3571 = vmatprep.mubr.f32.mxu0 0.0
      %3572 = vmatmul.mubr.f32.gmra.mrb[0].mxu0 %v3474
      %v3573 = vpop.f32.mrb[0].mxu0
      %v3574 = vadd.f32 0.0, %v3573
      %v3575 = vpop.f32.mrb[0].mxu0
      %3576 = vmatprep.mubr.f32.mxu0 0.0
      %3577 = vmatmul.mubr.f32.gmra.mrb[0].mxu0 %v3477
      %v3578 = vpop.f32.mrb[0].mxu0
      %v3579 = vadd.f32 0.0, %v3578
      %v3580 = vpop.f32.mrb[0].mxu0
      %3581 = vmatprep.mubr.f32.mxu0 0.0
      %3582 = vmatmul.mubr.f32.gmra.mrb[0].mxu0 %v3480
      %v3583 = vpop.f32.mrb[0].mxu0
      %v3584 = vadd.f32 0.0, %v3583
      %v3585 = vpop.f32.mrb[0].mxu0
      %3586 = vdwg.mxu0
      %3587 = vrot.lane.b32.xlu0 %v547, 56
      %v3588 = vpop.permute.xlu0 %3587
      %3589 = vrot.lane.b32.xlu0 %v552, 56
      %v3590 = vpop.permute.xlu0 %3589
      %3591 = vrot.lane.b32.xlu0 %v557, 56
      %v3592 = vpop.permute.xlu0 %3591
      %3593 = vrot.lane.b32.xlu0 %v562, 56
      %v3594 = vpop.permute.xlu0 %3593
      %3595 = vrot.lane.b32.xlu0 %v567, 56
      %v3596 = vpop.permute.xlu0 %3595
      %3597 = vrot.lane.b32.xlu0 %v572, 56
      %v3598 = vpop.permute.xlu0 %3597
      %3599 = vrot.lane.b32.xlu0 %v577, 56
      %v3600 = vpop.permute.xlu0 %3599
      %3601 = vrot.lane.b32.xlu0 %v582, 56
      %v3602 = vpop.permute.xlu0 %3601
      %v3612 = vsel %vm1278, %v3265, 0
      %v3615 = vsel %vm1278, %v3266, 0
      %v3618 = vsel %vm1278, %v3267, 0
      %v3621 = vsel %vm1278, %v3268, 0
      %v3624 = vsel %vm1278, %v3269, 0
      %v3627 = vsel %vm1278, %v3270, 0
      %v3630 = vsel %vm1278, %v3271, 0
      %v3633 = vsel %vm1278, %v3272, 0
      %3635 = vmatprep.subr.mxu0 0.0
      %3636 = vmatpush1.msra.mxu0 %v3588
      %3637 = vmatprep.subr.mxu0 0.0
      %3638 = vmatpush1.msra.mxu0 %v3590
      %3639 = vmatprep.subr.mxu0 0.0
      %3640 = vmatpush1.msra.mxu0 %v3592
      %3641 = vmatprep.subr.mxu0 0.0
      %3642 = vmatpush1.msra.mxu0 %v3594
      %3643 = vmatprep.subr.mxu0 0.0
      %3644 = vmatpush1.msra.mxu0 %v3596
      %3645 = vmatprep.subr.mxu0 0.0
      %3646 = vmatpush1.msra.mxu0 %v3598
      %3647 = vmatprep.subr.mxu0 0.0
      %3648 = vmatpush1.msra.mxu0 %v3600
      %3649 = vmatprep.subr.mxu0 0.0
      %3650 = vmatpush1.msra.mxu0 %v3602
      %3651 = vmatprep.subr.mxu0 0.0
      %3652 = vmatpush1.msra.mxu0 0.0
      %3653 = vmatprep.subr.mxu0 0.0
      %3654 = vmatpush1.msra.mxu0 0.0
      %3655 = vmatprep.subr.mxu0 0.0
      %3656 = vmatpush1.msra.mxu0 0.0
      %3657 = vmatprep.subr.mxu0 0.0
      %3658 = vmatpush1.msra.mxu0 0.0
      %3659 = vmatprep.subr.mxu0 0.0
      %3660 = vmatpush1.msra.mxu0 0.0
      %3661 = vmatprep.subr.mxu0 0.0
      %3662 = vmatpush1.msra.mxu0 0.0
      %3663 = vmatprep.subr.mxu0 0.0
      %3664 = vmatpush1.msra.mxu0 0.0
      %3665 = vmatprep.subr.mxu0 0.0
      %3666 = vmatpush1.msra.mxu0 0.0
      %3667 = vmatprep.subr.mxu0 0.0
      %3668 = vmatpush1.msra.mxu0 0.0
      %3669 = vmatprep.subr.mxu0 0.0
      %3670 = vmatpush1.msra.mxu0 0.0
      %3671 = vmatprep.subr.mxu0 0.0
      %3672 = vmatpush1.msra.mxu0 0.0
      %3673 = vmatprep.subr.mxu0 0.0
      %3674 = vmatpush1.msra.mxu0 0.0
      %3675 = vmatprep.subr.mxu0 0.0
      %3676 = vmatpush1.msra.mxu0 0.0
      %3677 = vmatprep.subr.mxu0 0.0
      %3678 = vmatpush1.msra.mxu0 0.0
      %3679 = vmatprep.subr.mxu0 0.0
      %3680 = vmatpush1.msra.mxu0 0.0
      %3681 = vmatprep.subr.mxu0 0.0
      %3682 = vmatpush1.msra.mxu0 0.0
      %3683 = vmatprep.subr.mxu0 0.0
      %3684 = vmatpush1.msra.mxu0 0.0
      %3685 = vmatprep.subr.mxu0 0.0
      %3686 = vmatpush1.msra.mxu0 0.0
      %3687 = vmatprep.subr.mxu0 0.0
      %3688 = vmatpush1.msra.mxu0 0.0
      %3689 = vmatprep.subr.mxu0 0.0
      %3690 = vmatpush1.msra.mxu0 0.0
      %3691 = vmatprep.subr.mxu0 0.0
      %3692 = vmatpush1.msra.mxu0 0.0
      %3693 = vmatprep.subr.mxu0 0.0
      %3694 = vmatpush1.msra.mxu0 0.0
      %3695 = vmatprep.subr.mxu0 0.0
      %3696 = vmatpush1.msra.mxu0 0.0
      %3697 = vmatprep.subr.mxu0 0.0
      %3698 = vmatpush1.msra.mxu0 0.0
      %3699 = vmatprep.mubr.f32.mxu0 0.0
      %3700 = vmatmul.mubr.f32.gmra.mrb[0].mxu0 %v3612
      %v3701 = vpop.f32.mrb[0].mxu0
      %v3702 = vadd.f32 0.0, %v3701
      %v3703 = vpop.f32.mrb[0].mxu0
      %3704 = vmatprep.mubr.f32.mxu0 0.0
      %3705 = vmatmul.mubr.f32.gmra.mrb[0].mxu0 %v3615
      %v3706 = vpop.f32.mrb[0].mxu0
      %v3707 = vadd.f32 0.0, %v3706
      %v3708 = vpop.f32.mrb[0].mxu0
      %3709 = vmatprep.mubr.f32.mxu0 0.0
      %3710 = vmatmul.mubr.f32.gmra.mrb[0].mxu0 %v3618
      %v3711 = vpop.f32.mrb[0].mxu0
      %v3712 = vadd.f32 0.0, %v3711
      %v3713 = vpop.f32.mrb[0].mxu0
      %3714 = vmatprep.mubr.f32.mxu0 0.0
      %3715 = vmatmul.mubr.f32.gmra.mrb[0].mxu0 %v3621
      %v3716 = vpop.f32.mrb[0].mxu0
      %v3717 = vadd.f32 0.0, %v3716
      %v3718 = vpop.f32.mrb[0].mxu0
      %3719 = vmatprep.mubr.f32.mxu0 0.0
      %3720 = vmatmul.mubr.f32.gmra.mrb[0].mxu0 %v3624
      %v3721 = vpop.f32.mrb[0].mxu0
      %v3722 = vadd.f32 0.0, %v3721
      %v3723 = vpop.f32.mrb[0].mxu0
      %3724 = vmatprep.mubr.f32.mxu0 0.0
      %3725 = vmatmul.mubr.f32.gmra.mrb[0].mxu0 %v3627
      %v3726 = vpop.f32.mrb[0].mxu0
      %v3727 = vadd.f32 0.0, %v3726
      %v3728 = vpop.f32.mrb[0].mxu0
      %3729 = vmatprep.mubr.f32.mxu0 0.0
      %3730 = vmatmul.mubr.f32.gmra.mrb[0].mxu0 %v3630
      %v3731 = vpop.f32.mrb[0].mxu0
      %v3732 = vadd.f32 0.0, %v3731
      %v3733 = vpop.f32.mrb[0].mxu0
      %3734 = vmatprep.mubr.f32.mxu0 0.0
      %3735 = vmatmul.mubr.f32.gmra.mrb[0].mxu0 %v3633
      %v3736 = vpop.f32.mrb[0].mxu0
      %v3737 = vadd.f32 0.0, %v3736
      %v3738 = vpop.f32.mrb[0].mxu0
      %3739 = vdwg.mxu0
      %3740 = vrot.lane.b32.xlu0 %v587, 56
      %v3741 = vpop.permute.xlu0 %3740
      %3742 = vrot.lane.b32.xlu0 %v592, 56
      %v3743 = vpop.permute.xlu0 %3742
      %3744 = vrot.lane.b32.xlu0 %v597, 56
      %v3745 = vpop.permute.xlu0 %3744
      %3746 = vrot.lane.b32.xlu0 %v602, 56
      %v3747 = vpop.permute.xlu0 %3746
      %3748 = vrot.lane.b32.xlu0 %v607, 56
      %v3749 = vpop.permute.xlu0 %3748
      %3750 = vrot.lane.b32.xlu0 %v612, 56
      %v3751 = vpop.permute.xlu0 %3750
      %3752 = vrot.lane.b32.xlu0 %v617, 56
      %v3753 = vpop.permute.xlu0 %3752
      %3754 = vrot.lane.b32.xlu0 %v622, 56
      %v3755 = vpop.permute.xlu0 %3754
      %v3765 = vsel %vm1278, %v3273, 0
      %v3768 = vsel %vm1278, %v3274, 0
      %v3771 = vsel %vm1278, %v3275, 0
      %v3774 = vsel %vm1278, %v3276, 0
      %v3777 = vsel %vm1278, %v3277, 0
      %v3780 = vsel %vm1278, %v3278, 0
      %v3783 = vsel %vm1278, %v3279, 0
      %v3786 = vsel %vm1278, %v3280, 0
      %3788 = vmatprep.subr.mxu0 0.0
      %3789 = vmatpush1.msra.mxu0 %v3741
      %3790 = vmatprep.subr.mxu0 0.0
      %3791 = vmatpush1.msra.mxu0 %v3743
      %3792 = vmatprep.subr.mxu0 0.0
      %3793 = vmatpush1.msra.mxu0 %v3745
      %3794 = vmatprep.subr.mxu0 0.0
      %3795 = vmatpush1.msra.mxu0 %v3747
      %3796 = vmatprep.subr.mxu0 0.0
      %3797 = vmatpush1.msra.mxu0 %v3749
      %3798 = vmatprep.subr.mxu0 0.0
      %3799 = vmatpush1.msra.mxu0 %v3751
      %3800 = vmatprep.subr.mxu0 0.0
      %3801 = vmatpush1.msra.mxu0 %v3753
      %3802 = vmatprep.subr.mxu0 0.0
      %3803 = vmatpush1.msra.mxu0 %v3755
      %3804 = vmatprep.subr.mxu0 0.0
      %3805 = vmatpush1.msra.mxu0 0.0
      %3806 = vmatprep.subr.mxu0 0.0
      %3807 = vmatpush1.msra.mxu0 0.0
      %3808 = vmatprep.subr.mxu0 0.0
      %3809 = vmatpush1.msra.mxu0 0.0
      %3810 = vmatprep.subr.mxu0 0.0
      %3811 = vmatpush1.msra.mxu0 0.0
      %3812 = vmatprep.subr.mxu0 0.0
      %3813 = vmatpush1.msra.mxu0 0.0
      %3814 = vmatprep.subr.mxu0 0.0
      %3815 = vmatpush1.msra.mxu0 0.0
      %3816 = vmatprep.subr.mxu0 0.0
      %3817 = vmatpush1.msra.mxu0 0.0
      %3818 = vmatprep.subr.mxu0 0.0
      %3819 = vmatpush1.msra.mxu0 0.0
      %3820 = vmatprep.subr.mxu0 0.0
      %3821 = vmatpush1.msra.mxu0 0.0
      %3822 = vmatprep.subr.mxu0 0.0
      %3823 = vmatpush1.msra.mxu0 0.0
      %3824 = vmatprep.subr.mxu0 0.0
      %3825 = vmatpush1.msra.mxu0 0.0
      %3826 = vmatprep.subr.mxu0 0.0
      %3827 = vmatpush1.msra.mxu0 0.0
      %3828 = vmatprep.subr.mxu0 0.0
      %3829 = vmatpush1.msra.mxu0 0.0
      %3830 = vmatprep.subr.mxu0 0.0
      %3831 = vmatpush1.msra.mxu0 0.0
      %3832 = vmatprep.subr.mxu0 0.0
      %3833 = vmatpush1.msra.mxu0 0.0
      %3834 = vmatprep.subr.mxu0 0.0
      %3835 = vmatpush1.msra.mxu0 0.0
      %3836 = vmatprep.subr.mxu0 0.0
      %3837 = vmatpush1.msra.mxu0 0.0
      %3838 = vmatprep.subr.mxu0 0.0
      %3839 = vmatpush1.msra.mxu0 0.0
      %3840 = vmatprep.subr.mxu0 0.0
      %3841 = vmatpush1.msra.mxu0 0.0
      %3842 = vmatprep.subr.mxu0 0.0
      %3843 = vmatpush1.msra.mxu0 0.0
      %3844 = vmatprep.subr.mxu0 0.0
      %3845 = vmatpush1.msra.mxu0 0.0
      %3846 = vmatprep.subr.mxu0 0.0
      %3847 = vmatpush1.msra.mxu0 0.0
      %3848 = vmatprep.subr.mxu0 0.0
      %3849 = vmatpush1.msra.mxu0 0.0
      %3850 = vmatprep.subr.mxu0 0.0
      %3851 = vmatpush1.msra.mxu0 0.0
      %3852 = vmatprep.mubr.f32.mxu0 0.0
      %3853 = vmatmul.mubr.f32.gmra.mrb[0].mxu0 %v3765
      %v3854 = vpop.f32.mrb[0].mxu0
      %v3855 = vadd.f32 0.0, %v3854
      %v3856 = vpop.f32.mrb[0].mxu0
      %3857 = vmatprep.mubr.f32.mxu0 0.0
      %3858 = vmatmul.mubr.f32.gmra.mrb[0].mxu0 %v3768
      %v3859 = vpop.f32.mrb[0].mxu0
      %v3860 = vadd.f32 0.0, %v3859
      %v3861 = vpop.f32.mrb[0].mxu0
      %3862 = vmatprep.mubr.f32.mxu0 0.0
      %3863 = vmatmul.mubr.f32.gmra.mrb[0].mxu0 %v3771
      %v3864 = vpop.f32.mrb[0].mxu0
      %v3865 = vadd.f32 0.0, %v3864
      %v3866 = vpop.f32.mrb[0].mxu0
      %3867 = vmatprep.mubr.f32.mxu0 0.0
      %3868 = vmatmul.mubr.f32.gmra.mrb[0].mxu0 %v3774
      %v3869 = vpop.f32.mrb[0].mxu0
      %v3870 = vadd.f32 0.0, %v3869
      %v3871 = vpop.f32.mrb[0].mxu0
      %3872 = vmatprep.mubr.f32.mxu0 0.0
      %3873 = vmatmul.mubr.f32.gmra.mrb[0].mxu0 %v3777
      %v3874 = vpop.f32.mrb[0].mxu0
      %v3875 = vadd.f32 0.0, %v3874
      %v3876 = vpop.f32.mrb[0].mxu0
      %3877 = vmatprep.mubr.f32.mxu0 0.0
      %3878 = vmatmul.mubr.f32.gmra.mrb[0].mxu0 %v3780
      %v3879 = vpop.f32.mrb[0].mxu0
      %v3880 = vadd.f32 0.0, %v3879
      %v3881 = vpop.f32.mrb[0].mxu0
      %3882 = vmatprep.mubr.f32.mxu0 0.0
      %3883 = vmatmul.mubr.f32.gmra.mrb[0].mxu0 %v3783
      %v3884 = vpop.f32.mrb[0].mxu0
      %v3885 = vadd.f32 0.0, %v3884
      %v3886 = vpop.f32.mrb[0].mxu0
      %3887 = vmatprep.mubr.f32.mxu0 0.0
      %3888 = vmatmul.mubr.f32.gmra.mrb[0].mxu0 %v3786
      %v3889 = vpop.f32.mrb[0].mxu0
      %v3890 = vadd.f32 0.0, %v3889
      %v3891 = vpop.f32.mrb[0].mxu0
      %3892 = vdwg.mxu0
      %v3893 = vld [vmem:[%s4 + $0x8] sm:$0xff]
      %v3895 = vsel %vm657, %v3396, 0
      %v3898 = vsel %vm657, %v3401, 0
      %v3901 = vsel %vm657, %v3406, 0
      %v3904 = vsel %vm657, %v3411, 0
      %v3907 = vsel %vm657, %v3416, 0
      %v3910 = vsel %vm657, %v3421, 0
      %v3913 = vsel %vm657, %v3426, 0
      %v3916 = vsel %vm657, %v3431, 0
      %v3919 = vsel %vm657, %v3549, 0
      %v3922 = vsel %vm657, %v3554, 0
      %v3925 = vsel %vm657, %v3559, 0
      %v3928 = vsel %vm657, %v3564, 0
      %v3931 = vsel %vm657, %v3569, 0
      %v3934 = vsel %vm657, %v3574, 0
      %v3937 = vsel %vm657, %v3579, 0
      %v3940 = vsel %vm657, %v3584, 0
      %v3943 = vsel %vm657, %v3702, 0
      %v3946 = vsel %vm657, %v3707, 0
      %v3949 = vsel %vm657, %v3712, 0
      %v3952 = vsel %vm657, %v3717, 0
      %v3955 = vsel %vm657, %v3722, 0
      %v3958 = vsel %vm657, %v3727, 0
      %v3961 = vsel %vm657, %v3732, 0
      %v3964 = vsel %vm657, %v3737, 0
      %v3967 = vsel %vm657, %v3855, 0
      %v3970 = vsel %vm657, %v3860, 0
      %v3973 = vsel %vm657, %v3865, 0
      %v3976 = vsel %vm657, %v3870, 0
      %v3979 = vsel %vm657, %v3875, 0
      %v3982 = vsel %vm657, %v3880, 0
      %v3985 = vsel %vm657, %v3885, 0
      %v3988 = vsel %vm657, %v3890, 0
      %3990 = vmatprep.subr.mxu0 0.0
      %3991 = vmatpush1.msra.mxu0 %v3893
      %3992 = vmatprep.subr.mxu0 0.0
      %3993 = vmatpush1.msra.mxu0 0.0
      %3994 = vmatprep.subr.mxu0 0.0
      %3995 = vmatpush1.msra.mxu0 0.0
      %3996 = vmatprep.subr.mxu0 0.0
      %3997 = vmatpush1.msra.mxu0 0.0
      %3998 = vmatprep.subr.mxu0 0.0
      %3999 = vmatpush1.msra.mxu0 0.0
      %4000 = vmatprep.subr.mxu0 0.0
      %4001 = vmatpush1.msra.mxu0 0.0
      %4002 = vmatprep.subr.mxu0 0.0
      %4003 = vmatpush1.msra.mxu0 0.0
      %4004 = vmatprep.subr.mxu0 0.0
      %4005 = vmatpush1.msra.mxu0 0.0
      %4006 = vmatprep.subr.mxu0 0.0
      %4007 = vmatpush1.msra.mxu0 0.0
      %4008 = vmatprep.subr.mxu0 0.0
      %4009 = vmatpush1.msra.mxu0 0.0
      %4010 = vmatprep.subr.mxu0 0.0
      %4011 = vmatpush1.msra.mxu0 0.0
      %4012 = vmatprep.subr.mxu0 0.0
      %4013 = vmatpush1.msra.mxu0 0.0
      %4014 = vmatprep.subr.mxu0 0.0
      %4015 = vmatpush1.msra.mxu0 0.0
      %4016 = vmatprep.subr.mxu0 0.0
      %4017 = vmatpush1.msra.mxu0 0.0
      %4018 = vmatprep.subr.mxu0 0.0
      %4019 = vmatpush1.msra.mxu0 0.0
      %4020 = vmatprep.subr.mxu0 0.0
      %4021 = vmatpush1.msra.mxu0 0.0
      %4022 = vmatprep.subr.mxu0 0.0
      %4023 = vmatpush1.msra.mxu0 0.0
      %4024 = vmatprep.subr.mxu0 0.0
      %4025 = vmatpush1.msra.mxu0 0.0
      %4026 = vmatprep.subr.mxu0 0.0
      %4027 = vmatpush1.msra.mxu0 0.0
      %4028 = vmatprep.subr.mxu0 0.0
      %4029 = vmatpush1.msra.mxu0 0.0
      %4030 = vmatprep.subr.mxu0 0.0
      %4031 = vmatpush1.msra.mxu0 0.0
      %4032 = vmatprep.subr.mxu0 0.0
      %4033 = vmatpush1.msra.mxu0 0.0
      %4034 = vmatprep.subr.mxu0 0.0
      %4035 = vmatpush1.msra.mxu0 0.0
      %4036 = vmatprep.subr.mxu0 0.0
      %4037 = vmatpush1.msra.mxu0 0.0
      %4038 = vmatprep.subr.mxu0 0.0
      %4039 = vmatpush1.msra.mxu0 0.0
      %4040 = vmatprep.subr.mxu0 0.0
      %4041 = vmatpush1.msra.mxu0 0.0
      %4042 = vmatprep.subr.mxu0 0.0
      %4043 = vmatpush1.msra.mxu0 0.0
      %4044 = vmatprep.subr.mxu0 0.0
      %4045 = vmatpush1.msra.mxu0 0.0
      %4046 = vmatprep.subr.mxu0 0.0
      %4047 = vmatpush1.msra.mxu0 0.0
      %4048 = vmatprep.subr.mxu0 0.0
      %4049 = vmatpush1.msra.mxu0 0.0
      %4050 = vmatprep.subr.mxu0 0.0
      %4051 = vmatpush1.msra.mxu0 0.0
      %4052 = vmatprep.subr.mxu0 0.0
      %4053 = vmatpush1.msra.mxu0 0.0
      %4054 = vmatprep.mubr.f32.mxu0 0.0
      %4055 = vmatmul.mubr.f32.gmra.mrb[0].mxu0 %v3895
      %v4056 = vpop.f32.mrb[0].mxu0
      %v4057 = vadd.f32 0.0, %v4056
      %v4058 = vpop.f32.mrb[0].mxu0
      %4059 = vmatprep.mubr.f32.mxu0 0.0
      %4060 = vmatmul.mubr.f32.gmra.mrb[0].mxu0 %v3898
      %v4061 = vpop.f32.mrb[0].mxu0
      %v4062 = vadd.f32 0.0, %v4061
      %v4063 = vpop.f32.mrb[0].mxu0
      %4064 = vmatprep.mubr.f32.mxu0 0.0
      %4065 = vmatmul.mubr.f32.gmra.mrb[0].mxu0 %v3901
      %v4066 = vpop.f32.mrb[0].mxu0
      %v4067 = vadd.f32 0.0, %v4066
      %v4068 = vpop.f32.mrb[0].mxu0
      %4069 = vmatprep.mubr.f32.mxu0 0.0
      %4070 = vmatmul.mubr.f32.gmra.mrb[0].mxu0 %v3904
      %v4071 = vpop.f32.mrb[0].mxu0
      %v4072 = vadd.f32 0.0, %v4071
      %v4073 = vpop.f32.mrb[0].mxu0
      %4074 = vmatprep.mubr.f32.mxu0 0.0
      %4075 = vmatmul.mubr.f32.gmra.mrb[0].mxu0 %v3907
      %v4076 = vpop.f32.mrb[0].mxu0
      %v4077 = vadd.f32 0.0, %v4076
      %v4078 = vpop.f32.mrb[0].mxu0
      %4079 = vmatprep.mubr.f32.mxu0 0.0
      %4080 = vmatmul.mubr.f32.gmra.mrb[0].mxu0 %v3910
      %v4081 = vpop.f32.mrb[0].mxu0
      %v4082 = vadd.f32 0.0, %v4081
      %v4083 = vpop.f32.mrb[0].mxu0
      %4084 = vmatprep.mubr.f32.mxu0 0.0
      %4085 = vmatmul.mubr.f32.gmra.mrb[0].mxu0 %v3913
      %v4086 = vpop.f32.mrb[0].mxu0
      %v4087 = vadd.f32 0.0, %v4086
      %v4088 = vpop.f32.mrb[0].mxu0
      %4089 = vmatprep.mubr.f32.mxu0 0.0
      %4090 = vmatmul.mubr.f32.gmra.mrb[0].mxu0 %v3916
      %v4091 = vpop.f32.mrb[0].mxu0
      %v4092 = vadd.f32 0.0, %v4091
      %v4093 = vpop.f32.mrb[0].mxu0
      %4094 = vmatprep.mubr.f32.mxu0 0.0
      %4095 = vmatmul.mubr.f32.gmra.mrb[0].mxu0 %v3919
      %v4096 = vpop.f32.mrb[0].mxu0
      %v4097 = vadd.f32 0.0, %v4096
      %v4098 = vpop.f32.mrb[0].mxu0
      %4099 = vmatprep.mubr.f32.mxu0 0.0
      %4100 = vmatmul.mubr.f32.gmra.mrb[0].mxu0 %v3922
      %v4101 = vpop.f32.mrb[0].mxu0
      %v4102 = vadd.f32 0.0, %v4101
      %v4103 = vpop.f32.mrb[0].mxu0
      %4104 = vmatprep.mubr.f32.mxu0 0.0
      %4105 = vmatmul.mubr.f32.gmra.mrb[0].mxu0 %v3925
      %v4106 = vpop.f32.mrb[0].mxu0
      %v4107 = vadd.f32 0.0, %v4106
      %v4108 = vpop.f32.mrb[0].mxu0
      %4109 = vmatprep.mubr.f32.mxu0 0.0
      %4110 = vmatmul.mubr.f32.gmra.mrb[0].mxu0 %v3928
      %v4111 = vpop.f32.mrb[0].mxu0
      %v4112 = vadd.f32 0.0, %v4111
      %v4113 = vpop.f32.mrb[0].mxu0
      %4114 = vmatprep.mubr.f32.mxu0 0.0
      %4115 = vmatmul.mubr.f32.gmra.mrb[0].mxu0 %v3931
      %v4116 = vpop.f32.mrb[0].mxu0
      %v4117 = vadd.f32 0.0, %v4116
      %v4118 = vpop.f32.mrb[0].mxu0
      %4119 = vmatprep.mubr.f32.mxu0 0.0
      %4120 = vmatmul.mubr.f32.gmra.mrb[0].mxu0 %v3934
      %v4121 = vpop.f32.mrb[0].mxu0
      %v4122 = vadd.f32 0.0, %v4121
      %v4123 = vpop.f32.mrb[0].mxu0
      %4124 = vmatprep.mubr.f32.mxu0 0.0
      %4125 = vmatmul.mubr.f32.gmra.mrb[0].mxu0 %v3937
      %v4126 = vpop.f32.mrb[0].mxu0
      %v4127 = vadd.f32 0.0, %v4126
      %v4128 = vpop.f32.mrb[0].mxu0
      %4129 = vmatprep.mubr.f32.mxu0 0.0
      %4130 = vmatmul.mubr.f32.gmra.mrb[0].mxu0 %v3940
      %v4131 = vpop.f32.mrb[0].mxu0
      %v4132 = vadd.f32 0.0, %v4131
      %v4133 = vpop.f32.mrb[0].mxu0
      %4134 = vmatprep.mubr.f32.mxu0 0.0
      %4135 = vmatmul.mubr.f32.gmra.mrb[0].mxu0 %v3943
      %v4136 = vpop.f32.mrb[0].mxu0
      %v4137 = vadd.f32 0.0, %v4136
      %v4138 = vpop.f32.mrb[0].mxu0
      %4139 = vmatprep.mubr.f32.mxu0 0.0
      %4140 = vmatmul.mubr.f32.gmra.mrb[0].mxu0 %v3946
      %v4141 = vpop.f32.mrb[0].mxu0
      %v4142 = vadd.f32 0.0, %v4141
      %v4143 = vpop.f32.mrb[0].mxu0
      %4144 = vmatprep.mubr.f32.mxu0 0.0
      %4145 = vmatmul.mubr.f32.gmra.mrb[0].mxu0 %v3949
      %v4146 = vpop.f32.mrb[0].mxu0
      %v4147 = vadd.f32 0.0, %v4146
      %v4148 = vpop.f32.mrb[0].mxu0
      %4149 = vmatprep.mubr.f32.mxu0 0.0
      %4150 = vmatmul.mubr.f32.gmra.mrb[0].mxu0 %v3952
      %v4151 = vpop.f32.mrb[0].mxu0
      %v4152 = vadd.f32 0.0, %v4151
      %v4153 = vpop.f32.mrb[0].mxu0
      %4154 = vmatprep.mubr.f32.mxu0 0.0
      %4155 = vmatmul.mubr.f32.gmra.mrb[0].mxu0 %v3955
      %v4156 = vpop.f32.mrb[0].mxu0
      %v4157 = vadd.f32 0.0, %v4156
      %v4158 = vpop.f32.mrb[0].mxu0
      %4159 = vmatprep.mubr.f32.mxu0 0.0
      %4160 = vmatmul.mubr.f32.gmra.mrb[0].mxu0 %v3958
      %v4161 = vpop.f32.mrb[0].mxu0
      %v4162 = vadd.f32 0.0, %v4161
      %v4163 = vpop.f32.mrb[0].mxu0
      %4164 = vmatprep.mubr.f32.mxu0 0.0
      %4165 = vmatmul.mubr.f32.gmra.mrb[0].mxu0 %v3961
      %v4166 = vpop.f32.mrb[0].mxu0
      %v4167 = vadd.f32 0.0, %v4166
      %v4168 = vpop.f32.mrb[0].mxu0
      %4169 = vmatprep.mubr.f32.mxu0 0.0
      %4170 = vmatmul.mubr.f32.gmra.mrb[0].mxu0 %v3964
      %v4171 = vpop.f32.mrb[0].mxu0
      %v4172 = vadd.f32 0.0, %v4171
      %v4173 = vpop.f32.mrb[0].mxu0
      %4174 = vmatprep.mubr.f32.mxu0 0.0
      %4175 = vmatmul.mubr.f32.gmra.mrb[0].mxu0 %v3967
      %v4176 = vpop.f32.mrb[0].mxu0
      %v4177 = vadd.f32 0.0, %v4176
      %v4178 = vpop.f32.mrb[0].mxu0
      %4179 = vmatprep.mubr.f32.mxu0 0.0
      %4180 = vmatmul.mubr.f32.gmra.mrb[0].mxu0 %v3970
      %v4181 = vpop.f32.mrb[0].mxu0
      %v4182 = vadd.f32 0.0, %v4181
      %v4183 = vpop.f32.mrb[0].mxu0
      %4184 = vmatprep.mubr.f32.mxu0 0.0
      %4185 = vmatmul.mubr.f32.gmra.mrb[0].mxu0 %v3973
      %v4186 = vpop.f32.mrb[0].mxu0
      %v4187 = vadd.f32 0.0, %v4186
      %v4188 = vpop.f32.mrb[0].mxu0
      %4189 = vmatprep.mubr.f32.mxu0 0.0
      %4190 = vmatmul.mubr.f32.gmra.mrb[0].mxu0 %v3976
      %v4191 = vpop.f32.mrb[0].mxu0
      %v4192 = vadd.f32 0.0, %v4191
      %v4193 = vpop.f32.mrb[0].mxu0
      %4194 = vmatprep.mubr.f32.mxu0 0.0
      %4195 = vmatmul.mubr.f32.gmra.mrb[0].mxu0 %v3979
      %v4196 = vpop.f32.mrb[0].mxu0
      %v4197 = vadd.f32 0.0, %v4196
      %v4198 = vpop.f32.mrb[0].mxu0
      %4199 = vmatprep.mubr.f32.mxu0 0.0
      %4200 = vmatmul.mubr.f32.gmra.mrb[0].mxu0 %v3982
      %v4201 = vpop.f32.mrb[0].mxu0
      %v4202 = vadd.f32 0.0, %v4201
      %v4203 = vpop.f32.mrb[0].mxu0
      %4204 = vmatprep.mubr.f32.mxu0 0.0
      %4205 = vmatmul.mubr.f32.gmra.mrb[0].mxu0 %v3985
      %v4206 = vpop.f32.mrb[0].mxu0
      %v4207 = vadd.f32 0.0, %v4206
      %v4208 = vpop.f32.mrb[0].mxu0
      %4209 = vmatprep.mubr.f32.mxu0 0.0
      %4210 = vmatmul.mubr.f32.gmra.mrb[0].mxu0 %v3988
      %v4211 = vpop.f32.mrb[0].mxu0
      %v4212 = vadd.f32 0.0, %v4211
      %v4213 = vpop.f32.mrb[0].mxu0
      %4214 = vdwg.mxu0
      %v4216 = vsel %vm657, %v1746, 0
      %v4219 = vsel %vm657, %v1751, 0
      %v4222 = vsel %vm657, %v1756, 0
      %v4225 = vsel %vm657, %v1761, 0
      %v4228 = vsel %vm657, %v1766, 0
      %v4231 = vsel %vm657, %v1771, 0
      %v4234 = vsel %vm657, %v1776, 0
      %v4237 = vsel %vm657, %v1781, 0
      %v4240 = vsel %vm657, %v1899, 0
      %v4243 = vsel %vm657, %v1904, 0
      %v4246 = vsel %vm657, %v1909, 0
      %v4249 = vsel %vm657, %v1914, 0
      %v4252 = vsel %vm657, %v1919, 0
      %v4255 = vsel %vm657, %v1924, 0
      %v4258 = vsel %vm657, %v1929, 0
      %v4261 = vsel %vm657, %v1934, 0
      %v4264 = vsel %vm657, %v2052, 0
      %v4267 = vsel %vm657, %v2057, 0
      %v4270 = vsel %vm657, %v2062, 0
      %v4273 = vsel %vm657, %v2067, 0
      %v4276 = vsel %vm657, %v2072, 0
      %v4279 = vsel %vm657, %v2077, 0
      %v4282 = vsel %vm657, %v2082, 0
      %v4285 = vsel %vm657, %v2087, 0
      %v4288 = vsel %vm657, %v2205, 0
      %v4291 = vsel %vm657, %v2210, 0
      %v4294 = vsel %vm657, %v2215, 0
      %v4297 = vsel %vm657, %v2220, 0
      %v4300 = vsel %vm657, %v2225, 0
      %v4303 = vsel %vm657, %v2230, 0
      %v4306 = vsel %vm657, %v2235, 0
      %v4309 = vsel %vm657, %v2240, 0
      %4311 = vmatprep.subr.mxu0 0.0
      %4312 = vmatpush1.msra.mxu0 %v2243
      %4313 = vmatprep.subr.mxu0 0.0
      %4314 = vmatpush1.msra.mxu0 0.0
      %4315 = vmatprep.subr.mxu0 0.0
      %4316 = vmatpush1.msra.mxu0 0.0
      %4317 = vmatprep.subr.mxu0 0.0
      %4318 = vmatpush1.msra.mxu0 0.0
      %4319 = vmatprep.subr.mxu0 0.0
      %4320 = vmatpush1.msra.mxu0 0.0
      %4321 = vmatprep.subr.mxu0 0.0
      %4322 = vmatpush1.msra.mxu0 0.0
      %4323 = vmatprep.subr.mxu0 0.0
      %4324 = vmatpush1.msra.mxu0 0.0
      %4325 = vmatprep.subr.mxu0 0.0
      %4326 = vmatpush1.msra.mxu0 0.0
      %4327 = vmatprep.subr.mxu0 0.0
      %4328 = vmatpush1.msra.mxu0 0.0
      %4329 = vmatprep.subr.mxu0 0.0
      %4330 = vmatpush1.msra.mxu0 0.0
      %4331 = vmatprep.subr.mxu0 0.0
      %4332 = vmatpush1.msra.mxu0 0.0
      %4333 = vmatprep.subr.mxu0 0.0
      %4334 = vmatpush1.msra.mxu0 0.0
      %4335 = vmatprep.subr.mxu0 0.0
      %4336 = vmatpush1.msra.mxu0 0.0
      %4337 = vmatprep.subr.mxu0 0.0
      %4338 = vmatpush1.msra.mxu0 0.0
      %4339 = vmatprep.subr.mxu0 0.0
      %4340 = vmatpush1.msra.mxu0 0.0
      %4341 = vmatprep.subr.mxu0 0.0
      %4342 = vmatpush1.msra.mxu0 0.0
      %4343 = vmatprep.subr.mxu0 0.0
      %4344 = vmatpush1.msra.mxu0 0.0
      %4345 = vmatprep.subr.mxu0 0.0
      %4346 = vmatpush1.msra.mxu0 0.0
      %4347 = vmatprep.subr.mxu0 0.0
      %4348 = vmatpush1.msra.mxu0 0.0
      %4349 = vmatprep.subr.mxu0 0.0
      %4350 = vmatpush1.msra.mxu0 0.0
      %4351 = vmatprep.subr.mxu0 0.0
      %4352 = vmatpush1.msra.mxu0 0.0
      %4353 = vmatprep.subr.mxu0 0.0
      %4354 = vmatpush1.msra.mxu0 0.0
      %4355 = vmatprep.subr.mxu0 0.0
      %4356 = vmatpush1.msra.mxu0 0.0
      %4357 = vmatprep.subr.mxu0 0.0
      %4358 = vmatpush1.msra.mxu0 0.0
      %4359 = vmatprep.subr.mxu0 0.0
      %4360 = vmatpush1.msra.mxu0 0.0
      %4361 = vmatprep.subr.mxu0 0.0
      %4362 = vmatpush1.msra.mxu0 0.0
      %4363 = vmatprep.subr.mxu0 0.0
      %4364 = vmatpush1.msra.mxu0 0.0
      %4365 = vmatprep.subr.mxu0 0.0
      %4366 = vmatpush1.msra.mxu0 0.0
      %4367 = vmatprep.subr.mxu0 0.0
      %4368 = vmatpush1.msra.mxu0 0.0
      %4369 = vmatprep.subr.mxu0 0.0
      %4370 = vmatpush1.msra.mxu0 0.0
      %4371 = vmatprep.subr.mxu0 0.0
      %4372 = vmatpush1.msra.mxu0 0.0
      %4373 = vmatprep.subr.mxu0 0.0
      %4374 = vmatpush1.msra.mxu0 0.0
      %4375 = vmatprep.mubr.f32.mxu0 0.0
      %4376 = vmatmul.mubr.f32.gmra.mrb[0].mxu0 %v4216
      %v4377 = vpop.f32.mrb[0].mxu0
      %v4378 = vadd.f32 %v4057, %v4377
      %v4379 = vpop.f32.mrb[0].mxu0
      %4380 = vmatprep.mubr.f32.mxu0 0.0
      %4381 = vmatmul.mubr.f32.gmra.mrb[0].mxu0 %v4219
      %v4382 = vpop.f32.mrb[0].mxu0
      %v4383 = vadd.f32 %v4062, %v4382
      %v4384 = vpop.f32.mrb[0].mxu0
      %4385 = vmatprep.mubr.f32.mxu0 0.0
      %4386 = vmatmul.mubr.f32.gmra.mrb[0].mxu0 %v4222
      %v4387 = vpop.f32.mrb[0].mxu0
      %v4388 = vadd.f32 %v4067, %v4387
      %v4389 = vpop.f32.mrb[0].mxu0
      %4390 = vmatprep.mubr.f32.mxu0 0.0
      %4391 = vmatmul.mubr.f32.gmra.mrb[0].mxu0 %v4225
      %v4392 = vpop.f32.mrb[0].mxu0
      %v4393 = vadd.f32 %v4072, %v4392
      %v4394 = vpop.f32.mrb[0].mxu0
      %4395 = vmatprep.mubr.f32.mxu0 0.0
      %4396 = vmatmul.mubr.f32.gmra.mrb[0].mxu0 %v4228
      %v4397 = vpop.f32.mrb[0].mxu0
      %v4398 = vadd.f32 %v4077, %v4397
      %v4399 = vpop.f32.mrb[0].mxu0
      %4400 = vmatprep.mubr.f32.mxu0 0.0
      %4401 = vmatmul.mubr.f32.gmra.mrb[0].mxu0 %v4231
      %v4402 = vpop.f32.mrb[0].mxu0
      %v4403 = vadd.f32 %v4082, %v4402
      %v4404 = vpop.f32.mrb[0].mxu0
      %4405 = vmatprep.mubr.f32.mxu0 0.0
      %4406 = vmatmul.mubr.f32.gmra.mrb[0].mxu0 %v4234
      %v4407 = vpop.f32.mrb[0].mxu0
      %v4408 = vadd.f32 %v4087, %v4407
      %v4409 = vpop.f32.mrb[0].mxu0
      %4410 = vmatprep.mubr.f32.mxu0 0.0
      %4411 = vmatmul.mubr.f32.gmra.mrb[0].mxu0 %v4237
      %v4412 = vpop.f32.mrb[0].mxu0
      %v4413 = vadd.f32 %v4092, %v4412
      %v4414 = vpop.f32.mrb[0].mxu0
      %4415 = vmatprep.mubr.f32.mxu0 0.0
      %4416 = vmatmul.mubr.f32.gmra.mrb[0].mxu0 %v4240
      %v4417 = vpop.f32.mrb[0].mxu0
      %v4418 = vadd.f32 %v4097, %v4417
      %v4419 = vpop.f32.mrb[0].mxu0
      %4420 = vmatprep.mubr.f32.mxu0 0.0
      %4421 = vmatmul.mubr.f32.gmra.mrb[0].mxu0 %v4243
      %v4422 = vpop.f32.mrb[0].mxu0
      %v4423 = vadd.f32 %v4102, %v4422
      %v4424 = vpop.f32.mrb[0].mxu0
      %4425 = vmatprep.mubr.f32.mxu0 0.0
      %4426 = vmatmul.mubr.f32.gmra.mrb[0].mxu0 %v4246
      %v4427 = vpop.f32.mrb[0].mxu0
      %v4428 = vadd.f32 %v4107, %v4427
      %v4429 = vpop.f32.mrb[0].mxu0
      %4430 = vmatprep.mubr.f32.mxu0 0.0
      %4431 = vmatmul.mubr.f32.gmra.mrb[0].mxu0 %v4249
      %v4432 = vpop.f32.mrb[0].mxu0
      %v4433 = vadd.f32 %v4112, %v4432
      %v4434 = vpop.f32.mrb[0].mxu0
      %4435 = vmatprep.mubr.f32.mxu0 0.0
      %4436 = vmatmul.mubr.f32.gmra.mrb[0].mxu0 %v4252
      %v4437 = vpop.f32.mrb[0].mxu0
      %v4438 = vadd.f32 %v4117, %v4437
      %v4439 = vpop.f32.mrb[0].mxu0
      %4440 = vmatprep.mubr.f32.mxu0 0.0
      %4441 = vmatmul.mubr.f32.gmra.mrb[0].mxu0 %v4255
      %v4442 = vpop.f32.mrb[0].mxu0
      %v4443 = vadd.f32 %v4122, %v4442
      %v4444 = vpop.f32.mrb[0].mxu0
      %4445 = vmatprep.mubr.f32.mxu0 0.0
      %4446 = vmatmul.mubr.f32.gmra.mrb[0].mxu0 %v4258
      %v4447 = vpop.f32.mrb[0].mxu0
      %v4448 = vadd.f32 %v4127, %v4447
      %v4449 = vpop.f32.mrb[0].mxu0
      %4450 = vmatprep.mubr.f32.mxu0 0.0
      %4451 = vmatmul.mubr.f32.gmra.mrb[0].mxu0 %v4261
      %v4452 = vpop.f32.mrb[0].mxu0
      %v4453 = vadd.f32 %v4132, %v4452
      %v4454 = vpop.f32.mrb[0].mxu0
      %4455 = vmatprep.mubr.f32.mxu0 0.0
      %4456 = vmatmul.mubr.f32.gmra.mrb[0].mxu0 %v4264
      %v4457 = vpop.f32.mrb[0].mxu0
      %v4458 = vadd.f32 %v4137, %v4457
      %v4459 = vpop.f32.mrb[0].mxu0
      %4460 = vmatprep.mubr.f32.mxu0 0.0
      %4461 = vmatmul.mubr.f32.gmra.mrb[0].mxu0 %v4267
      %v4462 = vpop.f32.mrb[0].mxu0
      %v4463 = vadd.f32 %v4142, %v4462
      %v4464 = vpop.f32.mrb[0].mxu0
      %4465 = vmatprep.mubr.f32.mxu0 0.0
      %4466 = vmatmul.mubr.f32.gmra.mrb[0].mxu0 %v4270
      %v4467 = vpop.f32.mrb[0].mxu0
      %v4468 = vadd.f32 %v4147, %v4467
      %v4469 = vpop.f32.mrb[0].mxu0
      %4470 = vmatprep.mubr.f32.mxu0 0.0
      %4471 = vmatmul.mubr.f32.gmra.mrb[0].mxu0 %v4273
      %v4472 = vpop.f32.mrb[0].mxu0
      %v4473 = vadd.f32 %v4152, %v4472
      %v4474 = vpop.f32.mrb[0].mxu0
      %4475 = vmatprep.mubr.f32.mxu0 0.0
      %4476 = vmatmul.mubr.f32.gmra.mrb[0].mxu0 %v4276
      %v4477 = vpop.f32.mrb[0].mxu0
      %v4478 = vadd.f32 %v4157, %v4477
      %v4479 = vpop.f32.mrb[0].mxu0
      %4480 = vmatprep.mubr.f32.mxu0 0.0
      %4481 = vmatmul.mubr.f32.gmra.mrb[0].mxu0 %v4279
      %v4482 = vpop.f32.mrb[0].mxu0
      %v4483 = vadd.f32 %v4162, %v4482
      %v4484 = vpop.f32.mrb[0].mxu0
      %4485 = vmatprep.mubr.f32.mxu0 0.0
      %4486 = vmatmul.mubr.f32.gmra.mrb[0].mxu0 %v4282
      %v4487 = vpop.f32.mrb[0].mxu0
      %v4488 = vadd.f32 %v4167, %v4487
      %v4489 = vpop.f32.mrb[0].mxu0
      %4490 = vmatprep.mubr.f32.mxu0 0.0
      %4491 = vmatmul.mubr.f32.gmra.mrb[0].mxu0 %v4285
      %v4492 = vpop.f32.mrb[0].mxu0
      %v4493 = vadd.f32 %v4172, %v4492
      %v4494 = vpop.f32.mrb[0].mxu0
      %4495 = vmatprep.mubr.f32.mxu0 0.0
      %4496 = vmatmul.mubr.f32.gmra.mrb[0].mxu0 %v4288
      %v4497 = vpop.f32.mrb[0].mxu0
      %v4498 = vadd.f32 %v4177, %v4497
      %v4499 = vpop.f32.mrb[0].mxu0
      %4500 = vmatprep.mubr.f32.mxu0 0.0
      %4501 = vmatmul.mubr.f32.gmra.mrb[0].mxu0 %v4291
      %v4502 = vpop.f32.mrb[0].mxu0
      %v4503 = vadd.f32 %v4182, %v4502
      %v4504 = vpop.f32.mrb[0].mxu0
      %4505 = vmatprep.mubr.f32.mxu0 0.0
      %4506 = vmatmul.mubr.f32.gmra.mrb[0].mxu0 %v4294
      %v4507 = vpop.f32.mrb[0].mxu0
      %v4508 = vadd.f32 %v4187, %v4507
      %v4509 = vpop.f32.mrb[0].mxu0
      %4510 = vmatprep.mubr.f32.mxu0 0.0
      %4511 = vmatmul.mubr.f32.gmra.mrb[0].mxu0 %v4297
      %v4512 = vpop.f32.mrb[0].mxu0
      %v4513 = vadd.f32 %v4192, %v4512
      %v4514 = vpop.f32.mrb[0].mxu0
      %4515 = vmatprep.mubr.f32.mxu0 0.0
      %4516 = vmatmul.mubr.f32.gmra.mrb[0].mxu0 %v4300
      %v4517 = vpop.f32.mrb[0].mxu0
      %v4518 = vadd.f32 %v4197, %v4517
      %v4519 = vpop.f32.mrb[0].mxu0
      %4520 = vmatprep.mubr.f32.mxu0 0.0
      %4521 = vmatmul.mubr.f32.gmra.mrb[0].mxu0 %v4303
      %v4522 = vpop.f32.mrb[0].mxu0
      %v4523 = vadd.f32 %v4202, %v4522
      %v4524 = vpop.f32.mrb[0].mxu0
      %4525 = vmatprep.mubr.f32.mxu0 0.0
      %4526 = vmatmul.mubr.f32.gmra.mrb[0].mxu0 %v4306
      %v4527 = vpop.f32.mrb[0].mxu0
      %v4528 = vadd.f32 %v4207, %v4527
      %v4529 = vpop.f32.mrb[0].mxu0
      %4530 = vmatprep.mubr.f32.mxu0 0.0
      %4531 = vmatmul.mubr.f32.gmra.mrb[0].mxu0 %v4309
      %v4532 = vpop.f32.mrb[0].mxu0
      %v4533 = vadd.f32 %v4212, %v4532
      %v4534 = vpop.f32.mrb[0].mxu0
      %4535 = vdwg.mxu0
      %s4536 = scalar_lea.vmem %s3, 128
      %v4537 = vld [vmem:[%s4536] sm:$0xff]
      %v4538 = vld [vmem:[%s4536 + $0x8] sm:$0xff]
      %v4539 = vld [vmem:[%s4536 + $0x10] sm:$0xff]
      %v4540 = vld [vmem:[%s4536 + $0x18] sm:$0xff]
      %v4541 = vld [vmem:[%s4536 + $0x20] sm:$0xff]
      %v4542 = vld [vmem:[%s4536 + $0x28] sm:$0xff]
      %v4543 = vld [vmem:[%s4536 + $0x30] sm:$0xff]
      %v4544 = vld [vmem:[%s4536 + $0x38] sm:$0xff]
      %4545 = vrot.lane.b32.xlu0 %v467, 112
      %v4546 = vpop.permute.xlu0 %4545
      %4547 = vrot.lane.b32.xlu0 %v472, 112
      %v4548 = vpop.permute.xlu0 %4547
      %4549 = vrot.lane.b32.xlu0 %v477, 112
      %v4550 = vpop.permute.xlu0 %4549
      %4551 = vrot.lane.b32.xlu0 %v482, 112
      %v4552 = vpop.permute.xlu0 %4551
      %4553 = vrot.lane.b32.xlu0 %v487, 112
      %v4554 = vpop.permute.xlu0 %4553
      %4555 = vrot.lane.b32.xlu0 %v492, 112
      %v4556 = vpop.permute.xlu0 %4555
      %4557 = vrot.lane.b32.xlu0 %v497, 112
      %v4558 = vpop.permute.xlu0 %4557
      %4559 = vrot.lane.b32.xlu0 %v502, 112
      %v4560 = vpop.permute.xlu0 %4559
      %4561 = vrot.lane.b32.xlu0 %v467, 80
      %v4562 = vpop.permute.xlu0 %4561
      %4563 = vrot.lane.b32.xlu0 %v472, 80
      %v4564 = vpop.permute.xlu0 %4563
      %4565 = vrot.lane.b32.xlu0 %v477, 80
      %v4566 = vpop.permute.xlu0 %4565
      %4567 = vrot.lane.b32.xlu0 %v482, 80
      %v4568 = vpop.permute.xlu0 %4567
      %4569 = vrot.lane.b32.xlu0 %v487, 80
      %v4570 = vpop.permute.xlu0 %4569
      %4571 = vrot.lane.b32.xlu0 %v492, 80
      %v4572 = vpop.permute.xlu0 %4571
      %4573 = vrot.lane.b32.xlu0 %v497, 80
      %v4574 = vpop.permute.xlu0 %4573
      %4575 = vrot.lane.b32.xlu0 %v502, 80
      %v4576 = vpop.permute.xlu0 %4575
      %v4577 = vsel %vm657, %v4546, 0
      %v4579 = vsel %vm657, %v4548, 0
      %v4581 = vsel %vm657, %v4550, 0
      %v4583 = vsel %vm657, %v4552, 0
      %v4585 = vsel %vm657, %v4554, 0
      %v4587 = vsel %vm657, %v4556, 0
      %v4589 = vsel %vm657, %v4558, 0
      %v4591 = vsel %vm657, %v4560, 0
      %v4593 = vsel %vm657, %v4562, 0
      %v4595 = vsel %vm657, %v4564, 0
      %v4597 = vsel %vm657, %v4566, 0
      %v4599 = vsel %vm657, %v4568, 0
      %v4601 = vsel %vm657, %v4570, 0
      %v4603 = vsel %vm657, %v4572, 0
      %v4605 = vsel %vm657, %v4574, 0
      %v4607 = vsel %vm657, %v4576, 0
      %4609 = vmatprep.subr.mxu0 0.0
      %4610 = vmatpush1.xpose.msra.mxu0 %v4593
      %4611 = vmatprep.subr.mxu0 0.0
      %4612 = vmatpush1.xpose.msra.mxu0 %v4595
      %4613 = vmatprep.subr.mxu0 0.0
      %4614 = vmatpush1.xpose.msra.mxu0 %v4597
      %4615 = vmatprep.subr.mxu0 0.0
      %4616 = vmatpush1.xpose.msra.mxu0 %v4599
      %4617 = vmatprep.subr.mxu0 0.0
      %4618 = vmatpush1.xpose.msra.mxu0 %v4601
      %4619 = vmatprep.subr.mxu0 0.0
      %4620 = vmatpush1.xpose.msra.mxu0 %v4603
      %4621 = vmatprep.subr.mxu0 0.0
      %4622 = vmatpush1.xpose.msra.mxu0 %v4605
      %4623 = vmatprep.subr.mxu0 0.0
      %4624 = vmatpush1.xpose.msra.mxu0 %v4607
      %4625 = vmatprep.subr.mxu0 0.0
      %4626 = vmatpush1.xpose.msra.mxu0 0.0
      %4627 = vmatprep.subr.mxu0 0.0
      %4628 = vmatpush1.xpose.msra.mxu0 0.0
      %4629 = vmatprep.subr.mxu0 0.0
      %4630 = vmatpush1.xpose.msra.mxu0 0.0
      %4631 = vmatprep.subr.mxu0 0.0
      %4632 = vmatpush1.xpose.msra.mxu0 0.0
      %4633 = vmatprep.subr.mxu0 0.0
      %4634 = vmatpush1.xpose.msra.mxu0 0.0
      %4635 = vmatprep.subr.mxu0 0.0
      %4636 = vmatpush1.xpose.msra.mxu0 0.0
      %4637 = vmatprep.subr.mxu0 0.0
      %4638 = vmatpush1.xpose.msra.mxu0 0.0
      %4639 = vmatprep.subr.mxu0 0.0
      %4640 = vmatpush1.xpose.msra.mxu0 0.0
      %4641 = vmatprep.subr.mxu0 0.0
      %4642 = vmatpush1.xpose.msra.mxu0 0.0
      %4643 = vmatprep.subr.mxu0 0.0
      %4644 = vmatpush1.xpose.msra.mxu0 0.0
      %4645 = vmatprep.subr.mxu0 0.0
      %4646 = vmatpush1.xpose.msra.mxu0 0.0
      %4647 = vmatprep.subr.mxu0 0.0
      %4648 = vmatpush1.xpose.msra.mxu0 0.0
      %4649 = vmatprep.subr.mxu0 0.0
      %4650 = vmatpush1.xpose.msra.mxu0 0.0
      %4651 = vmatprep.subr.mxu0 0.0
      %4652 = vmatpush1.xpose.msra.mxu0 0.0
      %4653 = vmatprep.subr.mxu0 0.0
      %4654 = vmatpush1.xpose.msra.mxu0 0.0
      %4655 = vmatprep.subr.mxu0 0.0
      %4656 = vmatpush1.xpose.msra.mxu0 0.0
      %4657 = vmatprep.subr.mxu0 0.0
      %4658 = vmatpush1.xpose.msra.mxu0 0.0
      %4659 = vmatprep.subr.mxu0 0.0
      %4660 = vmatpush1.xpose.msra.mxu0 0.0
      %4661 = vmatprep.subr.mxu0 0.0
      %4662 = vmatpush1.xpose.msra.mxu0 0.0
      %4663 = vmatprep.subr.mxu0 0.0
      %4664 = vmatpush1.xpose.msra.mxu0 0.0
      %4665 = vmatprep.subr.mxu0 0.0
      %4666 = vmatpush1.xpose.msra.mxu0 0.0
      %4667 = vmatprep.subr.mxu0 0.0
      %4668 = vmatpush1.xpose.msra.mxu0 0.0
      %4669 = vmatprep.subr.mxu0 0.0
      %4670 = vmatpush1.xpose.msra.mxu0 0.0
      %4671 = vmatprep.subr.mxu0 0.0
      %4672 = vmatpush1.xpose.msra.mxu0 0.0
      %4673 = vmatprep.mubr.f32.mxu0 0.0
      %4674 = vmatmul.mubr.f32.gmra.mrb[0].mxu0 %v4577
      %v4675 = vpop.f32.mrb[0].mxu0
      %v4676 = vadd.f32 %v4537, %v4675
      %v4677 = vpop.f32.mrb[0].mxu0
      %4678 = vmatprep.mubr.f32.mxu0 0.0
      %4679 = vmatmul.mubr.f32.gmra.mrb[0].mxu0 %v4579
      %v4680 = vpop.f32.mrb[0].mxu0
      %v4681 = vadd.f32 %v4538, %v4680
      %v4682 = vpop.f32.mrb[0].mxu0
      %4683 = vmatprep.mubr.f32.mxu0 0.0
      %4684 = vmatmul.mubr.f32.gmra.mrb[0].mxu0 %v4581
      %v4685 = vpop.f32.mrb[0].mxu0
      %v4686 = vadd.f32 %v4539, %v4685
      %v4687 = vpop.f32.mrb[0].mxu0
      %4688 = vmatprep.mubr.f32.mxu0 0.0
      %4689 = vmatmul.mubr.f32.gmra.mrb[0].mxu0 %v4583
      %v4690 = vpop.f32.mrb[0].mxu0
      %v4691 = vadd.f32 %v4540, %v4690
      %v4692 = vpop.f32.mrb[0].mxu0
      %4693 = vmatprep.mubr.f32.mxu0 0.0
      %4694 = vmatmul.mubr.f32.gmra.mrb[0].mxu0 %v4585
      %v4695 = vpop.f32.mrb[0].mxu0
      %v4696 = vadd.f32 %v4541, %v4695
      %v4697 = vpop.f32.mrb[0].mxu0
      %4698 = vmatprep.mubr.f32.mxu0 0.0
      %4699 = vmatmul.mubr.f32.gmra.mrb[0].mxu0 %v4587
      %v4700 = vpop.f32.mrb[0].mxu0
      %v4701 = vadd.f32 %v4542, %v4700
      %v4702 = vpop.f32.mrb[0].mxu0
      %4703 = vmatprep.mubr.f32.mxu0 0.0
      %4704 = vmatmul.mubr.f32.gmra.mrb[0].mxu0 %v4589
      %v4705 = vpop.f32.mrb[0].mxu0
      %v4706 = vadd.f32 %v4543, %v4705
      %v4707 = vpop.f32.mrb[0].mxu0
      %4708 = vmatprep.mubr.f32.mxu0 0.0
      %4709 = vmatmul.mubr.f32.gmra.mrb[0].mxu0 %v4591
      %v4710 = vpop.f32.mrb[0].mxu0
      %v4711 = vadd.f32 %v4544, %v4710
      %v4712 = vpop.f32.mrb[0].mxu0
      %4713 = vdwg.mxu0
      %4714 = vrot.lane.b32.xlu0 %v507, 112
      %v4715 = vpop.permute.xlu0 %4714
      %4716 = vrot.lane.b32.xlu0 %v512, 112
      %v4717 = vpop.permute.xlu0 %4716
      %4718 = vrot.lane.b32.xlu0 %v517, 112
      %v4719 = vpop.permute.xlu0 %4718
      %4720 = vrot.lane.b32.xlu0 %v522, 112
      %v4721 = vpop.permute.xlu0 %4720
      %4722 = vrot.lane.b32.xlu0 %v527, 112
      %v4723 = vpop.permute.xlu0 %4722
      %4724 = vrot.lane.b32.xlu0 %v532, 112
      %v4725 = vpop.permute.xlu0 %4724
      %4726 = vrot.lane.b32.xlu0 %v537, 112
      %v4727 = vpop.permute.xlu0 %4726
      %4728 = vrot.lane.b32.xlu0 %v542, 112
      %v4729 = vpop.permute.xlu0 %4728
      %4730 = vrot.lane.b32.xlu0 %v507, 80
      %v4731 = vpop.permute.xlu0 %4730
      %4732 = vrot.lane.b32.xlu0 %v512, 80
      %v4733 = vpop.permute.xlu0 %4732
      %4734 = vrot.lane.b32.xlu0 %v517, 80
      %v4735 = vpop.permute.xlu0 %4734
      %4736 = vrot.lane.b32.xlu0 %v522, 80
      %v4737 = vpop.permute.xlu0 %4736
      %4738 = vrot.lane.b32.xlu0 %v527, 80
      %v4739 = vpop.permute.xlu0 %4738
      %4740 = vrot.lane.b32.xlu0 %v532, 80
      %v4741 = vpop.permute.xlu0 %4740
      %4742 = vrot.lane.b32.xlu0 %v537, 80
      %v4743 = vpop.permute.xlu0 %4742
      %4744 = vrot.lane.b32.xlu0 %v542, 80
      %v4745 = vpop.permute.xlu0 %4744
      %v4746 = vsel %vm657, %v4715, 0
      %v4748 = vsel %vm657, %v4717, 0
      %v4750 = vsel %vm657, %v4719, 0
      %v4752 = vsel %vm657, %v4721, 0
      %v4754 = vsel %vm657, %v4723, 0
      %v4756 = vsel %vm657, %v4725, 0
      %v4758 = vsel %vm657, %v4727, 0
      %v4760 = vsel %vm657, %v4729, 0
      %v4762 = vsel %vm657, %v4731, 0
      %v4764 = vsel %vm657, %v4733, 0
      %v4766 = vsel %vm657, %v4735, 0
      %v4768 = vsel %vm657, %v4737, 0
      %v4770 = vsel %vm657, %v4739, 0
      %v4772 = vsel %vm657, %v4741, 0
      %v4774 = vsel %vm657, %v4743, 0
      %v4776 = vsel %vm657, %v4745, 0
      %4778 = vmatprep.subr.mxu0 0.0
      %4779 = vmatpush1.xpose.msra.mxu0 %v4762
      %4780 = vmatprep.subr.mxu0 0.0
      %4781 = vmatpush1.xpose.msra.mxu0 %v4764
      %4782 = vmatprep.subr.mxu0 0.0
      %4783 = vmatpush1.xpose.msra.mxu0 %v4766
      %4784 = vmatprep.subr.mxu0 0.0
      %4785 = vmatpush1.xpose.msra.mxu0 %v4768
      %4786 = vmatprep.subr.mxu0 0.0
      %4787 = vmatpush1.xpose.msra.mxu0 %v4770
      %4788 = vmatprep.subr.mxu0 0.0
      %4789 = vmatpush1.xpose.msra.mxu0 %v4772
      %4790 = vmatprep.subr.mxu0 0.0
      %4791 = vmatpush1.xpose.msra.mxu0 %v4774
      %4792 = vmatprep.subr.mxu0 0.0
      %4793 = vmatpush1.xpose.msra.mxu0 %v4776
      %4794 = vmatprep.subr.mxu0 0.0
      %4795 = vmatpush1.xpose.msra.mxu0 0.0
      %4796 = vmatprep.subr.mxu0 0.0
      %4797 = vmatpush1.xpose.msra.mxu0 0.0
      %4798 = vmatprep.subr.mxu0 0.0
      %4799 = vmatpush1.xpose.msra.mxu0 0.0
      %4800 = vmatprep.subr.mxu0 0.0
      %4801 = vmatpush1.xpose.msra.mxu0 0.0
      %4802 = vmatprep.subr.mxu0 0.0
      %4803 = vmatpush1.xpose.msra.mxu0 0.0
      %4804 = vmatprep.subr.mxu0 0.0
      %4805 = vmatpush1.xpose.msra.mxu0 0.0
      %4806 = vmatprep.subr.mxu0 0.0
      %4807 = vmatpush1.xpose.msra.mxu0 0.0
      %4808 = vmatprep.subr.mxu0 0.0
      %4809 = vmatpush1.xpose.msra.mxu0 0.0
      %4810 = vmatprep.subr.mxu0 0.0
      %4811 = vmatpush1.xpose.msra.mxu0 0.0
      %4812 = vmatprep.subr.mxu0 0.0
      %4813 = vmatpush1.xpose.msra.mxu0 0.0
      %4814 = vmatprep.subr.mxu0 0.0
      %4815 = vmatpush1.xpose.msra.mxu0 0.0
      %4816 = vmatprep.subr.mxu0 0.0
      %4817 = vmatpush1.xpose.msra.mxu0 0.0
      %4818 = vmatprep.subr.mxu0 0.0
      %4819 = vmatpush1.xpose.msra.mxu0 0.0
      %4820 = vmatprep.subr.mxu0 0.0
      %4821 = vmatpush1.xpose.msra.mxu0 0.0
      %4822 = vmatprep.subr.mxu0 0.0
      %4823 = vmatpush1.xpose.msra.mxu0 0.0
      %4824 = vmatprep.subr.mxu0 0.0
      %4825 = vmatpush1.xpose.msra.mxu0 0.0
      %4826 = vmatprep.subr.mxu0 0.0
      %4827 = vmatpush1.xpose.msra.mxu0 0.0
      %4828 = vmatprep.subr.mxu0 0.0
      %4829 = vmatpush1.xpose.msra.mxu0 0.0
      %4830 = vmatprep.subr.mxu0 0.0
      %4831 = vmatpush1.xpose.msra.mxu0 0.0
      %4832 = vmatprep.subr.mxu0 0.0
      %4833 = vmatpush1.xpose.msra.mxu0 0.0
      %4834 = vmatprep.subr.mxu0 0.0
      %4835 = vmatpush1.xpose.msra.mxu0 0.0
      %4836 = vmatprep.subr.mxu0 0.0
      %4837 = vmatpush1.xpose.msra.mxu0 0.0
      %4838 = vmatprep.subr.mxu0 0.0
      %4839 = vmatpush1.xpose.msra.mxu0 0.0
      %4840 = vmatprep.subr.mxu0 0.0
      %4841 = vmatpush1.xpose.msra.mxu0 0.0
      %4842 = vmatprep.mubr.f32.mxu0 0.0
      %4843 = vmatmul.mubr.f32.gmra.mrb[0].mxu0 %v4746
      %v4844 = vpop.f32.mrb[0].mxu0
      %v4845 = vadd.f32 %v4537, %v4844
      %v4846 = vpop.f32.mrb[0].mxu0
      %4847 = vmatprep.mubr.f32.mxu0 0.0
      %4848 = vmatmul.mubr.f32.gmra.mrb[0].mxu0 %v4748
      %v4849 = vpop.f32.mrb[0].mxu0
      %v4850 = vadd.f32 %v4538, %v4849
      %v4851 = vpop.f32.mrb[0].mxu0
      %4852 = vmatprep.mubr.f32.mxu0 0.0
      %4853 = vmatmul.mubr.f32.gmra.mrb[0].mxu0 %v4750
      %v4854 = vpop.f32.mrb[0].mxu0
      %v4855 = vadd.f32 %v4539, %v4854
      %v4856 = vpop.f32.mrb[0].mxu0
      %4857 = vmatprep.mubr.f32.mxu0 0.0
      %4858 = vmatmul.mubr.f32.gmra.mrb[0].mxu0 %v4752
      %v4859 = vpop.f32.mrb[0].mxu0
      %v4860 = vadd.f32 %v4540, %v4859
      %v4861 = vpop.f32.mrb[0].mxu0
      %4862 = vmatprep.mubr.f32.mxu0 0.0
      %4863 = vmatmul.mubr.f32.gmra.mrb[0].mxu0 %v4754
      %v4864 = vpop.f32.mrb[0].mxu0
      %v4865 = vadd.f32 %v4541, %v4864
      %v4866 = vpop.f32.mrb[0].mxu0
      %4867 = vmatprep.mubr.f32.mxu0 0.0
      %4868 = vmatmul.mubr.f32.gmra.mrb[0].mxu0 %v4756
      %v4869 = vpop.f32.mrb[0].mxu0
      %v4870 = vadd.f32 %v4542, %v4869
      %v4871 = vpop.f32.mrb[0].mxu0
      %4872 = vmatprep.mubr.f32.mxu0 0.0
      %4873 = vmatmul.mubr.f32.gmra.mrb[0].mxu0 %v4758
      %v4874 = vpop.f32.mrb[0].mxu0
      %v4875 = vadd.f32 %v4543, %v4874
      %v4876 = vpop.f32.mrb[0].mxu0
      %4877 = vmatprep.mubr.f32.mxu0 0.0
      %4878 = vmatmul.mubr.f32.gmra.mrb[0].mxu0 %v4760
      %v4879 = vpop.f32.mrb[0].mxu0
      %v4880 = vadd.f32 %v4544, %v4879
      %v4881 = vpop.f32.mrb[0].mxu0
      %4882 = vdwg.mxu0
      %4883 = vrot.lane.b32.xlu0 %v547, 112
      %v4884 = vpop.permute.xlu0 %4883
      %4885 = vrot.lane.b32.xlu0 %v552, 112
      %v4886 = vpop.permute.xlu0 %4885
      %4887 = vrot.lane.b32.xlu0 %v557, 112
      %v4888 = vpop.permute.xlu0 %4887
      %4889 = vrot.lane.b32.xlu0 %v562, 112
      %v4890 = vpop.permute.xlu0 %4889
      %4891 = vrot.lane.b32.xlu0 %v567, 112
      %v4892 = vpop.permute.xlu0 %4891
      %4893 = vrot.lane.b32.xlu0 %v572, 112
      %v4894 = vpop.permute.xlu0 %4893
      %4895 = vrot.lane.b32.xlu0 %v577, 112
      %v4896 = vpop.permute.xlu0 %4895
      %4897 = vrot.lane.b32.xlu0 %v582, 112
      %v4898 = vpop.permute.xlu0 %4897
      %4899 = vrot.lane.b32.xlu0 %v547, 80
      %v4900 = vpop.permute.xlu0 %4899
      %4901 = vrot.lane.b32.xlu0 %v552, 80
      %v4902 = vpop.permute.xlu0 %4901
      %4903 = vrot.lane.b32.xlu0 %v557, 80
      %v4904 = vpop.permute.xlu0 %4903
      %4905 = vrot.lane.b32.xlu0 %v562, 80
      %v4906 = vpop.permute.xlu0 %4905
      %4907 = vrot.lane.b32.xlu0 %v567, 80
      %v4908 = vpop.permute.xlu0 %4907
      %4909 = vrot.lane.b32.xlu0 %v572, 80
      %v4910 = vpop.permute.xlu0 %4909
      %4911 = vrot.lane.b32.xlu0 %v577, 80
      %v4912 = vpop.permute.xlu0 %4911
      %4913 = vrot.lane.b32.xlu0 %v582, 80
      %v4914 = vpop.permute.xlu0 %4913
      %v4915 = vsel %vm657, %v4884, 0
      %v4917 = vsel %vm657, %v4886, 0
      %v4919 = vsel %vm657, %v4888, 0
      %v4921 = vsel %vm657, %v4890, 0
      %v4923 = vsel %vm657, %v4892, 0
      %v4925 = vsel %vm657, %v4894, 0
      %v4927 = vsel %vm657, %v4896, 0
      %v4929 = vsel %vm657, %v4898, 0
      %v4931 = vsel %vm657, %v4900, 0
      %v4933 = vsel %vm657, %v4902, 0
      %v4935 = vsel %vm657, %v4904, 0
      %v4937 = vsel %vm657, %v4906, 0
      %v4939 = vsel %vm657, %v4908, 0
      %v4941 = vsel %vm657, %v4910, 0
      %v4943 = vsel %vm657, %v4912, 0
      %v4945 = vsel %vm657, %v4914, 0
      %4947 = vmatprep.subr.mxu0 0.0
      %4948 = vmatpush1.xpose.msra.mxu0 %v4931
      %4949 = vmatprep.subr.mxu0 0.0
      %4950 = vmatpush1.xpose.msra.mxu0 %v4933
      %4951 = vmatprep.subr.mxu0 0.0
      %4952 = vmatpush1.xpose.msra.mxu0 %v4935
      %4953 = vmatprep.subr.mxu0 0.0
      %4954 = vmatpush1.xpose.msra.mxu0 %v4937
      %4955 = vmatprep.subr.mxu0 0.0
      %4956 = vmatpush1.xpose.msra.mxu0 %v4939
      %4957 = vmatprep.subr.mxu0 0.0
      %4958 = vmatpush1.xpose.msra.mxu0 %v4941
      %4959 = vmatprep.subr.mxu0 0.0
      %4960 = vmatpush1.xpose.msra.mxu0 %v4943
      %4961 = vmatprep.subr.mxu0 0.0
      %4962 = vmatpush1.xpose.msra.mxu0 %v4945
      %4963 = vmatprep.subr.mxu0 0.0
      %4964 = vmatpush1.xpose.msra.mxu0 0.0
      %4965 = vmatprep.subr.mxu0 0.0
      %4966 = vmatpush1.xpose.msra.mxu0 0.0
      %4967 = vmatprep.subr.mxu0 0.0
      %4968 = vmatpush1.xpose.msra.mxu0 0.0
      %4969 = vmatprep.subr.mxu0 0.0
      %4970 = vmatpush1.xpose.msra.mxu0 0.0
      %4971 = vmatprep.subr.mxu0 0.0
      %4972 = vmatpush1.xpose.msra.mxu0 0.0
      %4973 = vmatprep.subr.mxu0 0.0
      %4974 = vmatpush1.xpose.msra.mxu0 0.0
      %4975 = vmatprep.subr.mxu0 0.0
      %4976 = vmatpush1.xpose.msra.mxu0 0.0
      %4977 = vmatprep.subr.mxu0 0.0
      %4978 = vmatpush1.xpose.msra.mxu0 0.0
      %4979 = vmatprep.subr.mxu0 0.0
      %4980 = vmatpush1.xpose.msra.mxu0 0.0
      %4981 = vmatprep.subr.mxu0 0.0
      %4982 = vmatpush1.xpose.msra.mxu0 0.0
      %4983 = vmatprep.subr.mxu0 0.0
      %4984 = vmatpush1.xpose.msra.mxu0 0.0
      %4985 = vmatprep.subr.mxu0 0.0
      %4986 = vmatpush1.xpose.msra.mxu0 0.0
      %4987 = vmatprep.subr.mxu0 0.0
      %4988 = vmatpush1.xpose.msra.mxu0 0.0
      %4989 = vmatprep.subr.mxu0 0.0
      %4990 = vmatpush1.xpose.msra.mxu0 0.0
      %4991 = vmatprep.subr.mxu0 0.0
      %4992 = vmatpush1.xpose.msra.mxu0 0.0
      %4993 = vmatprep.subr.mxu0 0.0
      %4994 = vmatpush1.xpose.msra.mxu0 0.0
      %4995 = vmatprep.subr.mxu0 0.0
      %4996 = vmatpush1.xpose.msra.mxu0 0.0
      %4997 = vmatprep.subr.mxu0 0.0
      %4998 = vmatpush1.xpose.msra.mxu0 0.0
      %4999 = vmatprep.subr.mxu0 0.0
      %5000 = vmatpush1.xpose.msra.mxu0 0.0
      %5001 = vmatprep.subr.mxu0 0.0
      %5002 = vmatpush1.xpose.msra.mxu0 0.0
      %5003 = vmatprep.subr.mxu0 0.0
      %5004 = vmatpush1.xpose.msra.mxu0 0.0
      %5005 = vmatprep.subr.mxu0 0.0
      %5006 = vmatpush1.xpose.msra.mxu0 0.0
      %5007 = vmatprep.subr.mxu0 0.0
      %5008 = vmatpush1.xpose.msra.mxu0 0.0
      %5009 = vmatprep.subr.mxu0 0.0
      %5010 = vmatpush1.xpose.msra.mxu0 0.0
      %5011 = vmatprep.mubr.f32.mxu0 0.0
      %5012 = vmatmul.mubr.f32.gmra.mrb[0].mxu0 %v4915
      %v5013 = vpop.f32.mrb[0].mxu0
      %v5014 = vadd.f32 %v4537, %v5013
      %v5015 = vpop.f32.mrb[0].mxu0
      %5016 = vmatprep.mubr.f32.mxu0 0.0
      %5017 = vmatmul.mubr.f32.gmra.mrb[0].mxu0 %v4917
      %v5018 = vpop.f32.mrb[0].mxu0
      %v5019 = vadd.f32 %v4538, %v5018
      %v5020 = vpop.f32.mrb[0].mxu0
      %5021 = vmatprep.mubr.f32.mxu0 0.0
      %5022 = vmatmul.mubr.f32.gmra.mrb[0].mxu0 %v4919
      %v5023 = vpop.f32.mrb[0].mxu0
      %v5024 = vadd.f32 %v4539, %v5023
      %v5025 = vpop.f32.mrb[0].mxu0
      %5026 = vmatprep.mubr.f32.mxu0 0.0
      %5027 = vmatmul.mubr.f32.gmra.mrb[0].mxu0 %v4921
      %v5028 = vpop.f32.mrb[0].mxu0
      %v5029 = vadd.f32 %v4540, %v5028
      %v5030 = vpop.f32.mrb[0].mxu0
      %5031 = vmatprep.mubr.f32.mxu0 0.0
      %5032 = vmatmul.mubr.f32.gmra.mrb[0].mxu0 %v4923
      %v5033 = vpop.f32.mrb[0].mxu0
      %v5034 = vadd.f32 %v4541, %v5033
      %v5035 = vpop.f32.mrb[0].mxu0
      %5036 = vmatprep.mubr.f32.mxu0 0.0
      %5037 = vmatmul.mubr.f32.gmra.mrb[0].mxu0 %v4925
      %v5038 = vpop.f32.mrb[0].mxu0
      %v5039 = vadd.f32 %v4542, %v5038
      %v5040 = vpop.f32.mrb[0].mxu0
      %5041 = vmatprep.mubr.f32.mxu0 0.0
      %5042 = vmatmul.mubr.f32.gmra.mrb[0].mxu0 %v4927
      %v5043 = vpop.f32.mrb[0].mxu0
      %v5044 = vadd.f32 %v4543, %v5043
      %v5045 = vpop.f32.mrb[0].mxu0
      %5046 = vmatprep.mubr.f32.mxu0 0.0
      %5047 = vmatmul.mubr.f32.gmra.mrb[0].mxu0 %v4929
      %v5048 = vpop.f32.mrb[0].mxu0
      %v5049 = vadd.f32 %v4544, %v5048
      %v5050 = vpop.f32.mrb[0].mxu0
      %5051 = vdwg.mxu0
      %5052 = vrot.lane.b32.xlu0 %v587, 112
      %v5053 = vpop.permute.xlu0 %5052
      %5054 = vrot.lane.b32.xlu0 %v592, 112
      %v5055 = vpop.permute.xlu0 %5054
      %5056 = vrot.lane.b32.xlu0 %v597, 112
      %v5057 = vpop.permute.xlu0 %5056
      %5058 = vrot.lane.b32.xlu0 %v602, 112
      %v5059 = vpop.permute.xlu0 %5058
      %5060 = vrot.lane.b32.xlu0 %v607, 112
      %v5061 = vpop.permute.xlu0 %5060
      %5062 = vrot.lane.b32.xlu0 %v612, 112
      %v5063 = vpop.permute.xlu0 %5062
      %5064 = vrot.lane.b32.xlu0 %v617, 112
      %v5065 = vpop.permute.xlu0 %5064
      %5066 = vrot.lane.b32.xlu0 %v622, 112
      %v5067 = vpop.permute.xlu0 %5066
      %5068 = vrot.lane.b32.xlu0 %v587, 80
      %v5069 = vpop.permute.xlu0 %5068
      %5070 = vrot.lane.b32.xlu0 %v592, 80
      %v5071 = vpop.permute.xlu0 %5070
      %5072 = vrot.lane.b32.xlu0 %v597, 80
      %v5073 = vpop.permute.xlu0 %5072
      %5074 = vrot.lane.b32.xlu0 %v602, 80
      %v5075 = vpop.permute.xlu0 %5074
      %5076 = vrot.lane.b32.xlu0 %v607, 80
      %v5077 = vpop.permute.xlu0 %5076
      %5078 = vrot.lane.b32.xlu0 %v612, 80
      %v5079 = vpop.permute.xlu0 %5078
      %5080 = vrot.lane.b32.xlu0 %v617, 80
      %v5081 = vpop.permute.xlu0 %5080
      %5082 = vrot.lane.b32.xlu0 %v622, 80
      %v5083 = vpop.permute.xlu0 %5082
      %v5084 = vsel %vm657, %v5053, 0
      %v5086 = vsel %vm657, %v5055, 0
      %v5088 = vsel %vm657, %v5057, 0
      %v5090 = vsel %vm657, %v5059, 0
      %v5092 = vsel %vm657, %v5061, 0
      %v5094 = vsel %vm657, %v5063, 0
      %v5096 = vsel %vm657, %v5065, 0
      %v5098 = vsel %vm657, %v5067, 0
      %v5100 = vsel %vm657, %v5069, 0
      %v5102 = vsel %vm657, %v5071, 0
      %v5104 = vsel %vm657, %v5073, 0
      %v5106 = vsel %vm657, %v5075, 0
      %v5108 = vsel %vm657, %v5077, 0
      %v5110 = vsel %vm657, %v5079, 0
      %v5112 = vsel %vm657, %v5081, 0
      %v5114 = vsel %vm657, %v5083, 0
      %5116 = vmatprep.subr.mxu0 0.0
      %5117 = vmatpush1.xpose.msra.mxu0 %v5100
      %5118 = vmatprep.subr.mxu0 0.0
      %5119 = vmatpush1.xpose.msra.mxu0 %v5102
      %5120 = vmatprep.subr.mxu0 0.0
      %5121 = vmatpush1.xpose.msra.mxu0 %v5104
      %5122 = vmatprep.subr.mxu0 0.0
      %5123 = vmatpush1.xpose.msra.mxu0 %v5106
      %5124 = vmatprep.subr.mxu0 0.0
      %5125 = vmatpush1.xpose.msra.mxu0 %v5108
      %5126 = vmatprep.subr.mxu0 0.0
      %5127 = vmatpush1.xpose.msra.mxu0 %v5110
      %5128 = vmatprep.subr.mxu0 0.0
      %5129 = vmatpush1.xpose.msra.mxu0 %v5112
      %5130 = vmatprep.subr.mxu0 0.0
      %5131 = vmatpush1.xpose.msra.mxu0 %v5114
      %5132 = vmatprep.subr.mxu0 0.0
      %5133 = vmatpush1.xpose.msra.mxu0 0.0
      %5134 = vmatprep.subr.mxu0 0.0
      %5135 = vmatpush1.xpose.msra.mxu0 0.0
      %5136 = vmatprep.subr.mxu0 0.0
      %5137 = vmatpush1.xpose.msra.mxu0 0.0
      %5138 = vmatprep.subr.mxu0 0.0
      %5139 = vmatpush1.xpose.msra.mxu0 0.0
      %5140 = vmatprep.subr.mxu0 0.0
      %5141 = vmatpush1.xpose.msra.mxu0 0.0
      %5142 = vmatprep.subr.mxu0 0.0
      %5143 = vmatpush1.xpose.msra.mxu0 0.0
      %5144 = vmatprep.subr.mxu0 0.0
      %5145 = vmatpush1.xpose.msra.mxu0 0.0
      %5146 = vmatprep.subr.mxu0 0.0
      %5147 = vmatpush1.xpose.msra.mxu0 0.0
      %5148 = vmatprep.subr.mxu0 0.0
      %5149 = vmatpush1.xpose.msra.mxu0 0.0
      %5150 = vmatprep.subr.mxu0 0.0
      %5151 = vmatpush1.xpose.msra.mxu0 0.0
      %5152 = vmatprep.subr.mxu0 0.0
      %5153 = vmatpush1.xpose.msra.mxu0 0.0
      %5154 = vmatprep.subr.mxu0 0.0
      %5155 = vmatpush1.xpose.msra.mxu0 0.0
      %5156 = vmatprep.subr.mxu0 0.0
      %5157 = vmatpush1.xpose.msra.mxu0 0.0
      %5158 = vmatprep.subr.mxu0 0.0
      %5159 = vmatpush1.xpose.msra.mxu0 0.0
      %5160 = vmatprep.subr.mxu0 0.0
      %5161 = vmatpush1.xpose.msra.mxu0 0.0
      %5162 = vmatprep.subr.mxu0 0.0
      %5163 = vmatpush1.xpose.msra.mxu0 0.0
      %5164 = vmatprep.subr.mxu0 0.0
      %5165 = vmatpush1.xpose.msra.mxu0 0.0
      %5166 = vmatprep.subr.mxu0 0.0
      %5167 = vmatpush1.xpose.msra.mxu0 0.0
      %5168 = vmatprep.subr.mxu0 0.0
      %5169 = vmatpush1.xpose.msra.mxu0 0.0
      %5170 = vmatprep.subr.mxu0 0.0
      %5171 = vmatpush1.xpose.msra.mxu0 0.0
      %5172 = vmatprep.subr.mxu0 0.0
      %5173 = vmatpush1.xpose.msra.mxu0 0.0
      %5174 = vmatprep.subr.mxu0 0.0
      %5175 = vmatpush1.xpose.msra.mxu0 0.0
      %5176 = vmatprep.subr.mxu0 0.0
      %5177 = vmatpush1.xpose.msra.mxu0 0.0
      %5178 = vmatprep.subr.mxu0 0.0
      %5179 = vmatpush1.xpose.msra.mxu0 0.0
      %5180 = vmatprep.mubr.f32.mxu0 0.0
      %5181 = vmatmul.mubr.f32.gmra.mrb[0].mxu0 %v5084
      %v5182 = vpop.f32.mrb[0].mxu0
      %v5183 = vadd.f32 %v4537, %v5182
      %v5184 = vpop.f32.mrb[0].mxu0
      %5185 = vmatprep.mubr.f32.mxu0 0.0
      %5186 = vmatmul.mubr.f32.gmra.mrb[0].mxu0 %v5086
      %v5187 = vpop.f32.mrb[0].mxu0
      %v5188 = vadd.f32 %v4538, %v5187
      %v5189 = vpop.f32.mrb[0].mxu0
      %5190 = vmatprep.mubr.f32.mxu0 0.0
      %5191 = vmatmul.mubr.f32.gmra.mrb[0].mxu0 %v5088
      %v5192 = vpop.f32.mrb[0].mxu0
      %v5193 = vadd.f32 %v4539, %v5192
      %v5194 = vpop.f32.mrb[0].mxu0
      %5195 = vmatprep.mubr.f32.mxu0 0.0
      %5196 = vmatmul.mubr.f32.gmra.mrb[0].mxu0 %v5090
      %v5197 = vpop.f32.mrb[0].mxu0
      %v5198 = vadd.f32 %v4540, %v5197
      %v5199 = vpop.f32.mrb[0].mxu0
      %5200 = vmatprep.mubr.f32.mxu0 0.0
      %5201 = vmatmul.mubr.f32.gmra.mrb[0].mxu0 %v5092
      %v5202 = vpop.f32.mrb[0].mxu0
      %v5203 = vadd.f32 %v4541, %v5202
      %v5204 = vpop.f32.mrb[0].mxu0
      %5205 = vmatprep.mubr.f32.mxu0 0.0
      %5206 = vmatmul.mubr.f32.gmra.mrb[0].mxu0 %v5094
      %v5207 = vpop.f32.mrb[0].mxu0
      %v5208 = vadd.f32 %v4542, %v5207
      %v5209 = vpop.f32.mrb[0].mxu0
      %5210 = vmatprep.mubr.f32.mxu0 0.0
      %5211 = vmatmul.mubr.f32.gmra.mrb[0].mxu0 %v5096
      %v5212 = vpop.f32.mrb[0].mxu0
      %v5213 = vadd.f32 %v4543, %v5212
      %v5214 = vpop.f32.mrb[0].mxu0
      %5215 = vmatprep.mubr.f32.mxu0 0.0
      %5216 = vmatmul.mubr.f32.gmra.mrb[0].mxu0 %v5098
      %v5217 = vpop.f32.mrb[0].mxu0
      %v5218 = vadd.f32 %v4544, %v5217
      %v5219 = vpop.f32.mrb[0].mxu0
      %5220 = vdwg.mxu0
      %v5221 = vsel %vm1278, %v4676, -inf
      %5222 = vmax.xlane.f32.xlu0 %v5221
      %v5223 = vpop.xlane.xlu0 %5222
      %v5224 = vsel %vm1278, %v4681, -inf
      %5225 = vmax.xlane.f32.xlu0 %v5224
      %v5226 = vpop.xlane.xlu0 %5225
      %v5227 = vsel %vm1278, %v4686, -inf
      %5228 = vmax.xlane.f32.xlu0 %v5227
      %v5229 = vpop.xlane.xlu0 %5228
      %v5230 = vsel %vm1278, %v4691, -inf
      %5231 = vmax.xlane.f32.xlu0 %v5230
      %v5232 = vpop.xlane.xlu0 %5231
      %v5233 = vsel %vm1278, %v4696, -inf
      %5234 = vmax.xlane.f32.xlu0 %v5233
      %v5235 = vpop.xlane.xlu0 %5234
      %v5236 = vsel %vm1278, %v4701, -inf
      %5237 = vmax.xlane.f32.xlu0 %v5236
      %v5238 = vpop.xlane.xlu0 %5237
      %v5239 = vsel %vm1278, %v4706, -inf
      %5240 = vmax.xlane.f32.xlu0 %v5239
      %v5241 = vpop.xlane.xlu0 %5240
      %v5242 = vsel %vm1278, %v4711, -inf
      %5243 = vmax.xlane.f32.xlu0 %v5242
      %v5244 = vpop.xlane.xlu0 %5243
      %v5245 = vsel %vm1278, %v4845, -inf
      %5246 = vmax.xlane.f32.xlu0 %v5245
      %v5247 = vpop.xlane.xlu0 %5246
      %v5248 = vsel %vm1278, %v4850, -inf
      %5249 = vmax.xlane.f32.xlu0 %v5248
      %v5250 = vpop.xlane.xlu0 %5249
      %v5251 = vsel %vm1278, %v4855, -inf
      %5252 = vmax.xlane.f32.xlu0 %v5251
      %v5253 = vpop.xlane.xlu0 %5252
      %v5254 = vsel %vm1278, %v4860, -inf
      %5255 = vmax.xlane.f32.xlu0 %v5254
      %v5256 = vpop.xlane.xlu0 %5255
      %v5257 = vsel %vm1278, %v4865, -inf
      %5258 = vmax.xlane.f32.xlu0 %v5257
      %v5259 = vpop.xlane.xlu0 %5258
      %v5260 = vsel %vm1278, %v4870, -inf
      %5261 = vmax.xlane.f32.xlu0 %v5260
      %v5262 = vpop.xlane.xlu0 %5261
      %v5263 = vsel %vm1278, %v4875, -inf
      %5264 = vmax.xlane.f32.xlu0 %v5263
      %v5265 = vpop.xlane.xlu0 %5264
      %v5266 = vsel %vm1278, %v4880, -inf
      %5267 = vmax.xlane.f32.xlu0 %v5266
      %v5268 = vpop.xlane.xlu0 %5267
      %v5269 = vsel %vm1278, %v5014, -inf
      %5270 = vmax.xlane.f32.xlu0 %v5269
      %v5271 = vpop.xlane.xlu0 %5270
      %v5272 = vsel %vm1278, %v5019, -inf
      %5273 = vmax.xlane.f32.xlu0 %v5272
      %v5274 = vpop.xlane.xlu0 %5273
      %v5275 = vsel %vm1278, %v5024, -inf
      %5276 = vmax.xlane.f32.xlu0 %v5275
      %v5277 = vpop.xlane.xlu0 %5276
      %v5278 = vsel %vm1278, %v5029, -inf
      %5279 = vmax.xlane.f32.xlu0 %v5278
      %v5280 = vpop.xlane.xlu0 %5279
      %v5281 = vsel %vm1278, %v5034, -inf
      %5282 = vmax.xlane.f32.xlu0 %v5281
      %v5283 = vpop.xlane.xlu0 %5282
      %v5284 = vsel %vm1278, %v5039, -inf
      %5285 = vmax.xlane.f32.xlu0 %v5284
      %v5286 = vpop.xlane.xlu0 %5285
      %v5287 = vsel %vm1278, %v5044, -inf
      %5288 = vmax.xlane.f32.xlu0 %v5287
      %v5289 = vpop.xlane.xlu0 %5288
      %v5290 = vsel %vm1278, %v5049, -inf
      %5291 = vmax.xlane.f32.xlu0 %v5290
      %v5292 = vpop.xlane.xlu0 %5291
      %v5293 = vsel %vm1278, %v5183, -inf
      %5294 = vmax.xlane.f32.xlu0 %v5293
      %v5295 = vpop.xlane.xlu0 %5294
      %v5296 = vsel %vm1278, %v5188, -inf
      %5297 = vmax.xlane.f32.xlu0 %v5296
      %v5298 = vpop.xlane.xlu0 %5297
      %v5299 = vsel %vm1278, %v5193, -inf
      %5300 = vmax.xlane.f32.xlu0 %v5299
      %v5301 = vpop.xlane.xlu0 %5300
      %v5302 = vsel %vm1278, %v5198, -inf
      %5303 = vmax.xlane.f32.xlu0 %v5302
      %v5304 = vpop.xlane.xlu0 %5303
      %v5305 = vsel %vm1278, %v5203, -inf
      %5306 = vmax.xlane.f32.xlu0 %v5305
      %v5307 = vpop.xlane.xlu0 %5306
      %v5308 = vsel %vm1278, %v5208, -inf
      %5309 = vmax.xlane.f32.xlu0 %v5308
      %v5310 = vpop.xlane.xlu0 %5309
      %v5311 = vsel %vm1278, %v5213, -inf
      %5312 = vmax.xlane.f32.xlu0 %v5311
      %v5313 = vpop.xlane.xlu0 %5312
      %v5314 = vsel %vm1278, %v5218, -inf
      %5315 = vmax.xlane.f32.xlu0 %v5314
      %v5316 = vpop.xlane.xlu0 %5315
      %v5317 = vsub.f32 %v4676, %v5223
      %v5318 = vsub.f32 %v4681, %v5226
      %v5319 = vsub.f32 %v4686, %v5229
      %v5320 = vsub.f32 %v4691, %v5232
      %v5321 = vsub.f32 %v4696, %v5235
      %v5322 = vsub.f32 %v4701, %v5238
      %v5323 = vsub.f32 %v4706, %v5241
      %v5324 = vsub.f32 %v4711, %v5244
      %v5325 = vsub.f32 %v4845, %v5247
      %v5326 = vsub.f32 %v4850, %v5250
      %v5327 = vsub.f32 %v4855, %v5253
      %v5328 = vsub.f32 %v4860, %v5256
      %v5329 = vsub.f32 %v4865, %v5259
      %v5330 = vsub.f32 %v4870, %v5262
      %v5331 = vsub.f32 %v4875, %v5265
      %v5332 = vsub.f32 %v4880, %v5268
      %v5333 = vsub.f32 %v5014, %v5271
      %v5334 = vsub.f32 %v5019, %v5274
      %v5335 = vsub.f32 %v5024, %v5277
      %v5336 = vsub.f32 %v5029, %v5280
      %v5337 = vsub.f32 %v5034, %v5283
      %v5338 = vsub.f32 %v5039, %v5286
      %v5339 = vsub.f32 %v5044, %v5289
      %v5340 = vsub.f32 %v5049, %v5292
      %v5341 = vsub.f32 %v5183, %v5295
      %v5342 = vsub.f32 %v5188, %v5298
      %v5343 = vsub.f32 %v5193, %v5301
      %v5344 = vsub.f32 %v5198, %v5304
      %v5345 = vsub.f32 %v5203, %v5307
      %v5346 = vsub.f32 %v5208, %v5310
      %v5347 = vsub.f32 %v5213, %v5313
      %v5348 = vsub.f32 %v5218, %v5316
      %v5349 = vmul.f32 %v5317, 1.442695
      %v5350 = vpow.pop %v5349
      %v5351 = vmul.f32 %v5318, 1.442695
      %v5352 = vpow.pop %v5351
      %v5353 = vmul.f32 %v5319, 1.442695
      %v5354 = vpow.pop %v5353
      %v5355 = vmul.f32 %v5320, 1.442695
      %v5356 = vpow.pop %v5355
      %v5357 = vmul.f32 %v5321, 1.442695
      %v5358 = vpow.pop %v5357
      %v5359 = vmul.f32 %v5322, 1.442695
      %v5360 = vpow.pop %v5359
      %v5361 = vmul.f32 %v5323, 1.442695
      %v5362 = vpow.pop %v5361
      %v5363 = vmul.f32 %v5324, 1.442695
      %v5364 = vpow.pop %v5363
      %v5365 = vmul.f32 %v5325, 1.442695
      %v5366 = vpow.pop %v5365
      %v5367 = vmul.f32 %v5326, 1.442695
      %v5368 = vpow.pop %v5367
      %v5369 = vmul.f32 %v5327, 1.442695
      %v5370 = vpow.pop %v5369
      %v5371 = vmul.f32 %v5328, 1.442695
      %v5372 = vpow.pop %v5371
      %v5373 = vmul.f32 %v5329, 1.442695
      %v5374 = vpow.pop %v5373
      %v5375 = vmul.f32 %v5330, 1.442695
      %v5376 = vpow.pop %v5375
      %v5377 = vmul.f32 %v5331, 1.442695
      %v5378 = vpow.pop %v5377
      %v5379 = vmul.f32 %v5332, 1.442695
      %v5380 = vpow.pop %v5379
      %v5381 = vmul.f32 %v5333, 1.442695
      %v5382 = vpow.pop %v5381
      %v5383 = vmul.f32 %v5334, 1.442695
      %v5384 = vpow.pop %v5383
      %v5385 = vmul.f32 %v5335, 1.442695
      %v5386 = vpow.pop %v5385
      %v5387 = vmul.f32 %v5336, 1.442695
      %v5388 = vpow.pop %v5387
      %v5389 = vmul.f32 %v5337, 1.442695
      %v5390 = vpow.pop %v5389
      %v5391 = vmul.f32 %v5338, 1.442695
      %v5392 = vpow.pop %v5391
      %v5393 = vmul.f32 %v5339, 1.442695
      %v5394 = vpow.pop %v5393
      %v5395 = vmul.f32 %v5340, 1.442695
      %v5396 = vpow.pop %v5395
      %v5397 = vmul.f32 %v5341, 1.442695
      %v5398 = vpow.pop %v5397
      %v5399 = vmul.f32 %v5342, 1.442695
      %v5400 = vpow.pop %v5399
      %v5401 = vmul.f32 %v5343, 1.442695
      %v5402 = vpow.pop %v5401
      %v5403 = vmul.f32 %v5344, 1.442695
      %v5404 = vpow.pop %v5403
      %v5405 = vmul.f32 %v5345, 1.442695
      %v5406 = vpow.pop %v5405
      %v5407 = vmul.f32 %v5346, 1.442695
      %v5408 = vpow.pop %v5407
      %v5409 = vmul.f32 %v5347, 1.442695
      %v5410 = vpow.pop %v5409
      %v5411 = vmul.f32 %v5348, 1.442695
      %v5412 = vpow.pop %v5411
      %v5413 = vsel %vm1278, %v5350, 0.0
      %5414 = vadd.xlane.f32.xlu0 %v5413
      %v5415 = vpop.xlane.xlu0 %5414
      %v5416 = vsel %vm1278, %v5352, 0.0
      %5417 = vadd.xlane.f32.xlu0 %v5416
      %v5418 = vpop.xlane.xlu0 %5417
      %v5419 = vsel %vm1278, %v5354, 0.0
      %5420 = vadd.xlane.f32.xlu0 %v5419
      %v5421 = vpop.xlane.xlu0 %5420
      %v5422 = vsel %vm1278, %v5356, 0.0
      %5423 = vadd.xlane.f32.xlu0 %v5422
      %v5424 = vpop.xlane.xlu0 %5423
      %v5425 = vsel %vm1278, %v5358, 0.0
      %5426 = vadd.xlane.f32.xlu0 %v5425
      %v5427 = vpop.xlane.xlu0 %5426
      %v5428 = vsel %vm1278, %v5360, 0.0
      %5429 = vadd.xlane.f32.xlu0 %v5428
      %v5430 = vpop.xlane.xlu0 %5429
      %v5431 = vsel %vm1278, %v5362, 0.0
      %5432 = vadd.xlane.f32.xlu0 %v5431
      %v5433 = vpop.xlane.xlu0 %5432
      %v5434 = vsel %vm1278, %v5364, 0.0
      %5435 = vadd.xlane.f32.xlu0 %v5434
      %v5436 = vpop.xlane.xlu0 %5435
      %v5437 = vsel %vm1278, %v5366, 0.0
      %5438 = vadd.xlane.f32.xlu0 %v5437
      %v5439 = vpop.xlane.xlu0 %5438
      %v5440 = vsel %vm1278, %v5368, 0.0
      %5441 = vadd.xlane.f32.xlu0 %v5440
      %v5442 = vpop.xlane.xlu0 %5441
      %v5443 = vsel %vm1278, %v5370, 0.0
      %5444 = vadd.xlane.f32.xlu0 %v5443
      %v5445 = vpop.xlane.xlu0 %5444
      %v5446 = vsel %vm1278, %v5372, 0.0
      %5447 = vadd.xlane.f32.xlu0 %v5446
      %v5448 = vpop.xlane.xlu0 %5447
      %v5449 = vsel %vm1278, %v5374, 0.0
      %5450 = vadd.xlane.f32.xlu0 %v5449
      %v5451 = vpop.xlane.xlu0 %5450
      %v5452 = vsel %vm1278, %v5376, 0.0
      %5453 = vadd.xlane.f32.xlu0 %v5452
      %v5454 = vpop.xlane.xlu0 %5453
      %v5455 = vsel %vm1278, %v5378, 0.0
      %5456 = vadd.xlane.f32.xlu0 %v5455
      %v5457 = vpop.xlane.xlu0 %5456
      %v5458 = vsel %vm1278, %v5380, 0.0
      %5459 = vadd.xlane.f32.xlu0 %v5458
      %v5460 = vpop.xlane.xlu0 %5459
      %v5461 = vsel %vm1278, %v5382, 0.0
      %5462 = vadd.xlane.f32.xlu0 %v5461
      %v5463 = vpop.xlane.xlu0 %5462
      %v5464 = vsel %vm1278, %v5384, 0.0
      %5465 = vadd.xlane.f32.xlu0 %v5464
      %v5466 = vpop.xlane.xlu0 %5465
      %v5467 = vsel %vm1278, %v5386, 0.0
      %5468 = vadd.xlane.f32.xlu0 %v5467
      %v5469 = vpop.xlane.xlu0 %5468
      %v5470 = vsel %vm1278, %v5388, 0.0
      %5471 = vadd.xlane.f32.xlu0 %v5470
      %v5472 = vpop.xlane.xlu0 %5471
      %v5473 = vsel %vm1278, %v5390, 0.0
      %5474 = vadd.xlane.f32.xlu0 %v5473
      %v5475 = vpop.xlane.xlu0 %5474
      %v5476 = vsel %vm1278, %v5392, 0.0
      %5477 = vadd.xlane.f32.xlu0 %v5476
      %v5478 = vpop.xlane.xlu0 %5477
      %v5479 = vsel %vm1278, %v5394, 0.0
      %5480 = vadd.xlane.f32.xlu0 %v5479
      %v5481 = vpop.xlane.xlu0 %5480
      %v5482 = vsel %vm1278, %v5396, 0.0
      %5483 = vadd.xlane.f32.xlu0 %v5482
      %v5484 = vpop.xlane.xlu0 %5483
      %v5485 = vsel %vm1278, %v5398, 0.0
      %5486 = vadd.xlane.f32.xlu0 %v5485
      %v5487 = vpop.xlane.xlu0 %5486
      %v5488 = vsel %vm1278, %v5400, 0.0
      %5489 = vadd.xlane.f32.xlu0 %v5488
      %v5490 = vpop.xlane.xlu0 %5489
      %v5491 = vsel %vm1278, %v5402, 0.0
      %5492 = vadd.xlane.f32.xlu0 %v5491
      %v5493 = vpop.xlane.xlu0 %5492
      %v5494 = vsel %vm1278, %v5404, 0.0
      %5495 = vadd.xlane.f32.xlu0 %v5494
      %v5496 = vpop.xlane.xlu0 %5495
      %v5497 = vsel %vm1278, %v5406, 0.0
      %5498 = vadd.xlane.f32.xlu0 %v5497
      %v5499 = vpop.xlane.xlu0 %5498
      %v5500 = vsel %vm1278, %v5408, 0.0
      %5501 = vadd.xlane.f32.xlu0 %v5500
      %v5502 = vpop.xlane.xlu0 %5501
      %v5503 = vsel %vm1278, %v5410, 0.0
      %5504 = vadd.xlane.f32.xlu0 %v5503
      %v5505 = vpop.xlane.xlu0 %5504
      %v5506 = vsel %vm1278, %v5412, 0.0
      %5507 = vadd.xlane.f32.xlu0 %v5506
      %v5508 = vpop.xlane.xlu0 %5507
      %v5509 = vrcp.pop %v5415
      %v5510 = vrcp.pop %v5418
      %v5511 = vrcp.pop %v5421
      %v5512 = vrcp.pop %v5424
      %v5513 = vrcp.pop %v5427
      %v5514 = vrcp.pop %v5430
      %v5515 = vrcp.pop %v5433
      %v5516 = vrcp.pop %v5436
      %v5517 = vrcp.pop %v5439
      %v5518 = vrcp.pop %v5442
      %v5519 = vrcp.pop %v5445
      %v5520 = vrcp.pop %v5448
      %v5521 = vrcp.pop %v5451
      %v5522 = vrcp.pop %v5454
      %v5523 = vrcp.pop %v5457
      %v5524 = vrcp.pop %v5460
      %v5525 = vrcp.pop %v5463
      %v5526 = vrcp.pop %v5466
      %v5527 = vrcp.pop %v5469
      %v5528 = vrcp.pop %v5472
      %v5529 = vrcp.pop %v5475
      %v5530 = vrcp.pop %v5478
      %v5531 = vrcp.pop %v5481
      %v5532 = vrcp.pop %v5484
      %v5533 = vrcp.pop %v5487
      %v5534 = vrcp.pop %v5490
      %v5535 = vrcp.pop %v5493
      %v5536 = vrcp.pop %v5496
      %v5537 = vrcp.pop %v5499
      %v5538 = vrcp.pop %v5502
      %v5539 = vrcp.pop %v5505
      %v5540 = vrcp.pop %v5508
      %v5541 = vmul.f32 %v5350, %v5509
      %v5542 = vmul.f32 %v5352, %v5510
      %v5543 = vmul.f32 %v5354, %v5511
      %v5544 = vmul.f32 %v5356, %v5512
      %v5545 = vmul.f32 %v5358, %v5513
      %v5546 = vmul.f32 %v5360, %v5514
      %v5547 = vmul.f32 %v5362, %v5515
      %v5548 = vmul.f32 %v5364, %v5516
      %v5549 = vmul.f32 %v5366, %v5517
      %v5550 = vmul.f32 %v5368, %v5518
      %v5551 = vmul.f32 %v5370, %v5519
      %v5552 = vmul.f32 %v5372, %v5520
      %v5553 = vmul.f32 %v5374, %v5521
      %v5554 = vmul.f32 %v5376, %v5522
      %v5555 = vmul.f32 %v5378, %v5523
      %v5556 = vmul.f32 %v5380, %v5524
      %v5557 = vmul.f32 %v5382, %v5525
      %v5558 = vmul.f32 %v5384, %v5526
      %v5559 = vmul.f32 %v5386, %v5527
      %v5560 = vmul.f32 %v5388, %v5528
      %v5561 = vmul.f32 %v5390, %v5529
      %v5562 = vmul.f32 %v5392, %v5530
      %v5563 = vmul.f32 %v5394, %v5531
      %v5564 = vmul.f32 %v5396, %v5532
      %v5565 = vmul.f32 %v5398, %v5533
      %v5566 = vmul.f32 %v5400, %v5534
      %v5567 = vmul.f32 %v5402, %v5535
      %v5568 = vmul.f32 %v5404, %v5536
      %v5569 = vmul.f32 %v5406, %v5537
      %v5570 = vmul.f32 %v5408, %v5538
      %v5571 = vmul.f32 %v5410, %v5539
      %v5572 = vmul.f32 %v5412, %v5540
      %5573 = vrot.lane.b32.xlu0 %v467, 48
      %v5574 = vpop.permute.xlu0 %5573
      %5575 = vrot.lane.b32.xlu0 %v472, 48
      %v5576 = vpop.permute.xlu0 %5575
      %5577 = vrot.lane.b32.xlu0 %v477, 48
      %v5578 = vpop.permute.xlu0 %5577
      %5579 = vrot.lane.b32.xlu0 %v482, 48
      %v5580 = vpop.permute.xlu0 %5579
      %5581 = vrot.lane.b32.xlu0 %v487, 48
      %v5582 = vpop.permute.xlu0 %5581
      %5583 = vrot.lane.b32.xlu0 %v492, 48
      %v5584 = vpop.permute.xlu0 %5583
      %5585 = vrot.lane.b32.xlu0 %v497, 48
      %v5586 = vpop.permute.xlu0 %5585
      %5587 = vrot.lane.b32.xlu0 %v502, 48
      %v5588 = vpop.permute.xlu0 %5587
      %v5598 = vsel %vm1278, %v5541, 0
      %v5601 = vsel %vm1278, %v5542, 0
      %v5604 = vsel %vm1278, %v5543, 0
      %v5607 = vsel %vm1278, %v5544, 0
      %v5610 = vsel %vm1278, %v5545, 0
      %v5613 = vsel %vm1278, %v5546, 0
      %v5616 = vsel %vm1278, %v5547, 0
      %v5619 = vsel %vm1278, %v5548, 0
      %5621 = vmatprep.subr.mxu0 0.0
      %5622 = vmatpush1.msra.mxu0 %v5574
      %5623 = vmatprep.subr.mxu0 0.0
      %5624 = vmatpush1.msra.mxu0 %v5576
      %5625 = vmatprep.subr.mxu0 0.0
      %5626 = vmatpush1.msra.mxu0 %v5578
      %5627 = vmatprep.subr.mxu0 0.0
      %5628 = vmatpush1.msra.mxu0 %v5580
      %5629 = vmatprep.subr.mxu0 0.0
      %5630 = vmatpush1.msra.mxu0 %v5582
      %5631 = vmatprep.subr.mxu0 0.0
      %5632 = vmatpush1.msra.mxu0 %v5584
      %5633 = vmatprep.subr.mxu0 0.0
      %5634 = vmatpush1.msra.mxu0 %v5586
      %5635 = vmatprep.subr.mxu0 0.0
      %5636 = vmatpush1.msra.mxu0 %v5588
      %5637 = vmatprep.subr.mxu0 0.0
      %5638 = vmatpush1.msra.mxu0 0.0
      %5639 = vmatprep.subr.mxu0 0.0
      %5640 = vmatpush1.msra.mxu0 0.0
      %5641 = vmatprep.subr.mxu0 0.0
      %5642 = vmatpush1.msra.mxu0 0.0
      %5643 = vmatprep.subr.mxu0 0.0
      %5644 = vmatpush1.msra.mxu0 0.0
      %5645 = vmatprep.subr.mxu0 0.0
      %5646 = vmatpush1.msra.mxu0 0.0
      %5647 = vmatprep.subr.mxu0 0.0
      %5648 = vmatpush1.msra.mxu0 0.0
      %5649 = vmatprep.subr.mxu0 0.0
      %5650 = vmatpush1.msra.mxu0 0.0
      %5651 = vmatprep.subr.mxu0 0.0
      %5652 = vmatpush1.msra.mxu0 0.0
      %5653 = vmatprep.subr.mxu0 0.0
      %5654 = vmatpush1.msra.mxu0 0.0
      %5655 = vmatprep.subr.mxu0 0.0
      %5656 = vmatpush1.msra.mxu0 0.0
      %5657 = vmatprep.subr.mxu0 0.0
      %5658 = vmatpush1.msra.mxu0 0.0
      %5659 = vmatprep.subr.mxu0 0.0
      %5660 = vmatpush1.msra.mxu0 0.0
      %5661 = vmatprep.subr.mxu0 0.0
      %5662 = vmatpush1.msra.mxu0 0.0
      %5663 = vmatprep.subr.mxu0 0.0
      %5664 = vmatpush1.msra.mxu0 0.0
      %5665 = vmatprep.subr.mxu0 0.0
      %5666 = vmatpush1.msra.mxu0 0.0
      %5667 = vmatprep.subr.mxu0 0.0
      %5668 = vmatpush1.msra.mxu0 0.0
      %5669 = vmatprep.subr.mxu0 0.0
      %5670 = vmatpush1.msra.mxu0 0.0
      %5671 = vmatprep.subr.mxu0 0.0
      %5672 = vmatpush1.msra.mxu0 0.0
      %5673 = vmatprep.subr.mxu0 0.0
      %5674 = vmatpush1.msra.mxu0 0.0
      %5675 = vmatprep.subr.mxu0 0.0
      %5676 = vmatpush1.msra.mxu0 0.0
      %5677 = vmatprep.subr.mxu0 0.0
      %5678 = vmatpush1.msra.mxu0 0.0
      %5679 = vmatprep.subr.mxu0 0.0
      %5680 = vmatpush1.msra.mxu0 0.0
      %5681 = vmatprep.subr.mxu0 0.0
      %5682 = vmatpush1.msra.mxu0 0.0
      %5683 = vmatprep.subr.mxu0 0.0
      %5684 = vmatpush1.msra.mxu0 0.0
      %5685 = vmatprep.mubr.f32.mxu0 0.0
      %5686 = vmatmul.mubr.f32.gmra.mrb[0].mxu0 %v5598
      %v5687 = vpop.f32.mrb[0].mxu0
      %v5688 = vadd.f32 0.0, %v5687
      %v5689 = vpop.f32.mrb[0].mxu0
      %5690 = vmatprep.mubr.f32.mxu0 0.0
      %5691 = vmatmul.mubr.f32.gmra.mrb[0].mxu0 %v5601
      %v5692 = vpop.f32.mrb[0].mxu0
      %v5693 = vadd.f32 0.0, %v5692
      %v5694 = vpop.f32.mrb[0].mxu0
      %5695 = vmatprep.mubr.f32.mxu0 0.0
      %5696 = vmatmul.mubr.f32.gmra.mrb[0].mxu0 %v5604
      %v5697 = vpop.f32.mrb[0].mxu0
      %v5698 = vadd.f32 0.0, %v5697
      %v5699 = vpop.f32.mrb[0].mxu0
      %5700 = vmatprep.mubr.f32.mxu0 0.0
      %5701 = vmatmul.mubr.f32.gmra.mrb[0].mxu0 %v5607
      %v5702 = vpop.f32.mrb[0].mxu0
      %v5703 = vadd.f32 0.0, %v5702
      %v5704 = vpop.f32.mrb[0].mxu0
      %5705 = vmatprep.mubr.f32.mxu0 0.0
      %5706 = vmatmul.mubr.f32.gmra.mrb[0].mxu0 %v5610
      %v5707 = vpop.f32.mrb[0].mxu0
      %v5708 = vadd.f32 0.0, %v5707
      %v5709 = vpop.f32.mrb[0].mxu0
      %5710 = vmatprep.mubr.f32.mxu0 0.0
      %5711 = vmatmul.mubr.f32.gmra.mrb[0].mxu0 %v5613
      %v5712 = vpop.f32.mrb[0].mxu0
      %v5713 = vadd.f32 0.0, %v5712
      %v5714 = vpop.f32.mrb[0].mxu0
      %5715 = vmatprep.mubr.f32.mxu0 0.0
      %5716 = vmatmul.mubr.f32.gmra.mrb[0].mxu0 %v5616
      %v5717 = vpop.f32.mrb[0].mxu0
      %v5718 = vadd.f32 0.0, %v5717
      %v5719 = vpop.f32.mrb[0].mxu0
      %5720 = vmatprep.mubr.f32.mxu0 0.0
      %5721 = vmatmul.mubr.f32.gmra.mrb[0].mxu0 %v5619
      %v5722 = vpop.f32.mrb[0].mxu0
      %v5723 = vadd.f32 0.0, %v5722
      %v5724 = vpop.f32.mrb[0].mxu0
      %5725 = vdwg.mxu0
      %5726 = vrot.lane.b32.xlu0 %v507, 48
      %v5727 = vpop.permute.xlu0 %5726
      %5728 = vrot.lane.b32.xlu0 %v512, 48
      %v5729 = vpop.permute.xlu0 %5728
      %5730 = vrot.lane.b32.xlu0 %v517, 48
      %v5731 = vpop.permute.xlu0 %5730
      %5732 = vrot.lane.b32.xlu0 %v522, 48
      %v5733 = vpop.permute.xlu0 %5732
      %5734 = vrot.lane.b32.xlu0 %v527, 48
      %v5735 = vpop.permute.xlu0 %5734
      %5736 = vrot.lane.b32.xlu0 %v532, 48
      %v5737 = vpop.permute.xlu0 %5736
      %5738 = vrot.lane.b32.xlu0 %v537, 48
      %v5739 = vpop.permute.xlu0 %5738
      %5740 = vrot.lane.b32.xlu0 %v542, 48
      %v5741 = vpop.permute.xlu0 %5740
      %v5751 = vsel %vm1278, %v5549, 0
      %v5754 = vsel %vm1278, %v5550, 0
      %v5757 = vsel %vm1278, %v5551, 0
      %v5760 = vsel %vm1278, %v5552, 0
      %v5763 = vsel %vm1278, %v5553, 0
      %v5766 = vsel %vm1278, %v5554, 0
      %v5769 = vsel %vm1278, %v5555, 0
      %v5772 = vsel %vm1278, %v5556, 0
      %5774 = vmatprep.subr.mxu0 0.0
      %5775 = vmatpush1.msra.mxu0 %v5727
      %5776 = vmatprep.subr.mxu0 0.0
      %5777 = vmatpush1.msra.mxu0 %v5729
      %5778 = vmatprep.subr.mxu0 0.0
      %5779 = vmatpush1.msra.mxu0 %v5731
      %5780 = vmatprep.subr.mxu0 0.0
      %5781 = vmatpush1.msra.mxu0 %v5733
      %5782 = vmatprep.subr.mxu0 0.0
      %5783 = vmatpush1.msra.mxu0 %v5735
      %5784 = vmatprep.subr.mxu0 0.0
      %5785 = vmatpush1.msra.mxu0 %v5737
      %5786 = vmatprep.subr.mxu0 0.0
      %5787 = vmatpush1.msra.mxu0 %v5739
      %5788 = vmatprep.subr.mxu0 0.0
      %5789 = vmatpush1.msra.mxu0 %v5741
      %5790 = vmatprep.subr.mxu0 0.0
      %5791 = vmatpush1.msra.mxu0 0.0
      %5792 = vmatprep.subr.mxu0 0.0
      %5793 = vmatpush1.msra.mxu0 0.0
      %5794 = vmatprep.subr.mxu0 0.0
      %5795 = vmatpush1.msra.mxu0 0.0
      %5796 = vmatprep.subr.mxu0 0.0
      %5797 = vmatpush1.msra.mxu0 0.0
      %5798 = vmatprep.subr.mxu0 0.0
      %5799 = vmatpush1.msra.mxu0 0.0
      %5800 = vmatprep.subr.mxu0 0.0
      %5801 = vmatpush1.msra.mxu0 0.0
      %5802 = vmatprep.subr.mxu0 0.0
      %5803 = vmatpush1.msra.mxu0 0.0
      %5804 = vmatprep.subr.mxu0 0.0
      %5805 = vmatpush1.msra.mxu0 0.0
      %5806 = vmatprep.subr.mxu0 0.0
      %5807 = vmatpush1.msra.mxu0 0.0
      %5808 = vmatprep.subr.mxu0 0.0
      %5809 = vmatpush1.msra.mxu0 0.0
      %5810 = vmatprep.subr.mxu0 0.0
      %5811 = vmatpush1.msra.mxu0 0.0
      %5812 = vmatprep.subr.mxu0 0.0
      %5813 = vmatpush1.msra.mxu0 0.0
      %5814 = vmatprep.subr.mxu0 0.0
      %5815 = vmatpush1.msra.mxu0 0.0
      %5816 = vmatprep.subr.mxu0 0.0
      %5817 = vmatpush1.msra.mxu0 0.0
      %5818 = vmatprep.subr.mxu0 0.0
      %5819 = vmatpush1.msra.mxu0 0.0
      %5820 = vmatprep.subr.mxu0 0.0
      %5821 = vmatpush1.msra.mxu0 0.0
      %5822 = vmatprep.subr.mxu0 0.0
      %5823 = vmatpush1.msra.mxu0 0.0
      %5824 = vmatprep.subr.mxu0 0.0
      %5825 = vmatpush1.msra.mxu0 0.0
      %5826 = vmatprep.subr.mxu0 0.0
      %5827 = vmatpush1.msra.mxu0 0.0
      %5828 = vmatprep.subr.mxu0 0.0
      %5829 = vmatpush1.msra.mxu0 0.0
      %5830 = vmatprep.subr.mxu0 0.0
      %5831 = vmatpush1.msra.mxu0 0.0
      %5832 = vmatprep.subr.mxu0 0.0
      %5833 = vmatpush1.msra.mxu0 0.0
      %5834 = vmatprep.subr.mxu0 0.0
      %5835 = vmatpush1.msra.mxu0 0.0
      %5836 = vmatprep.subr.mxu0 0.0
      %5837 = vmatpush1.msra.mxu0 0.0
      %5838 = vmatprep.mubr.f32.mxu0 0.0
      %5839 = vmatmul.mubr.f32.gmra.mrb[0].mxu0 %v5751
      %v5840 = vpop.f32.mrb[0].mxu0
      %v5841 = vadd.f32 0.0, %v5840
      %v5842 = vpop.f32.mrb[0].mxu0
      %5843 = vmatprep.mubr.f32.mxu0 0.0
      %5844 = vmatmul.mubr.f32.gmra.mrb[0].mxu0 %v5754
      %v5845 = vpop.f32.mrb[0].mxu0
      %v5846 = vadd.f32 0.0, %v5845
      %v5847 = vpop.f32.mrb[0].mxu0
      %5848 = vmatprep.mubr.f32.mxu0 0.0
      %5849 = vmatmul.mubr.f32.gmra.mrb[0].mxu0 %v5757
      %v5850 = vpop.f32.mrb[0].mxu0
      %v5851 = vadd.f32 0.0, %v5850
      %v5852 = vpop.f32.mrb[0].mxu0
      %5853 = vmatprep.mubr.f32.mxu0 0.0
      %5854 = vmatmul.mubr.f32.gmra.mrb[0].mxu0 %v5760
      %v5855 = vpop.f32.mrb[0].mxu0
      %v5856 = vadd.f32 0.0, %v5855
      %v5857 = vpop.f32.mrb[0].mxu0
      %5858 = vmatprep.mubr.f32.mxu0 0.0
      %5859 = vmatmul.mubr.f32.gmra.mrb[0].mxu0 %v5763
      %v5860 = vpop.f32.mrb[0].mxu0
      %v5861 = vadd.f32 0.0, %v5860
      %v5862 = vpop.f32.mrb[0].mxu0
      %5863 = vmatprep.mubr.f32.mxu0 0.0
      %5864 = vmatmul.mubr.f32.gmra.mrb[0].mxu0 %v5766
      %v5865 = vpop.f32.mrb[0].mxu0
      %v5866 = vadd.f32 0.0, %v5865
      %v5867 = vpop.f32.mrb[0].mxu0
      %5868 = vmatprep.mubr.f32.mxu0 0.0
      %5869 = vmatmul.mubr.f32.gmra.mrb[0].mxu0 %v5769
      %v5870 = vpop.f32.mrb[0].mxu0
      %v5871 = vadd.f32 0.0, %v5870
      %v5872 = vpop.f32.mrb[0].mxu0
      %5873 = vmatprep.mubr.f32.mxu0 0.0
      %5874 = vmatmul.mubr.f32.gmra.mrb[0].mxu0 %v5772
      %v5875 = vpop.f32.mrb[0].mxu0
      %v5876 = vadd.f32 0.0, %v5875
      %v5877 = vpop.f32.mrb[0].mxu0
      %5878 = vdwg.mxu0
      %5879 = vrot.lane.b32.xlu0 %v547, 48
      %v5880 = vpop.permute.xlu0 %5879
      %5881 = vrot.lane.b32.xlu0 %v552, 48
      %v5882 = vpop.permute.xlu0 %5881
      %5883 = vrot.lane.b32.xlu0 %v557, 48
      %v5884 = vpop.permute.xlu0 %5883
      %5885 = vrot.lane.b32.xlu0 %v562, 48
      %v5886 = vpop.permute.xlu0 %5885
      %5887 = vrot.lane.b32.xlu0 %v567, 48
      %v5888 = vpop.permute.xlu0 %5887
      %5889 = vrot.lane.b32.xlu0 %v572, 48
      %v5890 = vpop.permute.xlu0 %5889
      %5891 = vrot.lane.b32.xlu0 %v577, 48
      %v5892 = vpop.permute.xlu0 %5891
      %5893 = vrot.lane.b32.xlu0 %v582, 48
      %v5894 = vpop.permute.xlu0 %5893
      %v5904 = vsel %vm1278, %v5557, 0
      %v5907 = vsel %vm1278, %v5558, 0
      %v5910 = vsel %vm1278, %v5559, 0
      %v5913 = vsel %vm1278, %v5560, 0
      %v5916 = vsel %vm1278, %v5561, 0
      %v5919 = vsel %vm1278, %v5562, 0
      %v5922 = vsel %vm1278, %v5563, 0
      %v5925 = vsel %vm1278, %v5564, 0
      %5927 = vmatprep.subr.mxu0 0.0
      %5928 = vmatpush1.msra.mxu0 %v5880
      %5929 = vmatprep.subr.mxu0 0.0
      %5930 = vmatpush1.msra.mxu0 %v5882
      %5931 = vmatprep.subr.mxu0 0.0
      %5932 = vmatpush1.msra.mxu0 %v5884
      %5933 = vmatprep.subr.mxu0 0.0
      %5934 = vmatpush1.msra.mxu0 %v5886
      %5935 = vmatprep.subr.mxu0 0.0
      %5936 = vmatpush1.msra.mxu0 %v5888
      %5937 = vmatprep.subr.mxu0 0.0
      %5938 = vmatpush1.msra.mxu0 %v5890
      %5939 = vmatprep.subr.mxu0 0.0
      %5940 = vmatpush1.msra.mxu0 %v5892
      %5941 = vmatprep.subr.mxu0 0.0
      %5942 = vmatpush1.msra.mxu0 %v5894
      %5943 = vmatprep.subr.mxu0 0.0
      %5944 = vmatpush1.msra.mxu0 0.0
      %5945 = vmatprep.subr.mxu0 0.0
      %5946 = vmatpush1.msra.mxu0 0.0
      %5947 = vmatprep.subr.mxu0 0.0
      %5948 = vmatpush1.msra.mxu0 0.0
      %5949 = vmatprep.subr.mxu0 0.0
      %5950 = vmatpush1.msra.mxu0 0.0
      %5951 = vmatprep.subr.mxu0 0.0
      %5952 = vmatpush1.msra.mxu0 0.0
      %5953 = vmatprep.subr.mxu0 0.0
      %5954 = vmatpush1.msra.mxu0 0.0
      %5955 = vmatprep.subr.mxu0 0.0
      %5956 = vmatpush1.msra.mxu0 0.0
      %5957 = vmatprep.subr.mxu0 0.0
      %5958 = vmatpush1.msra.mxu0 0.0
      %5959 = vmatprep.subr.mxu0 0.0
      %5960 = vmatpush1.msra.mxu0 0.0
      %5961 = vmatprep.subr.mxu0 0.0
      %5962 = vmatpush1.msra.mxu0 0.0
      %5963 = vmatprep.subr.mxu0 0.0
      %5964 = vmatpush1.msra.mxu0 0.0
      %5965 = vmatprep.subr.mxu0 0.0
      %5966 = vmatpush1.msra.mxu0 0.0
      %5967 = vmatprep.subr.mxu0 0.0
      %5968 = vmatpush1.msra.mxu0 0.0
      %5969 = vmatprep.subr.mxu0 0.0
      %5970 = vmatpush1.msra.mxu0 0.0
      %5971 = vmatprep.subr.mxu0 0.0
      %5972 = vmatpush1.msra.mxu0 0.0
      %5973 = vmatprep.subr.mxu0 0.0
      %5974 = vmatpush1.msra.mxu0 0.0
      %5975 = vmatprep.subr.mxu0 0.0
      %5976 = vmatpush1.msra.mxu0 0.0
      %5977 = vmatprep.subr.mxu0 0.0
      %5978 = vmatpush1.msra.mxu0 0.0
      %5979 = vmatprep.subr.mxu0 0.0
      %5980 = vmatpush1.msra.mxu0 0.0
      %5981 = vmatprep.subr.mxu0 0.0
      %5982 = vmatpush1.msra.mxu0 0.0
      %5983 = vmatprep.subr.mxu0 0.0
      %5984 = vmatpush1.msra.mxu0 0.0
      %5985 = vmatprep.subr.mxu0 0.0
      %5986 = vmatpush1.msra.mxu0 0.0
      %5987 = vmatprep.subr.mxu0 0.0
      %5988 = vmatpush1.msra.mxu0 0.0
      %5989 = vmatprep.subr.mxu0 0.0
      %5990 = vmatpush1.msra.mxu0 0.0
      %5991 = vmatprep.mubr.f32.mxu0 0.0
      %5992 = vmatmul.mubr.f32.gmra.mrb[0].mxu0 %v5904
      %v5993 = vpop.f32.mrb[0].mxu0
      %v5994 = vadd.f32 0.0, %v5993
      %v5995 = vpop.f32.mrb[0].mxu0
      %5996 = vmatprep.mubr.f32.mxu0 0.0
      %5997 = vmatmul.mubr.f32.gmra.mrb[0].mxu0 %v5907
      %v5998 = vpop.f32.mrb[0].mxu0
      %v5999 = vadd.f32 0.0, %v5998
      %v6000 = vpop.f32.mrb[0].mxu0
      %6001 = vmatprep.mubr.f32.mxu0 0.0
      %6002 = vmatmul.mubr.f32.gmra.mrb[0].mxu0 %v5910
      %v6003 = vpop.f32.mrb[0].mxu0
      %v6004 = vadd.f32 0.0, %v6003
      %v6005 = vpop.f32.mrb[0].mxu0
      %6006 = vmatprep.mubr.f32.mxu0 0.0
      %6007 = vmatmul.mubr.f32.gmra.mrb[0].mxu0 %v5913
      %v6008 = vpop.f32.mrb[0].mxu0
      %v6009 = vadd.f32 0.0, %v6008
      %v6010 = vpop.f32.mrb[0].mxu0
      %6011 = vmatprep.mubr.f32.mxu0 0.0
      %6012 = vmatmul.mubr.f32.gmra.mrb[0].mxu0 %v5916
      %v6013 = vpop.f32.mrb[0].mxu0
      %v6014 = vadd.f32 0.0, %v6013
      %v6015 = vpop.f32.mrb[0].mxu0
      %6016 = vmatprep.mubr.f32.mxu0 0.0
      %6017 = vmatmul.mubr.f32.gmra.mrb[0].mxu0 %v5919
      %v6018 = vpop.f32.mrb[0].mxu0
      %v6019 = vadd.f32 0.0, %v6018
      %v6020 = vpop.f32.mrb[0].mxu0
      %6021 = vmatprep.mubr.f32.mxu0 0.0
      %6022 = vmatmul.mubr.f32.gmra.mrb[0].mxu0 %v5922
      %v6023 = vpop.f32.mrb[0].mxu0
      %v6024 = vadd.f32 0.0, %v6023
      %v6025 = vpop.f32.mrb[0].mxu0
      %6026 = vmatprep.mubr.f32.mxu0 0.0
      %6027 = vmatmul.mubr.f32.gmra.mrb[0].mxu0 %v5925
      %v6028 = vpop.f32.mrb[0].mxu0
      %v6029 = vadd.f32 0.0, %v6028
      %v6030 = vpop.f32.mrb[0].mxu0
      %6031 = vdwg.mxu0
      %6032 = vrot.lane.b32.xlu0 %v587, 48
      %v6033 = vpop.permute.xlu0 %6032
      %6034 = vrot.lane.b32.xlu0 %v592, 48
      %v6035 = vpop.permute.xlu0 %6034
      %6036 = vrot.lane.b32.xlu0 %v597, 48
      %v6037 = vpop.permute.xlu0 %6036
      %6038 = vrot.lane.b32.xlu0 %v602, 48
      %v6039 = vpop.permute.xlu0 %6038
      %6040 = vrot.lane.b32.xlu0 %v607, 48
      %v6041 = vpop.permute.xlu0 %6040
      %6042 = vrot.lane.b32.xlu0 %v612, 48
      %v6043 = vpop.permute.xlu0 %6042
      %6044 = vrot.lane.b32.xlu0 %v617, 48
      %v6045 = vpop.permute.xlu0 %6044
      %6046 = vrot.lane.b32.xlu0 %v622, 48
      %v6047 = vpop.permute.xlu0 %6046
      %v6057 = vsel %vm1278, %v5565, 0
      %v6060 = vsel %vm1278, %v5566, 0
      %v6063 = vsel %vm1278, %v5567, 0
      %v6066 = vsel %vm1278, %v5568, 0
      %v6069 = vsel %vm1278, %v5569, 0
      %v6072 = vsel %vm1278, %v5570, 0
      %v6075 = vsel %vm1278, %v5571, 0
      %v6078 = vsel %vm1278, %v5572, 0
      %6080 = vmatprep.subr.mxu0 0.0
      %6081 = vmatpush1.msra.mxu0 %v6033
      %6082 = vmatprep.subr.mxu0 0.0
      %6083 = vmatpush1.msra.mxu0 %v6035
      %6084 = vmatprep.subr.mxu0 0.0
      %6085 = vmatpush1.msra.mxu0 %v6037
      %6086 = vmatprep.subr.mxu0 0.0
      %6087 = vmatpush1.msra.mxu0 %v6039
      %6088 = vmatprep.subr.mxu0 0.0
      %6089 = vmatpush1.msra.mxu0 %v6041
      %6090 = vmatprep.subr.mxu0 0.0
      %6091 = vmatpush1.msra.mxu0 %v6043
      %6092 = vmatprep.subr.mxu0 0.0
      %6093 = vmatpush1.msra.mxu0 %v6045
      %6094 = vmatprep.subr.mxu0 0.0
      %6095 = vmatpush1.msra.mxu0 %v6047
      %6096 = vmatprep.subr.mxu0 0.0
      %6097 = vmatpush1.msra.mxu0 0.0
      %6098 = vmatprep.subr.mxu0 0.0
      %6099 = vmatpush1.msra.mxu0 0.0
      %6100 = vmatprep.subr.mxu0 0.0
      %6101 = vmatpush1.msra.mxu0 0.0
      %6102 = vmatprep.subr.mxu0 0.0
      %6103 = vmatpush1.msra.mxu0 0.0
      %6104 = vmatprep.subr.mxu0 0.0
      %6105 = vmatpush1.msra.mxu0 0.0
      %6106 = vmatprep.subr.mxu0 0.0
      %6107 = vmatpush1.msra.mxu0 0.0
      %6108 = vmatprep.subr.mxu0 0.0
      %6109 = vmatpush1.msra.mxu0 0.0
      %6110 = vmatprep.subr.mxu0 0.0
      %6111 = vmatpush1.msra.mxu0 0.0
      %6112 = vmatprep.subr.mxu0 0.0
      %6113 = vmatpush1.msra.mxu0 0.0
      %6114 = vmatprep.subr.mxu0 0.0
      %6115 = vmatpush1.msra.mxu0 0.0
      %6116 = vmatprep.subr.mxu0 0.0
      %6117 = vmatpush1.msra.mxu0 0.0
      %6118 = vmatprep.subr.mxu0 0.0
      %6119 = vmatpush1.msra.mxu0 0.0
      %6120 = vmatprep.subr.mxu0 0.0
      %6121 = vmatpush1.msra.mxu0 0.0
      %6122 = vmatprep.subr.mxu0 0.0
      %6123 = vmatpush1.msra.mxu0 0.0
      %6124 = vmatprep.subr.mxu0 0.0
      %6125 = vmatpush1.msra.mxu0 0.0
      %6126 = vmatprep.subr.mxu0 0.0
      %6127 = vmatpush1.msra.mxu0 0.0
      %6128 = vmatprep.subr.mxu0 0.0
      %6129 = vmatpush1.msra.mxu0 0.0
      %6130 = vmatprep.subr.mxu0 0.0
      %6131 = vmatpush1.msra.mxu0 0.0
      %6132 = vmatprep.subr.mxu0 0.0
      %6133 = vmatpush1.msra.mxu0 0.0
      %6134 = vmatprep.subr.mxu0 0.0
      %6135 = vmatpush1.msra.mxu0 0.0
      %6136 = vmatprep.subr.mxu0 0.0
      %6137 = vmatpush1.msra.mxu0 0.0
      %6138 = vmatprep.subr.mxu0 0.0
      %6139 = vmatpush1.msra.mxu0 0.0
      %6140 = vmatprep.subr.mxu0 0.0
      %6141 = vmatpush1.msra.mxu0 0.0
      %6142 = vmatprep.subr.mxu0 0.0
      %6143 = vmatpush1.msra.mxu0 0.0
      %6144 = vmatprep.mubr.f32.mxu0 0.0
      %6145 = vmatmul.mubr.f32.gmra.mrb[0].mxu0 %v6057
      %v6146 = vpop.f32.mrb[0].mxu0
      %v6147 = vadd.f32 0.0, %v6146
      %v6148 = vpop.f32.mrb[0].mxu0
      %6149 = vmatprep.mubr.f32.mxu0 0.0
      %6150 = vmatmul.mubr.f32.gmra.mrb[0].mxu0 %v6060
      %v6151 = vpop.f32.mrb[0].mxu0
      %v6152 = vadd.f32 0.0, %v6151
      %v6153 = vpop.f32.mrb[0].mxu0
      %6154 = vmatprep.mubr.f32.mxu0 0.0
      %6155 = vmatmul.mubr.f32.gmra.mrb[0].mxu0 %v6063
      %v6156 = vpop.f32.mrb[0].mxu0
      %v6157 = vadd.f32 0.0, %v6156
      %v6158 = vpop.f32.mrb[0].mxu0
      %6159 = vmatprep.mubr.f32.mxu0 0.0
      %6160 = vmatmul.mubr.f32.gmra.mrb[0].mxu0 %v6066
      %v6161 = vpop.f32.mrb[0].mxu0
      %v6162 = vadd.f32 0.0, %v6161
      %v6163 = vpop.f32.mrb[0].mxu0
      %6164 = vmatprep.mubr.f32.mxu0 0.0
      %6165 = vmatmul.mubr.f32.gmra.mrb[0].mxu0 %v6069
      %v6166 = vpop.f32.mrb[0].mxu0
      %v6167 = vadd.f32 0.0, %v6166
      %v6168 = vpop.f32.mrb[0].mxu0
      %6169 = vmatprep.mubr.f32.mxu0 0.0
      %6170 = vmatmul.mubr.f32.gmra.mrb[0].mxu0 %v6072
      %v6171 = vpop.f32.mrb[0].mxu0
      %v6172 = vadd.f32 0.0, %v6171
      %v6173 = vpop.f32.mrb[0].mxu0
      %6174 = vmatprep.mubr.f32.mxu0 0.0
      %6175 = vmatmul.mubr.f32.gmra.mrb[0].mxu0 %v6075
      %v6176 = vpop.f32.mrb[0].mxu0
      %v6177 = vadd.f32 0.0, %v6176
      %v6178 = vpop.f32.mrb[0].mxu0
      %6179 = vmatprep.mubr.f32.mxu0 0.0
      %6180 = vmatmul.mubr.f32.gmra.mrb[0].mxu0 %v6078
      %v6181 = vpop.f32.mrb[0].mxu0
      %v6182 = vadd.f32 0.0, %v6181
      %v6183 = vpop.f32.mrb[0].mxu0
      %6184 = vdwg.mxu0
      %v6185 = vld [vmem:[%s4 + $0x10] sm:$0xff]
      %v6187 = vsel %vm657, %v5688, 0
      %v6190 = vsel %vm657, %v5693, 0
      %v6193 = vsel %vm657, %v5698, 0
      %v6196 = vsel %vm657, %v5703, 0
      %v6199 = vsel %vm657, %v5708, 0
      %v6202 = vsel %vm657, %v5713, 0
      %v6205 = vsel %vm657, %v5718, 0
      %v6208 = vsel %vm657, %v5723, 0
      %v6211 = vsel %vm657, %v5841, 0
      %v6214 = vsel %vm657, %v5846, 0
      %v6217 = vsel %vm657, %v5851, 0
      %v6220 = vsel %vm657, %v5856, 0
      %v6223 = vsel %vm657, %v5861, 0
      %v6226 = vsel %vm657, %v5866, 0
      %v6229 = vsel %vm657, %v5871, 0
      %v6232 = vsel %vm657, %v5876, 0
      %v6235 = vsel %vm657, %v5994, 0
      %v6238 = vsel %vm657, %v5999, 0
      %v6241 = vsel %vm657, %v6004, 0
      %v6244 = vsel %vm657, %v6009, 0
      %v6247 = vsel %vm657, %v6014, 0
      %v6250 = vsel %vm657, %v6019, 0
      %v6253 = vsel %vm657, %v6024, 0
      %v6256 = vsel %vm657, %v6029, 0
      %v6259 = vsel %vm657, %v6147, 0
      %v6262 = vsel %vm657, %v6152, 0
      %v6265 = vsel %vm657, %v6157, 0
      %v6268 = vsel %vm657, %v6162, 0
      %v6271 = vsel %vm657, %v6167, 0
      %v6274 = vsel %vm657, %v6172, 0
      %v6277 = vsel %vm657, %v6177, 0
      %v6280 = vsel %vm657, %v6182, 0
      %6282 = vmatprep.subr.mxu0 0.0
      %6283 = vmatpush1.msra.mxu0 %v6185
      %6284 = vmatprep.subr.mxu0 0.0
      %6285 = vmatpush1.msra.mxu0 0.0
      %6286 = vmatprep.subr.mxu0 0.0
      %6287 = vmatpush1.msra.mxu0 0.0
      %6288 = vmatprep.subr.mxu0 0.0
      %6289 = vmatpush1.msra.mxu0 0.0
      %6290 = vmatprep.subr.mxu0 0.0
      %6291 = vmatpush1.msra.mxu0 0.0
      %6292 = vmatprep.subr.mxu0 0.0
      %6293 = vmatpush1.msra.mxu0 0.0
      %6294 = vmatprep.subr.mxu0 0.0
      %6295 = vmatpush1.msra.mxu0 0.0
      %6296 = vmatprep.subr.mxu0 0.0
      %6297 = vmatpush1.msra.mxu0 0.0
      %6298 = vmatprep.subr.mxu0 0.0
      %6299 = vmatpush1.msra.mxu0 0.0
      %6300 = vmatprep.subr.mxu0 0.0
      %6301 = vmatpush1.msra.mxu0 0.0
      %6302 = vmatprep.subr.mxu0 0.0
      %6303 = vmatpush1.msra.mxu0 0.0
      %6304 = vmatprep.subr.mxu0 0.0
      %6305 = vmatpush1.msra.mxu0 0.0
      %6306 = vmatprep.subr.mxu0 0.0
      %6307 = vmatpush1.msra.mxu0 0.0
      %6308 = vmatprep.subr.mxu0 0.0
      %6309 = vmatpush1.msra.mxu0 0.0
      %6310 = vmatprep.subr.mxu0 0.0
      %6311 = vmatpush1.msra.mxu0 0.0
      %6312 = vmatprep.subr.mxu0 0.0
      %6313 = vmatpush1.msra.mxu0 0.0
      %6314 = vmatprep.subr.mxu0 0.0
      %6315 = vmatpush1.msra.mxu0 0.0
      %6316 = vmatprep.subr.mxu0 0.0
      %6317 = vmatpush1.msra.mxu0 0.0
      %6318 = vmatprep.subr.mxu0 0.0
      %6319 = vmatpush1.msra.mxu0 0.0
      %6320 = vmatprep.subr.mxu0 0.0
      %6321 = vmatpush1.msra.mxu0 0.0
      %6322 = vmatprep.subr.mxu0 0.0
      %6323 = vmatpush1.msra.mxu0 0.0
      %6324 = vmatprep.subr.mxu0 0.0
      %6325 = vmatpush1.msra.mxu0 0.0
      %6326 = vmatprep.subr.mxu0 0.0
      %6327 = vmatpush1.msra.mxu0 0.0
      %6328 = vmatprep.subr.mxu0 0.0
      %6329 = vmatpush1.msra.mxu0 0.0
      %6330 = vmatprep.subr.mxu0 0.0
      %6331 = vmatpush1.msra.mxu0 0.0
      %6332 = vmatprep.subr.mxu0 0.0
      %6333 = vmatpush1.msra.mxu0 0.0
      %6334 = vmatprep.subr.mxu0 0.0
      %6335 = vmatpush1.msra.mxu0 0.0
      %6336 = vmatprep.subr.mxu0 0.0
      %6337 = vmatpush1.msra.mxu0 0.0
      %6338 = vmatprep.subr.mxu0 0.0
      %6339 = vmatpush1.msra.mxu0 0.0
      %6340 = vmatprep.subr.mxu0 0.0
      %6341 = vmatpush1.msra.mxu0 0.0
      %6342 = vmatprep.subr.mxu0 0.0
      %6343 = vmatpush1.msra.mxu0 0.0
      %6344 = vmatprep.subr.mxu0 0.0
      %6345 = vmatpush1.msra.mxu0 0.0
      %6346 = vmatprep.mubr.f32.mxu0 0.0
      %6347 = vmatmul.mubr.f32.gmra.mrb[0].mxu0 %v6187
      %v6348 = vpop.f32.mrb[0].mxu0
      %v6349 = vadd.f32 0.0, %v6348
      %v6350 = vpop.f32.mrb[0].mxu0
      %6351 = vmatprep.mubr.f32.mxu0 0.0
      %6352 = vmatmul.mubr.f32.gmra.mrb[0].mxu0 %v6190
      %v6353 = vpop.f32.mrb[0].mxu0
      %v6354 = vadd.f32 0.0, %v6353
      %v6355 = vpop.f32.mrb[0].mxu0
      %6356 = vmatprep.mubr.f32.mxu0 0.0
      %6357 = vmatmul.mubr.f32.gmra.mrb[0].mxu0 %v6193
      %v6358 = vpop.f32.mrb[0].mxu0
      %v6359 = vadd.f32 0.0, %v6358
      %v6360 = vpop.f32.mrb[0].mxu0
      %6361 = vmatprep.mubr.f32.mxu0 0.0
      %6362 = vmatmul.mubr.f32.gmra.mrb[0].mxu0 %v6196
      %v6363 = vpop.f32.mrb[0].mxu0
      %v6364 = vadd.f32 0.0, %v6363
      %v6365 = vpop.f32.mrb[0].mxu0
      %6366 = vmatprep.mubr.f32.mxu0 0.0
      %6367 = vmatmul.mubr.f32.gmra.mrb[0].mxu0 %v6199
      %v6368 = vpop.f32.mrb[0].mxu0
      %v6369 = vadd.f32 0.0, %v6368
      %v6370 = vpop.f32.mrb[0].mxu0
      %6371 = vmatprep.mubr.f32.mxu0 0.0
      %6372 = vmatmul.mubr.f32.gmra.mrb[0].mxu0 %v6202
      %v6373 = vpop.f32.mrb[0].mxu0
      %v6374 = vadd.f32 0.0, %v6373
      %v6375 = vpop.f32.mrb[0].mxu0
      %6376 = vmatprep.mubr.f32.mxu0 0.0
      %6377 = vmatmul.mubr.f32.gmra.mrb[0].mxu0 %v6205
      %v6378 = vpop.f32.mrb[0].mxu0
      %v6379 = vadd.f32 0.0, %v6378
      %v6380 = vpop.f32.mrb[0].mxu0
      %6381 = vmatprep.mubr.f32.mxu0 0.0
      %6382 = vmatmul.mubr.f32.gmra.mrb[0].mxu0 %v6208
      %v6383 = vpop.f32.mrb[0].mxu0
      %v6384 = vadd.f32 0.0, %v6383
      %v6385 = vpop.f32.mrb[0].mxu0
      %6386 = vmatprep.mubr.f32.mxu0 0.0
      %6387 = vmatmul.mubr.f32.gmra.mrb[0].mxu0 %v6211
      %v6388 = vpop.f32.mrb[0].mxu0
      %v6389 = vadd.f32 0.0, %v6388
      %v6390 = vpop.f32.mrb[0].mxu0
      %6391 = vmatprep.mubr.f32.mxu0 0.0
      %6392 = vmatmul.mubr.f32.gmra.mrb[0].mxu0 %v6214
      %v6393 = vpop.f32.mrb[0].mxu0
      %v6394 = vadd.f32 0.0, %v6393
      %v6395 = vpop.f32.mrb[0].mxu0
      %6396 = vmatprep.mubr.f32.mxu0 0.0
      %6397 = vmatmul.mubr.f32.gmra.mrb[0].mxu0 %v6217
      %v6398 = vpop.f32.mrb[0].mxu0
      %v6399 = vadd.f32 0.0, %v6398
      %v6400 = vpop.f32.mrb[0].mxu0
      %6401 = vmatprep.mubr.f32.mxu0 0.0
      %6402 = vmatmul.mubr.f32.gmra.mrb[0].mxu0 %v6220
      %v6403 = vpop.f32.mrb[0].mxu0
      %v6404 = vadd.f32 0.0, %v6403
      %v6405 = vpop.f32.mrb[0].mxu0
      %6406 = vmatprep.mubr.f32.mxu0 0.0
      %6407 = vmatmul.mubr.f32.gmra.mrb[0].mxu0 %v6223
      %v6408 = vpop.f32.mrb[0].mxu0
      %v6409 = vadd.f32 0.0, %v6408
      %v6410 = vpop.f32.mrb[0].mxu0
      %6411 = vmatprep.mubr.f32.mxu0 0.0
      %6412 = vmatmul.mubr.f32.gmra.mrb[0].mxu0 %v6226
      %v6413 = vpop.f32.mrb[0].mxu0
      %v6414 = vadd.f32 0.0, %v6413
      %v6415 = vpop.f32.mrb[0].mxu0
      %6416 = vmatprep.mubr.f32.mxu0 0.0
      %6417 = vmatmul.mubr.f32.gmra.mrb[0].mxu0 %v6229
      %v6418 = vpop.f32.mrb[0].mxu0
      %v6419 = vadd.f32 0.0, %v6418
      %v6420 = vpop.f32.mrb[0].mxu0
      %6421 = vmatprep.mubr.f32.mxu0 0.0
      %6422 = vmatmul.mubr.f32.gmra.mrb[0].mxu0 %v6232
      %v6423 = vpop.f32.mrb[0].mxu0
      %v6424 = vadd.f32 0.0, %v6423
      %v6425 = vpop.f32.mrb[0].mxu0
      %6426 = vmatprep.mubr.f32.mxu0 0.0
      %6427 = vmatmul.mubr.f32.gmra.mrb[0].mxu0 %v6235
      %v6428 = vpop.f32.mrb[0].mxu0
      %v6429 = vadd.f32 0.0, %v6428
      %v6430 = vpop.f32.mrb[0].mxu0
      %6431 = vmatprep.mubr.f32.mxu0 0.0
      %6432 = vmatmul.mubr.f32.gmra.mrb[0].mxu0 %v6238
      %v6433 = vpop.f32.mrb[0].mxu0
      %v6434 = vadd.f32 0.0, %v6433
      %v6435 = vpop.f32.mrb[0].mxu0
      %6436 = vmatprep.mubr.f32.mxu0 0.0
      %6437 = vmatmul.mubr.f32.gmra.mrb[0].mxu0 %v6241
      %v6438 = vpop.f32.mrb[0].mxu0
      %v6439 = vadd.f32 0.0, %v6438
      %v6440 = vpop.f32.mrb[0].mxu0
      %6441 = vmatprep.mubr.f32.mxu0 0.0
      %6442 = vmatmul.mubr.f32.gmra.mrb[0].mxu0 %v6244
      %v6443 = vpop.f32.mrb[0].mxu0
      %v6444 = vadd.f32 0.0, %v6443
      %v6445 = vpop.f32.mrb[0].mxu0
      %6446 = vmatprep.mubr.f32.mxu0 0.0
      %6447 = vmatmul.mubr.f32.gmra.mrb[0].mxu0 %v6247
      %v6448 = vpop.f32.mrb[0].mxu0
      %v6449 = vadd.f32 0.0, %v6448
      %v6450 = vpop.f32.mrb[0].mxu0
      %6451 = vmatprep.mubr.f32.mxu0 0.0
      %6452 = vmatmul.mubr.f32.gmra.mrb[0].mxu0 %v6250
      %v6453 = vpop.f32.mrb[0].mxu0
      %v6454 = vadd.f32 0.0, %v6453
      %v6455 = vpop.f32.mrb[0].mxu0
      %6456 = vmatprep.mubr.f32.mxu0 0.0
      %6457 = vmatmul.mubr.f32.gmra.mrb[0].mxu0 %v6253
      %v6458 = vpop.f32.mrb[0].mxu0
      %v6459 = vadd.f32 0.0, %v6458
      %v6460 = vpop.f32.mrb[0].mxu0
      %6461 = vmatprep.mubr.f32.mxu0 0.0
      %6462 = vmatmul.mubr.f32.gmra.mrb[0].mxu0 %v6256
      %v6463 = vpop.f32.mrb[0].mxu0
      %v6464 = vadd.f32 0.0, %v6463
      %v6465 = vpop.f32.mrb[0].mxu0
      %6466 = vmatprep.mubr.f32.mxu0 0.0
      %6467 = vmatmul.mubr.f32.gmra.mrb[0].mxu0 %v6259
      %v6468 = vpop.f32.mrb[0].mxu0
      %v6469 = vadd.f32 0.0, %v6468
      %v6470 = vpop.f32.mrb[0].mxu0
      %6471 = vmatprep.mubr.f32.mxu0 0.0
      %6472 = vmatmul.mubr.f32.gmra.mrb[0].mxu0 %v6262
      %v6473 = vpop.f32.mrb[0].mxu0
      %v6474 = vadd.f32 0.0, %v6473
      %v6475 = vpop.f32.mrb[0].mxu0
      %6476 = vmatprep.mubr.f32.mxu0 0.0
      %6477 = vmatmul.mubr.f32.gmra.mrb[0].mxu0 %v6265
      %v6478 = vpop.f32.mrb[0].mxu0
      %v6479 = vadd.f32 0.0, %v6478
      %v6480 = vpop.f32.mrb[0].mxu0
      %6481 = vmatprep.mubr.f32.mxu0 0.0
      %6482 = vmatmul.mubr.f32.gmra.mrb[0].mxu0 %v6268
      %v6483 = vpop.f32.mrb[0].mxu0
      %v6484 = vadd.f32 0.0, %v6483
      %v6485 = vpop.f32.mrb[0].mxu0
      %6486 = vmatprep.mubr.f32.mxu0 0.0
      %6487 = vmatmul.mubr.f32.gmra.mrb[0].mxu0 %v6271
      %v6488 = vpop.f32.mrb[0].mxu0
      %v6489 = vadd.f32 0.0, %v6488
      %v6490 = vpop.f32.mrb[0].mxu0
      %6491 = vmatprep.mubr.f32.mxu0 0.0
      %6492 = vmatmul.mubr.f32.gmra.mrb[0].mxu0 %v6274
      %v6493 = vpop.f32.mrb[0].mxu0
      %v6494 = vadd.f32 0.0, %v6493
      %v6495 = vpop.f32.mrb[0].mxu0
      %6496 = vmatprep.mubr.f32.mxu0 0.0
      %6497 = vmatmul.mubr.f32.gmra.mrb[0].mxu0 %v6277
      %v6498 = vpop.f32.mrb[0].mxu0
      %v6499 = vadd.f32 0.0, %v6498
      %v6500 = vpop.f32.mrb[0].mxu0
      %6501 = vmatprep.mubr.f32.mxu0 0.0
      %6502 = vmatmul.mubr.f32.gmra.mrb[0].mxu0 %v6280
      %v6503 = vpop.f32.mrb[0].mxu0
      %v6504 = vadd.f32 0.0, %v6503
      %v6505 = vpop.f32.mrb[0].mxu0
      %6506 = vdwg.mxu0
      %v6507 = vadd.f32 %v4378, %v6349
      %v6508 = vadd.f32 %v4383, %v6354
      %v6509 = vadd.f32 %v4388, %v6359
      %v6510 = vadd.f32 %v4393, %v6364
      %v6511 = vadd.f32 %v4398, %v6369
      %v6512 = vadd.f32 %v4403, %v6374
      %v6513 = vadd.f32 %v4408, %v6379
      %v6514 = vadd.f32 %v4413, %v6384
      %v6515 = vadd.f32 %v4418, %v6389
      %v6516 = vadd.f32 %v4423, %v6394
      %v6517 = vadd.f32 %v4428, %v6399
      %v6518 = vadd.f32 %v4433, %v6404
      %v6519 = vadd.f32 %v4438, %v6409
      %v6520 = vadd.f32 %v4443, %v6414
      %v6521 = vadd.f32 %v4448, %v6419
      %v6522 = vadd.f32 %v4453, %v6424
      %v6523 = vadd.f32 %v4458, %v6429
      %v6524 = vadd.f32 %v4463, %v6434
      %v6525 = vadd.f32 %v4468, %v6439
      %v6526 = vadd.f32 %v4473, %v6444
      %v6527 = vadd.f32 %v4478, %v6449
      %v6528 = vadd.f32 %v4483, %v6454
      %v6529 = vadd.f32 %v4488, %v6459
      %v6530 = vadd.f32 %v4493, %v6464
      %v6531 = vadd.f32 %v4498, %v6469
      %v6532 = vadd.f32 %v4503, %v6474
      %v6533 = vadd.f32 %v4508, %v6479
      %v6534 = vadd.f32 %v4513, %v6484
      %v6535 = vadd.f32 %v4518, %v6489
      %v6536 = vadd.f32 %v4523, %v6494
      %v6537 = vadd.f32 %v4528, %v6499
      %v6538 = vadd.f32 %v4533, %v6504
      %s6539 = scalar_lea.vmem %s3, 192
      %v6540 = vld [vmem:[%s6539] sm:$0xff]
      %v6541 = vld [vmem:[%s6539 + $0x8] sm:$0xff]
      %v6542 = vld [vmem:[%s6539 + $0x10] sm:$0xff]
      %v6543 = vld [vmem:[%s6539 + $0x18] sm:$0xff]
      %v6544 = vld [vmem:[%s6539 + $0x20] sm:$0xff]
      %v6545 = vld [vmem:[%s6539 + $0x28] sm:$0xff]
      %v6546 = vld [vmem:[%s6539 + $0x30] sm:$0xff]
      %v6547 = vld [vmem:[%s6539 + $0x38] sm:$0xff]
      %6548 = vrot.lane.b32.xlu0 %v467, 104
      %v6549 = vpop.permute.xlu0 %6548
      %6550 = vrot.lane.b32.xlu0 %v472, 104
      %v6551 = vpop.permute.xlu0 %6550
      %6552 = vrot.lane.b32.xlu0 %v477, 104
      %v6553 = vpop.permute.xlu0 %6552
      %6554 = vrot.lane.b32.xlu0 %v482, 104
      %v6555 = vpop.permute.xlu0 %6554
      %6556 = vrot.lane.b32.xlu0 %v487, 104
      %v6557 = vpop.permute.xlu0 %6556
      %6558 = vrot.lane.b32.xlu0 %v492, 104
      %v6559 = vpop.permute.xlu0 %6558
      %6560 = vrot.lane.b32.xlu0 %v497, 104
      %v6561 = vpop.permute.xlu0 %6560
      %6562 = vrot.lane.b32.xlu0 %v502, 104
      %v6563 = vpop.permute.xlu0 %6562
      %6564 = vrot.lane.b32.xlu0 %v467, 72
      %v6565 = vpop.permute.xlu0 %6564
      %6566 = vrot.lane.b32.xlu0 %v472, 72
      %v6567 = vpop.permute.xlu0 %6566
      %6568 = vrot.lane.b32.xlu0 %v477, 72
      %v6569 = vpop.permute.xlu0 %6568
      %6570 = vrot.lane.b32.xlu0 %v482, 72
      %v6571 = vpop.permute.xlu0 %6570
      %6572 = vrot.lane.b32.xlu0 %v487, 72
      %v6573 = vpop.permute.xlu0 %6572
      %6574 = vrot.lane.b32.xlu0 %v492, 72
      %v6575 = vpop.permute.xlu0 %6574
      %6576 = vrot.lane.b32.xlu0 %v497, 72
      %v6577 = vpop.permute.xlu0 %6576
      %6578 = vrot.lane.b32.xlu0 %v502, 72
      %v6579 = vpop.permute.xlu0 %6578
      %v6580 = vsel %vm657, %v6549, 0
      %v6582 = vsel %vm657, %v6551, 0
      %v6584 = vsel %vm657, %v6553, 0
      %v6586 = vsel %vm657, %v6555, 0
      %v6588 = vsel %vm657, %v6557, 0
      %v6590 = vsel %vm657, %v6559, 0
      %v6592 = vsel %vm657, %v6561, 0
      %v6594 = vsel %vm657, %v6563, 0
      %v6596 = vsel %vm657, %v6565, 0
      %v6598 = vsel %vm657, %v6567, 0
      %v6600 = vsel %vm657, %v6569, 0
      %v6602 = vsel %vm657, %v6571, 0
      %v6604 = vsel %vm657, %v6573, 0
      %v6606 = vsel %vm657, %v6575, 0
      %v6608 = vsel %vm657, %v6577, 0
      %v6610 = vsel %vm657, %v6579, 0
      %6612 = vmatprep.subr.mxu0 0.0
      %6613 = vmatpush1.xpose.msra.mxu0 %v6596
      %6614 = vmatprep.subr.mxu0 0.0
      %6615 = vmatpush1.xpose.msra.mxu0 %v6598
      %6616 = vmatprep.subr.mxu0 0.0
      %6617 = vmatpush1.xpose.msra.mxu0 %v6600
      %6618 = vmatprep.subr.mxu0 0.0
      %6619 = vmatpush1.xpose.msra.mxu0 %v6602
      %6620 = vmatprep.subr.mxu0 0.0
      %6621 = vmatpush1.xpose.msra.mxu0 %v6604
      %6622 = vmatprep.subr.mxu0 0.0
      %6623 = vmatpush1.xpose.msra.mxu0 %v6606
      %6624 = vmatprep.subr.mxu0 0.0
      %6625 = vmatpush1.xpose.msra.mxu0 %v6608
      %6626 = vmatprep.subr.mxu0 0.0
      %6627 = vmatpush1.xpose.msra.mxu0 %v6610
      %6628 = vmatprep.subr.mxu0 0.0
      %6629 = vmatpush1.xpose.msra.mxu0 0.0
      %6630 = vmatprep.subr.mxu0 0.0
      %6631 = vmatpush1.xpose.msra.mxu0 0.0
      %6632 = vmatprep.subr.mxu0 0.0
      %6633 = vmatpush1.xpose.msra.mxu0 0.0
      %6634 = vmatprep.subr.mxu0 0.0
      %6635 = vmatpush1.xpose.msra.mxu0 0.0
      %6636 = vmatprep.subr.mxu0 0.0
      %6637 = vmatpush1.xpose.msra.mxu0 0.0
      %6638 = vmatprep.subr.mxu0 0.0
      %6639 = vmatpush1.xpose.msra.mxu0 0.0
      %6640 = vmatprep.subr.mxu0 0.0
      %6641 = vmatpush1.xpose.msra.mxu0 0.0
      %6642 = vmatprep.subr.mxu0 0.0
      %6643 = vmatpush1.xpose.msra.mxu0 0.0
      %6644 = vmatprep.subr.mxu0 0.0
      %6645 = vmatpush1.xpose.msra.mxu0 0.0
      %6646 = vmatprep.subr.mxu0 0.0
      %6647 = vmatpush1.xpose.msra.mxu0 0.0
      %6648 = vmatprep.subr.mxu0 0.0
      %6649 = vmatpush1.xpose.msra.mxu0 0.0
      %6650 = vmatprep.subr.mxu0 0.0
      %6651 = vmatpush1.xpose.msra.mxu0 0.0
      %6652 = vmatprep.subr.mxu0 0.0
      %6653 = vmatpush1.xpose.msra.mxu0 0.0
      %6654 = vmatprep.subr.mxu0 0.0
      %6655 = vmatpush1.xpose.msra.mxu0 0.0
      %6656 = vmatprep.subr.mxu0 0.0
      %6657 = vmatpush1.xpose.msra.mxu0 0.0
      %6658 = vmatprep.subr.mxu0 0.0
      %6659 = vmatpush1.xpose.msra.mxu0 0.0
      %6660 = vmatprep.subr.mxu0 0.0
      %6661 = vmatpush1.xpose.msra.mxu0 0.0
      %6662 = vmatprep.subr.mxu0 0.0
      %6663 = vmatpush1.xpose.msra.mxu0 0.0
      %6664 = vmatprep.subr.mxu0 0.0
      %6665 = vmatpush1.xpose.msra.mxu0 0.0
      %6666 = vmatprep.subr.mxu0 0.0
      %6667 = vmatpush1.xpose.msra.mxu0 0.0
      %6668 = vmatprep.subr.mxu0 0.0
      %6669 = vmatpush1.xpose.msra.mxu0 0.0
      %6670 = vmatprep.subr.mxu0 0.0
      %6671 = vmatpush1.xpose.msra.mxu0 0.0
      %6672 = vmatprep.subr.mxu0 0.0
      %6673 = vmatpush1.xpose.msra.mxu0 0.0
      %6674 = vmatprep.subr.mxu0 0.0
      %6675 = vmatpush1.xpose.msra.mxu0 0.0
      %6676 = vmatprep.mubr.f32.mxu0 0.0
      %6677 = vmatmul.mubr.f32.gmra.mrb[0].mxu0 %v6580
      %v6678 = vpop.f32.mrb[0].mxu0
      %v6679 = vadd.f32 %v6540, %v6678
      %v6680 = vpop.f32.mrb[0].mxu0
      %6681 = vmatprep.mubr.f32.mxu0 0.0
      %6682 = vmatmul.mubr.f32.gmra.mrb[0].mxu0 %v6582
      %v6683 = vpop.f32.mrb[0].mxu0
      %v6684 = vadd.f32 %v6541, %v6683
      %v6685 = vpop.f32.mrb[0].mxu0
      %6686 = vmatprep.mubr.f32.mxu0 0.0
      %6687 = vmatmul.mubr.f32.gmra.mrb[0].mxu0 %v6584
      %v6688 = vpop.f32.mrb[0].mxu0
      %v6689 = vadd.f32 %v6542, %v6688
      %v6690 = vpop.f32.mrb[0].mxu0
      %6691 = vmatprep.mubr.f32.mxu0 0.0
      %6692 = vmatmul.mubr.f32.gmra.mrb[0].mxu0 %v6586
      %v6693 = vpop.f32.mrb[0].mxu0
      %v6694 = vadd.f32 %v6543, %v6693
      %v6695 = vpop.f32.mrb[0].mxu0
      %6696 = vmatprep.mubr.f32.mxu0 0.0
      %6697 = vmatmul.mubr.f32.gmra.mrb[0].mxu0 %v6588
      %v6698 = vpop.f32.mrb[0].mxu0
      %v6699 = vadd.f32 %v6544, %v6698
      %v6700 = vpop.f32.mrb[0].mxu0
      %6701 = vmatprep.mubr.f32.mxu0 0.0
      %6702 = vmatmul.mubr.f32.gmra.mrb[0].mxu0 %v6590
      %v6703 = vpop.f32.mrb[0].mxu0
      %v6704 = vadd.f32 %v6545, %v6703
      %v6705 = vpop.f32.mrb[0].mxu0
      %6706 = vmatprep.mubr.f32.mxu0 0.0
      %6707 = vmatmul.mubr.f32.gmra.mrb[0].mxu0 %v6592
      %v6708 = vpop.f32.mrb[0].mxu0
      %v6709 = vadd.f32 %v6546, %v6708
      %v6710 = vpop.f32.mrb[0].mxu0
      %6711 = vmatprep.mubr.f32.mxu0 0.0
      %6712 = vmatmul.mubr.f32.gmra.mrb[0].mxu0 %v6594
      %v6713 = vpop.f32.mrb[0].mxu0
      %v6714 = vadd.f32 %v6547, %v6713
      %v6715 = vpop.f32.mrb[0].mxu0
      %6716 = vdwg.mxu0
      %6717 = vrot.lane.b32.xlu0 %v507, 104
      %v6718 = vpop.permute.xlu0 %6717
      %6719 = vrot.lane.b32.xlu0 %v512, 104
      %v6720 = vpop.permute.xlu0 %6719
      %6721 = vrot.lane.b32.xlu0 %v517, 104
      %v6722 = vpop.permute.xlu0 %6721
      %6723 = vrot.lane.b32.xlu0 %v522, 104
      %v6724 = vpop.permute.xlu0 %6723
      %6725 = vrot.lane.b32.xlu0 %v527, 104
      %v6726 = vpop.permute.xlu0 %6725
      %6727 = vrot.lane.b32.xlu0 %v532, 104
      %v6728 = vpop.permute.xlu0 %6727
      %6729 = vrot.lane.b32.xlu0 %v537, 104
      %v6730 = vpop.permute.xlu0 %6729
      %6731 = vrot.lane.b32.xlu0 %v542, 104
      %v6732 = vpop.permute.xlu0 %6731
      %6733 = vrot.lane.b32.xlu0 %v507, 72
      %v6734 = vpop.permute.xlu0 %6733
      %6735 = vrot.lane.b32.xlu0 %v512, 72
      %v6736 = vpop.permute.xlu0 %6735
      %6737 = vrot.lane.b32.xlu0 %v517, 72
      %v6738 = vpop.permute.xlu0 %6737
      %6739 = vrot.lane.b32.xlu0 %v522, 72
      %v6740 = vpop.permute.xlu0 %6739
      %6741 = vrot.lane.b32.xlu0 %v527, 72
      %v6742 = vpop.permute.xlu0 %6741
      %6743 = vrot.lane.b32.xlu0 %v532, 72
      %v6744 = vpop.permute.xlu0 %6743
      %6745 = vrot.lane.b32.xlu0 %v537, 72
      %v6746 = vpop.permute.xlu0 %6745
      %6747 = vrot.lane.b32.xlu0 %v542, 72
      %v6748 = vpop.permute.xlu0 %6747
      %v6749 = vsel %vm657, %v6718, 0
      %v6751 = vsel %vm657, %v6720, 0
      %v6753 = vsel %vm657, %v6722, 0
      %v6755 = vsel %vm657, %v6724, 0
      %v6757 = vsel %vm657, %v6726, 0
      %v6759 = vsel %vm657, %v6728, 0
      %v6761 = vsel %vm657, %v6730, 0
      %v6763 = vsel %vm657, %v6732, 0
      %v6765 = vsel %vm657, %v6734, 0
      %v6767 = vsel %vm657, %v6736, 0
      %v6769 = vsel %vm657, %v6738, 0
      %v6771 = vsel %vm657, %v6740, 0
      %v6773 = vsel %vm657, %v6742, 0
      %v6775 = vsel %vm657, %v6744, 0
      %v6777 = vsel %vm657, %v6746, 0
      %v6779 = vsel %vm657, %v6748, 0
      %6781 = vmatprep.subr.mxu0 0.0
      %6782 = vmatpush1.xpose.msra.mxu0 %v6765
      %6783 = vmatprep.subr.mxu0 0.0
      %6784 = vmatpush1.xpose.msra.mxu0 %v6767
      %6785 = vmatprep.subr.mxu0 0.0
      %6786 = vmatpush1.xpose.msra.mxu0 %v6769
      %6787 = vmatprep.subr.mxu0 0.0
      %6788 = vmatpush1.xpose.msra.mxu0 %v6771
      %6789 = vmatprep.subr.mxu0 0.0
      %6790 = vmatpush1.xpose.msra.mxu0 %v6773
      %6791 = vmatprep.subr.mxu0 0.0
      %6792 = vmatpush1.xpose.msra.mxu0 %v6775
      %6793 = vmatprep.subr.mxu0 0.0
      %6794 = vmatpush1.xpose.msra.mxu0 %v6777
      %6795 = vmatprep.subr.mxu0 0.0
      %6796 = vmatpush1.xpose.msra.mxu0 %v6779
      %6797 = vmatprep.subr.mxu0 0.0
      %6798 = vmatpush1.xpose.msra.mxu0 0.0
      %6799 = vmatprep.subr.mxu0 0.0
      %6800 = vmatpush1.xpose.msra.mxu0 0.0
      %6801 = vmatprep.subr.mxu0 0.0
      %6802 = vmatpush1.xpose.msra.mxu0 0.0
      %6803 = vmatprep.subr.mxu0 0.0
      %6804 = vmatpush1.xpose.msra.mxu0 0.0
      %6805 = vmatprep.subr.mxu0 0.0
      %6806 = vmatpush1.xpose.msra.mxu0 0.0
      %6807 = vmatprep.subr.mxu0 0.0
      %6808 = vmatpush1.xpose.msra.mxu0 0.0
      %6809 = vmatprep.subr.mxu0 0.0
      %6810 = vmatpush1.xpose.msra.mxu0 0.0
      %6811 = vmatprep.subr.mxu0 0.0
      %6812 = vmatpush1.xpose.msra.mxu0 0.0
      %6813 = vmatprep.subr.mxu0 0.0
      %6814 = vmatpush1.xpose.msra.mxu0 0.0
      %6815 = vmatprep.subr.mxu0 0.0
      %6816 = vmatpush1.xpose.msra.mxu0 0.0
      %6817 = vmatprep.subr.mxu0 0.0
      %6818 = vmatpush1.xpose.msra.mxu0 0.0
      %6819 = vmatprep.subr.mxu0 0.0
      %6820 = vmatpush1.xpose.msra.mxu0 0.0
      %6821 = vmatprep.subr.mxu0 0.0
      %6822 = vmatpush1.xpose.msra.mxu0 0.0
      %6823 = vmatprep.subr.mxu0 0.0
      %6824 = vmatpush1.xpose.msra.mxu0 0.0
      %6825 = vmatprep.subr.mxu0 0.0
      %6826 = vmatpush1.xpose.msra.mxu0 0.0
      %6827 = vmatprep.subr.mxu0 0.0
      %6828 = vmatpush1.xpose.msra.mxu0 0.0
      %6829 = vmatprep.subr.mxu0 0.0
      %6830 = vmatpush1.xpose.msra.mxu0 0.0
      %6831 = vmatprep.subr.mxu0 0.0
      %6832 = vmatpush1.xpose.msra.mxu0 0.0
      %6833 = vmatprep.subr.mxu0 0.0
      %6834 = vmatpush1.xpose.msra.mxu0 0.0
      %6835 = vmatprep.subr.mxu0 0.0
      %6836 = vmatpush1.xpose.msra.mxu0 0.0
      %6837 = vmatprep.subr.mxu0 0.0
      %6838 = vmatpush1.xpose.msra.mxu0 0.0
      %6839 = vmatprep.subr.mxu0 0.0
      %6840 = vmatpush1.xpose.msra.mxu0 0.0
      %6841 = vmatprep.subr.mxu0 0.0
      %6842 = vmatpush1.xpose.msra.mxu0 0.0
      %6843 = vmatprep.subr.mxu0 0.0
      %6844 = vmatpush1.xpose.msra.mxu0 0.0
      %6845 = vmatprep.mubr.f32.mxu0 0.0
      %6846 = vmatmul.mubr.f32.gmra.mrb[0].mxu0 %v6749
      %v6847 = vpop.f32.mrb[0].mxu0
      %v6848 = vadd.f32 %v6540, %v6847
      %v6849 = vpop.f32.mrb[0].mxu0
      %6850 = vmatprep.mubr.f32.mxu0 0.0
      %6851 = vmatmul.mubr.f32.gmra.mrb[0].mxu0 %v6751
      %v6852 = vpop.f32.mrb[0].mxu0
      %v6853 = vadd.f32 %v6541, %v6852
      %v6854 = vpop.f32.mrb[0].mxu0
      %6855 = vmatprep.mubr.f32.mxu0 0.0
      %6856 = vmatmul.mubr.f32.gmra.mrb[0].mxu0 %v6753
      %v6857 = vpop.f32.mrb[0].mxu0
      %v6858 = vadd.f32 %v6542, %v6857
      %v6859 = vpop.f32.mrb[0].mxu0
      %6860 = vmatprep.mubr.f32.mxu0 0.0
      %6861 = vmatmul.mubr.f32.gmra.mrb[0].mxu0 %v6755
      %v6862 = vpop.f32.mrb[0].mxu0
      %v6863 = vadd.f32 %v6543, %v6862
      %v6864 = vpop.f32.mrb[0].mxu0
      %6865 = vmatprep.mubr.f32.mxu0 0.0
      %6866 = vmatmul.mubr.f32.gmra.mrb[0].mxu0 %v6757
      %v6867 = vpop.f32.mrb[0].mxu0
      %v6868 = vadd.f32 %v6544, %v6867
      %v6869 = vpop.f32.mrb[0].mxu0
      %6870 = vmatprep.mubr.f32.mxu0 0.0
      %6871 = vmatmul.mubr.f32.gmra.mrb[0].mxu0 %v6759
      %v6872 = vpop.f32.mrb[0].mxu0
      %v6873 = vadd.f32 %v6545, %v6872
      %v6874 = vpop.f32.mrb[0].mxu0
      %6875 = vmatprep.mubr.f32.mxu0 0.0
      %6876 = vmatmul.mubr.f32.gmra.mrb[0].mxu0 %v6761
      %v6877 = vpop.f32.mrb[0].mxu0
      %v6878 = vadd.f32 %v6546, %v6877
      %v6879 = vpop.f32.mrb[0].mxu0
      %6880 = vmatprep.mubr.f32.mxu0 0.0
      %6881 = vmatmul.mubr.f32.gmra.mrb[0].mxu0 %v6763
      %v6882 = vpop.f32.mrb[0].mxu0
      %v6883 = vadd.f32 %v6547, %v6882
      %v6884 = vpop.f32.mrb[0].mxu0
      %6885 = vdwg.mxu0
      %6886 = vrot.lane.b32.xlu0 %v547, 104
      %v6887 = vpop.permute.xlu0 %6886
      %6888 = vrot.lane.b32.xlu0 %v552, 104
      %v6889 = vpop.permute.xlu0 %6888
      %6890 = vrot.lane.b32.xlu0 %v557, 104
      %v6891 = vpop.permute.xlu0 %6890
      %6892 = vrot.lane.b32.xlu0 %v562, 104
      %v6893 = vpop.permute.xlu0 %6892
      %6894 = vrot.lane.b32.xlu0 %v567, 104
      %v6895 = vpop.permute.xlu0 %6894
      %6896 = vrot.lane.b32.xlu0 %v572, 104
      %v6897 = vpop.permute.xlu0 %6896
      %6898 = vrot.lane.b32.xlu0 %v577, 104
      %v6899 = vpop.permute.xlu0 %6898
      %6900 = vrot.lane.b32.xlu0 %v582, 104
      %v6901 = vpop.permute.xlu0 %6900
      %6902 = vrot.lane.b32.xlu0 %v547, 72
      %v6903 = vpop.permute.xlu0 %6902
      %6904 = vrot.lane.b32.xlu0 %v552, 72
      %v6905 = vpop.permute.xlu0 %6904
      %6906 = vrot.lane.b32.xlu0 %v557, 72
      %v6907 = vpop.permute.xlu0 %6906
      %6908 = vrot.lane.b32.xlu0 %v562, 72
      %v6909 = vpop.permute.xlu0 %6908
      %6910 = vrot.lane.b32.xlu0 %v567, 72
      %v6911 = vpop.permute.xlu0 %6910
      %6912 = vrot.lane.b32.xlu0 %v572, 72
      %v6913 = vpop.permute.xlu0 %6912
      %6914 = vrot.lane.b32.xlu0 %v577, 72
      %v6915 = vpop.permute.xlu0 %6914
      %6916 = vrot.lane.b32.xlu0 %v582, 72
      %v6917 = vpop.permute.xlu0 %6916
      %v6918 = vsel %vm657, %v6887, 0
      %v6920 = vsel %vm657, %v6889, 0
      %v6922 = vsel %vm657, %v6891, 0
      %v6924 = vsel %vm657, %v6893, 0
      %v6926 = vsel %vm657, %v6895, 0
      %v6928 = vsel %vm657, %v6897, 0
      %v6930 = vsel %vm657, %v6899, 0
      %v6932 = vsel %vm657, %v6901, 0
      %v6934 = vsel %vm657, %v6903, 0
      %v6936 = vsel %vm657, %v6905, 0
      %v6938 = vsel %vm657, %v6907, 0
      %v6940 = vsel %vm657, %v6909, 0
      %v6942 = vsel %vm657, %v6911, 0
      %v6944 = vsel %vm657, %v6913, 0
      %v6946 = vsel %vm657, %v6915, 0
      %v6948 = vsel %vm657, %v6917, 0
      %6950 = vmatprep.subr.mxu0 0.0
      %6951 = vmatpush1.xpose.msra.mxu0 %v6934
      %6952 = vmatprep.subr.mxu0 0.0
      %6953 = vmatpush1.xpose.msra.mxu0 %v6936
      %6954 = vmatprep.subr.mxu0 0.0
      %6955 = vmatpush1.xpose.msra.mxu0 %v6938
      %6956 = vmatprep.subr.mxu0 0.0
      %6957 = vmatpush1.xpose.msra.mxu0 %v6940
      %6958 = vmatprep.subr.mxu0 0.0
      %6959 = vmatpush1.xpose.msra.mxu0 %v6942
      %6960 = vmatprep.subr.mxu0 0.0
      %6961 = vmatpush1.xpose.msra.mxu0 %v6944
      %6962 = vmatprep.subr.mxu0 0.0
      %6963 = vmatpush1.xpose.msra.mxu0 %v6946
      %6964 = vmatprep.subr.mxu0 0.0
      %6965 = vmatpush1.xpose.msra.mxu0 %v6948
      %6966 = vmatprep.subr.mxu0 0.0
      %6967 = vmatpush1.xpose.msra.mxu0 0.0
      %6968 = vmatprep.subr.mxu0 0.0
      %6969 = vmatpush1.xpose.msra.mxu0 0.0
      %6970 = vmatprep.subr.mxu0 0.0
      %6971 = vmatpush1.xpose.msra.mxu0 0.0
      %6972 = vmatprep.subr.mxu0 0.0
      %6973 = vmatpush1.xpose.msra.mxu0 0.0
      %6974 = vmatprep.subr.mxu0 0.0
      %6975 = vmatpush1.xpose.msra.mxu0 0.0
      %6976 = vmatprep.subr.mxu0 0.0
      %6977 = vmatpush1.xpose.msra.mxu0 0.0
      %6978 = vmatprep.subr.mxu0 0.0
      %6979 = vmatpush1.xpose.msra.mxu0 0.0
      %6980 = vmatprep.subr.mxu0 0.0
      %6981 = vmatpush1.xpose.msra.mxu0 0.0
      %6982 = vmatprep.subr.mxu0 0.0
      %6983 = vmatpush1.xpose.msra.mxu0 0.0
      %6984 = vmatprep.subr.mxu0 0.0
      %6985 = vmatpush1.xpose.msra.mxu0 0.0
      %6986 = vmatprep.subr.mxu0 0.0
      %6987 = vmatpush1.xpose.msra.mxu0 0.0
      %6988 = vmatprep.subr.mxu0 0.0
      %6989 = vmatpush1.xpose.msra.mxu0 0.0
      %6990 = vmatprep.subr.mxu0 0.0
      %6991 = vmatpush1.xpose.msra.mxu0 0.0
      %6992 = vmatprep.subr.mxu0 0.0
      %6993 = vmatpush1.xpose.msra.mxu0 0.0
      %6994 = vmatprep.subr.mxu0 0.0
      %6995 = vmatpush1.xpose.msra.mxu0 0.0
      %6996 = vmatprep.subr.mxu0 0.0
      %6997 = vmatpush1.xpose.msra.mxu0 0.0
      %6998 = vmatprep.subr.mxu0 0.0
      %6999 = vmatpush1.xpose.msra.mxu0 0.0
      %7000 = vmatprep.subr.mxu0 0.0
      %7001 = vmatpush1.xpose.msra.mxu0 0.0
      %7002 = vmatprep.subr.mxu0 0.0
      %7003 = vmatpush1.xpose.msra.mxu0 0.0
      %7004 = vmatprep.subr.mxu0 0.0
      %7005 = vmatpush1.xpose.msra.mxu0 0.0
      %7006 = vmatprep.subr.mxu0 0.0
      %7007 = vmatpush1.xpose.msra.mxu0 0.0
      %7008 = vmatprep.subr.mxu0 0.0
      %7009 = vmatpush1.xpose.msra.mxu0 0.0
      %7010 = vmatprep.subr.mxu0 0.0
      %7011 = vmatpush1.xpose.msra.mxu0 0.0
      %7012 = vmatprep.subr.mxu0 0.0
      %7013 = vmatpush1.xpose.msra.mxu0 0.0
      %7014 = vmatprep.mubr.f32.mxu0 0.0
      %7015 = vmatmul.mubr.f32.gmra.mrb[0].mxu0 %v6918
      %v7016 = vpop.f32.mrb[0].mxu0
      %v7017 = vadd.f32 %v6540, %v7016
      %v7018 = vpop.f32.mrb[0].mxu0
      %7019 = vmatprep.mubr.f32.mxu0 0.0
      %7020 = vmatmul.mubr.f32.gmra.mrb[0].mxu0 %v6920
      %v7021 = vpop.f32.mrb[0].mxu0
      %v7022 = vadd.f32 %v6541, %v7021
      %v7023 = vpop.f32.mrb[0].mxu0
      %7024 = vmatprep.mubr.f32.mxu0 0.0
      %7025 = vmatmul.mubr.f32.gmra.mrb[0].mxu0 %v6922
      %v7026 = vpop.f32.mrb[0].mxu0
      %v7027 = vadd.f32 %v6542, %v7026
      %v7028 = vpop.f32.mrb[0].mxu0
      %7029 = vmatprep.mubr.f32.mxu0 0.0
      %7030 = vmatmul.mubr.f32.gmra.mrb[0].mxu0 %v6924
      %v7031 = vpop.f32.mrb[0].mxu0
      %v7032 = vadd.f32 %v6543, %v7031
      %v7033 = vpop.f32.mrb[0].mxu0
      %7034 = vmatprep.mubr.f32.mxu0 0.0
      %7035 = vmatmul.mubr.f32.gmra.mrb[0].mxu0 %v6926
      %v7036 = vpop.f32.mrb[0].mxu0
      %v7037 = vadd.f32 %v6544, %v7036
      %v7038 = vpop.f32.mrb[0].mxu0
      %7039 = vmatprep.mubr.f32.mxu0 0.0
      %7040 = vmatmul.mubr.f32.gmra.mrb[0].mxu0 %v6928
      %v7041 = vpop.f32.mrb[0].mxu0
      %v7042 = vadd.f32 %v6545, %v7041
      %v7043 = vpop.f32.mrb[0].mxu0
      %7044 = vmatprep.mubr.f32.mxu0 0.0
      %7045 = vmatmul.mubr.f32.gmra.mrb[0].mxu0 %v6930
      %v7046 = vpop.f32.mrb[0].mxu0
      %v7047 = vadd.f32 %v6546, %v7046
      %v7048 = vpop.f32.mrb[0].mxu0
      %7049 = vmatprep.mubr.f32.mxu0 0.0
      %7050 = vmatmul.mubr.f32.gmra.mrb[0].mxu0 %v6932
      %v7051 = vpop.f32.mrb[0].mxu0
      %v7052 = vadd.f32 %v6547, %v7051
      %v7053 = vpop.f32.mrb[0].mxu0
      %7054 = vdwg.mxu0
      %7055 = vrot.lane.b32.xlu0 %v587, 104
      %v7056 = vpop.permute.xlu0 %7055
      %7057 = vrot.lane.b32.xlu0 %v592, 104
      %v7058 = vpop.permute.xlu0 %7057
      %7059 = vrot.lane.b32.xlu0 %v597, 104
      %v7060 = vpop.permute.xlu0 %7059
      %7061 = vrot.lane.b32.xlu0 %v602, 104
      %v7062 = vpop.permute.xlu0 %7061
      %7063 = vrot.lane.b32.xlu0 %v607, 104
      %v7064 = vpop.permute.xlu0 %7063
      %7065 = vrot.lane.b32.xlu0 %v612, 104
      %v7066 = vpop.permute.xlu0 %7065
      %7067 = vrot.lane.b32.xlu0 %v617, 104
      %v7068 = vpop.permute.xlu0 %7067
      %7069 = vrot.lane.b32.xlu0 %v622, 104
      %v7070 = vpop.permute.xlu0 %7069
      %7071 = vrot.lane.b32.xlu0 %v587, 72
      %v7072 = vpop.permute.xlu0 %7071
      %7073 = vrot.lane.b32.xlu0 %v592, 72
      %v7074 = vpop.permute.xlu0 %7073
      %7075 = vrot.lane.b32.xlu0 %v597, 72
      %v7076 = vpop.permute.xlu0 %7075
      %7077 = vrot.lane.b32.xlu0 %v602, 72
      %v7078 = vpop.permute.xlu0 %7077
      %7079 = vrot.lane.b32.xlu0 %v607, 72
      %v7080 = vpop.permute.xlu0 %7079
      %7081 = vrot.lane.b32.xlu0 %v612, 72
      %v7082 = vpop.permute.xlu0 %7081
      %7083 = vrot.lane.b32.xlu0 %v617, 72
      %v7084 = vpop.permute.xlu0 %7083
      %7085 = vrot.lane.b32.xlu0 %v622, 72
      %v7086 = vpop.permute.xlu0 %7085
      %v7087 = vsel %vm657, %v7056, 0
      %v7089 = vsel %vm657, %v7058, 0
      %v7091 = vsel %vm657, %v7060, 0
      %v7093 = vsel %vm657, %v7062, 0
      %v7095 = vsel %vm657, %v7064, 0
      %v7097 = vsel %vm657, %v7066, 0
      %v7099 = vsel %vm657, %v7068, 0
      %v7101 = vsel %vm657, %v7070, 0
      %v7103 = vsel %vm657, %v7072, 0
      %v7105 = vsel %vm657, %v7074, 0
      %v7107 = vsel %vm657, %v7076, 0
      %v7109 = vsel %vm657, %v7078, 0
      %v7111 = vsel %vm657, %v7080, 0
      %v7113 = vsel %vm657, %v7082, 0
      %v7115 = vsel %vm657, %v7084, 0
      %v7117 = vsel %vm657, %v7086, 0
      %7119 = vmatprep.subr.mxu0 0.0
      %7120 = vmatpush1.xpose.msra.mxu0 %v7103
      %7121 = vmatprep.subr.mxu0 0.0
      %7122 = vmatpush1.xpose.msra.mxu0 %v7105
      %7123 = vmatprep.subr.mxu0 0.0
      %7124 = vmatpush1.xpose.msra.mxu0 %v7107
      %7125 = vmatprep.subr.mxu0 0.0
      %7126 = vmatpush1.xpose.msra.mxu0 %v7109
      %7127 = vmatprep.subr.mxu0 0.0
      %7128 = vmatpush1.xpose.msra.mxu0 %v7111
      %7129 = vmatprep.subr.mxu0 0.0
      %7130 = vmatpush1.xpose.msra.mxu0 %v7113
      %7131 = vmatprep.subr.mxu0 0.0
      %7132 = vmatpush1.xpose.msra.mxu0 %v7115
      %7133 = vmatprep.subr.mxu0 0.0
      %7134 = vmatpush1.xpose.msra.mxu0 %v7117
      %7135 = vmatprep.subr.mxu0 0.0
      %7136 = vmatpush1.xpose.msra.mxu0 0.0
      %7137 = vmatprep.subr.mxu0 0.0
      %7138 = vmatpush1.xpose.msra.mxu0 0.0
      %7139 = vmatprep.subr.mxu0 0.0
      %7140 = vmatpush1.xpose.msra.mxu0 0.0
      %7141 = vmatprep.subr.mxu0 0.0
      %7142 = vmatpush1.xpose.msra.mxu0 0.0
      %7143 = vmatprep.subr.mxu0 0.0
      %7144 = vmatpush1.xpose.msra.mxu0 0.0
      %7145 = vmatprep.subr.mxu0 0.0
      %7146 = vmatpush1.xpose.msra.mxu0 0.0
      %7147 = vmatprep.subr.mxu0 0.0
      %7148 = vmatpush1.xpose.msra.mxu0 0.0
      %7149 = vmatprep.subr.mxu0 0.0
      %7150 = vmatpush1.xpose.msra.mxu0 0.0
      %7151 = vmatprep.subr.mxu0 0.0
      %7152 = vmatpush1.xpose.msra.mxu0 0.0
      %7153 = vmatprep.subr.mxu0 0.0
      %7154 = vmatpush1.xpose.msra.mxu0 0.0
      %7155 = vmatprep.subr.mxu0 0.0
      %7156 = vmatpush1.xpose.msra.mxu0 0.0
      %7157 = vmatprep.subr.mxu0 0.0
      %7158 = vmatpush1.xpose.msra.mxu0 0.0
      %7159 = vmatprep.subr.mxu0 0.0
      %7160 = vmatpush1.xpose.msra.mxu0 0.0
      %7161 = vmatprep.subr.mxu0 0.0
      %7162 = vmatpush1.xpose.msra.mxu0 0.0
      %7163 = vmatprep.subr.mxu0 0.0
      %7164 = vmatpush1.xpose.msra.mxu0 0.0
      %7165 = vmatprep.subr.mxu0 0.0
      %7166 = vmatpush1.xpose.msra.mxu0 0.0
      %7167 = vmatprep.subr.mxu0 0.0
      %7168 = vmatpush1.xpose.msra.mxu0 0.0
      %7169 = vmatprep.subr.mxu0 0.0
      %7170 = vmatpush1.xpose.msra.mxu0 0.0
      %7171 = vmatprep.subr.mxu0 0.0
      %7172 = vmatpush1.xpose.msra.mxu0 0.0
      %7173 = vmatprep.subr.mxu0 0.0
      %7174 = vmatpush1.xpose.msra.mxu0 0.0
      %7175 = vmatprep.subr.mxu0 0.0
      %7176 = vmatpush1.xpose.msra.mxu0 0.0
      %7177 = vmatprep.subr.mxu0 0.0
      %7178 = vmatpush1.xpose.msra.mxu0 0.0
      %7179 = vmatprep.subr.mxu0 0.0
      %7180 = vmatpush1.xpose.msra.mxu0 0.0
      %7181 = vmatprep.subr.mxu0 0.0
      %7182 = vmatpush1.xpose.msra.mxu0 0.0
      %7183 = vmatprep.mubr.f32.mxu0 0.0
      %7184 = vmatmul.mubr.f32.gmra.mrb[0].mxu0 %v7087
      %v7185 = vpop.f32.mrb[0].mxu0
      %v7186 = vadd.f32 %v6540, %v7185
      %v7187 = vpop.f32.mrb[0].mxu0
      %7188 = vmatprep.mubr.f32.mxu0 0.0
      %7189 = vmatmul.mubr.f32.gmra.mrb[0].mxu0 %v7089
      %v7190 = vpop.f32.mrb[0].mxu0
      %v7191 = vadd.f32 %v6541, %v7190
      %v7192 = vpop.f32.mrb[0].mxu0
      %7193 = vmatprep.mubr.f32.mxu0 0.0
      %7194 = vmatmul.mubr.f32.gmra.mrb[0].mxu0 %v7091
      %v7195 = vpop.f32.mrb[0].mxu0
      %v7196 = vadd.f32 %v6542, %v7195
      %v7197 = vpop.f32.mrb[0].mxu0
      %7198 = vmatprep.mubr.f32.mxu0 0.0
      %7199 = vmatmul.mubr.f32.gmra.mrb[0].mxu0 %v7093
      %v7200 = vpop.f32.mrb[0].mxu0
      %v7201 = vadd.f32 %v6543, %v7200
      %v7202 = vpop.f32.mrb[0].mxu0
      %7203 = vmatprep.mubr.f32.mxu0 0.0
      %7204 = vmatmul.mubr.f32.gmra.mrb[0].mxu0 %v7095
      %v7205 = vpop.f32.mrb[0].mxu0
      %v7206 = vadd.f32 %v6544, %v7205
      %v7207 = vpop.f32.mrb[0].mxu0
      %7208 = vmatprep.mubr.f32.mxu0 0.0
      %7209 = vmatmul.mubr.f32.gmra.mrb[0].mxu0 %v7097
      %v7210 = vpop.f32.mrb[0].mxu0
      %v7211 = vadd.f32 %v6545, %v7210
      %v7212 = vpop.f32.mrb[0].mxu0
      %7213 = vmatprep.mubr.f32.mxu0 0.0
      %7214 = vmatmul.mubr.f32.gmra.mrb[0].mxu0 %v7099
      %v7215 = vpop.f32.mrb[0].mxu0
      %v7216 = vadd.f32 %v6546, %v7215
      %v7217 = vpop.f32.mrb[0].mxu0
      %7218 = vmatprep.mubr.f32.mxu0 0.0
      %7219 = vmatmul.mubr.f32.gmra.mrb[0].mxu0 %v7101
      %v7220 = vpop.f32.mrb[0].mxu0
      %v7221 = vadd.f32 %v6547, %v7220
      %v7222 = vpop.f32.mrb[0].mxu0
      %7223 = vdwg.mxu0
      %v7224 = vsel %vm1278, %v6679, -inf
      %7225 = vmax.xlane.f32.xlu0 %v7224
      %v7226 = vpop.xlane.xlu0 %7225
      %v7227 = vsel %vm1278, %v6684, -inf
      %7228 = vmax.xlane.f32.xlu0 %v7227
      %v7229 = vpop.xlane.xlu0 %7228
      %v7230 = vsel %vm1278, %v6689, -inf
      %7231 = vmax.xlane.f32.xlu0 %v7230
      %v7232 = vpop.xlane.xlu0 %7231
      %v7233 = vsel %vm1278, %v6694, -inf
      %7234 = vmax.xlane.f32.xlu0 %v7233
      %v7235 = vpop.xlane.xlu0 %7234
      %v7236 = vsel %vm1278, %v6699, -inf
      %7237 = vmax.xlane.f32.xlu0 %v7236
      %v7238 = vpop.xlane.xlu0 %7237
      %v7239 = vsel %vm1278, %v6704, -inf
      %7240 = vmax.xlane.f32.xlu0 %v7239
      %v7241 = vpop.xlane.xlu0 %7240
      %v7242 = vsel %vm1278, %v6709, -inf
      %7243 = vmax.xlane.f32.xlu0 %v7242
      %v7244 = vpop.xlane.xlu0 %7243
      %v7245 = vsel %vm1278, %v6714, -inf
      %7246 = vmax.xlane.f32.xlu0 %v7245
      %v7247 = vpop.xlane.xlu0 %7246
      %v7248 = vsel %vm1278, %v6848, -inf
      %7249 = vmax.xlane.f32.xlu0 %v7248
      %v7250 = vpop.xlane.xlu0 %7249
      %v7251 = vsel %vm1278, %v6853, -inf
      %7252 = vmax.xlane.f32.xlu0 %v7251
      %v7253 = vpop.xlane.xlu0 %7252
      %v7254 = vsel %vm1278, %v6858, -inf
      %7255 = vmax.xlane.f32.xlu0 %v7254
      %v7256 = vpop.xlane.xlu0 %7255
      %v7257 = vsel %vm1278, %v6863, -inf
      %7258 = vmax.xlane.f32.xlu0 %v7257
      %v7259 = vpop.xlane.xlu0 %7258
      %v7260 = vsel %vm1278, %v6868, -inf
      %7261 = vmax.xlane.f32.xlu0 %v7260
      %v7262 = vpop.xlane.xlu0 %7261
      %v7263 = vsel %vm1278, %v6873, -inf
      %7264 = vmax.xlane.f32.xlu0 %v7263
      %v7265 = vpop.xlane.xlu0 %7264
      %v7266 = vsel %vm1278, %v6878, -inf
      %7267 = vmax.xlane.f32.xlu0 %v7266
      %v7268 = vpop.xlane.xlu0 %7267
      %v7269 = vsel %vm1278, %v6883, -inf
      %7270 = vmax.xlane.f32.xlu0 %v7269
      %v7271 = vpop.xlane.xlu0 %7270
      %v7272 = vsel %vm1278, %v7017, -inf
      %7273 = vmax.xlane.f32.xlu0 %v7272
      %v7274 = vpop.xlane.xlu0 %7273
      %v7275 = vsel %vm1278, %v7022, -inf
      %7276 = vmax.xlane.f32.xlu0 %v7275
      %v7277 = vpop.xlane.xlu0 %7276
      %v7278 = vsel %vm1278, %v7027, -inf
      %7279 = vmax.xlane.f32.xlu0 %v7278
      %v7280 = vpop.xlane.xlu0 %7279
      %v7281 = vsel %vm1278, %v7032, -inf
      %7282 = vmax.xlane.f32.xlu0 %v7281
      %v7283 = vpop.xlane.xlu0 %7282
      %v7284 = vsel %vm1278, %v7037, -inf
      %7285 = vmax.xlane.f32.xlu0 %v7284
      %v7286 = vpop.xlane.xlu0 %7285
      %v7287 = vsel %vm1278, %v7042, -inf
      %7288 = vmax.xlane.f32.xlu0 %v7287
      %v7289 = vpop.xlane.xlu0 %7288
      %v7290 = vsel %vm1278, %v7047, -inf
      %7291 = vmax.xlane.f32.xlu0 %v7290
      %v7292 = vpop.xlane.xlu0 %7291
      %v7293 = vsel %vm1278, %v7052, -inf
      %7294 = vmax.xlane.f32.xlu0 %v7293
      %v7295 = vpop.xlane.xlu0 %7294
      %v7296 = vsel %vm1278, %v7186, -inf
      %7297 = vmax.xlane.f32.xlu0 %v7296
      %v7298 = vpop.xlane.xlu0 %7297
      %v7299 = vsel %vm1278, %v7191, -inf
      %7300 = vmax.xlane.f32.xlu0 %v7299
      %v7301 = vpop.xlane.xlu0 %7300
      %v7302 = vsel %vm1278, %v7196, -inf
      %7303 = vmax.xlane.f32.xlu0 %v7302
      %v7304 = vpop.xlane.xlu0 %7303
      %v7305 = vsel %vm1278, %v7201, -inf
      %7306 = vmax.xlane.f32.xlu0 %v7305
      %v7307 = vpop.xlane.xlu0 %7306
      %v7308 = vsel %vm1278, %v7206, -inf
      %7309 = vmax.xlane.f32.xlu0 %v7308
      %v7310 = vpop.xlane.xlu0 %7309
      %v7311 = vsel %vm1278, %v7211, -inf
      %7312 = vmax.xlane.f32.xlu0 %v7311
      %v7313 = vpop.xlane.xlu0 %7312
      %v7314 = vsel %vm1278, %v7216, -inf
      %7315 = vmax.xlane.f32.xlu0 %v7314
      %v7316 = vpop.xlane.xlu0 %7315
      %v7317 = vsel %vm1278, %v7221, -inf
      %7318 = vmax.xlane.f32.xlu0 %v7317
      %v7319 = vpop.xlane.xlu0 %7318
      %v7320 = vsub.f32 %v6679, %v7226
      %v7321 = vsub.f32 %v6684, %v7229
      %v7322 = vsub.f32 %v6689, %v7232
      %v7323 = vsub.f32 %v6694, %v7235
      %v7324 = vsub.f32 %v6699, %v7238
      %v7325 = vsub.f32 %v6704, %v7241
      %v7326 = vsub.f32 %v6709, %v7244
      %v7327 = vsub.f32 %v6714, %v7247
      %v7328 = vsub.f32 %v6848, %v7250
      %v7329 = vsub.f32 %v6853, %v7253
      %v7330 = vsub.f32 %v6858, %v7256
      %v7331 = vsub.f32 %v6863, %v7259
      %v7332 = vsub.f32 %v6868, %v7262
      %v7333 = vsub.f32 %v6873, %v7265
      %v7334 = vsub.f32 %v6878, %v7268
      %v7335 = vsub.f32 %v6883, %v7271
      %v7336 = vsub.f32 %v7017, %v7274
      %v7337 = vsub.f32 %v7022, %v7277
      %v7338 = vsub.f32 %v7027, %v7280
      %v7339 = vsub.f32 %v7032, %v7283
      %v7340 = vsub.f32 %v7037, %v7286
      %v7341 = vsub.f32 %v7042, %v7289
      %v7342 = vsub.f32 %v7047, %v7292
      %v7343 = vsub.f32 %v7052, %v7295
      %v7344 = vsub.f32 %v7186, %v7298
      %v7345 = vsub.f32 %v7191, %v7301
      %v7346 = vsub.f32 %v7196, %v7304
      %v7347 = vsub.f32 %v7201, %v7307
      %v7348 = vsub.f32 %v7206, %v7310
      %v7349 = vsub.f32 %v7211, %v7313
      %v7350 = vsub.f32 %v7216, %v7316
      %v7351 = vsub.f32 %v7221, %v7319
      %v7352 = vmul.f32 %v7320, 1.442695
      %v7353 = vpow.pop %v7352
      %v7354 = vmul.f32 %v7321, 1.442695
      %v7355 = vpow.pop %v7354
      %v7356 = vmul.f32 %v7322, 1.442695
      %v7357 = vpow.pop %v7356
      %v7358 = vmul.f32 %v7323, 1.442695
      %v7359 = vpow.pop %v7358
      %v7360 = vmul.f32 %v7324, 1.442695
      %v7361 = vpow.pop %v7360
      %v7362 = vmul.f32 %v7325, 1.442695
      %v7363 = vpow.pop %v7362
      %v7364 = vmul.f32 %v7326, 1.442695
      %v7365 = vpow.pop %v7364
      %v7366 = vmul.f32 %v7327, 1.442695
      %v7367 = vpow.pop %v7366
      %v7368 = vmul.f32 %v7328, 1.442695
      %v7369 = vpow.pop %v7368
      %v7370 = vmul.f32 %v7329, 1.442695
      %v7371 = vpow.pop %v7370
      %v7372 = vmul.f32 %v7330, 1.442695
      %v7373 = vpow.pop %v7372
      %v7374 = vmul.f32 %v7331, 1.442695
      %v7375 = vpow.pop %v7374
      %v7376 = vmul.f32 %v7332, 1.442695
      %v7377 = vpow.pop %v7376
      %v7378 = vmul.f32 %v7333, 1.442695
      %v7379 = vpow.pop %v7378
      %v7380 = vmul.f32 %v7334, 1.442695
      %v7381 = vpow.pop %v7380
      %v7382 = vmul.f32 %v7335, 1.442695
      %v7383 = vpow.pop %v7382
      %v7384 = vmul.f32 %v7336, 1.442695
      %v7385 = vpow.pop %v7384
      %v7386 = vmul.f32 %v7337, 1.442695
      %v7387 = vpow.pop %v7386
      %v7388 = vmul.f32 %v7338, 1.442695
      %v7389 = vpow.pop %v7388
      %v7390 = vmul.f32 %v7339, 1.442695
      %v7391 = vpow.pop %v7390
      %v7392 = vmul.f32 %v7340, 1.442695
      %v7393 = vpow.pop %v7392
      %v7394 = vmul.f32 %v7341, 1.442695
      %v7395 = vpow.pop %v7394
      %v7396 = vmul.f32 %v7342, 1.442695
      %v7397 = vpow.pop %v7396
      %v7398 = vmul.f32 %v7343, 1.442695
      %v7399 = vpow.pop %v7398
      %v7400 = vmul.f32 %v7344, 1.442695
      %v7401 = vpow.pop %v7400
      %v7402 = vmul.f32 %v7345, 1.442695
      %v7403 = vpow.pop %v7402
      %v7404 = vmul.f32 %v7346, 1.442695
      %v7405 = vpow.pop %v7404
      %v7406 = vmul.f32 %v7347, 1.442695
      %v7407 = vpow.pop %v7406
      %v7408 = vmul.f32 %v7348, 1.442695
      %v7409 = vpow.pop %v7408
      %v7410 = vmul.f32 %v7349, 1.442695
      %v7411 = vpow.pop %v7410
      %v7412 = vmul.f32 %v7350, 1.442695
      %v7413 = vpow.pop %v7412
      %v7414 = vmul.f32 %v7351, 1.442695
      %v7415 = vpow.pop %v7414
      %v7416 = vsel %vm1278, %v7353, 0.0
      %7417 = vadd.xlane.f32.xlu0 %v7416
      %v7418 = vpop.xlane.xlu0 %7417
      %v7419 = vsel %vm1278, %v7355, 0.0
      %7420 = vadd.xlane.f32.xlu0 %v7419
      %v7421 = vpop.xlane.xlu0 %7420
      %v7422 = vsel %vm1278, %v7357, 0.0
      %7423 = vadd.xlane.f32.xlu0 %v7422
      %v7424 = vpop.xlane.xlu0 %7423
      %v7425 = vsel %vm1278, %v7359, 0.0
      %7426 = vadd.xlane.f32.xlu0 %v7425
      %v7427 = vpop.xlane.xlu0 %7426
      %v7428 = vsel %vm1278, %v7361, 0.0
      %7429 = vadd.xlane.f32.xlu0 %v7428
      %v7430 = vpop.xlane.xlu0 %7429
      %v7431 = vsel %vm1278, %v7363, 0.0
      %7432 = vadd.xlane.f32.xlu0 %v7431
      %v7433 = vpop.xlane.xlu0 %7432
      %v7434 = vsel %vm1278, %v7365, 0.0
      %7435 = vadd.xlane.f32.xlu0 %v7434
      %v7436 = vpop.xlane.xlu0 %7435
      %v7437 = vsel %vm1278, %v7367, 0.0
      %7438 = vadd.xlane.f32.xlu0 %v7437
      %v7439 = vpop.xlane.xlu0 %7438
      %v7440 = vsel %vm1278, %v7369, 0.0
      %7441 = vadd.xlane.f32.xlu0 %v7440
      %v7442 = vpop.xlane.xlu0 %7441
      %v7443 = vsel %vm1278, %v7371, 0.0
      %7444 = vadd.xlane.f32.xlu0 %v7443
      %v7445 = vpop.xlane.xlu0 %7444
      %v7446 = vsel %vm1278, %v7373, 0.0
      %7447 = vadd.xlane.f32.xlu0 %v7446
      %v7448 = vpop.xlane.xlu0 %7447
      %v7449 = vsel %vm1278, %v7375, 0.0
      %7450 = vadd.xlane.f32.xlu0 %v7449
      %v7451 = vpop.xlane.xlu0 %7450
      %v7452 = vsel %vm1278, %v7377, 0.0
      %7453 = vadd.xlane.f32.xlu0 %v7452
      %v7454 = vpop.xlane.xlu0 %7453
      %v7455 = vsel %vm1278, %v7379, 0.0
      %7456 = vadd.xlane.f32.xlu0 %v7455
      %v7457 = vpop.xlane.xlu0 %7456
      %v7458 = vsel %vm1278, %v7381, 0.0
      %7459 = vadd.xlane.f32.xlu0 %v7458
      %v7460 = vpop.xlane.xlu0 %7459
      %v7461 = vsel %vm1278, %v7383, 0.0
      %7462 = vadd.xlane.f32.xlu0 %v7461
      %v7463 = vpop.xlane.xlu0 %7462
      %v7464 = vsel %vm1278, %v7385, 0.0
      %7465 = vadd.xlane.f32.xlu0 %v7464
      %v7466 = vpop.xlane.xlu0 %7465
      %v7467 = vsel %vm1278, %v7387, 0.0
      %7468 = vadd.xlane.f32.xlu0 %v7467
      %v7469 = vpop.xlane.xlu0 %7468
      %v7470 = vsel %vm1278, %v7389, 0.0
      %7471 = vadd.xlane.f32.xlu0 %v7470
      %v7472 = vpop.xlane.xlu0 %7471
      %v7473 = vsel %vm1278, %v7391, 0.0
      %7474 = vadd.xlane.f32.xlu0 %v7473
      %v7475 = vpop.xlane.xlu0 %7474
      %v7476 = vsel %vm1278, %v7393, 0.0
      %7477 = vadd.xlane.f32.xlu0 %v7476
      %v7478 = vpop.xlane.xlu0 %7477
      %v7479 = vsel %vm1278, %v7395, 0.0
      %7480 = vadd.xlane.f32.xlu0 %v7479
      %v7481 = vpop.xlane.xlu0 %7480
      %v7482 = vsel %vm1278, %v7397, 0.0
      %7483 = vadd.xlane.f32.xlu0 %v7482
      %v7484 = vpop.xlane.xlu0 %7483
      %v7485 = vsel %vm1278, %v7399, 0.0
      %7486 = vadd.xlane.f32.xlu0 %v7485
      %v7487 = vpop.xlane.xlu0 %7486
      %v7488 = vsel %vm1278, %v7401, 0.0
      %7489 = vadd.xlane.f32.xlu0 %v7488
      %v7490 = vpop.xlane.xlu0 %7489
      %v7491 = vsel %vm1278, %v7403, 0.0
      %7492 = vadd.xlane.f32.xlu0 %v7491
      %v7493 = vpop.xlane.xlu0 %7492
      %v7494 = vsel %vm1278, %v7405, 0.0
      %7495 = vadd.xlane.f32.xlu0 %v7494
      %v7496 = vpop.xlane.xlu0 %7495
      %v7497 = vsel %vm1278, %v7407, 0.0
      %7498 = vadd.xlane.f32.xlu0 %v7497
      %v7499 = vpop.xlane.xlu0 %7498
      %v7500 = vsel %vm1278, %v7409, 0.0
      %7501 = vadd.xlane.f32.xlu0 %v7500
      %v7502 = vpop.xlane.xlu0 %7501
      %v7503 = vsel %vm1278, %v7411, 0.0
      %7504 = vadd.xlane.f32.xlu0 %v7503
      %v7505 = vpop.xlane.xlu0 %7504
      %v7506 = vsel %vm1278, %v7413, 0.0
      %7507 = vadd.xlane.f32.xlu0 %v7506
      %v7508 = vpop.xlane.xlu0 %7507
      %v7509 = vsel %vm1278, %v7415, 0.0
      %7510 = vadd.xlane.f32.xlu0 %v7509
      %v7511 = vpop.xlane.xlu0 %7510
      %v7512 = vrcp.pop %v7418
      %v7513 = vrcp.pop %v7421
      %v7514 = vrcp.pop %v7424
      %v7515 = vrcp.pop %v7427
      %v7516 = vrcp.pop %v7430
      %v7517 = vrcp.pop %v7433
      %v7518 = vrcp.pop %v7436
      %v7519 = vrcp.pop %v7439
      %v7520 = vrcp.pop %v7442
      %v7521 = vrcp.pop %v7445
      %v7522 = vrcp.pop %v7448
      %v7523 = vrcp.pop %v7451
      %v7524 = vrcp.pop %v7454
      %v7525 = vrcp.pop %v7457
      %v7526 = vrcp.pop %v7460
      %v7527 = vrcp.pop %v7463
      %v7528 = vrcp.pop %v7466
      %v7529 = vrcp.pop %v7469
      %v7530 = vrcp.pop %v7472
      %v7531 = vrcp.pop %v7475
      %v7532 = vrcp.pop %v7478
      %v7533 = vrcp.pop %v7481
      %v7534 = vrcp.pop %v7484
      %v7535 = vrcp.pop %v7487
      %v7536 = vrcp.pop %v7490
      %v7537 = vrcp.pop %v7493
      %v7538 = vrcp.pop %v7496
      %v7539 = vrcp.pop %v7499
      %v7540 = vrcp.pop %v7502
      %v7541 = vrcp.pop %v7505
      %v7542 = vrcp.pop %v7508
      %v7543 = vrcp.pop %v7511
      %v7544 = vmul.f32 %v7353, %v7512
      %v7545 = vmul.f32 %v7355, %v7513
      %v7546 = vmul.f32 %v7357, %v7514
      %v7547 = vmul.f32 %v7359, %v7515
      %v7548 = vmul.f32 %v7361, %v7516
      %v7549 = vmul.f32 %v7363, %v7517
      %v7550 = vmul.f32 %v7365, %v7518
      %v7551 = vmul.f32 %v7367, %v7519
      %v7552 = vmul.f32 %v7369, %v7520
      %v7553 = vmul.f32 %v7371, %v7521
      %v7554 = vmul.f32 %v7373, %v7522
      %v7555 = vmul.f32 %v7375, %v7523
      %v7556 = vmul.f32 %v7377, %v7524
      %v7557 = vmul.f32 %v7379, %v7525
      %v7558 = vmul.f32 %v7381, %v7526
      %v7559 = vmul.f32 %v7383, %v7527
      %v7560 = vmul.f32 %v7385, %v7528
      %v7561 = vmul.f32 %v7387, %v7529
      %v7562 = vmul.f32 %v7389, %v7530
      %v7563 = vmul.f32 %v7391, %v7531
      %v7564 = vmul.f32 %v7393, %v7532
      %v7565 = vmul.f32 %v7395, %v7533
      %v7566 = vmul.f32 %v7397, %v7534
      %v7567 = vmul.f32 %v7399, %v7535
      %v7568 = vmul.f32 %v7401, %v7536
      %v7569 = vmul.f32 %v7403, %v7537
      %v7570 = vmul.f32 %v7405, %v7538
      %v7571 = vmul.f32 %v7407, %v7539
      %v7572 = vmul.f32 %v7409, %v7540
      %v7573 = vmul.f32 %v7411, %v7541
      %v7574 = vmul.f32 %v7413, %v7542
      %v7575 = vmul.f32 %v7415, %v7543
      %7576 = vrot.lane.b32.xlu0 %v467, 40
      %v7577 = vpop.permute.xlu0 %7576
      %7578 = vrot.lane.b32.xlu0 %v472, 40
      %v7579 = vpop.permute.xlu0 %7578
      %7580 = vrot.lane.b32.xlu0 %v477, 40
      %v7581 = vpop.permute.xlu0 %7580
      %7582 = vrot.lane.b32.xlu0 %v482, 40
      %v7583 = vpop.permute.xlu0 %7582
      %7584 = vrot.lane.b32.xlu0 %v487, 40
      %v7585 = vpop.permute.xlu0 %7584
      %7586 = vrot.lane.b32.xlu0 %v492, 40
      %v7587 = vpop.permute.xlu0 %7586
      %7588 = vrot.lane.b32.xlu0 %v497, 40
      %v7589 = vpop.permute.xlu0 %7588
      %7590 = vrot.lane.b32.xlu0 %v502, 40
      %v7591 = vpop.permute.xlu0 %7590
      %v7601 = vsel %vm1278, %v7544, 0
      %v7604 = vsel %vm1278, %v7545, 0
      %v7607 = vsel %vm1278, %v7546, 0
      %v7610 = vsel %vm1278, %v7547, 0
      %v7613 = vsel %vm1278, %v7548, 0
      %v7616 = vsel %vm1278, %v7549, 0
      %v7619 = vsel %vm1278, %v7550, 0
      %v7622 = vsel %vm1278, %v7551, 0
      %7624 = vmatprep.subr.mxu0 0.0
      %7625 = vmatpush1.msra.mxu0 %v7577
      %7626 = vmatprep.subr.mxu0 0.0
      %7627 = vmatpush1.msra.mxu0 %v7579
      %7628 = vmatprep.subr.mxu0 0.0
      %7629 = vmatpush1.msra.mxu0 %v7581
      %7630 = vmatprep.subr.mxu0 0.0
      %7631 = vmatpush1.msra.mxu0 %v7583
      %7632 = vmatprep.subr.mxu0 0.0
      %7633 = vmatpush1.msra.mxu0 %v7585
      %7634 = vmatprep.subr.mxu0 0.0
      %7635 = vmatpush1.msra.mxu0 %v7587
      %7636 = vmatprep.subr.mxu0 0.0
      %7637 = vmatpush1.msra.mxu0 %v7589
      %7638 = vmatprep.subr.mxu0 0.0
      %7639 = vmatpush1.msra.mxu0 %v7591
      %7640 = vmatprep.subr.mxu0 0.0
      %7641 = vmatpush1.msra.mxu0 0.0
      %7642 = vmatprep.subr.mxu0 0.0
      %7643 = vmatpush1.msra.mxu0 0.0
      %7644 = vmatprep.subr.mxu0 0.0
      %7645 = vmatpush1.msra.mxu0 0.0
      %7646 = vmatprep.subr.mxu0 0.0
      %7647 = vmatpush1.msra.mxu0 0.0
      %7648 = vmatprep.subr.mxu0 0.0
      %7649 = vmatpush1.msra.mxu0 0.0
      %7650 = vmatprep.subr.mxu0 0.0
      %7651 = vmatpush1.msra.mxu0 0.0
      %7652 = vmatprep.subr.mxu0 0.0
      %7653 = vmatpush1.msra.mxu0 0.0
      %7654 = vmatprep.subr.mxu0 0.0
      %7655 = vmatpush1.msra.mxu0 0.0
      %7656 = vmatprep.subr.mxu0 0.0
      %7657 = vmatpush1.msra.mxu0 0.0
      %7658 = vmatprep.subr.mxu0 0.0
      %7659 = vmatpush1.msra.mxu0 0.0
      %7660 = vmatprep.subr.mxu0 0.0
      %7661 = vmatpush1.msra.mxu0 0.0
      %7662 = vmatprep.subr.mxu0 0.0
      %7663 = vmatpush1.msra.mxu0 0.0
      %7664 = vmatprep.subr.mxu0 0.0
      %7665 = vmatpush1.msra.mxu0 0.0
      %7666 = vmatprep.subr.mxu0 0.0
      %7667 = vmatpush1.msra.mxu0 0.0
      %7668 = vmatprep.subr.mxu0 0.0
      %7669 = vmatpush1.msra.mxu0 0.0
      %7670 = vmatprep.subr.mxu0 0.0
      %7671 = vmatpush1.msra.mxu0 0.0
      %7672 = vmatprep.subr.mxu0 0.0
      %7673 = vmatpush1.msra.mxu0 0.0
      %7674 = vmatprep.subr.mxu0 0.0
      %7675 = vmatpush1.msra.mxu0 0.0
      %7676 = vmatprep.subr.mxu0 0.0
      %7677 = vmatpush1.msra.mxu0 0.0
      %7678 = vmatprep.subr.mxu0 0.0
      %7679 = vmatpush1.msra.mxu0 0.0
      %7680 = vmatprep.subr.mxu0 0.0
      %7681 = vmatpush1.msra.mxu0 0.0
      %7682 = vmatprep.subr.mxu0 0.0
      %7683 = vmatpush1.msra.mxu0 0.0
      %7684 = vmatprep.subr.mxu0 0.0
      %7685 = vmatpush1.msra.mxu0 0.0
      %7686 = vmatprep.subr.mxu0 0.0
      %7687 = vmatpush1.msra.mxu0 0.0
      %7688 = vmatprep.mubr.f32.mxu0 0.0
      %7689 = vmatmul.mubr.f32.gmra.mrb[0].mxu0 %v7601
      %v7690 = vpop.f32.mrb[0].mxu0
      %v7691 = vadd.f32 0.0, %v7690
      %v7692 = vpop.f32.mrb[0].mxu0
      %7693 = vmatprep.mubr.f32.mxu0 0.0
      %7694 = vmatmul.mubr.f32.gmra.mrb[0].mxu0 %v7604
      %v7695 = vpop.f32.mrb[0].mxu0
      %v7696 = vadd.f32 0.0, %v7695
      %v7697 = vpop.f32.mrb[0].mxu0
      %7698 = vmatprep.mubr.f32.mxu0 0.0
      %7699 = vmatmul.mubr.f32.gmra.mrb[0].mxu0 %v7607
      %v7700 = vpop.f32.mrb[0].mxu0
      %v7701 = vadd.f32 0.0, %v7700
      %v7702 = vpop.f32.mrb[0].mxu0
      %7703 = vmatprep.mubr.f32.mxu0 0.0
      %7704 = vmatmul.mubr.f32.gmra.mrb[0].mxu0 %v7610
      %v7705 = vpop.f32.mrb[0].mxu0
      %v7706 = vadd.f32 0.0, %v7705
      %v7707 = vpop.f32.mrb[0].mxu0
      %7708 = vmatprep.mubr.f32.mxu0 0.0
      %7709 = vmatmul.mubr.f32.gmra.mrb[0].mxu0 %v7613
      %v7710 = vpop.f32.mrb[0].mxu0
      %v7711 = vadd.f32 0.0, %v7710
      %v7712 = vpop.f32.mrb[0].mxu0
      %7713 = vmatprep.mubr.f32.mxu0 0.0
      %7714 = vmatmul.mubr.f32.gmra.mrb[0].mxu0 %v7616
      %v7715 = vpop.f32.mrb[0].mxu0
      %v7716 = vadd.f32 0.0, %v7715
      %v7717 = vpop.f32.mrb[0].mxu0
      %7718 = vmatprep.mubr.f32.mxu0 0.0
      %7719 = vmatmul.mubr.f32.gmra.mrb[0].mxu0 %v7619
      %v7720 = vpop.f32.mrb[0].mxu0
      %v7721 = vadd.f32 0.0, %v7720
      %v7722 = vpop.f32.mrb[0].mxu0
      %7723 = vmatprep.mubr.f32.mxu0 0.0
      %7724 = vmatmul.mubr.f32.gmra.mrb[0].mxu0 %v7622
      %v7725 = vpop.f32.mrb[0].mxu0
      %v7726 = vadd.f32 0.0, %v7725
      %v7727 = vpop.f32.mrb[0].mxu0
      %7728 = vdwg.mxu0
      %7729 = vrot.lane.b32.xlu0 %v507, 40
      %v7730 = vpop.permute.xlu0 %7729
      %7731 = vrot.lane.b32.xlu0 %v512, 40
      %v7732 = vpop.permute.xlu0 %7731
      %7733 = vrot.lane.b32.xlu0 %v517, 40
      %v7734 = vpop.permute.xlu0 %7733
      %7735 = vrot.lane.b32.xlu0 %v522, 40
      %v7736 = vpop.permute.xlu0 %7735
      %7737 = vrot.lane.b32.xlu0 %v527, 40
      %v7738 = vpop.permute.xlu0 %7737
      %7739 = vrot.lane.b32.xlu0 %v532, 40
      %v7740 = vpop.permute.xlu0 %7739
      %7741 = vrot.lane.b32.xlu0 %v537, 40
      %v7742 = vpop.permute.xlu0 %7741
      %7743 = vrot.lane.b32.xlu0 %v542, 40
      %v7744 = vpop.permute.xlu0 %7743
      %v7754 = vsel %vm1278, %v7552, 0
      %v7757 = vsel %vm1278, %v7553, 0
      %v7760 = vsel %vm1278, %v7554, 0
      %v7763 = vsel %vm1278, %v7555, 0
      %v7766 = vsel %vm1278, %v7556, 0
      %v7769 = vsel %vm1278, %v7557, 0
      %v7772 = vsel %vm1278, %v7558, 0
      %v7775 = vsel %vm1278, %v7559, 0
      %7777 = vmatprep.subr.mxu0 0.0
      %7778 = vmatpush1.msra.mxu0 %v7730
      %7779 = vmatprep.subr.mxu0 0.0
      %7780 = vmatpush1.msra.mxu0 %v7732
      %7781 = vmatprep.subr.mxu0 0.0
      %7782 = vmatpush1.msra.mxu0 %v7734
      %7783 = vmatprep.subr.mxu0 0.0
      %7784 = vmatpush1.msra.mxu0 %v7736
      %7785 = vmatprep.subr.mxu0 0.0
      %7786 = vmatpush1.msra.mxu0 %v7738
      %7787 = vmatprep.subr.mxu0 0.0
      %7788 = vmatpush1.msra.mxu0 %v7740
      %7789 = vmatprep.subr.mxu0 0.0
      %7790 = vmatpush1.msra.mxu0 %v7742
      %7791 = vmatprep.subr.mxu0 0.0
      %7792 = vmatpush1.msra.mxu0 %v7744
      %7793 = vmatprep.subr.mxu0 0.0
      %7794 = vmatpush1.msra.mxu0 0.0
      %7795 = vmatprep.subr.mxu0 0.0
      %7796 = vmatpush1.msra.mxu0 0.0
      %7797 = vmatprep.subr.mxu0 0.0
      %7798 = vmatpush1.msra.mxu0 0.0
      %7799 = vmatprep.subr.mxu0 0.0
      %7800 = vmatpush1.msra.mxu0 0.0
      %7801 = vmatprep.subr.mxu0 0.0
      %7802 = vmatpush1.msra.mxu0 0.0
      %7803 = vmatprep.subr.mxu0 0.0
      %7804 = vmatpush1.msra.mxu0 0.0
      %7805 = vmatprep.subr.mxu0 0.0
      %7806 = vmatpush1.msra.mxu0 0.0
      %7807 = vmatprep.subr.mxu0 0.0
      %7808 = vmatpush1.msra.mxu0 0.0
      %7809 = vmatprep.subr.mxu0 0.0
      %7810 = vmatpush1.msra.mxu0 0.0
      %7811 = vmatprep.subr.mxu0 0.0
      %7812 = vmatpush1.msra.mxu0 0.0
      %7813 = vmatprep.subr.mxu0 0.0
      %7814 = vmatpush1.msra.mxu0 0.0
      %7815 = vmatprep.subr.mxu0 0.0
      %7816 = vmatpush1.msra.mxu0 0.0
      %7817 = vmatprep.subr.mxu0 0.0
      %7818 = vmatpush1.msra.mxu0 0.0
      %7819 = vmatprep.subr.mxu0 0.0
      %7820 = vmatpush1.msra.mxu0 0.0
      %7821 = vmatprep.subr.mxu0 0.0
      %7822 = vmatpush1.msra.mxu0 0.0
      %7823 = vmatprep.subr.mxu0 0.0
      %7824 = vmatpush1.msra.mxu0 0.0
      %7825 = vmatprep.subr.mxu0 0.0
      %7826 = vmatpush1.msra.mxu0 0.0
      %7827 = vmatprep.subr.mxu0 0.0
      %7828 = vmatpush1.msra.mxu0 0.0
      %7829 = vmatprep.subr.mxu0 0.0
      %7830 = vmatpush1.msra.mxu0 0.0
      %7831 = vmatprep.subr.mxu0 0.0
      %7832 = vmatpush1.msra.mxu0 0.0
      %7833 = vmatprep.subr.mxu0 0.0
      %7834 = vmatpush1.msra.mxu0 0.0
      %7835 = vmatprep.subr.mxu0 0.0
      %7836 = vmatpush1.msra.mxu0 0.0
      %7837 = vmatprep.subr.mxu0 0.0
      %7838 = vmatpush1.msra.mxu0 0.0
      %7839 = vmatprep.subr.mxu0 0.0
      %7840 = vmatpush1.msra.mxu0 0.0
      %7841 = vmatprep.mubr.f32.mxu0 0.0
      %7842 = vmatmul.mubr.f32.gmra.mrb[0].mxu0 %v7754
      %v7843 = vpop.f32.mrb[0].mxu0
      %v7844 = vadd.f32 0.0, %v7843
      %v7845 = vpop.f32.mrb[0].mxu0
      %7846 = vmatprep.mubr.f32.mxu0 0.0
      %7847 = vmatmul.mubr.f32.gmra.mrb[0].mxu0 %v7757
      %v7848 = vpop.f32.mrb[0].mxu0
      %v7849 = vadd.f32 0.0, %v7848
      %v7850 = vpop.f32.mrb[0].mxu0
      %7851 = vmatprep.mubr.f32.mxu0 0.0
      %7852 = vmatmul.mubr.f32.gmra.mrb[0].mxu0 %v7760
      %v7853 = vpop.f32.mrb[0].mxu0
      %v7854 = vadd.f32 0.0, %v7853
      %v7855 = vpop.f32.mrb[0].mxu0
      %7856 = vmatprep.mubr.f32.mxu0 0.0
      %7857 = vmatmul.mubr.f32.gmra.mrb[0].mxu0 %v7763
      %v7858 = vpop.f32.mrb[0].mxu0
      %v7859 = vadd.f32 0.0, %v7858
      %v7860 = vpop.f32.mrb[0].mxu0
      %7861 = vmatprep.mubr.f32.mxu0 0.0
      %7862 = vmatmul.mubr.f32.gmra.mrb[0].mxu0 %v7766
      %v7863 = vpop.f32.mrb[0].mxu0
      %v7864 = vadd.f32 0.0, %v7863
      %v7865 = vpop.f32.mrb[0].mxu0
      %7866 = vmatprep.mubr.f32.mxu0 0.0
      %7867 = vmatmul.mubr.f32.gmra.mrb[0].mxu0 %v7769
      %v7868 = vpop.f32.mrb[0].mxu0
      %v7869 = vadd.f32 0.0, %v7868
      %v7870 = vpop.f32.mrb[0].mxu0
      %7871 = vmatprep.mubr.f32.mxu0 0.0
      %7872 = vmatmul.mubr.f32.gmra.mrb[0].mxu0 %v7772
      %v7873 = vpop.f32.mrb[0].mxu0
      %v7874 = vadd.f32 0.0, %v7873
      %v7875 = vpop.f32.mrb[0].mxu0
      %7876 = vmatprep.mubr.f32.mxu0 0.0
      %7877 = vmatmul.mubr.f32.gmra.mrb[0].mxu0 %v7775
      %v7878 = vpop.f32.mrb[0].mxu0
      %v7879 = vadd.f32 0.0, %v7878
      %v7880 = vpop.f32.mrb[0].mxu0
      %7881 = vdwg.mxu0
      %7882 = vrot.lane.b32.xlu0 %v547, 40
      %v7883 = vpop.permute.xlu0 %7882
      %7884 = vrot.lane.b32.xlu0 %v552, 40
      %v7885 = vpop.permute.xlu0 %7884
      %7886 = vrot.lane.b32.xlu0 %v557, 40
      %v7887 = vpop.permute.xlu0 %7886
      %7888 = vrot.lane.b32.xlu0 %v562, 40
      %v7889 = vpop.permute.xlu0 %7888
      %7890 = vrot.lane.b32.xlu0 %v567, 40
      %v7891 = vpop.permute.xlu0 %7890
      %7892 = vrot.lane.b32.xlu0 %v572, 40
      %v7893 = vpop.permute.xlu0 %7892
      %7894 = vrot.lane.b32.xlu0 %v577, 40
      %v7895 = vpop.permute.xlu0 %7894
      %7896 = vrot.lane.b32.xlu0 %v582, 40
      %v7897 = vpop.permute.xlu0 %7896
      %v7907 = vsel %vm1278, %v7560, 0
      %v7910 = vsel %vm1278, %v7561, 0
      %v7913 = vsel %vm1278, %v7562, 0
      %v7916 = vsel %vm1278, %v7563, 0
      %v7919 = vsel %vm1278, %v7564, 0
      %v7922 = vsel %vm1278, %v7565, 0
      %v7925 = vsel %vm1278, %v7566, 0
      %v7928 = vsel %vm1278, %v7567, 0
      %7930 = vmatprep.subr.mxu0 0.0
      %7931 = vmatpush1.msra.mxu0 %v7883
      %7932 = vmatprep.subr.mxu0 0.0
      %7933 = vmatpush1.msra.mxu0 %v7885
      %7934 = vmatprep.subr.mxu0 0.0
      %7935 = vmatpush1.msra.mxu0 %v7887
      %7936 = vmatprep.subr.mxu0 0.0
      %7937 = vmatpush1.msra.mxu0 %v7889
      %7938 = vmatprep.subr.mxu0 0.0
      %7939 = vmatpush1.msra.mxu0 %v7891
      %7940 = vmatprep.subr.mxu0 0.0
      %7941 = vmatpush1.msra.mxu0 %v7893
      %7942 = vmatprep.subr.mxu0 0.0
      %7943 = vmatpush1.msra.mxu0 %v7895
      %7944 = vmatprep.subr.mxu0 0.0
      %7945 = vmatpush1.msra.mxu0 %v7897
      %7946 = vmatprep.subr.mxu0 0.0
      %7947 = vmatpush1.msra.mxu0 0.0
      %7948 = vmatprep.subr.mxu0 0.0
      %7949 = vmatpush1.msra.mxu0 0.0
      %7950 = vmatprep.subr.mxu0 0.0
      %7951 = vmatpush1.msra.mxu0 0.0
      %7952 = vmatprep.subr.mxu0 0.0
      %7953 = vmatpush1.msra.mxu0 0.0
      %7954 = vmatprep.subr.mxu0 0.0
      %7955 = vmatpush1.msra.mxu0 0.0
      %7956 = vmatprep.subr.mxu0 0.0
      %7957 = vmatpush1.msra.mxu0 0.0
      %7958 = vmatprep.subr.mxu0 0.0
      %7959 = vmatpush1.msra.mxu0 0.0
      %7960 = vmatprep.subr.mxu0 0.0
      %7961 = vmatpush1.msra.mxu0 0.0
      %7962 = vmatprep.subr.mxu0 0.0
      %7963 = vmatpush1.msra.mxu0 0.0
      %7964 = vmatprep.subr.mxu0 0.0
      %7965 = vmatpush1.msra.mxu0 0.0
      %7966 = vmatprep.subr.mxu0 0.0
      %7967 = vmatpush1.msra.mxu0 0.0
      %7968 = vmatprep.subr.mxu0 0.0
      %7969 = vmatpush1.msra.mxu0 0.0
      %7970 = vmatprep.subr.mxu0 0.0
      %7971 = vmatpush1.msra.mxu0 0.0
      %7972 = vmatprep.subr.mxu0 0.0
      %7973 = vmatpush1.msra.mxu0 0.0
      %7974 = vmatprep.subr.mxu0 0.0
      %7975 = vmatpush1.msra.mxu0 0.0
      %7976 = vmatprep.subr.mxu0 0.0
      %7977 = vmatpush1.msra.mxu0 0.0
      %7978 = vmatprep.subr.mxu0 0.0
      %7979 = vmatpush1.msra.mxu0 0.0
      %7980 = vmatprep.subr.mxu0 0.0
      %7981 = vmatpush1.msra.mxu0 0.0
      %7982 = vmatprep.subr.mxu0 0.0
      %7983 = vmatpush1.msra.mxu0 0.0
      %7984 = vmatprep.subr.mxu0 0.0
      %7985 = vmatpush1.msra.mxu0 0.0
      %7986 = vmatprep.subr.mxu0 0.0
      %7987 = vmatpush1.msra.mxu0 0.0
      %7988 = vmatprep.subr.mxu0 0.0
      %7989 = vmatpush1.msra.mxu0 0.0
      %7990 = vmatprep.subr.mxu0 0.0
      %7991 = vmatpush1.msra.mxu0 0.0
      %7992 = vmatprep.subr.mxu0 0.0
      %7993 = vmatpush1.msra.mxu0 0.0
      %7994 = vmatprep.mubr.f32.mxu0 0.0
      %7995 = vmatmul.mubr.f32.gmra.mrb[0].mxu0 %v7907
      %v7996 = vpop.f32.mrb[0].mxu0
      %v7997 = vadd.f32 0.0, %v7996
      %v7998 = vpop.f32.mrb[0].mxu0
      %7999 = vmatprep.mubr.f32.mxu0 0.0
      %8000 = vmatmul.mubr.f32.gmra.mrb[0].mxu0 %v7910
      %v8001 = vpop.f32.mrb[0].mxu0
      %v8002 = vadd.f32 0.0, %v8001
      %v8003 = vpop.f32.mrb[0].mxu0
      %8004 = vmatprep.mubr.f32.mxu0 0.0
      %8005 = vmatmul.mubr.f32.gmra.mrb[0].mxu0 %v7913
      %v8006 = vpop.f32.mrb[0].mxu0
      %v8007 = vadd.f32 0.0, %v8006
      %v8008 = vpop.f32.mrb[0].mxu0
      %8009 = vmatprep.mubr.f32.mxu0 0.0
      %8010 = vmatmul.mubr.f32.gmra.mrb[0].mxu0 %v7916
      %v8011 = vpop.f32.mrb[0].mxu0
      %v8012 = vadd.f32 0.0, %v8011
      %v8013 = vpop.f32.mrb[0].mxu0
      %8014 = vmatprep.mubr.f32.mxu0 0.0
      %8015 = vmatmul.mubr.f32.gmra.mrb[0].mxu0 %v7919
      %v8016 = vpop.f32.mrb[0].mxu0
      %v8017 = vadd.f32 0.0, %v8016
      %v8018 = vpop.f32.mrb[0].mxu0
      %8019 = vmatprep.mubr.f32.mxu0 0.0
      %8020 = vmatmul.mubr.f32.gmra.mrb[0].mxu0 %v7922
      %v8021 = vpop.f32.mrb[0].mxu0
      %v8022 = vadd.f32 0.0, %v8021
      %v8023 = vpop.f32.mrb[0].mxu0
      %8024 = vmatprep.mubr.f32.mxu0 0.0
      %8025 = vmatmul.mubr.f32.gmra.mrb[0].mxu0 %v7925
      %v8026 = vpop.f32.mrb[0].mxu0
      %v8027 = vadd.f32 0.0, %v8026
      %v8028 = vpop.f32.mrb[0].mxu0
      %8029 = vmatprep.mubr.f32.mxu0 0.0
      %8030 = vmatmul.mubr.f32.gmra.mrb[0].mxu0 %v7928
      %v8031 = vpop.f32.mrb[0].mxu0
      %v8032 = vadd.f32 0.0, %v8031
      %v8033 = vpop.f32.mrb[0].mxu0
      %8034 = vdwg.mxu0
      %8035 = vrot.lane.b32.xlu0 %v587, 40
      %v8036 = vpop.permute.xlu0 %8035
      %8037 = vrot.lane.b32.xlu0 %v592, 40
      %v8038 = vpop.permute.xlu0 %8037
      %8039 = vrot.lane.b32.xlu0 %v597, 40
      %v8040 = vpop.permute.xlu0 %8039
      %8041 = vrot.lane.b32.xlu0 %v602, 40
      %v8042 = vpop.permute.xlu0 %8041
      %8043 = vrot.lane.b32.xlu0 %v607, 40
      %v8044 = vpop.permute.xlu0 %8043
      %8045 = vrot.lane.b32.xlu0 %v612, 40
      %v8046 = vpop.permute.xlu0 %8045
      %8047 = vrot.lane.b32.xlu0 %v617, 40
      %v8048 = vpop.permute.xlu0 %8047
      %8049 = vrot.lane.b32.xlu0 %v622, 40
      %v8050 = vpop.permute.xlu0 %8049
      %v8060 = vsel %vm1278, %v7568, 0
      %v8063 = vsel %vm1278, %v7569, 0
      %v8066 = vsel %vm1278, %v7570, 0
      %v8069 = vsel %vm1278, %v7571, 0
      %v8072 = vsel %vm1278, %v7572, 0
      %v8075 = vsel %vm1278, %v7573, 0
      %v8078 = vsel %vm1278, %v7574, 0
      %v8081 = vsel %vm1278, %v7575, 0
      %8083 = vmatprep.subr.mxu0 0.0
      %8084 = vmatpush1.msra.mxu0 %v8036
      %8085 = vmatprep.subr.mxu0 0.0
      %8086 = vmatpush1.msra.mxu0 %v8038
      %8087 = vmatprep.subr.mxu0 0.0
      %8088 = vmatpush1.msra.mxu0 %v8040
      %8089 = vmatprep.subr.mxu0 0.0
      %8090 = vmatpush1.msra.mxu0 %v8042
      %8091 = vmatprep.subr.mxu0 0.0
      %8092 = vmatpush1.msra.mxu0 %v8044
      %8093 = vmatprep.subr.mxu0 0.0
      %8094 = vmatpush1.msra.mxu0 %v8046
      %8095 = vmatprep.subr.mxu0 0.0
      %8096 = vmatpush1.msra.mxu0 %v8048
      %8097 = vmatprep.subr.mxu0 0.0
      %8098 = vmatpush1.msra.mxu0 %v8050
      %8099 = vmatprep.subr.mxu0 0.0
      %8100 = vmatpush1.msra.mxu0 0.0
      %8101 = vmatprep.subr.mxu0 0.0
      %8102 = vmatpush1.msra.mxu0 0.0
      %8103 = vmatprep.subr.mxu0 0.0
      %8104 = vmatpush1.msra.mxu0 0.0
      %8105 = vmatprep.subr.mxu0 0.0
      %8106 = vmatpush1.msra.mxu0 0.0
      %8107 = vmatprep.subr.mxu0 0.0
      %8108 = vmatpush1.msra.mxu0 0.0
      %8109 = vmatprep.subr.mxu0 0.0
      %8110 = vmatpush1.msra.mxu0 0.0
      %8111 = vmatprep.subr.mxu0 0.0
      %8112 = vmatpush1.msra.mxu0 0.0
      %8113 = vmatprep.subr.mxu0 0.0
      %8114 = vmatpush1.msra.mxu0 0.0
      %8115 = vmatprep.subr.mxu0 0.0
      %8116 = vmatpush1.msra.mxu0 0.0
      %8117 = vmatprep.subr.mxu0 0.0
      %8118 = vmatpush1.msra.mxu0 0.0
      %8119 = vmatprep.subr.mxu0 0.0
      %8120 = vmatpush1.msra.mxu0 0.0
      %8121 = vmatprep.subr.mxu0 0.0
      %8122 = vmatpush1.msra.mxu0 0.0
      %8123 = vmatprep.subr.mxu0 0.0
      %8124 = vmatpush1.msra.mxu0 0.0
      %8125 = vmatprep.subr.mxu0 0.0
      %8126 = vmatpush1.msra.mxu0 0.0
      %8127 = vmatprep.subr.mxu0 0.0
      %8128 = vmatpush1.msra.mxu0 0.0
      %8129 = vmatprep.subr.mxu0 0.0
      %8130 = vmatpush1.msra.mxu0 0.0
      %8131 = vmatprep.subr.mxu0 0.0
      %8132 = vmatpush1.msra.mxu0 0.0
      %8133 = vmatprep.subr.mxu0 0.0
      %8134 = vmatpush1.msra.mxu0 0.0
      %8135 = vmatprep.subr.mxu0 0.0
      %8136 = vmatpush1.msra.mxu0 0.0
      %8137 = vmatprep.subr.mxu0 0.0
      %8138 = vmatpush1.msra.mxu0 0.0
      %8139 = vmatprep.subr.mxu0 0.0
      %8140 = vmatpush1.msra.mxu0 0.0
      %8141 = vmatprep.subr.mxu0 0.0
      %8142 = vmatpush1.msra.mxu0 0.0
      %8143 = vmatprep.subr.mxu0 0.0
      %8144 = vmatpush1.msra.mxu0 0.0
      %8145 = vmatprep.subr.mxu0 0.0
      %8146 = vmatpush1.msra.mxu0 0.0
      %8147 = vmatprep.mubr.f32.mxu0 0.0
      %8148 = vmatmul.mubr.f32.gmra.mrb[0].mxu0 %v8060
      %v8149 = vpop.f32.mrb[0].mxu0
      %v8150 = vadd.f32 0.0, %v8149
      %v8151 = vpop.f32.mrb[0].mxu0
      %8152 = vmatprep.mubr.f32.mxu0 0.0
      %8153 = vmatmul.mubr.f32.gmra.mrb[0].mxu0 %v8063
      %v8154 = vpop.f32.mrb[0].mxu0
      %v8155 = vadd.f32 0.0, %v8154
      %v8156 = vpop.f32.mrb[0].mxu0
      %8157 = vmatprep.mubr.f32.mxu0 0.0
      %8158 = vmatmul.mubr.f32.gmra.mrb[0].mxu0 %v8066
      %v8159 = vpop.f32.mrb[0].mxu0
      %v8160 = vadd.f32 0.0, %v8159
      %v8161 = vpop.f32.mrb[0].mxu0
      %8162 = vmatprep.mubr.f32.mxu0 0.0
      %8163 = vmatmul.mubr.f32.gmra.mrb[0].mxu0 %v8069
      %v8164 = vpop.f32.mrb[0].mxu0
      %v8165 = vadd.f32 0.0, %v8164
      %v8166 = vpop.f32.mrb[0].mxu0
      %8167 = vmatprep.mubr.f32.mxu0 0.0
      %8168 = vmatmul.mubr.f32.gmra.mrb[0].mxu0 %v8072
      %v8169 = vpop.f32.mrb[0].mxu0
      %v8170 = vadd.f32 0.0, %v8169
      %v8171 = vpop.f32.mrb[0].mxu0
      %8172 = vmatprep.mubr.f32.mxu0 0.0
      %8173 = vmatmul.mubr.f32.gmra.mrb[0].mxu0 %v8075
      %v8174 = vpop.f32.mrb[0].mxu0
      %v8175 = vadd.f32 0.0, %v8174
      %v8176 = vpop.f32.mrb[0].mxu0
      %8177 = vmatprep.mubr.f32.mxu0 0.0
      %8178 = vmatmul.mubr.f32.gmra.mrb[0].mxu0 %v8078
      %v8179 = vpop.f32.mrb[0].mxu0
      %v8180 = vadd.f32 0.0, %v8179
      %v8181 = vpop.f32.mrb[0].mxu0
      %8182 = vmatprep.mubr.f32.mxu0 0.0
      %8183 = vmatmul.mubr.f32.gmra.mrb[0].mxu0 %v8081
      %v8184 = vpop.f32.mrb[0].mxu0
      %v8185 = vadd.f32 0.0, %v8184
      %v8186 = vpop.f32.mrb[0].mxu0
      %8187 = vdwg.mxu0
      %v8188 = vld [vmem:[%s4 + $0x18] sm:$0xff]
      %v8190 = vsel %vm657, %v7691, 0
      %v8193 = vsel %vm657, %v7696, 0
      %v8196 = vsel %vm657, %v7701, 0
      %v8199 = vsel %vm657, %v7706, 0
      %v8202 = vsel %vm657, %v7711, 0
      %v8205 = vsel %vm657, %v7716, 0
      %v8208 = vsel %vm657, %v7721, 0
      %v8211 = vsel %vm657, %v7726, 0
      %v8214 = vsel %vm657, %v7844, 0
      %v8217 = vsel %vm657, %v7849, 0
      %v8220 = vsel %vm657, %v7854, 0
      %v8223 = vsel %vm657, %v7859, 0
      %v8226 = vsel %vm657, %v7864, 0
      %v8229 = vsel %vm657, %v7869, 0
      %v8232 = vsel %vm657, %v7874, 0
      %v8235 = vsel %vm657, %v7879, 0
      %v8238 = vsel %vm657, %v7997, 0
      %v8241 = vsel %vm657, %v8002, 0
      %v8244 = vsel %vm657, %v8007, 0
      %v8247 = vsel %vm657, %v8012, 0
      %v8250 = vsel %vm657, %v8017, 0
      %v8253 = vsel %vm657, %v8022, 0
      %v8256 = vsel %vm657, %v8027, 0
      %v8259 = vsel %vm657, %v8032, 0
      %v8262 = vsel %vm657, %v8150, 0
      %v8265 = vsel %vm657, %v8155, 0
      %v8268 = vsel %vm657, %v8160, 0
      %v8271 = vsel %vm657, %v8165, 0
      %v8274 = vsel %vm657, %v8170, 0
      %v8277 = vsel %vm657, %v8175, 0
      %v8280 = vsel %vm657, %v8180, 0
      %v8283 = vsel %vm657, %v8185, 0
      %8285 = vmatprep.subr.mxu0 0.0
      %8286 = vmatpush1.msra.mxu0 %v8188
      %8287 = vmatprep.subr.mxu0 0.0
      %8288 = vmatpush1.msra.mxu0 0.0
      %8289 = vmatprep.subr.mxu0 0.0
      %8290 = vmatpush1.msra.mxu0 0.0
      %8291 = vmatprep.subr.mxu0 0.0
      %8292 = vmatpush1.msra.mxu0 0.0
      %8293 = vmatprep.subr.mxu0 0.0
      %8294 = vmatpush1.msra.mxu0 0.0
      %8295 = vmatprep.subr.mxu0 0.0
      %8296 = vmatpush1.msra.mxu0 0.0
      %8297 = vmatprep.subr.mxu0 0.0
      %8298 = vmatpush1.msra.mxu0 0.0
      %8299 = vmatprep.subr.mxu0 0.0
      %8300 = vmatpush1.msra.mxu0 0.0
      %8301 = vmatprep.subr.mxu0 0.0
      %8302 = vmatpush1.msra.mxu0 0.0
      %8303 = vmatprep.subr.mxu0 0.0
      %8304 = vmatpush1.msra.mxu0 0.0
      %8305 = vmatprep.subr.mxu0 0.0
      %8306 = vmatpush1.msra.mxu0 0.0
      %8307 = vmatprep.subr.mxu0 0.0
      %8308 = vmatpush1.msra.mxu0 0.0
      %8309 = vmatprep.subr.mxu0 0.0
      %8310 = vmatpush1.msra.mxu0 0.0
      %8311 = vmatprep.subr.mxu0 0.0
      %8312 = vmatpush1.msra.mxu0 0.0
      %8313 = vmatprep.subr.mxu0 0.0
      %8314 = vmatpush1.msra.mxu0 0.0
      %8315 = vmatprep.subr.mxu0 0.0
      %8316 = vmatpush1.msra.mxu0 0.0
      %8317 = vmatprep.subr.mxu0 0.0
      %8318 = vmatpush1.msra.mxu0 0.0
      %8319 = vmatprep.subr.mxu0 0.0
      %8320 = vmatpush1.msra.mxu0 0.0
      %8321 = vmatprep.subr.mxu0 0.0
      %8322 = vmatpush1.msra.mxu0 0.0
      %8323 = vmatprep.subr.mxu0 0.0
      %8324 = vmatpush1.msra.mxu0 0.0
      %8325 = vmatprep.subr.mxu0 0.0
      %8326 = vmatpush1.msra.mxu0 0.0
      %8327 = vmatprep.subr.mxu0 0.0
      %8328 = vmatpush1.msra.mxu0 0.0
      %8329 = vmatprep.subr.mxu0 0.0
      %8330 = vmatpush1.msra.mxu0 0.0
      %8331 = vmatprep.subr.mxu0 0.0
      %8332 = vmatpush1.msra.mxu0 0.0
      %8333 = vmatprep.subr.mxu0 0.0
      %8334 = vmatpush1.msra.mxu0 0.0
      %8335 = vmatprep.subr.mxu0 0.0
      %8336 = vmatpush1.msra.mxu0 0.0
      %8337 = vmatprep.subr.mxu0 0.0
      %8338 = vmatpush1.msra.mxu0 0.0
      %8339 = vmatprep.subr.mxu0 0.0
      %8340 = vmatpush1.msra.mxu0 0.0
      %8341 = vmatprep.subr.mxu0 0.0
      %8342 = vmatpush1.msra.mxu0 0.0
      %8343 = vmatprep.subr.mxu0 0.0
      %8344 = vmatpush1.msra.mxu0 0.0
      %8345 = vmatprep.subr.mxu0 0.0
      %8346 = vmatpush1.msra.mxu0 0.0
      %8347 = vmatprep.subr.mxu0 0.0
      %8348 = vmatpush1.msra.mxu0 0.0
      %8349 = vmatprep.mubr.f32.mxu0 0.0
      %8350 = vmatmul.mubr.f32.gmra.mrb[0].mxu0 %v8190
      %v8351 = vpop.f32.mrb[0].mxu0
      %v8352 = vadd.f32 0.0, %v8351
      %v8353 = vpop.f32.mrb[0].mxu0
      %8354 = vmatprep.mubr.f32.mxu0 0.0
      %8355 = vmatmul.mubr.f32.gmra.mrb[0].mxu0 %v8193
      %v8356 = vpop.f32.mrb[0].mxu0
      %v8357 = vadd.f32 0.0, %v8356
      %v8358 = vpop.f32.mrb[0].mxu0
      %8359 = vmatprep.mubr.f32.mxu0 0.0
      %8360 = vmatmul.mubr.f32.gmra.mrb[0].mxu0 %v8196
      %v8361 = vpop.f32.mrb[0].mxu0
      %v8362 = vadd.f32 0.0, %v8361
      %v8363 = vpop.f32.mrb[0].mxu0
      %8364 = vmatprep.mubr.f32.mxu0 0.0
      %8365 = vmatmul.mubr.f32.gmra.mrb[0].mxu0 %v8199
      %v8366 = vpop.f32.mrb[0].mxu0
      %v8367 = vadd.f32 0.0, %v8366
      %v8368 = vpop.f32.mrb[0].mxu0
      %8369 = vmatprep.mubr.f32.mxu0 0.0
      %8370 = vmatmul.mubr.f32.gmra.mrb[0].mxu0 %v8202
      %v8371 = vpop.f32.mrb[0].mxu0
      %v8372 = vadd.f32 0.0, %v8371
      %v8373 = vpop.f32.mrb[0].mxu0
      %8374 = vmatprep.mubr.f32.mxu0 0.0
      %8375 = vmatmul.mubr.f32.gmra.mrb[0].mxu0 %v8205
      %v8376 = vpop.f32.mrb[0].mxu0
      %v8377 = vadd.f32 0.0, %v8376
      %v8378 = vpop.f32.mrb[0].mxu0
      %8379 = vmatprep.mubr.f32.mxu0 0.0
      %8380 = vmatmul.mubr.f32.gmra.mrb[0].mxu0 %v8208
      %v8381 = vpop.f32.mrb[0].mxu0
      %v8382 = vadd.f32 0.0, %v8381
      %v8383 = vpop.f32.mrb[0].mxu0
      %8384 = vmatprep.mubr.f32.mxu0 0.0
      %8385 = vmatmul.mubr.f32.gmra.mrb[0].mxu0 %v8211
      %v8386 = vpop.f32.mrb[0].mxu0
      %v8387 = vadd.f32 0.0, %v8386
      %v8388 = vpop.f32.mrb[0].mxu0
      %8389 = vmatprep.mubr.f32.mxu0 0.0
      %8390 = vmatmul.mubr.f32.gmra.mrb[0].mxu0 %v8214
      %v8391 = vpop.f32.mrb[0].mxu0
      %v8392 = vadd.f32 0.0, %v8391
      %v8393 = vpop.f32.mrb[0].mxu0
      %8394 = vmatprep.mubr.f32.mxu0 0.0
      %8395 = vmatmul.mubr.f32.gmra.mrb[0].mxu0 %v8217
      %v8396 = vpop.f32.mrb[0].mxu0
      %v8397 = vadd.f32 0.0, %v8396
      %v8398 = vpop.f32.mrb[0].mxu0
      %8399 = vmatprep.mubr.f32.mxu0 0.0
      %8400 = vmatmul.mubr.f32.gmra.mrb[0].mxu0 %v8220
      %v8401 = vpop.f32.mrb[0].mxu0
      %v8402 = vadd.f32 0.0, %v8401
      %v8403 = vpop.f32.mrb[0].mxu0
      %8404 = vmatprep.mubr.f32.mxu0 0.0
      %8405 = vmatmul.mubr.f32.gmra.mrb[0].mxu0 %v8223
      %v8406 = vpop.f32.mrb[0].mxu0
      %v8407 = vadd.f32 0.0, %v8406
      %v8408 = vpop.f32.mrb[0].mxu0
      %8409 = vmatprep.mubr.f32.mxu0 0.0
      %8410 = vmatmul.mubr.f32.gmra.mrb[0].mxu0 %v8226
      %v8411 = vpop.f32.mrb[0].mxu0
      %v8412 = vadd.f32 0.0, %v8411
      %v8413 = vpop.f32.mrb[0].mxu0
      %8414 = vmatprep.mubr.f32.mxu0 0.0
      %8415 = vmatmul.mubr.f32.gmra.mrb[0].mxu0 %v8229
      %v8416 = vpop.f32.mrb[0].mxu0
      %v8417 = vadd.f32 0.0, %v8416
      %v8418 = vpop.f32.mrb[0].mxu0
      %8419 = vmatprep.mubr.f32.mxu0 0.0
      %8420 = vmatmul.mubr.f32.gmra.mrb[0].mxu0 %v8232
      %v8421 = vpop.f32.mrb[0].mxu0
      %v8422 = vadd.f32 0.0, %v8421
      %v8423 = vpop.f32.mrb[0].mxu0
      %8424 = vmatprep.mubr.f32.mxu0 0.0
      %8425 = vmatmul.mubr.f32.gmra.mrb[0].mxu0 %v8235
      %v8426 = vpop.f32.mrb[0].mxu0
      %v8427 = vadd.f32 0.0, %v8426
      %v8428 = vpop.f32.mrb[0].mxu0
      %8429 = vmatprep.mubr.f32.mxu0 0.0
      %8430 = vmatmul.mubr.f32.gmra.mrb[0].mxu0 %v8238
      %v8431 = vpop.f32.mrb[0].mxu0
      %v8432 = vadd.f32 0.0, %v8431
      %v8433 = vpop.f32.mrb[0].mxu0
      %8434 = vmatprep.mubr.f32.mxu0 0.0
      %8435 = vmatmul.mubr.f32.gmra.mrb[0].mxu0 %v8241
      %v8436 = vpop.f32.mrb[0].mxu0
      %v8437 = vadd.f32 0.0, %v8436
      %v8438 = vpop.f32.mrb[0].mxu0
      %8439 = vmatprep.mubr.f32.mxu0 0.0
      %8440 = vmatmul.mubr.f32.gmra.mrb[0].mxu0 %v8244
      %v8441 = vpop.f32.mrb[0].mxu0
      %v8442 = vadd.f32 0.0, %v8441
      %v8443 = vpop.f32.mrb[0].mxu0
      %8444 = vmatprep.mubr.f32.mxu0 0.0
      %8445 = vmatmul.mubr.f32.gmra.mrb[0].mxu0 %v8247
      %v8446 = vpop.f32.mrb[0].mxu0
      %v8447 = vadd.f32 0.0, %v8446
      %v8448 = vpop.f32.mrb[0].mxu0
      %8449 = vmatprep.mubr.f32.mxu0 0.0
      %8450 = vmatmul.mubr.f32.gmra.mrb[0].mxu0 %v8250
      %v8451 = vpop.f32.mrb[0].mxu0
      %v8452 = vadd.f32 0.0, %v8451
      %v8453 = vpop.f32.mrb[0].mxu0
      %8454 = vmatprep.mubr.f32.mxu0 0.0
      %8455 = vmatmul.mubr.f32.gmra.mrb[0].mxu0 %v8253
      %v8456 = vpop.f32.mrb[0].mxu0
      %v8457 = vadd.f32 0.0, %v8456
      %v8458 = vpop.f32.mrb[0].mxu0
      %8459 = vmatprep.mubr.f32.mxu0 0.0
      %8460 = vmatmul.mubr.f32.gmra.mrb[0].mxu0 %v8256
      %v8461 = vpop.f32.mrb[0].mxu0
      %v8462 = vadd.f32 0.0, %v8461
      %v8463 = vpop.f32.mrb[0].mxu0
      %8464 = vmatprep.mubr.f32.mxu0 0.0
      %8465 = vmatmul.mubr.f32.gmra.mrb[0].mxu0 %v8259
      %v8466 = vpop.f32.mrb[0].mxu0
      %v8467 = vadd.f32 0.0, %v8466
      %v8468 = vpop.f32.mrb[0].mxu0
      %8469 = vmatprep.mubr.f32.mxu0 0.0
      %8470 = vmatmul.mubr.f32.gmra.mrb[0].mxu0 %v8262
      %v8471 = vpop.f32.mrb[0].mxu0
      %v8472 = vadd.f32 0.0, %v8471
      %v8473 = vpop.f32.mrb[0].mxu0
      %8474 = vmatprep.mubr.f32.mxu0 0.0
      %8475 = vmatmul.mubr.f32.gmra.mrb[0].mxu0 %v8265
      %v8476 = vpop.f32.mrb[0].mxu0
      %v8477 = vadd.f32 0.0, %v8476
      %v8478 = vpop.f32.mrb[0].mxu0
      %8479 = vmatprep.mubr.f32.mxu0 0.0
      %8480 = vmatmul.mubr.f32.gmra.mrb[0].mxu0 %v8268
      %v8481 = vpop.f32.mrb[0].mxu0
      %v8482 = vadd.f32 0.0, %v8481
      %v8483 = vpop.f32.mrb[0].mxu0
      %8484 = vmatprep.mubr.f32.mxu0 0.0
      %8485 = vmatmul.mubr.f32.gmra.mrb[0].mxu0 %v8271
      %v8486 = vpop.f32.mrb[0].mxu0
      %v8487 = vadd.f32 0.0, %v8486
      %v8488 = vpop.f32.mrb[0].mxu0
      %8489 = vmatprep.mubr.f32.mxu0 0.0
      %8490 = vmatmul.mubr.f32.gmra.mrb[0].mxu0 %v8274
      %v8491 = vpop.f32.mrb[0].mxu0
      %v8492 = vadd.f32 0.0, %v8491
      %v8493 = vpop.f32.mrb[0].mxu0
      %8494 = vmatprep.mubr.f32.mxu0 0.0
      %8495 = vmatmul.mubr.f32.gmra.mrb[0].mxu0 %v8277
      %v8496 = vpop.f32.mrb[0].mxu0
      %v8497 = vadd.f32 0.0, %v8496
      %v8498 = vpop.f32.mrb[0].mxu0
      %8499 = vmatprep.mubr.f32.mxu0 0.0
      %8500 = vmatmul.mubr.f32.gmra.mrb[0].mxu0 %v8280
      %v8501 = vpop.f32.mrb[0].mxu0
      %v8502 = vadd.f32 0.0, %v8501
      %v8503 = vpop.f32.mrb[0].mxu0
      %8504 = vmatprep.mubr.f32.mxu0 0.0
      %8505 = vmatmul.mubr.f32.gmra.mrb[0].mxu0 %v8283
      %v8506 = vpop.f32.mrb[0].mxu0
      %v8507 = vadd.f32 0.0, %v8506
      %v8508 = vpop.f32.mrb[0].mxu0
      %8509 = vdwg.mxu0
      %v8510 = vadd.f32 %v6507, %v8352
      %v8511 = vadd.f32 %v6508, %v8357
      %v8512 = vadd.f32 %v6509, %v8362
      %v8513 = vadd.f32 %v6510, %v8367
      %v8514 = vadd.f32 %v6511, %v8372
      %v8515 = vadd.f32 %v6512, %v8377
      %v8516 = vadd.f32 %v6513, %v8382
      %v8517 = vadd.f32 %v6514, %v8387
      %v8518 = vadd.f32 %v6515, %v8392
      %v8519 = vadd.f32 %v6516, %v8397
      %v8520 = vadd.f32 %v6517, %v8402
      %v8521 = vadd.f32 %v6518, %v8407
      %v8522 = vadd.f32 %v6519, %v8412
      %v8523 = vadd.f32 %v6520, %v8417
      %v8524 = vadd.f32 %v6521, %v8422
      %v8525 = vadd.f32 %v6522, %v8427
      %v8526 = vadd.f32 %v6523, %v8432
      %v8527 = vadd.f32 %v6524, %v8437
      %v8528 = vadd.f32 %v6525, %v8442
      %v8529 = vadd.f32 %v6526, %v8447
      %v8530 = vadd.f32 %v6527, %v8452
      %v8531 = vadd.f32 %v6528, %v8457
      %v8532 = vadd.f32 %v6529, %v8462
      %v8533 = vadd.f32 %v6530, %v8467
      %v8534 = vadd.f32 %v6531, %v8472
      %v8535 = vadd.f32 %v6532, %v8477
      %v8536 = vadd.f32 %v6533, %v8482
      %v8537 = vadd.f32 %v6534, %v8487
      %v8538 = vadd.f32 %v6535, %v8492
      %v8539 = vadd.f32 %v6536, %v8497
      %v8540 = vadd.f32 %v6537, %v8502
      %v8541 = vadd.f32 %v6538, %v8507
      %v8542 = vld [vmem:[%s5] sm:$0x1]
      %v8544 = vlaneseq
      %v8545 = vshrl.u32 %v8544, 7
      %v8546 = vsub.s32 0, %v8545
      %v8547 = vrot.slane %v8542, %v8546
      %v8549 = vadd.f32 %v8510, %v8547
      %v8550 = vadd.f32 %v8511, %v8547
      %v8551 = vadd.f32 %v8512, %v8547
      %v8552 = vadd.f32 %v8513, %v8547
      %v8553 = vadd.f32 %v8514, %v8547
      %v8554 = vadd.f32 %v8515, %v8547
      %v8555 = vadd.f32 %v8516, %v8547
      %v8556 = vadd.f32 %v8517, %v8547
      %v8557 = vadd.f32 %v8518, %v8547
      %v8558 = vadd.f32 %v8519, %v8547
      %v8559 = vadd.f32 %v8520, %v8547
      %v8560 = vadd.f32 %v8521, %v8547
      %v8561 = vadd.f32 %v8522, %v8547
      %v8562 = vadd.f32 %v8523, %v8547
      %v8563 = vadd.f32 %v8524, %v8547
      %v8564 = vadd.f32 %v8525, %v8547
      %v8565 = vadd.f32 %v8526, %v8547
      %v8566 = vadd.f32 %v8527, %v8547
      %v8567 = vadd.f32 %v8528, %v8547
      %v8568 = vadd.f32 %v8529, %v8547
      %v8569 = vadd.f32 %v8530, %v8547
      %v8570 = vadd.f32 %v8531, %v8547
      %v8571 = vadd.f32 %v8532, %v8547
      %v8572 = vadd.f32 %v8533, %v8547
      %v8573 = vadd.f32 %v8534, %v8547
      %v8574 = vadd.f32 %v8535, %v8547
      %v8575 = vadd.f32 %v8536, %v8547
      %v8576 = vadd.f32 %v8537, %v8547
      %v8577 = vadd.f32 %v8538, %v8547
      %v8578 = vadd.f32 %v8539, %v8547
      %v8579 = vadd.f32 %v8540, %v8547
      %v8580 = vadd.f32 %v8541, %v8547
      %8581 = vst.msk [vmem:[%s258] sm:$0xff] %vm303, %v8549
      %8582 = vst.msk [vmem:[%s258 + $0x8] sm:$0xff] %vm303, %v8550
      %8583 = vst.msk [vmem:[%s258 + $0x10] sm:$0xff] %vm303, %v8551
      %8584 = vst.msk [vmem:[%s258 + $0x18] sm:$0xff] %vm303, %v8552
      %8585 = vst.msk [vmem:[%s258 + $0x20] sm:$0xff] %vm303, %v8553
      %8586 = vst.msk [vmem:[%s258 + $0x28] sm:$0xff] %vm303, %v8554
      %8587 = vst.msk [vmem:[%s258 + $0x30] sm:$0xff] %vm303, %v8555
      %8588 = vst.msk [vmem:[%s258 + $0x38] sm:$0xff] %vm303, %v8556
      %8589 = vst.msk [vmem:[%s258 + $0x40] sm:$0xff] %vm303, %v8557
      %8590 = vst.msk [vmem:[%s258 + $0x48] sm:$0xff] %vm303, %v8558
      %8591 = vst.msk [vmem:[%s258 + $0x50] sm:$0xff] %vm303, %v8559
      %8592 = vst.msk [vmem:[%s258 + $0x58] sm:$0xff] %vm303, %v8560
      %8593 = vst.msk [vmem:[%s258 + $0x60] sm:$0xff] %vm303, %v8561
      %8594 = vst.msk [vmem:[%s258 + $0x68] sm:$0xff] %vm303, %v8562
      %8595 = vst.msk [vmem:[%s258 + $0x70] sm:$0xff] %vm303, %v8563
      %8596 = vst.msk [vmem:[%s258 + $0x78] sm:$0xff] %vm303, %v8564
      %8597 = vst.msk [vmem:[%s258 + $0x80] sm:$0xff] %vm303, %v8565
      %8598 = vst.msk [vmem:[%s258 + $0x88] sm:$0xff] %vm303, %v8566
      %8599 = vst.msk [vmem:[%s258 + $0x90] sm:$0xff] %vm303, %v8567
      %8600 = vst.msk [vmem:[%s258 + $0x98] sm:$0xff] %vm303, %v8568
      %8601 = vst.msk [vmem:[%s258 + $0xa0] sm:$0xff] %vm303, %v8569
      %8602 = vst.msk [vmem:[%s258 + $0xa8] sm:$0xff] %vm303, %v8570
      %8603 = vst.msk [vmem:[%s258 + $0xb0] sm:$0xff] %vm303, %v8571
      %8604 = vst.msk [vmem:[%s258 + $0xb8] sm:$0xff] %vm303, %v8572
      %8605 = vst.msk [vmem:[%s258 + $0xc0] sm:$0xff] %vm303, %v8573
      %8606 = vst.msk [vmem:[%s258 + $0xc8] sm:$0xff] %vm303, %v8574
      %8607 = vst.msk [vmem:[%s258 + $0xd0] sm:$0xff] %vm303, %v8575
      %8608 = vst.msk [vmem:[%s258 + $0xd8] sm:$0xff] %vm303, %v8576
      %8609 = vst.msk [vmem:[%s258 + $0xe0] sm:$0xff] %vm303, %v8577
      %8610 = vst.msk [vmem:[%s258 + $0xe8] sm:$0xff] %vm303, %v8578
      %8611 = vst.msk [vmem:[%s258 + $0xf0] sm:$0xff] %vm303, %v8579
      %8612 = vst.msk [vmem:[%s258 + $0xf8] sm:$0xff] %vm303, %v8580
      %s8613 = smul.u32 4, %s17
      %p8614 = scmp.lt.s32.totalorder %s8613, 7
      %s8615 = scalar_select %p8614, %s8613, 7
      %s8616 = smul.addr %s8615, 8
      %s8617 = smul.addr %s8616, 8
      %s8618 = scalar_lea.vmem %s6, %s8617
      // Predicated region
      $region45: #{_lambda_.1} parent=43 // pred_check
        %p8619 = pneg %p166
      $region46: #{_lambda_.1} parent=43 // pred_check_branch
        %8621 = sbr.rel (%p8619) target = $region48
      $region47: #{_lambda_.1} parent=43 // pred_region
        %s8622 = smul.u32 4, %s17
      $region48: #{_lambda_.1} parent=43 // pred_fallthru
        _
    $region44: #{_lambda_.1} parent=5 // pred_fallthru
      _
    %p8623 = scmp.le.s32.totalorder 2, %s12
    // Predicated region
    $region49: #{_lambda_.1} parent=5 // pred_check
      %p8624 = pneg %p8623
    $region50: #{_lambda_.1} parent=5 // pred_check_branch
      %8626 = sbr.rel (%p8624) target = $region52
    $region51: #{_lambda_.1} parent=5 // pred_region
      %s8627 = ssub.s32 %s12, 2
      // Predicated region
      $region53: #{_lambda_.1} parent=51 // pred_check
        %p8628 = pneg %p172
      $region54: #{_lambda_.1} parent=51 // pred_check_branch
        %8630 = sbr.rel (%p8628) target = $region56
      $region55: #{_lambda_.1} parent=51 // pred_region
        %s8631 = smul.u32 4, %s18
        %p8632 = scmp.lt.s32.totalorder %s8631, 7
        %s8633 = scalar_select %p8632, %s8631, 7
        %s8634 = smul.addr %s8633, 8
        %s8635 = smul.addr %s8634, 8
        %s8636 = scalar_lea.vmem %s6, %s8635
      $region56: #{_lambda_.1} parent=51 // pred_fallthru
        _
    $region52: #{_lambda_.1} parent=5 // pred_fallthru
      _
  $region6: #{_lambda_.1} parent=0 // loop_footer
    %s16 = sadd.s32 1, %s12
  $region7: #{_lambda_.1} parent=0 // loop_footer_branch
    %11 = sbr.rel target = $region3
  $region8: #{_lambda_.1} parent=0 // loop_exit
    _

</llo_original>
